<compile_context>
chip_gen: v7x
topology: tpu7x:2x2x1
jax: 0.10.0
libtpu: 0.0.40
codegen_flags: <defaults>
</compile_context>

<pallas_src>
import functools

import jax
import jax.numpy as jnp
from jax.experimental import pallas as pl
from jax.experimental.pallas import tpu as pltpu

_EPS = 1e-5


def _elu(v):
    return jnp.where(v > 0.0, v, jnp.exp(jnp.minimum(v, 0.0)) - 1.0)


# ----------------------------------------------------------------------------
# Fused whole-encoder kernel
# ----------------------------------------------------------------------------
def _encoder_kernel(xt_ref, ml_ref, mr_ref, w0_ref, sh0_ref,
                    w1_ref, sh1_ref, w2_ref, sh2_ref, alpha_ref,
                    o_ref, in_scr, act_a, act_b,
                    *, block_n, Wo, n_layers):
    T = o_ref.shape[1]            # Ho*Wo tokens per image
    PAD = Wo + 1                  # zero-separator rows around each image
    STRIDE = T + PAD              # per-image row pitch in the token scratches
    Lw = block_n * STRIDE - PAD   # rows of each wide MXU operand
    C = act_a.shape[-1]
    Cs = in_scr.shape[-1]

    # Re-zero only the tiny separator rows every step (valid rows are fully
    # overwritten; per-step keeps it correct under megacore grid splitting).
    for k in range(block_n + 1):
        r0 = k * STRIDE
        in_scr[r0:r0 + PAD, :] = jnp.zeros((PAD, Cs), in_scr.dtype)
        act_a[r0:r0 + PAD, :] = jnp.zeros((PAD, C), act_a.dtype)
        act_b[r0:r0 + PAD, :] = jnp.zeros((PAD, C), act_b.dtype)

    # 0/1 masks killing taps whose row-shifted read wraps across an image row.
    ml = ml_ref[...]              # (Lw, 1) bf16, 0 where token column j == 0
    mr = mr_ref[...]              # (Lw, 1) bf16, 0 where token column j == Wo-1

    # Stage the space-to-depth token input into its zero-separated scratch.
    for n in range(block_n):
        b = PAD + n * STRIDE
        in_scr[b:b + T, :] = xt_ref[n]

    def conv(scr, taps, w, shift):
        """One conv = ONE K-merged MXU dot over bf16 row-shifted slices."""
        groups = []
        for row in taps:                                   # 2-stage concat keeps the
            slabs = []                                     # vreg live-set small
            for off, mask in row:
                s = scr[PAD + off:PAD + off + Lw, :]       # bf16, no f32 round trip
                if mask is not None:
                    s = s * mask
                slabs.append(s)
            groups.append(jnp.concatenate(slabs, axis=-1) if len(slabs) > 1
                          else slabs[0])
        op = jnp.concatenate(groups, axis=-1) if len(groups) > 1 else groups[0]
        return jnp.dot(op, w, preferred_element_type=jnp.float32) + shift

    def store_tokens(scr, val):
        for n in range(block_n):
            b = PAD + n * STRIDE
            scr[b:b + T, :] = val[n * STRIDE:n * STRIDE + T, :].astype(scr.dtype)

    # Tap tables: token-row offset + optional wrap mask, grouped per kernel row.
    taps3 = [[((kh - 1) * Wo + (kw - 1),
               ml if kw == 0 else (mr if kw == 2 else None))
              for kw in range(3)] for kh in range(3)]
    taps_stem = [[((da - 1) * Wo + (db - 1), ml if db == 0 else None)
                  for db in range(2)] for da in range(2)]

    # --- stem: Conv2d(i_dim, h_dim, 3, stride=2, pad=1) + BN (+ Dropout=id) ---
    cur = conv(in_scr, taps_stem, w0_ref[...], sh0_ref[...])   # f32 (Lw, C)
    if n_layers == 0:
        cur = jnp.maximum(cur, 0.0)                            # stack ReLU
    else:
        store_tokens(act_a, cur)

    # --- ReZero stack; h1 never leaves VMEM; residual carried in f32 ----------
    for l in range(n_layers):
        h1 = _elu(conv(act_a, taps3, w1_ref[l], sh1_ref[l]))
        store_tokens(act_b, h1)
        h2 = _elu(conv(act_b, taps3, w2_ref[l], sh2_ref[l]))
        cur = h2 * alpha_ref[l, 0] + cur                       # ReZero residual
        if l == n_layers - 1:
            cur = jnp.maximum(cur, 0.0)                        # final stack ReLU
        else:
            store_tokens(act_a, cur)

    # --- emit valid tokens (separator rows are dropped) ------------------------
    for n in range(block_n):
        o_ref[n] = cur[n * STRIDE:n * STRIDE + T, :]


# ----------------------------------------------------------------------------
# Parameter folding (eval-mode BatchNorm folded into bf16 weights + f32 shift)
# ----------------------------------------------------------------------------
def _bn_scale_shift(bias, gamma, beta, mean, var):
    scale = gamma / jnp.sqrt(var + _EPS)
    shift = (bias - mean) * scale + beta
    return scale, shift


def _fold_stem(w, b, bn):
    """HWIO (3,3,Cin,Cout) stride-2 conv + bias + BN -> space-to-depth 2x2 form.

    Returns ((16*Cin, Cout) bf16, (1, Cout) f32); K index is
    ((da*2+db)*4 + ph*2+pw)*Cin + ci, matching the kernel's tap/concat order.
    """
    Cin, Cout = w.shape[2], w.shape[3]
    scale, shift = _bn_scale_shift(b, **bn)
    ws = w * scale
    w2 = jnp.zeros((2, 2, 2, 2, Cin, Cout), jnp.float32)
    for kh in range(3):
        da, ph = (0, 1) if kh == 0 else (1, kh - 1)
        for kw in range(3):
            db, pw = (0, 1) if kw == 0 else (1, kw - 1)
            w2 = w2.at[da, db, ph, pw].set(ws[kh, kw])
    return (w2.reshape(16 * Cin, Cout).astype(jnp.bfloat16),
            shift.reshape(1, Cout).astype(jnp.float32))


def _fold_conv3(w, bn):
    """HWIO (3,3,C,C) bias-free conv + BN -> ((9*C, C) bf16, (1, C) f32)."""
    C = w.shape[-1]
    scale, shift = _bn_scale_shift(jnp.zeros((C,), jnp.float32), **bn)
    return ((w * scale).reshape(9 * C, C).astype(jnp.bfloat16),
            shift.reshape(1, C).astype(jnp.float32))


# ----------------------------------------------------------------------------
# Encoder forward (single pallas_call)
# ----------------------------------------------------------------------------
def encoder_forward(params, x_nchw):
    """Encoder(enc_type='half') eval forward: (N, i_dim, H, W) -> (N, h_dim, H//2, W//2)."""
    x = x_nchw.astype(jnp.float32)
    N, Cin, H, W = x.shape
    assert H % 2 == 0 and W % 2 == 0, "TODO(synk): odd spatial sizes not handled"
    Ho, Wo = H // 2, W // 2
    T = Ho * Wo
    PAD = Wo + 1
    C = params["conv0_w"].shape[-1]
    L = len(params["rezero"])
    Leff = max(L, 1)

    # >= 2 images per grid step -> M = block_n*T (+ separators) >= 128 per dot.
    # (For very small N on v7x one could prefer block_n=1 to feed both cores.)
    block_n = 2 if N % 2 == 0 else 1
    nb = N // block_n
    STRIDE = T + PAD
    ROWS = PAD + block_n * STRIDE
    Lw = block_n * STRIDE - PAD
    Cs = 4 * Cin

    # Input: NCHW -> space-to-depth token form (N, Ho*Wo, 4*Cin) bf16 (one XLA copy).
    xt = x.reshape(N, Cin, Ho, 2, Wo, 2)
    xt = jnp.transpose(xt, (0, 2, 4, 3, 5, 1)).reshape(N, T, Cs).astype(jnp.bfloat16)

    # Column-wrap masks for the kw=0 / kw=2 (and stem db=0) taps.
    r = jnp.arange(Lw)
    j = (r % STRIDE) % Wo
    mask_l = (j != 0).astype(jnp.bfloat16).reshape(Lw, 1)
    mask_r = (j != Wo - 1).astype(jnp.bfloat16).reshape(Lw, 1)

    # Fold conv bias + eval-mode BN into bf16 weights and f32 per-channel shifts.
    w0, sh0 = _fold_stem(params["conv0_w"], params["conv0_b"], params["bn0"])
    if L > 0:
        f1 = [_fold_conv3(lyr["w1"], lyr["bn1"]) for lyr in params["rezero"]]
        f2 = [_fold_conv3(lyr["w2"], lyr["bn2"]) for lyr in params["rezero"]]
        w1 = jnp.stack([a for a, _ in f1]); s1 = jnp.stack([b for _, b in f1])
        w2 = jnp.stack([a for a, _ in f2]); s2 = jnp.stack([b for _, b in f2])
        alphas = jnp.stack([lyr["alpha"].astype(jnp.float32).reshape(1)
                            for lyr in params["rezero"]])
    else:  # dummies (never read when n_layers == 0)
        w1 = jnp.zeros((1, 9 * C, C), jnp.bfloat16)
        s1 = jnp.zeros((1, 1, C), jnp.float32)
        w2, s2 = w1, s1
        alphas = jnp.zeros((1, 1), jnp.float32)

    kernel = functools.partial(_encoder_kernel, block_n=block_n, Wo=Wo, n_layers=L)
    out = pl.pallas_call(
        kernel,
        out_shape=jax.ShapeDtypeStruct((N, T, C), jnp.float32),
        grid=(nb,),
        in_specs=[
            pl.BlockSpec((block_n, T, Cs), lambda g: (g, 0, 0)),    # s2d tokens
            pl.BlockSpec((Lw, 1), lambda g: (0, 0)),                # mask_l
            pl.BlockSpec((Lw, 1), lambda g: (0, 0)),                # mask_r
            pl.BlockSpec((16 * Cin, C), lambda g: (0, 0)),          # stem W (folded)
            pl.BlockSpec((1, C), lambda g: (0, 0)),                 # stem shift
            pl.BlockSpec((Leff, 9 * C, C), lambda g: (0, 0, 0)),    # W1 (all layers)
            pl.BlockSpec((Leff, 1, C), lambda g: (0, 0, 0)),        # shift1
            pl.BlockSpec((Leff, 9 * C, C), lambda g: (0, 0, 0)),    # W2
            pl.BlockSpec((Leff, 1, C), lambda g: (0, 0, 0)),        # shift2
            pl.BlockSpec((Leff, 1), lambda g: (0, 0),
                         memory_space=pltpu.SMEM),                  # alphas
        ],
        out_specs=pl.BlockSpec((block_n, T, C), lambda g: (g, 0, 0)),
        scratch_shapes=[
            pltpu.VMEM((ROWS, Cs), jnp.bfloat16),   # zero-separated s2d input tokens
            pltpu.VMEM((ROWS, C), jnp.bfloat16),    # zero-separated layer input
            pltpu.VMEM((ROWS, C), jnp.bfloat16),    # zero-separated h1
        ],
        compiler_params=pltpu.CompilerParams(dimension_semantics=("parallel",)),
    )(xt, mask_l, mask_r, w0, sh0, w1, s1, w2, s2, alphas)

    # (N, Ho*Wo, C) token-major -> NCHW (the reshape is free; one small transpose).
    return jnp.transpose(out.reshape(N, Ho, Wo, C), (0, 3, 1, 2))


# ----------------------------------------------------------------------------
# Deterministic synthetic parameters and pure-JAX f32 reference
# ----------------------------------------------------------------------------
def init_params(key, i_dim, h_dim, nb_r_layers):
    keys = iter(jax.random.split(key, 8 + 12 * max(nb_r_layers, 1)))

    def nrm(shape, s=0.1):
        return s * jax.random.normal(next(keys), shape, jnp.float32)

    def bn(c):
        return dict(gamma=1.0 + nrm((c,)), beta=nrm((c,)),
                    mean=nrm((c,)), var=1.0 + jnp.abs(nrm((c,))))

    params = dict(
        conv0_w=nrm((3, 3, i_dim, h_dim)),   # HWIO (PyTorch OIHW permuted)
        conv0_b=nrm((h_dim,)),
        bn0=bn(h_dim),
        rezero=[],
    )
    for _ in range(nb_r_layers):
        params["rezero"].append(dict(
            w1=nrm((3, 3, h_dim, h_dim)), bn1=bn(h_dim),   # conv1 (bias=False)
            w2=nrm((3, 3, h_dim, h_dim)), bn2=bn(h_dim),   # conv2 (bias=False)
            alpha=nrm(()),  # PyTorch inits alpha=0; random keeps the branch exercised
        ))
    return params


def _ref_conv_bn(x, w, b, bn, stride):
    y = jax.lax.conv_general_dilated(x, w, (stride, stride), ((1, 1), (1, 1)),
                                     dimension_numbers=("NHWC", "HWIO", "NHWC"))
    if b is not None:
        y = y + b
    return (y - bn["mean"]) / jnp.sqrt(bn["var"] + _EPS) * bn["gamma"] + bn["beta"]


def encoder_reference(params, x_nchw):
    x = jnp.transpose(x_nchw, (0, 2, 3, 1)).astype(jnp.float32)
    h = _ref_conv_bn(x, params["conv0_w"], params["conv0_b"], params["bn0"], 2)
    for lyr in params["rezero"]:
        h1 = jax.nn.elu(_ref_conv_bn(h, lyr["w1"], None, lyr["bn1"], 1))
        h2 = jax.nn.elu(_ref_conv_bn(h1, lyr["w2"], None, lyr["bn2"], 1))
        h = h2 * lyr["alpha"] + h
    h = jax.nn.relu(h)
    return jnp.transpose(h, (0, 3, 1, 2))


if __name__ == "__main__":
    key = jax.random.PRNGKey(0)
    kx, kp = jax.random.split(key)

    # Shapes consistent with Encoder(i_dim=4, h_dim=32, nb_r_layers=2, r_dim=16, 'half')
    # (r_dim is unused by the ReZero stack).
    N, i_dim, S = 2, 4, 16
    h_dim, nb_r_layers = 32, 2

    x = jax.random.normal(kx, (N, i_dim, S, S), jnp.float32)  # NCHW, like PyTorch
    params = init_params(kp, i_dim, h_dim, nb_r_layers)

    out = jax.block_until_ready(jax.jit(encoder_forward)(params, x))
    ref = jax.block_until_ready(encoder_reference(params, x))

    assert out.shape == (N, h_dim, S // 2, S // 2), out.shape
    max_err = float(jnp.max(jnp.abs(out - ref)))
    # bf16 matmul operands with f32 accumulation -> relaxed tolerance vs. f32 ref.
    assert jnp.allclose(out, ref, atol=5e-2, rtol=5e-2), f"max_err={max_err}"
    print("KERNEL_OK")
</pallas_src>

<mosaic_0001>
module attributes {stable_mosaic.version = 11 : i64} {
  func.func @_encoder_kernel(%arg0: i32, %arg1: memref<2x64x16xbf16, #tpu.memory_space<vmem>>, %arg2: memref<137x1xbf16, #tpu.memory_space<vmem>>, %arg3: memref<137x1xbf16, #tpu.memory_space<vmem>>, %arg4: memref<64x32xbf16, #tpu.memory_space<vmem>>, %arg5: memref<1x32xf32, #tpu.memory_space<vmem>>, %arg6: memref<2x288x32xbf16, #tpu.memory_space<vmem>>, %arg7: memref<2x1x32xf32, #tpu.memory_space<vmem>>, %arg8: memref<2x288x32xbf16, #tpu.memory_space<vmem>>, %arg9: memref<2x1x32xf32, #tpu.memory_space<vmem>>, %arg10: memref<2x1xf32, #tpu.memory_space<smem>>, %arg11: memref<2x64x32xf32, #tpu.memory_space<vmem>>, %arg12: memref<155x16xbf16, #tpu.memory_space<vmem>>, %arg13: memref<155x32xbf16, #tpu.memory_space<vmem>>, %arg14: memref<155x32xbf16, #tpu.memory_space<vmem>>) attributes {dimension_semantics = [#tpu.dimension_semantics<parallel>], iteration_bounds = array<i64: 1>, scalar_prefetch = 0 : i64, scratch_operands = 3 : i64, tpu.core_type = #tpu.core_type<tc>, window_params = [{transform_indices = @transform_0, window_bounds = array<i64: 2, 64, 16>}, {pipeline_mode = #tpu.pipeline_mode<synchronous>, transform_indices = @transform_1, window_bounds = array<i64: 137, 1>}, {pipeline_mode = #tpu.pipeline_mode<synchronous>, transform_indices = @transform_2, window_bounds = array<i64: 137, 1>}, {pipeline_mode = #tpu.pipeline_mode<synchronous>, transform_indices = @transform_3, window_bounds = array<i64: 64, 32>}, {pipeline_mode = #tpu.pipeline_mode<synchronous>, transform_indices = @transform_4, window_bounds = array<i64: 1, 32>}, {pipeline_mode = #tpu.pipeline_mode<synchronous>, transform_indices = @transform_5, window_bounds = array<i64: 2, 288, 32>}, {pipeline_mode = #tpu.pipeline_mode<synchronous>, transform_indices = @transform_6, window_bounds = array<i64: 2, 1, 32>}, {pipeline_mode = #tpu.pipeline_mode<synchronous>, transform_indices = @transform_7, window_bounds = array<i64: 2, 288, 32>}, {pipeline_mode = #tpu.pipeline_mode<synchronous>, transform_indices = @transform_8, window_bounds = array<i64: 2, 1, 32>}, {transform_indices = @transform_9, window_bounds = array<i64: 2, 1>}, {transform_indices = @transform_10, window_bounds = array<i64: 2, 64, 32>}]} {
    %cst = arith.constant 0.000000e+00 : bf16
    %0 = vector.broadcast %cst : bf16 to vector<9x16xbf16>
    %c0 = arith.constant 0 : index
    %c0_0 = arith.constant 0 : index
    %1 = vector.load %arg12[%c0, %c0_0] : memref<155x16xbf16, #tpu.memory_space<vmem>>, vector<9x16xbf16>
    tpu.vector_store %arg12[%c0, %c0_0], %0 {strides = array<i32>} : memref<155x16xbf16, #tpu.memory_space<vmem>>, vector<9x16xbf16>,
    %cst_1 = arith.constant 0.000000e+00 : bf16
    %2 = vector.broadcast %cst_1 : bf16 to vector<9x32xbf16>
    %c0_2 = arith.constant 0 : index
    %c0_3 = arith.constant 0 : index
    %3 = vector.load %arg13[%c0_2, %c0_3] : memref<155x32xbf16, #tpu.memory_space<vmem>>, vector<9x32xbf16>
    tpu.vector_store %arg13[%c0_2, %c0_3], %2 {strides = array<i32>} : memref<155x32xbf16, #tpu.memory_space<vmem>>, vector<9x32xbf16>,
    %cst_4 = arith.constant 0.000000e+00 : bf16
    %4 = vector.broadcast %cst_4 : bf16 to vector<9x32xbf16>
    %c0_5 = arith.constant 0 : index
    %c0_6 = arith.constant 0 : index
    %5 = vector.load %arg14[%c0_5, %c0_6] : memref<155x32xbf16, #tpu.memory_space<vmem>>, vector<9x32xbf16>
    tpu.vector_store %arg14[%c0_5, %c0_6], %4 {strides = array<i32>} : memref<155x32xbf16, #tpu.memory_space<vmem>>, vector<9x32xbf16>,
    %cst_7 = arith.constant 0.000000e+00 : bf16
    %6 = vector.broadcast %cst_7 : bf16 to vector<9x16xbf16>
    %c73 = arith.constant 73 : index
    %c0_8 = arith.constant 0 : index
    %7 = vector.load %arg12[%c73, %c0_8] : memref<155x16xbf16, #tpu.memory_space<vmem>>, vector<9x16xbf16>
    tpu.vector_store %arg12[%c73, %c0_8], %6 {strides = array<i32>} : memref<155x16xbf16, #tpu.memory_space<vmem>>, vector<9x16xbf16>,
    %cst_9 = arith.constant 0.000000e+00 : bf16
    %8 = vector.broadcast %cst_9 : bf16 to vector<9x32xbf16>
    %c73_10 = arith.constant 73 : index
    %c0_11 = arith.constant 0 : index
    %9 = vector.load %arg13[%c73_10, %c0_11] : memref<155x32xbf16, #tpu.memory_space<vmem>>, vector<9x32xbf16>
    tpu.vector_store %arg13[%c73_10, %c0_11], %8 {strides = array<i32>} : memref<155x32xbf16, #tpu.memory_space<vmem>>, vector<9x32xbf16>,
    %cst_12 = arith.constant 0.000000e+00 : bf16
    %10 = vector.broadcast %cst_12 : bf16 to vector<9x32xbf16>
    %c73_13 = arith.constant 73 : index
    %c0_14 = arith.constant 0 : index
    %11 = vector.load %arg14[%c73_13, %c0_14] : memref<155x32xbf16, #tpu.memory_space<vmem>>, vector<9x32xbf16>
    tpu.vector_store %arg14[%c73_13, %c0_14], %10 {strides = array<i32>} : memref<155x32xbf16, #tpu.memory_space<vmem>>, vector<9x32xbf16>,
    %cst_15 = arith.constant 0.000000e+00 : bf16
    %12 = vector.broadcast %cst_15 : bf16 to vector<9x16xbf16>
    %c146 = arith.constant 146 : index
    %c0_16 = arith.constant 0 : index
    %13 = vector.load %arg12[%c146, %c0_16] : memref<155x16xbf16, #tpu.memory_space<vmem>>, vector<9x16xbf16>
    tpu.vector_store %arg12[%c146, %c0_16], %12 {strides = array<i32>} : memref<155x16xbf16, #tpu.memory_space<vmem>>, vector<9x16xbf16>,
    %cst_17 = arith.constant 0.000000e+00 : bf16
    %14 = vector.broadcast %cst_17 : bf16 to vector<9x32xbf16>
    %c146_18 = arith.constant 146 : index
    %c0_19 = arith.constant 0 : index
    %15 = vector.load %arg13[%c146_18, %c0_19] : memref<155x32xbf16, #tpu.memory_space<vmem>>, vector<9x32xbf16>
    tpu.vector_store %arg13[%c146_18, %c0_19], %14 {strides = array<i32>} : memref<155x32xbf16, #tpu.memory_space<vmem>>, vector<9x32xbf16>,
    %cst_20 = arith.constant 0.000000e+00 : bf16
    %16 = vector.broadcast %cst_20 : bf16 to vector<9x32xbf16>
    %c146_21 = arith.constant 146 : index
    %c0_22 = arith.constant 0 : index
    %17 = vector.load %arg14[%c146_21, %c0_22] : memref<155x32xbf16, #tpu.memory_space<vmem>>, vector<9x32xbf16>
    tpu.vector_store %arg14[%c146_21, %c0_22], %16 {strides = array<i32>} : memref<155x32xbf16, #tpu.memory_space<vmem>>, vector<9x32xbf16>,
    %c0_23 = arith.constant 0 : index
    %c0_24 = arith.constant 0 : index
    %18 = vector.load %arg2[%c0_23, %c0_24] : memref<137x1xbf16, #tpu.memory_space<vmem>>, vector<137x1xbf16>
    %c0_25 = arith.constant 0 : index
    %c0_26 = arith.constant 0 : index
    %19 = vector.load %arg3[%c0_25, %c0_26] : memref<137x1xbf16, #tpu.memory_space<vmem>>, vector<137x1xbf16>
    %c0_27 = arith.constant 0 : index
    %c0_28 = arith.constant 0 : index
    %c0_29 = arith.constant 0 : index
    %20 = vector.load %arg1[%c0_27, %c0_28, %c0_29] : memref<2x64x16xbf16, #tpu.memory_space<vmem>>, vector<1x64x16xbf16>
    %21 = vector.shape_cast %20 : vector<1x64x16xbf16> to vector<64x16xbf16>
    %c9 = arith.constant 9 : index
    %c0_30 = arith.constant 0 : index
    %22 = vector.load %arg12[%c9, %c0_30] : memref<155x16xbf16, #tpu.memory_space<vmem>>, vector<64x16xbf16>
    tpu.vector_store %arg12[%c9, %c0_30], %21 {strides = array<i32>} : memref<155x16xbf16, #tpu.memory_space<vmem>>, vector<64x16xbf16>,
    %c1 = arith.constant 1 : index
    %c0_31 = arith.constant 0 : index
    %c0_32 = arith.constant 0 : index
    %23 = vector.load %arg1[%c1, %c0_31, %c0_32] : memref<2x64x16xbf16, #tpu.memory_space<vmem>>, vector<1x64x16xbf16>
    %24 = vector.shape_cast %23 : vector<1x64x16xbf16> to vector<64x16xbf16>
    %c82 = arith.constant 82 : index
    %c0_33 = arith.constant 0 : index
    %25 = vector.load %arg12[%c82, %c0_33] : memref<155x16xbf16, #tpu.memory_space<vmem>>, vector<64x16xbf16>
    tpu.vector_store %arg12[%c82, %c0_33], %24 {strides = array<i32>} : memref<155x16xbf16, #tpu.memory_space<vmem>>, vector<64x16xbf16>,
    %c0_34 = arith.constant 0 : index
    %c0_35 = arith.constant 0 : index
    %26 = vector.load %arg4[%c0_34, %c0_35] : memref<64x32xbf16, #tpu.memory_space<vmem>>, vector<64x32xbf16>
    %c0_36 = arith.constant 0 : index
    %c0_37 = arith.constant 0 : index
    %27 = vector.load %arg5[%c0_36, %c0_37] : memref<1x32xf32, #tpu.memory_space<vmem>>, vector<1x32xf32>
    %c0_38 = arith.constant 0 : index
    %c0_39 = arith.constant 0 : index
    %28 = vector.load %arg12[%c0_38, %c0_39] : memref<155x16xbf16, #tpu.memory_space<vmem>>, vector<137x16xbf16>
    %29 = vector.broadcast %18 : vector<137x1xbf16> to vector<137x16xbf16>
    %30 = arith.mulf %28, %29 : vector<137x16xbf16>
    %c1_40 = arith.constant 1 : index
    %c0_41 = arith.constant 0 : index
    %31 = vector.load %arg12[%c1_40, %c0_41] : memref<155x16xbf16, #tpu.memory_space<vmem>>, vector<137x16xbf16>
    %32 = tpu.concatenate %30, %31 in 1 : vector<137x16xbf16>, vector<137x16xbf16> -> vector<137x32xbf16>
    %c8 = arith.constant 8 : index
    %c0_42 = arith.constant 0 : index
    %33 = vector.load %arg12[%c8, %c0_42] : memref<155x16xbf16, #tpu.memory_space<vmem>>, vector<137x16xbf16>
    %34 = vector.broadcast %18 : vector<137x1xbf16> to vector<137x16xbf16>
    %35 = arith.mulf %33, %34 : vector<137x16xbf16>
    %c9_43 = arith.constant 9 : index
    %c0_44 = arith.constant 0 : index
    %36 = vector.load %arg12[%c9_43, %c0_44] : memref<155x16xbf16, #tpu.memory_space<vmem>>, vector<137x16xbf16>
    %37 = tpu.concatenate %35, %36 in 1 : vector<137x16xbf16>, vector<137x16xbf16> -> vector<137x32xbf16>
    %38 = tpu.concatenate %32, %37 in 1 : vector<137x32xbf16>, vector<137x32xbf16> -> vector<137x64xbf16>
    %cst_45 = arith.constant dense<0.000000e+00> : vector<137x32xf32>
    %39 = tpu.matmul %38, %26, %cst_45 {dimension_numbers = #tpu.dot_dimension_numbers<[1], [0], [0], [1], [0, 0, 1, 1], [], []>} : vector<137x64xbf16>, vector<64x32xbf16>, vector<137x32xf32> -> vector<137x32xf32>
    %40 = vector.broadcast %27 : vector<1x32xf32> to vector<137x32xf32>
    %41 = arith.addf %39, %40 : vector<137x32xf32>
    %42 = vector.extract_strided_slice %41 {offsets = [0, 0], sizes = [64, 32], strides = [1, 1]} : vector<137x32xf32> to vector<64x32xf32>
    %43 = arith.truncf %42 : vector<64x32xf32> to vector<64x32xbf16>
    %c9_46 = arith.constant 9 : index
    %c0_47 = arith.constant 0 : index
    %44 = vector.load %arg13[%c9_46, %c0_47] : memref<155x32xbf16, #tpu.memory_space<vmem>>, vector<64x32xbf16>
    tpu.vector_store %arg13[%c9_46, %c0_47], %43 {strides = array<i32>} : memref<155x32xbf16, #tpu.memory_space<vmem>>, vector<64x32xbf16>,
    %45 = vector.extract_strided_slice %41 {offsets = [73, 0], sizes = [64, 32], strides = [1, 1]} : vector<137x32xf32> to vector<64x32xf32>
    %46 = arith.truncf %45 : vector<64x32xf32> to vector<64x32xbf16>
    %c82_48 = arith.constant 82 : index
    %c0_49 = arith.constant 0 : index
    %47 = vector.load %arg13[%c82_48, %c0_49] : memref<155x32xbf16, #tpu.memory_space<vmem>>, vector<64x32xbf16>
    tpu.vector_store %arg13[%c82_48, %c0_49], %46 {strides = array<i32>} : memref<155x32xbf16, #tpu.memory_space<vmem>>, vector<64x32xbf16>,
    %c0_50 = arith.constant 0 : index
    %c0_51 = arith.constant 0 : index
    %c0_52 = arith.constant 0 : index
    %48 = vector.load %arg6[%c0_50, %c0_51, %c0_52] : memref<2x288x32xbf16, #tpu.memory_space<vmem>>, vector<1x288x32xbf16>
    %49 = vector.shape_cast %48 : vector<1x288x32xbf16> to vector<288x32xbf16>
    %c0_53 = arith.constant 0 : index
    %c0_54 = arith.constant 0 : index
    %c0_55 = arith.constant 0 : index
    %50 = vector.load %arg7[%c0_53, %c0_54, %c0_55] : memref<2x1x32xf32, #tpu.memory_space<vmem>>, vector<1x1x32xf32>
    %51 = vector.shape_cast %50 : vector<1x1x32xf32> to vector<1x32xf32>
    %c0_56 = arith.constant 0 : index
    %c0_57 = arith.constant 0 : index
    %52 = vector.load %arg13[%c0_56, %c0_57] : memref<155x32xbf16, #tpu.memory_space<vmem>>, vector<137x32xbf16>
    %53 = vector.broadcast %18 : vector<137x1xbf16> to vector<137x32xbf16>
    %54 = arith.mulf %52, %53 : vector<137x32xbf16>
    %c1_58 = arith.constant 1 : index
    %c0_59 = arith.constant 0 : index
    %55 = vector.load %arg13[%c1_58, %c0_59] : memref<155x32xbf16, #tpu.memory_space<vmem>>, vector<137x32xbf16>
    %c2 = arith.constant 2 : index
    %c0_60 = arith.constant 0 : index
    %56 = vector.load %arg13[%c2, %c0_60] : memref<155x32xbf16, #tpu.memory_space<vmem>>, vector<137x32xbf16>
    %57 = vector.broadcast %19 : vector<137x1xbf16> to vector<137x32xbf16>
    %58 = arith.mulf %56, %57 : vector<137x32xbf16>
    %59 = tpu.concatenate %54, %55, %58 in 1 : vector<137x32xbf16>, vector<137x32xbf16>, vector<137x32xbf16> -> vector<137x96xbf16>
    %c8_61 = arith.constant 8 : index
    %c0_62 = arith.constant 0 : index
    %60 = vector.load %arg13[%c8_61, %c0_62] : memref<155x32xbf16, #tpu.memory_space<vmem>>, vector<137x32xbf16>
    %61 = vector.broadcast %18 : vector<137x1xbf16> to vector<137x32xbf16>
    %62 = arith.mulf %60, %61 : vector<137x32xbf16>
    %c9_63 = arith.constant 9 : index
    %c0_64 = arith.constant 0 : index
    %63 = vector.load %arg13[%c9_63, %c0_64] : memref<155x32xbf16, #tpu.memory_space<vmem>>, vector<137x32xbf16>
    %c10 = arith.constant 10 : index
    %c0_65 = arith.constant 0 : index
    %64 = vector.load %arg13[%c10, %c0_65] : memref<155x32xbf16, #tpu.memory_space<vmem>>, vector<137x32xbf16>
    %65 = vector.broadcast %19 : vector<137x1xbf16> to vector<137x32xbf16>
    %66 = arith.mulf %64, %65 : vector<137x32xbf16>
    %67 = tpu.concatenate %62, %63, %66 in 1 : vector<137x32xbf16>, vector<137x32xbf16>, vector<137x32xbf16> -> vector<137x96xbf16>
    %c16 = arith.constant 16 : index
    %c0_66 = arith.constant 0 : index
    %68 = vector.load %arg13[%c16, %c0_66] : memref<155x32xbf16, #tpu.memory_space<vmem>>, vector<137x32xbf16>
    %69 = vector.broadcast %18 : vector<137x1xbf16> to vector<137x32xbf16>
    %70 = arith.mulf %68, %69 : vector<137x32xbf16>
    %c17 = arith.constant 17 : index
    %c0_67 = arith.constant 0 : index
    %71 = vector.load %arg13[%c17, %c0_67] : memref<155x32xbf16, #tpu.memory_space<vmem>>, vector<137x32xbf16>
    %c18 = arith.constant 18 : index
    %c0_68 = arith.constant 0 : index
    %72 = vector.load %arg13[%c18, %c0_68] : memref<155x32xbf16, #tpu.memory_space<vmem>>, vector<137x32xbf16>
    %73 = vector.broadcast %19 : vector<137x1xbf16> to vector<137x32xbf16>
    %74 = arith.mulf %72, %73 : vector<137x32xbf16>
    %75 = tpu.concatenate %70, %71, %74 in 1 : vector<137x32xbf16>, vector<137x32xbf16>, vector<137x32xbf16> -> vector<137x96xbf16>
    %76 = tpu.concatenate %59, %67, %75 in 1 : vector<137x96xbf16>, vector<137x96xbf16>, vector<137x96xbf16> -> vector<137x288xbf16>
    %cst_69 = arith.constant dense<0.000000e+00> : vector<137x32xf32>
    %77 = tpu.matmul %76, %49, %cst_69 {dimension_numbers = #tpu.dot_dimension_numbers<[1], [0], [0], [1], [0, 0, 1, 1], [], []>} : vector<137x288xbf16>, vector<288x32xbf16>, vector<137x32xf32> -> vector<137x32xf32>
    %78 = vector.broadcast %51 : vector<1x32xf32> to vector<137x32xf32>
    %79 = arith.addf %77, %78 : vector<137x32xf32>
    %cst_70 = arith.constant 0.000000e+00 : f32
    %80 = vector.broadcast %cst_70 : f32 to vector<137x32xf32>
    %81 = arith.cmpf ogt, %79, %80 : vector<137x32xf32>
    %cst_71 = arith.constant 0.000000e+00 : f32
    %82 = vector.broadcast %cst_71 : f32 to vector<137x32xf32>
    %83 = arith.minimumf %79, %82 : vector<137x32xf32>
    %84 = math.exp %83 : vector<137x32xf32>
    %cst_72 = arith.constant 1.000000e+00 : f32
    %85 = vector.broadcast %cst_72 : f32 to vector<137x32xf32>
    %86 = arith.subf %84, %85 : vector<137x32xf32>
    %87 = arith.select %81, %79, %86 : vector<137x32xi1>, vector<137x32xf32>
    %88 = vector.extract_strided_slice %87 {offsets = [0, 0], sizes = [64, 32], strides = [1, 1]} : vector<137x32xf32> to vector<64x32xf32>
    %89 = arith.truncf %88 : vector<64x32xf32> to vector<64x32xbf16>
    %c9_73 = arith.constant 9 : index
    %c0_74 = arith.constant 0 : index
    %90 = vector.load %arg14[%c9_73, %c0_74] : memref<155x32xbf16, #tpu.memory_space<vmem>>, vector<64x32xbf16>
    tpu.vector_store %arg14[%c9_73, %c0_74], %89 {strides = array<i32>} : memref<155x32xbf16, #tpu.memory_space<vmem>>, vector<64x32xbf16>,
    %91 = vector.extract_strided_slice %87 {offsets = [73, 0], sizes = [64, 32], strides = [1, 1]} : vector<137x32xf32> to vector<64x32xf32>
    %92 = arith.truncf %91 : vector<64x32xf32> to vector<64x32xbf16>
    %c82_75 = arith.constant 82 : index
    %c0_76 = arith.constant 0 : index
    %93 = vector.load %arg14[%c82_75, %c0_76] : memref<155x32xbf16, #tpu.memory_space<vmem>>, vector<64x32xbf16>
    tpu.vector_store %arg14[%c82_75, %c0_76], %92 {strides = array<i32>} : memref<155x32xbf16, #tpu.memory_space<vmem>>, vector<64x32xbf16>,
    %c0_77 = arith.constant 0 : index
    %c0_78 = arith.constant 0 : index
    %c0_79 = arith.constant 0 : index
    %94 = vector.load %arg8[%c0_77, %c0_78, %c0_79] : memref<2x288x32xbf16, #tpu.memory_space<vmem>>, vector<1x288x32xbf16>
    %95 = vector.shape_cast %94 : vector<1x288x32xbf16> to vector<288x32xbf16>
    %c0_80 = arith.constant 0 : index
    %c0_81 = arith.constant 0 : index
    %c0_82 = arith.constant 0 : index
    %96 = vector.load %arg9[%c0_80, %c0_81, %c0_82] : memref<2x1x32xf32, #tpu.memory_space<vmem>>, vector<1x1x32xf32>
    %97 = vector.shape_cast %96 : vector<1x1x32xf32> to vector<1x32xf32>
    %c0_83 = arith.constant 0 : index
    %c0_84 = arith.constant 0 : index
    %98 = vector.load %arg14[%c0_83, %c0_84] : memref<155x32xbf16, #tpu.memory_space<vmem>>, vector<137x32xbf16>
    %99 = vector.broadcast %18 : vector<137x1xbf16> to vector<137x32xbf16>
    %100 = arith.mulf %98, %99 : vector<137x32xbf16>
    %c1_85 = arith.constant 1 : index
    %c0_86 = arith.constant 0 : index
    %101 = vector.load %arg14[%c1_85, %c0_86] : memref<155x32xbf16, #tpu.memory_space<vmem>>, vector<137x32xbf16>
    %c2_87 = arith.constant 2 : index
    %c0_88 = arith.constant 0 : index
    %102 = vector.load %arg14[%c2_87, %c0_88] : memref<155x32xbf16, #tpu.memory_space<vmem>>, vector<137x32xbf16>
    %103 = vector.broadcast %19 : vector<137x1xbf16> to vector<137x32xbf16>
    %104 = arith.mulf %102, %103 : vector<137x32xbf16>
    %105 = tpu.concatenate %100, %101, %104 in 1 : vector<137x32xbf16>, vector<137x32xbf16>, vector<137x32xbf16> -> vector<137x96xbf16>
    %c8_89 = arith.constant 8 : index
    %c0_90 = arith.constant 0 : index
    %106 = vector.load %arg14[%c8_89, %c0_90] : memref<155x32xbf16, #tpu.memory_space<vmem>>, vector<137x32xbf16>
    %107 = vector.broadcast %18 : vector<137x1xbf16> to vector<137x32xbf16>
    %108 = arith.mulf %106, %107 : vector<137x32xbf16>
    %c9_91 = arith.constant 9 : index
    %c0_92 = arith.constant 0 : index
    %109 = vector.load %arg14[%c9_91, %c0_92] : memref<155x32xbf16, #tpu.memory_space<vmem>>, vector<137x32xbf16>
    %c10_93 = arith.constant 10 : index
    %c0_94 = arith.constant 0 : index
    %110 = vector.load %arg14[%c10_93, %c0_94] : memref<155x32xbf16, #tpu.memory_space<vmem>>, vector<137x32xbf16>
    %111 = vector.broadcast %19 : vector<137x1xbf16> to vector<137x32xbf16>
    %112 = arith.mulf %110, %111 : vector<137x32xbf16>
    %113 = tpu.concatenate %108, %109, %112 in 1 : vector<137x32xbf16>, vector<137x32xbf16>, vector<137x32xbf16> -> vector<137x96xbf16>
    %c16_95 = arith.constant 16 : index
    %c0_96 = arith.constant 0 : index
    %114 = vector.load %arg14[%c16_95, %c0_96] : memref<155x32xbf16, #tpu.memory_space<vmem>>, vector<137x32xbf16>
    %115 = vector.broadcast %18 : vector<137x1xbf16> to vector<137x32xbf16>
    %116 = arith.mulf %114, %115 : vector<137x32xbf16>
    %c17_97 = arith.constant 17 : index
    %c0_98 = arith.constant 0 : index
    %117 = vector.load %arg14[%c17_97, %c0_98] : memref<155x32xbf16, #tpu.memory_space<vmem>>, vector<137x32xbf16>
    %c18_99 = arith.constant 18 : index
    %c0_100 = arith.constant 0 : index
    %118 = vector.load %arg14[%c18_99, %c0_100] : memref<155x32xbf16, #tpu.memory_space<vmem>>, vector<137x32xbf16>
    %119 = vector.broadcast %19 : vector<137x1xbf16> to vector<137x32xbf16>
    %120 = arith.mulf %118, %119 : vector<137x32xbf16>
    %121 = tpu.concatenate %116, %117, %120 in 1 : vector<137x32xbf16>, vector<137x32xbf16>, vector<137x32xbf16> -> vector<137x96xbf16>
    %122 = tpu.concatenate %105, %113, %121 in 1 : vector<137x96xbf16>, vector<137x96xbf16>, vector<137x96xbf16> -> vector<137x288xbf16>
    %cst_101 = arith.constant dense<0.000000e+00> : vector<137x32xf32>
    %123 = tpu.matmul %122, %95, %cst_101 {dimension_numbers = #tpu.dot_dimension_numbers<[1], [0], [0], [1], [0, 0, 1, 1], [], []>} : vector<137x288xbf16>, vector<288x32xbf16>, vector<137x32xf32> -> vector<137x32xf32>
    %124 = vector.broadcast %97 : vector<1x32xf32> to vector<137x32xf32>
    %125 = arith.addf %123, %124 : vector<137x32xf32>
    %cst_102 = arith.constant 0.000000e+00 : f32
    %126 = vector.broadcast %cst_102 : f32 to vector<137x32xf32>
    %127 = arith.cmpf ogt, %125, %126 : vector<137x32xf32>
    %cst_103 = arith.constant 0.000000e+00 : f32
    %128 = vector.broadcast %cst_103 : f32 to vector<137x32xf32>
    %129 = arith.minimumf %125, %128 : vector<137x32xf32>
    %130 = math.exp %129 : vector<137x32xf32>
    %cst_104 = arith.constant 1.000000e+00 : f32
    %131 = vector.broadcast %cst_104 : f32 to vector<137x32xf32>
    %132 = arith.subf %130, %131 : vector<137x32xf32>
    %133 = arith.select %127, %125, %132 : vector<137x32xi1>, vector<137x32xf32>
    %c0_105 = arith.constant 0 : index
    %c0_106 = arith.constant 0 : index
    %134 = memref.load %arg10[%c0_105, %c0_106] : memref<2x1xf32, #tpu.memory_space<smem>>
    %135 = vector.broadcast %134 : f32 to vector<137x32xf32>
    %136 = arith.mulf %133, %135 : vector<137x32xf32>
    %137 = arith.addf %136, %41 : vector<137x32xf32>
    %138 = vector.extract_strided_slice %137 {offsets = [0, 0], sizes = [64, 32], strides = [1, 1]} : vector<137x32xf32> to vector<64x32xf32>
    %139 = arith.truncf %138 : vector<64x32xf32> to vector<64x32xbf16>
    %c9_107 = arith.constant 9 : index
    %c0_108 = arith.constant 0 : index
    %140 = vector.load %arg13[%c9_107, %c0_108] : memref<155x32xbf16, #tpu.memory_space<vmem>>, vector<64x32xbf16>
    tpu.vector_store %arg13[%c9_107, %c0_108], %139 {strides = array<i32>} : memref<155x32xbf16, #tpu.memory_space<vmem>>, vector<64x32xbf16>,
    %141 = vector.extract_strided_slice %137 {offsets = [73, 0], sizes = [64, 32], strides = [1, 1]} : vector<137x32xf32> to vector<64x32xf32>
    %142 = arith.truncf %141 : vector<64x32xf32> to vector<64x32xbf16>
    %c82_109 = arith.constant 82 : index
    %c0_110 = arith.constant 0 : index
    %143 = vector.load %arg13[%c82_109, %c0_110] : memref<155x32xbf16, #tpu.memory_space<vmem>>, vector<64x32xbf16>
    tpu.vector_store %arg13[%c82_109, %c0_110], %142 {strides = array<i32>} : memref<155x32xbf16, #tpu.memory_space<vmem>>, vector<64x32xbf16>,
    %c1_111 = arith.constant 1 : index
    %c0_112 = arith.constant 0 : index
    %c0_113 = arith.constant 0 : index
    %144 = vector.load %arg6[%c1_111, %c0_112, %c0_113] : memref<2x288x32xbf16, #tpu.memory_space<vmem>>, vector<1x288x32xbf16>
    %145 = vector.shape_cast %144 : vector<1x288x32xbf16> to vector<288x32xbf16>
    %c1_114 = arith.constant 1 : index
    %c0_115 = arith.constant 0 : index
    %c0_116 = arith.constant 0 : index
    %146 = vector.load %arg7[%c1_114, %c0_115, %c0_116] : memref<2x1x32xf32, #tpu.memory_space<vmem>>, vector<1x1x32xf32>
    %147 = vector.shape_cast %146 : vector<1x1x32xf32> to vector<1x32xf32>
    %c0_117 = arith.constant 0 : index
    %c0_118 = arith.constant 0 : index
    %148 = vector.load %arg13[%c0_117, %c0_118] : memref<155x32xbf16, #tpu.memory_space<vmem>>, vector<137x32xbf16>
    %149 = vector.broadcast %18 : vector<137x1xbf16> to vector<137x32xbf16>
    %150 = arith.mulf %148, %149 : vector<137x32xbf16>
    %c1_119 = arith.constant 1 : index
    %c0_120 = arith.constant 0 : index
    %151 = vector.load %arg13[%c1_119, %c0_120] : memref<155x32xbf16, #tpu.memory_space<vmem>>, vector<137x32xbf16>
    %c2_121 = arith.constant 2 : index
    %c0_122 = arith.constant 0 : index
    %152 = vector.load %arg13[%c2_121, %c0_122] : memref<155x32xbf16, #tpu.memory_space<vmem>>, vector<137x32xbf16>
    %153 = vector.broadcast %19 : vector<137x1xbf16> to vector<137x32xbf16>
    %154 = arith.mulf %152, %153 : vector<137x32xbf16>
    %155 = tpu.concatenate %150, %151, %154 in 1 : vector<137x32xbf16>, vector<137x32xbf16>, vector<137x32xbf16> -> vector<137x96xbf16>
    %c8_123 = arith.constant 8 : index
    %c0_124 = arith.constant 0 : index
    %156 = vector.load %arg13[%c8_123, %c0_124] : memref<155x32xbf16, #tpu.memory_space<vmem>>, vector<137x32xbf16>
    %157 = vector.broadcast %18 : vector<137x1xbf16> to vector<137x32xbf16>
    %158 = arith.mulf %156, %157 : vector<137x32xbf16>
    %c9_125 = arith.constant 9 : index
    %c0_126 = arith.constant 0 : index
    %159 = vector.load %arg13[%c9_125, %c0_126] : memref<155x32xbf16, #tpu.memory_space<vmem>>, vector<137x32xbf16>
    %c10_127 = arith.constant 10 : index
    %c0_128 = arith.constant 0 : index
    %160 = vector.load %arg13[%c10_127, %c0_128] : memref<155x32xbf16, #tpu.memory_space<vmem>>, vector<137x32xbf16>
    %161 = vector.broadcast %19 : vector<137x1xbf16> to vector<137x32xbf16>
    %162 = arith.mulf %160, %161 : vector<137x32xbf16>
    %163 = tpu.concatenate %158, %159, %162 in 1 : vector<137x32xbf16>, vector<137x32xbf16>, vector<137x32xbf16> -> vector<137x96xbf16>
    %c16_129 = arith.constant 16 : index
    %c0_130 = arith.constant 0 : index
    %164 = vector.load %arg13[%c16_129, %c0_130] : memref<155x32xbf16, #tpu.memory_space<vmem>>, vector<137x32xbf16>
    %165 = vector.broadcast %18 : vector<137x1xbf16> to vector<137x32xbf16>
    %166 = arith.mulf %164, %165 : vector<137x32xbf16>
    %c17_131 = arith.constant 17 : index
    %c0_132 = arith.constant 0 : index
    %167 = vector.load %arg13[%c17_131, %c0_132] : memref<155x32xbf16, #tpu.memory_space<vmem>>, vector<137x32xbf16>
    %c18_133 = arith.constant 18 : index
    %c0_134 = arith.constant 0 : index
    %168 = vector.load %arg13[%c18_133, %c0_134] : memref<155x32xbf16, #tpu.memory_space<vmem>>, vector<137x32xbf16>
    %169 = vector.broadcast %19 : vector<137x1xbf16> to vector<137x32xbf16>
    %170 = arith.mulf %168, %169 : vector<137x32xbf16>
    %171 = tpu.concatenate %166, %167, %170 in 1 : vector<137x32xbf16>, vector<137x32xbf16>, vector<137x32xbf16> -> vector<137x96xbf16>
    %172 = tpu.concatenate %155, %163, %171 in 1 : vector<137x96xbf16>, vector<137x96xbf16>, vector<137x96xbf16> -> vector<137x288xbf16>
    %cst_135 = arith.constant dense<0.000000e+00> : vector<137x32xf32>
    %173 = tpu.matmul %172, %145, %cst_135 {dimension_numbers = #tpu.dot_dimension_numbers<[1], [0], [0], [1], [0, 0, 1, 1], [], []>} : vector<137x288xbf16>, vector<288x32xbf16>, vector<137x32xf32> -> vector<137x32xf32>
    %174 = vector.broadcast %147 : vector<1x32xf32> to vector<137x32xf32>
    %175 = arith.addf %173, %174 : vector<137x32xf32>
    %cst_136 = arith.constant 0.000000e+00 : f32
    %176 = vector.broadcast %cst_136 : f32 to vector<137x32xf32>
    %177 = arith.cmpf ogt, %175, %176 : vector<137x32xf32>
    %cst_137 = arith.constant 0.000000e+00 : f32
    %178 = vector.broadcast %cst_137 : f32 to vector<137x32xf32>
    %179 = arith.minimumf %175, %178 : vector<137x32xf32>
    %180 = math.exp %179 : vector<137x32xf32>
    %cst_138 = arith.constant 1.000000e+00 : f32
    %181 = vector.broadcast %cst_138 : f32 to vector<137x32xf32>
    %182 = arith.subf %180, %181 : vector<137x32xf32>
    %183 = arith.select %177, %175, %182 : vector<137x32xi1>, vector<137x32xf32>
    %184 = vector.extract_strided_slice %183 {offsets = [0, 0], sizes = [64, 32], strides = [1, 1]} : vector<137x32xf32> to vector<64x32xf32>
    %185 = arith.truncf %184 : vector<64x32xf32> to vector<64x32xbf16>
    %c9_139 = arith.constant 9 : index
    %c0_140 = arith.constant 0 : index
    %186 = vector.load %arg14[%c9_139, %c0_140] : memref<155x32xbf16, #tpu.memory_space<vmem>>, vector<64x32xbf16>
    tpu.vector_store %arg14[%c9_139, %c0_140], %185 {strides = array<i32>} : memref<155x32xbf16, #tpu.memory_space<vmem>>, vector<64x32xbf16>,
    %187 = vector.extract_strided_slice %183 {offsets = [73, 0], sizes = [64, 32], strides = [1, 1]} : vector<137x32xf32> to vector<64x32xf32>
    %188 = arith.truncf %187 : vector<64x32xf32> to vector<64x32xbf16>
    %c82_141 = arith.constant 82 : index
    %c0_142 = arith.constant 0 : index
    %189 = vector.load %arg14[%c82_141, %c0_142] : memref<155x32xbf16, #tpu.memory_space<vmem>>, vector<64x32xbf16>
    tpu.vector_store %arg14[%c82_141, %c0_142], %188 {strides = array<i32>} : memref<155x32xbf16, #tpu.memory_space<vmem>>, vector<64x32xbf16>,
    %c1_143 = arith.constant 1 : index
    %c0_144 = arith.constant 0 : index
    %c0_145 = arith.constant 0 : index
    %190 = vector.load %arg8[%c1_143, %c0_144, %c0_145] : memref<2x288x32xbf16, #tpu.memory_space<vmem>>, vector<1x288x32xbf16>
    %191 = vector.shape_cast %190 : vector<1x288x32xbf16> to vector<288x32xbf16>
    %c1_146 = arith.constant 1 : index
    %c0_147 = arith.constant 0 : index
    %c0_148 = arith.constant 0 : index
    %192 = vector.load %arg9[%c1_146, %c0_147, %c0_148] : memref<2x1x32xf32, #tpu.memory_space<vmem>>, vector<1x1x32xf32>
    %193 = vector.shape_cast %192 : vector<1x1x32xf32> to vector<1x32xf32>
    %c0_149 = arith.constant 0 : index
    %c0_150 = arith.constant 0 : index
    %194 = vector.load %arg14[%c0_149, %c0_150] : memref<155x32xbf16, #tpu.memory_space<vmem>>, vector<137x32xbf16>
    %195 = vector.broadcast %18 : vector<137x1xbf16> to vector<137x32xbf16>
    %196 = arith.mulf %194, %195 : vector<137x32xbf16>
    %c1_151 = arith.constant 1 : index
    %c0_152 = arith.constant 0 : index
    %197 = vector.load %arg14[%c1_151, %c0_152] : memref<155x32xbf16, #tpu.memory_space<vmem>>, vector<137x32xbf16>
    %c2_153 = arith.constant 2 : index
    %c0_154 = arith.constant 0 : index
    %198 = vector.load %arg14[%c2_153, %c0_154] : memref<155x32xbf16, #tpu.memory_space<vmem>>, vector<137x32xbf16>
    %199 = vector.broadcast %19 : vector<137x1xbf16> to vector<137x32xbf16>
    %200 = arith.mulf %198, %199 : vector<137x32xbf16>
    %201 = tpu.concatenate %196, %197, %200 in 1 : vector<137x32xbf16>, vector<137x32xbf16>, vector<137x32xbf16> -> vector<137x96xbf16>
    %c8_155 = arith.constant 8 : index
    %c0_156 = arith.constant 0 : index
    %202 = vector.load %arg14[%c8_155, %c0_156] : memref<155x32xbf16, #tpu.memory_space<vmem>>, vector<137x32xbf16>
    %203 = vector.broadcast %18 : vector<137x1xbf16> to vector<137x32xbf16>
    %204 = arith.mulf %202, %203 : vector<137x32xbf16>
    %c9_157 = arith.constant 9 : index
    %c0_158 = arith.constant 0 : index
    %205 = vector.load %arg14[%c9_157, %c0_158] : memref<155x32xbf16, #tpu.memory_space<vmem>>, vector<137x32xbf16>
    %c10_159 = arith.constant 10 : index
    %c0_160 = arith.constant 0 : index
    %206 = vector.load %arg14[%c10_159, %c0_160] : memref<155x32xbf16, #tpu.memory_space<vmem>>, vector<137x32xbf16>
    %207 = vector.broadcast %19 : vector<137x1xbf16> to vector<137x32xbf16>
    %208 = arith.mulf %206, %207 : vector<137x32xbf16>
    %209 = tpu.concatenate %204, %205, %208 in 1 : vector<137x32xbf16>, vector<137x32xbf16>, vector<137x32xbf16> -> vector<137x96xbf16>
    %c16_161 = arith.constant 16 : index
    %c0_162 = arith.constant 0 : index
    %210 = vector.load %arg14[%c16_161, %c0_162] : memref<155x32xbf16, #tpu.memory_space<vmem>>, vector<137x32xbf16>
    %211 = vector.broadcast %18 : vector<137x1xbf16> to vector<137x32xbf16>
    %212 = arith.mulf %210, %211 : vector<137x32xbf16>
    %c17_163 = arith.constant 17 : index
    %c0_164 = arith.constant 0 : index
    %213 = vector.load %arg14[%c17_163, %c0_164] : memref<155x32xbf16, #tpu.memory_space<vmem>>, vector<137x32xbf16>
    %c18_165 = arith.constant 18 : index
    %c0_166 = arith.constant 0 : index
    %214 = vector.load %arg14[%c18_165, %c0_166] : memref<155x32xbf16, #tpu.memory_space<vmem>>, vector<137x32xbf16>
    %215 = vector.broadcast %19 : vector<137x1xbf16> to vector<137x32xbf16>
    %216 = arith.mulf %214, %215 : vector<137x32xbf16>
    %217 = tpu.concatenate %212, %213, %216 in 1 : vector<137x32xbf16>, vector<137x32xbf16>, vector<137x32xbf16> -> vector<137x96xbf16>
    %218 = tpu.concatenate %201, %209, %217 in 1 : vector<137x96xbf16>, vector<137x96xbf16>, vector<137x96xbf16> -> vector<137x288xbf16>
    %cst_167 = arith.constant dense<0.000000e+00> : vector<137x32xf32>
    %219 = tpu.matmul %218, %191, %cst_167 {dimension_numbers = #tpu.dot_dimension_numbers<[1], [0], [0], [1], [0, 0, 1, 1], [], []>} : vector<137x288xbf16>, vector<288x32xbf16>, vector<137x32xf32> -> vector<137x32xf32>
    %220 = vector.broadcast %193 : vector<1x32xf32> to vector<137x32xf32>
    %221 = arith.addf %219, %220 : vector<137x32xf32>
    %cst_168 = arith.constant 0.000000e+00 : f32
    %222 = vector.broadcast %cst_168 : f32 to vector<137x32xf32>
    %223 = arith.cmpf ogt, %221, %222 : vector<137x32xf32>
    %cst_169 = arith.constant 0.000000e+00 : f32
    %224 = vector.broadcast %cst_169 : f32 to vector<137x32xf32>
    %225 = arith.minimumf %221, %224 : vector<137x32xf32>
    %226 = math.exp %225 : vector<137x32xf32>
    %cst_170 = arith.constant 1.000000e+00 : f32
    %227 = vector.broadcast %cst_170 : f32 to vector<137x32xf32>
    %228 = arith.subf %226, %227 : vector<137x32xf32>
    %229 = arith.select %223, %221, %228 : vector<137x32xi1>, vector<137x32xf32>
    %c1_171 = arith.constant 1 : index
    %c0_172 = arith.constant 0 : index
    %230 = memref.load %arg10[%c1_171, %c0_172] : memref<2x1xf32, #tpu.memory_space<smem>>
    %231 = vector.broadcast %230 : f32 to vector<137x32xf32>
    %232 = arith.mulf %229, %231 : vector<137x32xf32>
    %233 = arith.addf %232, %137 : vector<137x32xf32>
    %cst_173 = arith.constant 0.000000e+00 : f32
    %234 = vector.broadcast %cst_173 : f32 to vector<137x32xf32>
    %235 = arith.maximumf %233, %234 : vector<137x32xf32>
    %236 = vector.extract_strided_slice %235 {offsets = [0, 0], sizes = [64, 32], strides = [1, 1]} : vector<137x32xf32> to vector<64x32xf32>
    %c0_174 = arith.constant 0 : index
    %c0_175 = arith.constant 0 : index
    %c0_176 = arith.constant 0 : index
    %237 = vector.load %arg11[%c0_174, %c0_175, %c0_176] : memref<2x64x32xf32, #tpu.memory_space<vmem>>, vector<1x64x32xf32>
    %238 = vector.shape_cast %237 : vector<1x64x32xf32> to vector<64x32xf32>
    %239 = vector.shape_cast %236 : vector<64x32xf32> to vector<1x64x32xf32>
    tpu.vector_store %arg11[%c0_174, %c0_175, %c0_176], %239 {strides = array<i32>} : memref<2x64x32xf32, #tpu.memory_space<vmem>>, vector<1x64x32xf32>,
    %240 = vector.extract_strided_slice %235 {offsets = [73, 0], sizes = [64, 32], strides = [1, 1]} : vector<137x32xf32> to vector<64x32xf32>
    %c1_177 = arith.constant 1 : index
    %c0_178 = arith.constant 0 : index
    %c0_179 = arith.constant 0 : index
    %241 = vector.load %arg11[%c1_177, %c0_178, %c0_179] : memref<2x64x32xf32, #tpu.memory_space<vmem>>, vector<1x64x32xf32>
    %242 = vector.shape_cast %241 : vector<1x64x32xf32> to vector<64x32xf32>
    %243 = vector.shape_cast %240 : vector<64x32xf32> to vector<1x64x32xf32>
    tpu.vector_store %arg11[%c1_177, %c0_178, %c0_179], %243 {strides = array<i32>} : memref<2x64x32xf32, #tpu.memory_space<vmem>>, vector<1x64x32xf32>,
    return
  }
  func.func @transform_0(%arg0: i32) -> (i32, i32, i32) {
    %c0_i32 = arith.constant 0 : i32
    %c0_i32_0 = arith.constant 0 : i32
    %c0_i32_1 = arith.constant 0 : i32
    return %arg0, %c0_i32, %c0_i32_0 : i32, i32, i32
  }
  func.func @transform_1(%arg0: i32) -> (i32, i32) {
    %c0_i32 = arith.constant 0 : i32
    %c0_i32_0 = arith.constant 0 : i32
    %c0_i32_1 = arith.constant 0 : i32
    return %c0_i32, %c0_i32_0 : i32, i32
  }
  func.func @transform_2(%arg0: i32) -> (i32, i32) {
    %c0_i32 = arith.constant 0 : i32
    %c0_i32_0 = arith.constant 0 : i32
    %c0_i32_1 = arith.constant 0 : i32
    return %c0_i32, %c0_i32_0 : i32, i32
  }
  func.func @transform_3(%arg0: i32) -> (i32, i32) {
    %c0_i32 = arith.constant 0 : i32
    %c0_i32_0 = arith.constant 0 : i32
    %c0_i32_1 = arith.constant 0 : i32
    return %c0_i32, %c0_i32_0 : i32, i32
  }
  func.func @transform_4(%arg0: i32) -> (i32, i32) {
    %c0_i32 = arith.constant 0 : i32
    %c0_i32_0 = arith.constant 0 : i32
    %c0_i32_1 = arith.constant 0 : i32
    return %c0_i32, %c0_i32_0 : i32, i32
  }
  func.func @transform_5(%arg0: i32) -> (i32, i32, i32) {
    %c0_i32 = arith.constant 0 : i32
    %c0_i32_0 = arith.constant 0 : i32
    %c0_i32_1 = arith.constant 0 : i32
    %c0_i32_2 = arith.constant 0 : i32
    return %c0_i32, %c0_i32_0, %c0_i32_1 : i32, i32, i32
  }
  func.func @transform_6(%arg0: i32) -> (i32, i32, i32) {
    %c0_i32 = arith.constant 0 : i32
    %c0_i32_0 = arith.constant 0 : i32
    %c0_i32_1 = arith.constant 0 : i32
    %c0_i32_2 = arith.constant 0 : i32
    return %c0_i32, %c0_i32_0, %c0_i32_1 : i32, i32, i32
  }
  func.func @transform_7(%arg0: i32) -> (i32, i32, i32) {
    %c0_i32 = arith.constant 0 : i32
    %c0_i32_0 = arith.constant 0 : i32
    %c0_i32_1 = arith.constant 0 : i32
    %c0_i32_2 = arith.constant 0 : i32
    return %c0_i32, %c0_i32_0, %c0_i32_1 : i32, i32, i32
  }
  func.func @transform_8(%arg0: i32) -> (i32, i32, i32) {
    %c0_i32 = arith.constant 0 : i32
    %c0_i32_0 = arith.constant 0 : i32
    %c0_i32_1 = arith.constant 0 : i32
    %c0_i32_2 = arith.constant 0 : i32
    return %c0_i32, %c0_i32_0, %c0_i32_1 : i32, i32, i32
  }
  func.func @transform_9(%arg0: i32) -> (i32, i32) {
    %c0_i32 = arith.constant 0 : i32
    %c0_i32_0 = arith.constant 0 : i32
    %c0_i32_1 = arith.constant 0 : i32
    return %c0_i32, %c0_i32_0 : i32, i32
  }
  func.func @transform_10(%arg0: i32) -> (i32, i32, i32) {
    %c0_i32 = arith.constant 0 : i32
    %c0_i32_0 = arith.constant 0 : i32
    %c0_i32_1 = arith.constant 0 : i32
    return %arg0, %c0_i32, %c0_i32_0 : i32, i32, i32
  }
}

</mosaic_0001>

<llo_original>
// kernel: encoder_forward.1
$region0: #{encoder_forward.1}
  #allocation0 [shape = 'u32[]', space=smem, size = 0x4, offset = 0x4, fixed_abs, tag = 'smem constant byte address 0x4 - core index']
  #allocation1 [shape = 'u32[144,128]{1,0:T(1,128)}', space=vmem, size = 0x12000, scoped, tag = 'internal scratch']
  #allocation2 [shape = 'bf16[155,16]{1,0:T(8,128)(2,1)}', space=vmem, size = 0xa000, scoped, tag = 'scratch operand']
  #allocation3 [shape = 'bf16[155,32]{1,0:T(8,128)(2,1)}', space=vmem, size = 0xa000, scoped, tag = 'scratch operand']
  #allocation4 [shape = 'bf16[155,32]{1,0:T(8,128)(2,1)}', space=vmem, size = 0xa000, scoped, tag = 'scratch operand']
  %s0 = inlined_call_operand.vmem [shape: bf16[2,64,16], index: 0, kind: input, shape index: {}]
  %s1 = inlined_call_operand.vmem [shape: bf16[137,1], index: 1, kind: input, shape index: {}]
  %s2 = inlined_call_operand.vmem [shape: bf16[137,1], index: 2, kind: input, shape index: {}]
  %s3 = inlined_call_operand.vmem [shape: bf16[64,32], index: 3, kind: input, shape index: {}]
  %s4 = inlined_call_operand.vmem [shape: f32[1,32], index: 4, kind: input, shape index: {}]
  %s5 = inlined_call_operand.vmem [shape: bf16[2,288,32], index: 5, kind: input, shape index: {}]
  %s6 = inlined_call_operand.vmem [shape: f32[2,1,32], index: 6, kind: input, shape index: {}]
  %s7 = inlined_call_operand.vmem [shape: bf16[2,288,32], index: 7, kind: input, shape index: {}]
  %s8 = inlined_call_operand.vmem [shape: f32[2,1,32], index: 8, kind: input, shape index: {}]
  %s9 = inlined_call_operand.vmem [shape: f32[2,1], index: 9, kind: input, shape index: {}]
  %s10 = inlined_call_operand.hbm [shape: f32[2,64,32], index: 10, kind: output, shape index: {}]
  %s11 = sld [smem:[#allocation0]]
  $region54: #{encoder_forward.1} parent=0
    _
  %s13 = ssub.s32 1, %s11
  %s14 = scalar_select 0, %s13, %s11
  $region1: #{encoder_forward.1} parent=0
    #allocation5 [shape = 'u8[1024]{0}', space=smem, size = 0x400, scoped, tag = 'input window, operand 9, single buffered']
    #allocation6 [shape = 's32[1]{0}', space=sflag, size = 0x4, scoped, tag = 'scoped memory for encoder_forward.1']
    #allocation7 [shape = 's32[1]{0}', space=sflag, size = 0x4, scoped, tag = 'scoped memory for encoder_forward.1']
    #allocation8 [shape = 'u8[65536]{0}', space=vmem, size = 0x10000, scoped, tag = 'output window, operand 0, single buffered']
    %15 = vsyncpa [#allocation7], 0
    %16 = vsyncpa [#allocation6], 0
    // Predicated region
    $region2: #{encoder_forward.1} parent=1 // pred_check
      _
    $region3: #{encoder_forward.1} parent=1 // pred_check_branch
      %18 = sbr.rel (0) target = $region5
    $region4: #{encoder_forward.1} parent=1 // pred_region
      _
    $region5: #{encoder_forward.1} parent=1 // pred_fallthru
      _
    // Predicated region
    $region6: #{encoder_forward.1} parent=1 // pred_check
      _
    $region7: #{encoder_forward.1} parent=1 // pred_check_branch
      %20 = sbr.rel (0) target = $region9
    $region8: #{encoder_forward.1} parent=1 // pred_region
      _
    $region9: #{encoder_forward.1} parent=1 // pred_fallthru
      _
    // Predicated region
    $region10: #{encoder_forward.1} parent=1 // pred_check
      _
    $region11: #{encoder_forward.1} parent=1 // pred_check_branch
      %22 = sbr.rel (0) target = $region13
    $region12: #{encoder_forward.1} parent=1 // pred_region
      _
    $region13: #{encoder_forward.1} parent=1 // pred_fallthru
      _
    // Predicated region
    $region14: #{encoder_forward.1} parent=1 // pred_check
      _
    $region15: #{encoder_forward.1} parent=1 // pred_check_branch
      %24 = sbr.rel (0) target = $region17
    $region16: #{encoder_forward.1} parent=1 // pred_region
      _
    $region17: #{encoder_forward.1} parent=1 // pred_fallthru
      _
    // Predicated region
    $region18: #{encoder_forward.1} parent=1 // pred_check
      _
    $region19: #{encoder_forward.1} parent=1 // pred_check_branch
      %26 = sbr.rel (0) target = $region21
    $region20: #{encoder_forward.1} parent=1 // pred_region
      _
    $region21: #{encoder_forward.1} parent=1 // pred_fallthru
      _
    // Predicated region
    $region22: #{encoder_forward.1} parent=1 // pred_check
      _
    $region23: #{encoder_forward.1} parent=1 // pred_check_branch
      %28 = sbr.rel (0) target = $region25
    $region24: #{encoder_forward.1} parent=1 // pred_region
      _
    $region25: #{encoder_forward.1} parent=1 // pred_fallthru
      _
    // Predicated region
    $region26: #{encoder_forward.1} parent=1 // pred_check
      _
    $region27: #{encoder_forward.1} parent=1 // pred_check_branch
      %30 = sbr.rel (0) target = $region29
    $region28: #{encoder_forward.1} parent=1 // pred_region
      _
    $region29: #{encoder_forward.1} parent=1 // pred_fallthru
      _
    // Predicated region
    $region30: #{encoder_forward.1} parent=1 // pred_check
      _
    $region31: #{encoder_forward.1} parent=1 // pred_check_branch
      %32 = sbr.rel (0) target = $region33
    $region32: #{encoder_forward.1} parent=1 // pred_region
      _
    $region33: #{encoder_forward.1} parent=1 // pred_fallthru
      _
    // Predicated region
    $region34: #{encoder_forward.1} parent=1 // pred_check
      _
    $region35: #{encoder_forward.1} parent=1 // pred_check_branch
      %34 = sbr.rel (0) target = $region37
    $region36: #{encoder_forward.1} parent=1 // pred_region
      _
    $region37: #{encoder_forward.1} parent=1 // pred_fallthru
      _
    // Predicated region
    $region38: #{encoder_forward.1} parent=1 // pred_check
      _
    $region39: #{encoder_forward.1} parent=1 // pred_check_branch
      %36 = sbr.rel (0) target = $region41
    $region40: #{encoder_forward.1} parent=1 // pred_region
      %s38 = ssub.s32 32, 32
      %39 = vsyncadd [#allocation7], %s38
      %s41 = sshll.u32 %s9, 4
      %s42 = int_to_ptr.vmem [resolvable:$true] %s41
      %44 = dma.vmem_to_smem %s42, 32, [#allocation5], [#allocation7]
    $region41: #{encoder_forward.1} parent=1 // pred_fallthru
      _
    // Predicated region
    $region42: #{encoder_forward.1} parent=1 // pred_check
      _
    $region43: #{encoder_forward.1} parent=1 // pred_check_branch
      %46 = sbr.rel (0) target = $region45
    $region44: #{encoder_forward.1} parent=1 // pred_region
      %47 = dma.done [#allocation7], 32
    $region45: #{encoder_forward.1} parent=1 // pred_fallthru
      _
    %48 = sfence
    %vm50 = vcmask 125952
    %51 = vst.msk [vmem:[#allocation2] sm:$0xf] %vm50, 0
    %vm52 = vcmask 122880
    %vm53 = vsmask.f32 256
    %vm54 = vmand %vm52, %vm53
    %v55 = vld [vmem:[#allocation2 + $0x4] sm:$0x1]
    %v56 = vsel %vm54, 0, %v55
    %57 = vst [vmem:[#allocation2 + $0x4] sm:$0x1] %v56
    %vm58 = vcmask 257024
    %59 = vst.msk [vmem:[#allocation3] sm:$0xf] %vm58, 0
    %vm60 = vcmask 253952
    %vm61 = vmand %vm60, %vm53
    %v62 = vld [vmem:[#allocation3 + $0x4] sm:$0x1]
    %v63 = vsel %vm61, 0, %v62
    %64 = vst [vmem:[#allocation3 + $0x4] sm:$0x1] %v63
    %65 = vst.msk [vmem:[#allocation4] sm:$0xf] %vm58, 0
    %v66 = vld [vmem:[#allocation4 + $0x4] sm:$0x1]
    %v67 = vsel %vm61, 0, %v66
    %68 = vst [vmem:[#allocation4 + $0x4] sm:$0x1] %v67
    %vm69 = vcmask 125952
    %vm70 = vsmask.f32 7938
    %vm71 = vmand %vm69, %vm70
    %v72 = vld [vmem:[#allocation2 + $0x24] sm:$0xf]
    %v73 = vsel %vm71, 0, %v72
    %74 = vst [vmem:[#allocation2 + $0x24] sm:$0xf] %v73
    %vm75 = vcmask 122880
    %76 = vst.msk [vmem:[#allocation2 + $0x28] sm:$0x1] %vm75, 0
    %vm77 = vcmask 257024
    %vm78 = vmand %vm77, %vm70
    %v79 = vld [vmem:[#allocation3 + $0x24] sm:$0xf]
    %v80 = vsel %vm78, 0, %v79
    %81 = vst [vmem:[#allocation3 + $0x24] sm:$0xf] %v80
    %vm82 = vcmask 253952
    %83 = vst.msk [vmem:[#allocation3 + $0x28] sm:$0x1] %vm82, 0
    %v84 = vld [vmem:[#allocation4 + $0x24] sm:$0xf]
    %v85 = vsel %vm78, 0, %v84
    %86 = vst [vmem:[#allocation4 + $0x24] sm:$0xf] %v85
    %87 = vst.msk [vmem:[#allocation4 + $0x28] sm:$0x1] %vm82, 0
    %vm88 = vcmask 125953
    %89 = vst.msk [vmem:[#allocation2 + $0x48] sm:$0xe] %vm88, 0
    %vm90 = vcmask 123904
    %vm91 = vsmask.f32 1280
    %vm92 = vmand %vm90, %vm91
    %v93 = vld [vmem:[#allocation2 + $0x4c] sm:$0x3]
    %v94 = vsel %vm92, 0, %v93
    %95 = vst [vmem:[#allocation2 + $0x4c] sm:$0x3] %v94
    %vm96 = vcmask 257025
    %97 = vst.msk [vmem:[#allocation3 + $0x48] sm:$0xe] %vm96, 0
    %vm98 = vcmask 254976
    %vm99 = vmand %vm98, %vm91
    %v100 = vld [vmem:[#allocation3 + $0x4c] sm:$0x3]
    %v101 = vsel %vm99, 0, %v100
    %102 = vst [vmem:[#allocation3 + $0x4c] sm:$0x3] %v101
    %103 = vst.msk [vmem:[#allocation4 + $0x48] sm:$0xe] %vm96, 0
    %v104 = vld [vmem:[#allocation4 + $0x4c] sm:$0x3]
    %v105 = vsel %vm99, 0, %v104
    %106 = vst [vmem:[#allocation4 + $0x4c] sm:$0x3] %v105
    %v107 = vld [vmem:[%s1] sm:$0xf]
    %v108 = vld [vmem:[%s1 + $0x4] sm:$0xf]
    %v109 = vld [vmem:[%s1 + $0x8] sm:$0xf]
    %v110 = vld [vmem:[%s1 + $0xc] sm:$0xf]
    %v111 = vld [vmem:[%s1 + $0x10] sm:$0xf]
    %v112 = vld [vmem:[%s1 + $0x14] sm:$0xf]
    %v113 = vld [vmem:[%s1 + $0x18] sm:$0xf]
    %v114 = vld [vmem:[%s1 + $0x1c] sm:$0xf]
    %v115 = vld [vmem:[%s1 + $0x20] sm:$0xf]
    %v116 = vld [vmem:[%s1 + $0x24] sm:$0xf]
    %v117 = vld [vmem:[%s1 + $0x28] sm:$0xf]
    %v118 = vld [vmem:[%s1 + $0x2c] sm:$0xf]
    %v119 = vld [vmem:[%s1 + $0x30] sm:$0xf]
    %v120 = vld [vmem:[%s1 + $0x34] sm:$0xf]
    %v121 = vld [vmem:[%s1 + $0x38] sm:$0xf]
    %v122 = vld [vmem:[%s1 + $0x3c] sm:$0xf]
    %v123 = vld [vmem:[%s1 + $0x40] sm:$0xf]
    %v124 = vld [vmem:[%s1 + $0x44] sm:$0x1]
    %v125 = vld [vmem:[%s2] sm:$0xf]
    %v126 = vld [vmem:[%s2 + $0x4] sm:$0xf]
    %v127 = vld [vmem:[%s2 + $0x8] sm:$0xf]
    %v128 = vld [vmem:[%s2 + $0xc] sm:$0xf]
    %v129 = vld [vmem:[%s2 + $0x10] sm:$0xf]
    %v130 = vld [vmem:[%s2 + $0x14] sm:$0xf]
    %v131 = vld [vmem:[%s2 + $0x18] sm:$0xf]
    %v132 = vld [vmem:[%s2 + $0x1c] sm:$0xf]
    %v133 = vld [vmem:[%s2 + $0x20] sm:$0xf]
    %v134 = vld [vmem:[%s2 + $0x24] sm:$0xf]
    %v135 = vld [vmem:[%s2 + $0x28] sm:$0xf]
    %v136 = vld [vmem:[%s2 + $0x2c] sm:$0xf]
    %v137 = vld [vmem:[%s2 + $0x30] sm:$0xf]
    %v138 = vld [vmem:[%s2 + $0x34] sm:$0xf]
    %v139 = vld [vmem:[%s2 + $0x38] sm:$0xf]
    %v140 = vld [vmem:[%s2 + $0x3c] sm:$0xf]
    %v141 = vld [vmem:[%s2 + $0x40] sm:$0xf]
    %v142 = vld [vmem:[%s2 + $0x44] sm:$0x1]
    %v143 = vld [vmem:[%s0] sm:$0xf]
    %v144 = vld [vmem:[%s0 + $0x4] sm:$0xf]
    %v145 = vld [vmem:[%s0 + $0x8] sm:$0xf]
    %v146 = vld [vmem:[%s0 + $0xc] sm:$0xf]
    %v147 = vld [vmem:[%s0 + $0x10] sm:$0xf]
    %v148 = vld [vmem:[%s0 + $0x14] sm:$0xf]
    %v149 = vld [vmem:[%s0 + $0x18] sm:$0xf]
    %v150 = vld [vmem:[%s0 + $0x1c] sm:$0xf]
    %vm151 = vsmask.f32 4368
    %vm152 = vmor %vm53, %vm151
    %v154 = vshrl.u32 %v143, 16
    %v156 = vrot.slane %v154, 7
    %v157 = vshll.u32 %v143, 16
    %v159 = vor.u32 %v156, %v157
    %v160 = vrot.slane %v156, 4
    %v162 = vshrl.u32 %v144, 16
    %v164 = vrot.slane %v162, 7
    %v165 = vshll.u32 %v144, 16
    %v167 = vor.u32 %v164, %v165
    %v168 = vsel %vm152, %v160, %v167
    %v169 = vrot.slane %v164, 4
    %v171 = vshrl.u32 %v145, 16
    %v173 = vrot.slane %v171, 7
    %v174 = vshll.u32 %v145, 16
    %v176 = vor.u32 %v173, %v174
    %v177 = vsel %vm152, %v169, %v176
    %v178 = vrot.slane %v173, 4
    %v180 = vshrl.u32 %v146, 16
    %v182 = vrot.slane %v180, 7
    %v183 = vshll.u32 %v146, 16
    %v185 = vor.u32 %v182, %v183
    %v186 = vsel %vm152, %v178, %v185
    %v187 = vrot.slane %v182, 4
    %v189 = vshrl.u32 %v147, 16
    %v191 = vrot.slane %v189, 7
    %v192 = vshll.u32 %v147, 16
    %v194 = vor.u32 %v191, %v192
    %v195 = vsel %vm152, %v187, %v194
    %v196 = vrot.slane %v191, 4
    %v198 = vshrl.u32 %v148, 16
    %v200 = vrot.slane %v198, 7
    %v201 = vshll.u32 %v148, 16
    %v203 = vor.u32 %v200, %v201
    %v204 = vsel %vm152, %v196, %v203
    %v205 = vrot.slane %v200, 4
    %v207 = vshrl.u32 %v149, 16
    %v209 = vrot.slane %v207, 7
    %v210 = vshll.u32 %v149, 16
    %v212 = vor.u32 %v209, %v210
    %v213 = vsel %vm152, %v205, %v212
    %v214 = vrot.slane %v209, 4
    %v216 = vshrl.u32 %v150, 16
    %v218 = vrot.slane %v216, 7
    %v219 = vshll.u32 %v150, 16
    %v221 = vor.u32 %v218, %v219
    %v222 = vsel %vm152, %v214, %v221
    %v223 = vrot.slane %v218, 4
    %v233 = vld [vmem:[#allocation2 + $0x4] sm:$0xf]
    %v234 = vsel %vm71, %v159, %v233
    %235 = vst [vmem:[#allocation2 + $0x4] sm:$0xf] %v234
    %236 = vst.msk [vmem:[#allocation2 + $0x8] sm:$0xf] %vm50, %v168
    %237 = vst.msk [vmem:[#allocation2 + $0xc] sm:$0xf] %vm50, %v177
    %238 = vst.msk [vmem:[#allocation2 + $0x10] sm:$0xf] %vm50, %v186
    %239 = vst.msk [vmem:[#allocation2 + $0x14] sm:$0xf] %vm50, %v195
    %240 = vst.msk [vmem:[#allocation2 + $0x18] sm:$0xf] %vm50, %v204
    %241 = vst.msk [vmem:[#allocation2 + $0x1c] sm:$0xf] %vm50, %v213
    %242 = vst.msk [vmem:[#allocation2 + $0x20] sm:$0xf] %vm50, %v222
    %v243 = vld [vmem:[#allocation2 + $0x24] sm:$0x1]
    %v244 = vsel %vm54, %v223, %v243
    %245 = vst [vmem:[#allocation2 + $0x24] sm:$0x1] %v244
    %s246 = scalar_lea.vmem %s0, 32
    %v247 = vld [vmem:[%s246] sm:$0xf]
    %v248 = vld [vmem:[%s246 + $0x4] sm:$0xf]
    %v249 = vld [vmem:[%s246 + $0x8] sm:$0xf]
    %v250 = vld [vmem:[%s246 + $0xc] sm:$0xf]
    %v251 = vld [vmem:[%s246 + $0x10] sm:$0xf]
    %v252 = vld [vmem:[%s246 + $0x14] sm:$0xf]
    %v253 = vld [vmem:[%s246 + $0x18] sm:$0xf]
    %v254 = vld [vmem:[%s246 + $0x1c] sm:$0xf]
    %vm263 = vcmask 1040384
    %vm264 = vcmask 1044484
    %vm265 = vmor %vm263, %vm264
    %v266 = vrot.slane %v247, 7
    %v267 = vrot.slane %v266, 4
    %v268 = vrot.slane %v248, 7
    %v269 = vsel %vm265, %v267, %v268
    %v270 = vrot.slane %v268, 4
    %v271 = vrot.slane %v249, 7
    %v272 = vsel %vm265, %v270, %v271
    %v273 = vrot.slane %v271, 4
    %v274 = vrot.slane %v250, 7
    %v275 = vsel %vm265, %v273, %v274
    %v276 = vrot.slane %v274, 4
    %v277 = vrot.slane %v251, 7
    %v278 = vsel %vm265, %v276, %v277
    %v279 = vrot.slane %v277, 4
    %v280 = vrot.slane %v252, 7
    %v281 = vsel %vm265, %v279, %v280
    %v282 = vrot.slane %v280, 4
    %v283 = vrot.slane %v253, 7
    %v284 = vsel %vm265, %v282, %v283
    %v285 = vrot.slane %v283, 4
    %v286 = vrot.slane %v254, 7
    %v287 = vsel %vm265, %v285, %v286
    %v288 = vrot.slane %v286, 4
    %298 = vst.msk [vmem:[#allocation2 + $0x28] sm:$0xe] %vm88, %v266
    %299 = vst.msk [vmem:[#allocation2 + $0x2c] sm:$0xf] %vm50, %v269
    %300 = vst.msk [vmem:[#allocation2 + $0x30] sm:$0xf] %vm50, %v272
    %301 = vst.msk [vmem:[#allocation2 + $0x34] sm:$0xf] %vm50, %v275
    %302 = vst.msk [vmem:[#allocation2 + $0x38] sm:$0xf] %vm50, %v278
    %303 = vst.msk [vmem:[#allocation2 + $0x3c] sm:$0xf] %vm50, %v281
    %304 = vst.msk [vmem:[#allocation2 + $0x40] sm:$0xf] %vm50, %v284
    %305 = vst.msk [vmem:[#allocation2 + $0x44] sm:$0xf] %vm50, %v287
    %306 = vst.msk [vmem:[#allocation2 + $0x48] sm:$0x1] %vm75, %v288
    %v307 = vld [vmem:[%s3] sm:$0xf]
    %v308 = vld [vmem:[%s3 + $0x4] sm:$0xf]
    %v309 = vld [vmem:[%s3 + $0x8] sm:$0xf]
    %v310 = vld [vmem:[%s3 + $0xc] sm:$0xf]
    %v311 = vld [vmem:[%s3 + $0x10] sm:$0xf]
    %v312 = vld [vmem:[%s3 + $0x14] sm:$0xf]
    %v313 = vld [vmem:[%s3 + $0x18] sm:$0xf]
    %v314 = vld [vmem:[%s3 + $0x1c] sm:$0xf]
    %v315 = vld [vmem:[%s4] sm:$0x1]
    %v316 = vld [vmem:[#allocation2] sm:$0xf]
    %v317 = vld [vmem:[#allocation2 + $0x4] sm:$0xf]
    %v318 = vld [vmem:[#allocation2 + $0x8] sm:$0xf]
    %v319 = vld [vmem:[#allocation2 + $0xc] sm:$0xf]
    %v320 = vld [vmem:[#allocation2 + $0x10] sm:$0xf]
    %v321 = vld [vmem:[#allocation2 + $0x14] sm:$0xf]
    %v322 = vld [vmem:[#allocation2 + $0x18] sm:$0xf]
    %v323 = vld [vmem:[#allocation2 + $0x1c] sm:$0xf]
    %v324 = vld [vmem:[#allocation2 + $0x20] sm:$0xf]
    %v325 = vld [vmem:[#allocation2 + $0x24] sm:$0xf]
    %v326 = vld [vmem:[#allocation2 + $0x28] sm:$0xf]
    %v327 = vld [vmem:[#allocation2 + $0x2c] sm:$0xf]
    %v328 = vld [vmem:[#allocation2 + $0x30] sm:$0xf]
    %v329 = vld [vmem:[#allocation2 + $0x34] sm:$0xf]
    %v330 = vld [vmem:[#allocation2 + $0x38] sm:$0xf]
    %v331 = vld [vmem:[#allocation2 + $0x3c] sm:$0xf]
    %v332 = vld [vmem:[#allocation2 + $0x40] sm:$0xf]
    %v333 = vld [vmem:[#allocation2 + $0x44] sm:$0x1]
    %335 = vset.pattern.permute.xlu0 0
    %336 = vperm.xlu0 %335, %v107
    %v337 = vpop.permute.xlu0 %336
    %v340 = vunpack.c.l.s4 839922192
    %v341 = vunpack.c.0.s8 %v340
    %v342 = vlaneseq
    %v343 = vshrl.u32 %v342, 7
    %v344 = vsub.s32 %v341, %v343
    %v345 = vrot.slane %v337, %v344
    %347 = vset.pattern.permute.xlu0 0
    %348 = vperm.xlu0 %347, %v108
    %v349 = vpop.permute.xlu0 %348
    %v352 = vunpack.c.l.s4 839922192
    %v353 = vunpack.c.0.s8 %v352
    %v354 = vlaneseq
    %v355 = vshrl.u32 %v354, 7
    %v356 = vsub.s32 %v353, %v355
    %v357 = vrot.slane %v349, %v356
    %359 = vset.pattern.permute.xlu0 0
    %360 = vperm.xlu0 %359, %v109
    %v361 = vpop.permute.xlu0 %360
    %v364 = vunpack.c.l.s4 839922192
    %v365 = vunpack.c.0.s8 %v364
    %v366 = vlaneseq
    %v367 = vshrl.u32 %v366, 7
    %v368 = vsub.s32 %v365, %v367
    %v369 = vrot.slane %v361, %v368
    %371 = vset.pattern.permute.xlu0 0
    %372 = vperm.xlu0 %371, %v110
    %v373 = vpop.permute.xlu0 %372
    %v376 = vunpack.c.l.s4 839922192
    %v377 = vunpack.c.0.s8 %v376
    %v378 = vlaneseq
    %v379 = vshrl.u32 %v378, 7
    %v380 = vsub.s32 %v377, %v379
    %v381 = vrot.slane %v373, %v380
    %383 = vset.pattern.permute.xlu0 0
    %384 = vperm.xlu0 %383, %v111
    %v385 = vpop.permute.xlu0 %384
    %v388 = vunpack.c.l.s4 839922192
    %v389 = vunpack.c.0.s8 %v388
    %v390 = vlaneseq
    %v391 = vshrl.u32 %v390, 7
    %v392 = vsub.s32 %v389, %v391
    %v393 = vrot.slane %v385, %v392
    %395 = vset.pattern.permute.xlu0 0
    %396 = vperm.xlu0 %395, %v112
    %v397 = vpop.permute.xlu0 %396
    %v400 = vunpack.c.l.s4 839922192
    %v401 = vunpack.c.0.s8 %v400
    %v402 = vlaneseq
    %v403 = vshrl.u32 %v402, 7
    %v404 = vsub.s32 %v401, %v403
    %v405 = vrot.slane %v397, %v404
    %407 = vset.pattern.permute.xlu0 0
    %408 = vperm.xlu0 %407, %v113
    %v409 = vpop.permute.xlu0 %408
    %v412 = vunpack.c.l.s4 839922192
    %v413 = vunpack.c.0.s8 %v412
    %v414 = vlaneseq
    %v415 = vshrl.u32 %v414, 7
    %v416 = vsub.s32 %v413, %v415
    %v417 = vrot.slane %v409, %v416
    %419 = vset.pattern.permute.xlu0 0
    %420 = vperm.xlu0 %419, %v114
    %v421 = vpop.permute.xlu0 %420
    %v424 = vunpack.c.l.s4 839922192
    %v425 = vunpack.c.0.s8 %v424
    %v426 = vlaneseq
    %v427 = vshrl.u32 %v426, 7
    %v428 = vsub.s32 %v425, %v427
    %v429 = vrot.slane %v421, %v428
    %431 = vset.pattern.permute.xlu0 0
    %432 = vperm.xlu0 %431, %v115
    %v433 = vpop.permute.xlu0 %432
    %v436 = vunpack.c.l.s4 839922192
    %v437 = vunpack.c.0.s8 %v436
    %v438 = vlaneseq
    %v439 = vshrl.u32 %v438, 7
    %v440 = vsub.s32 %v437, %v439
    %v441 = vrot.slane %v433, %v440
    %443 = vset.pattern.permute.xlu0 0
    %444 = vperm.xlu0 %443, %v116
    %v445 = vpop.permute.xlu0 %444
    %v448 = vunpack.c.l.s4 839922192
    %v449 = vunpack.c.0.s8 %v448
    %v450 = vlaneseq
    %v451 = vshrl.u32 %v450, 7
    %v452 = vsub.s32 %v449, %v451
    %v453 = vrot.slane %v445, %v452
    %455 = vset.pattern.permute.xlu0 0
    %456 = vperm.xlu0 %455, %v117
    %v457 = vpop.permute.xlu0 %456
    %v460 = vunpack.c.l.s4 839922192
    %v461 = vunpack.c.0.s8 %v460
    %v462 = vlaneseq
    %v463 = vshrl.u32 %v462, 7
    %v464 = vsub.s32 %v461, %v463
    %v465 = vrot.slane %v457, %v464
    %467 = vset.pattern.permute.xlu0 0
    %468 = vperm.xlu0 %467, %v118
    %v469 = vpop.permute.xlu0 %468
    %v472 = vunpack.c.l.s4 839922192
    %v473 = vunpack.c.0.s8 %v472
    %v474 = vlaneseq
    %v475 = vshrl.u32 %v474, 7
    %v476 = vsub.s32 %v473, %v475
    %v477 = vrot.slane %v469, %v476
    %479 = vset.pattern.permute.xlu0 0
    %480 = vperm.xlu0 %479, %v119
    %v481 = vpop.permute.xlu0 %480
    %v484 = vunpack.c.l.s4 839922192
    %v485 = vunpack.c.0.s8 %v484
    %v486 = vlaneseq
    %v487 = vshrl.u32 %v486, 7
    %v488 = vsub.s32 %v485, %v487
    %v489 = vrot.slane %v481, %v488
    %491 = vset.pattern.permute.xlu0 0
    %492 = vperm.xlu0 %491, %v120
    %v493 = vpop.permute.xlu0 %492
    %v496 = vunpack.c.l.s4 839922192
    %v497 = vunpack.c.0.s8 %v496
    %v498 = vlaneseq
    %v499 = vshrl.u32 %v498, 7
    %v500 = vsub.s32 %v497, %v499
    %v501 = vrot.slane %v493, %v500
    %503 = vset.pattern.permute.xlu0 0
    %504 = vperm.xlu0 %503, %v121
    %v505 = vpop.permute.xlu0 %504
    %v508 = vunpack.c.l.s4 839922192
    %v509 = vunpack.c.0.s8 %v508
    %v510 = vlaneseq
    %v511 = vshrl.u32 %v510, 7
    %v512 = vsub.s32 %v509, %v511
    %v513 = vrot.slane %v505, %v512
    %515 = vset.pattern.permute.xlu0 0
    %516 = vperm.xlu0 %515, %v122
    %v517 = vpop.permute.xlu0 %516
    %v520 = vunpack.c.l.s4 839922192
    %v521 = vunpack.c.0.s8 %v520
    %v522 = vlaneseq
    %v523 = vshrl.u32 %v522, 7
    %v524 = vsub.s32 %v521, %v523
    %v525 = vrot.slane %v517, %v524
    %527 = vset.pattern.permute.xlu0 0
    %528 = vperm.xlu0 %527, %v123
    %v529 = vpop.permute.xlu0 %528
    %v532 = vunpack.c.l.s4 839922192
    %v533 = vunpack.c.0.s8 %v532
    %v534 = vlaneseq
    %v535 = vshrl.u32 %v534, 7
    %v536 = vsub.s32 %v533, %v535
    %v537 = vrot.slane %v529, %v536
    %539 = vset.pattern.permute.xlu0 0
    %540 = vperm.xlu0 %539, %v124
    %v541 = vpop.permute.xlu0 %540
    %v544 = vunpack.c.l.s4 839922192
    %v545 = vunpack.c.0.s8 %v544
    %v546 = vlaneseq
    %v547 = vshrl.u32 %v546, 7
    %v548 = vsub.s32 %v545, %v547
    %v549 = vrot.slane %v541, %v548
    %v550 = vmul.bf16 %v316, %v345
    %v551 = vmul.bf16 %v317, %v357
    %v552 = vmul.bf16 %v318, %v369
    %v553 = vmul.bf16 %v319, %v381
    %v554 = vmul.bf16 %v320, %v393
    %v555 = vmul.bf16 %v321, %v405
    %v556 = vmul.bf16 %v322, %v417
    %v557 = vmul.bf16 %v323, %v429
    %v558 = vmul.bf16 %v324, %v441
    %v559 = vmul.bf16 %v325, %v453
    %v560 = vmul.bf16 %v326, %v465
    %v561 = vmul.bf16 %v327, %v477
    %v562 = vmul.bf16 %v328, %v489
    %v563 = vmul.bf16 %v329, %v501
    %v564 = vmul.bf16 %v330, %v513
    %v565 = vmul.bf16 %v331, %v525
    %v566 = vmul.bf16 %v332, %v537
    %v567 = vmul.bf16 %v333, %v549
    %v586 = vunpack.c.l.b16 %v550
    %v587 = vunpack.c.l.b16 %v551
    %v588 = vunpack.c.l.b16 %v552
    %v589 = vunpack.c.l.b16 %v553
    %v590 = vunpack.c.l.b16 %v554
    %v591 = vunpack.c.l.b16 %v555
    %v592 = vunpack.c.l.b16 %v556
    %v593 = vunpack.c.l.b16 %v557
    %v594 = vunpack.c.l.b16 %v558
    %v595 = vunpack.c.l.b16 %v559
    %v596 = vunpack.c.l.b16 %v560
    %v597 = vunpack.c.l.b16 %v561
    %v598 = vunpack.c.l.b16 %v562
    %v599 = vunpack.c.l.b16 %v563
    %v600 = vunpack.c.l.b16 %v564
    %v601 = vunpack.c.l.b16 %v565
    %v602 = vunpack.c.l.b16 %v566
    %v603 = vunpack.c.l.b16 %v567
    %v604 = vpack.c.b16 %v587, %v586
    %v605 = vpack.c.b16 %v589, %v588
    %v606 = vpack.c.b16 %v591, %v590
    %v607 = vpack.c.b16 %v593, %v592
    %v608 = vpack.c.b16 %v595, %v594
    %v609 = vpack.c.b16 %v597, %v596
    %v610 = vpack.c.b16 %v599, %v598
    %v611 = vpack.c.b16 %v601, %v600
    %v612 = vpack.c.b16 %v603, %v602
    %v631 = vunpack.c.l.b16 %v316
    %v632 = vunpack.c.l.b16 %v317
    %v633 = vunpack.c.l.b16 %v318
    %v634 = vunpack.c.l.b16 %v319
    %v635 = vunpack.c.l.b16 %v320
    %v636 = vunpack.c.l.b16 %v321
    %v637 = vunpack.c.l.b16 %v322
    %v638 = vunpack.c.l.b16 %v323
    %v639 = vunpack.c.l.b16 %v324
    %v640 = vunpack.c.l.b16 %v325
    %v641 = vunpack.c.l.b16 %v326
    %v642 = vunpack.c.l.b16 %v327
    %v643 = vunpack.c.l.b16 %v328
    %v644 = vunpack.c.l.b16 %v329
    %v645 = vunpack.c.l.b16 %v330
    %v646 = vunpack.c.l.b16 %v331
    %v647 = vunpack.c.l.b16 %v332
    %v648 = vunpack.c.l.b16 %v333
    %v649 = vpack.c.b16 %v632, %v631
    %v650 = vpack.c.b16 %v634, %v633
    %v651 = vpack.c.b16 %v636, %v635
    %v652 = vpack.c.b16 %v638, %v637
    %v653 = vpack.c.b16 %v640, %v639
    %v654 = vpack.c.b16 %v642, %v641
    %v655 = vpack.c.b16 %v644, %v643
    %v656 = vpack.c.b16 %v646, %v645
    %v657 = vpack.c.b16 %v648, %v647
    %vm658 = vsmask.f32 7424
    %v660 = vshrl.u32 %v649, 16
    %v662 = vshll.u32 %v649, 16
    %v664 = vrot.slane %v662, 1
    %v665 = vor.u32 %v660, %v664
    %v667 = vshll.u32 %v650, 16
    %v669 = vrot.slane %v667, 1
    %v670 = vsel %vm658, %v665, %v669
    %v671 = vshrl.u32 %v650, 16
    %v673 = vor.u32 %v671, %v669
    %v675 = vshll.u32 %v651, 16
    %v677 = vrot.slane %v675, 1
    %v678 = vsel %vm658, %v673, %v677
    %v679 = vshrl.u32 %v651, 16
    %v681 = vor.u32 %v679, %v677
    %v683 = vshll.u32 %v652, 16
    %v685 = vrot.slane %v683, 1
    %v686 = vsel %vm658, %v681, %v685
    %v687 = vshrl.u32 %v652, 16
    %v689 = vor.u32 %v687, %v685
    %v691 = vshll.u32 %v653, 16
    %v693 = vrot.slane %v691, 1
    %v694 = vsel %vm658, %v689, %v693
    %v695 = vshrl.u32 %v653, 16
    %v697 = vor.u32 %v695, %v693
    %v699 = vshll.u32 %v654, 16
    %v701 = vrot.slane %v699, 1
    %v702 = vsel %vm658, %v697, %v701
    %v703 = vshrl.u32 %v654, 16
    %v705 = vor.u32 %v703, %v701
    %v707 = vshll.u32 %v655, 16
    %v709 = vrot.slane %v707, 1
    %v710 = vsel %vm658, %v705, %v709
    %v711 = vshrl.u32 %v655, 16
    %v713 = vor.u32 %v711, %v709
    %v715 = vshll.u32 %v656, 16
    %v717 = vrot.slane %v715, 1
    %v718 = vsel %vm658, %v713, %v717
    %v719 = vshrl.u32 %v656, 16
    %v721 = vor.u32 %v719, %v717
    %v723 = vshll.u32 %v657, 16
    %v725 = vrot.slane %v723, 1
    %v726 = vsel %vm658, %v721, %v725
    %v727 = vshrl.u32 %v657, 16
    %v729 = vor.u32 %v727, %v725
    %730 = vrot.lane.b32.xlu0 %v670, 16
    %v731 = vpop.permute.xlu0 %730
    %732 = vrot.lane.b32.xlu0 %v678, 16
    %v733 = vpop.permute.xlu0 %732
    %734 = vrot.lane.b32.xlu0 %v686, 16
    %v735 = vpop.permute.xlu0 %734
    %736 = vrot.lane.b32.xlu0 %v694, 16
    %v737 = vpop.permute.xlu0 %736
    %738 = vrot.lane.b32.xlu0 %v702, 16
    %v739 = vpop.permute.xlu0 %738
    %740 = vrot.lane.b32.xlu0 %v710, 16
    %v741 = vpop.permute.xlu0 %740
    %742 = vrot.lane.b32.xlu0 %v718, 16
    %v743 = vpop.permute.xlu0 %742
    %744 = vrot.lane.b32.xlu0 %v726, 16
    %v745 = vpop.permute.xlu0 %744
    %746 = vrot.lane.b32.xlu0 %v729, 16
    %v747 = vpop.permute.xlu0 %746
    %vm748 = vcmask 130048
    %v751 = vsel %vm748, %v604, %v731
    %v754 = vsel %vm748, %v605, %v733
    %v757 = vsel %vm748, %v606, %v735
    %v760 = vsel %vm748, %v607, %v737
    %v763 = vsel %vm748, %v608, %v739
    %v766 = vsel %vm748, %v609, %v741
    %v769 = vsel %vm748, %v610, %v743
    %v772 = vsel %vm748, %v611, %v745
    %v775 = vsel %vm748, %v612, %v747
    %v776 = vld [vmem:[#allocation2 + $0x4] sm:$0xf]
    %v777 = vld [vmem:[#allocation2 + $0x8] sm:$0xf]
    %v778 = vld [vmem:[#allocation2 + $0xc] sm:$0xf]
    %v779 = vld [vmem:[#allocation2 + $0x10] sm:$0xf]
    %v780 = vld [vmem:[#allocation2 + $0x14] sm:$0xf]
    %v781 = vld [vmem:[#allocation2 + $0x18] sm:$0xf]
    %v782 = vld [vmem:[#allocation2 + $0x1c] sm:$0xf]
    %v783 = vld [vmem:[#allocation2 + $0x20] sm:$0xf]
    %v784 = vld [vmem:[#allocation2 + $0x24] sm:$0xf]
    %v785 = vld [vmem:[#allocation2 + $0x28] sm:$0xf]
    %v786 = vld [vmem:[#allocation2 + $0x2c] sm:$0xf]
    %v787 = vld [vmem:[#allocation2 + $0x30] sm:$0xf]
    %v788 = vld [vmem:[#allocation2 + $0x34] sm:$0xf]
    %v789 = vld [vmem:[#allocation2 + $0x38] sm:$0xf]
    %v790 = vld [vmem:[#allocation2 + $0x3c] sm:$0xf]
    %v791 = vld [vmem:[#allocation2 + $0x40] sm:$0xf]
    %v792 = vld [vmem:[#allocation2 + $0x44] sm:$0xf]
    %v793 = vld [vmem:[#allocation2 + $0x48] sm:$0x1]
    %v794 = vmul.bf16 %v776, %v345
    %v795 = vmul.bf16 %v777, %v357
    %v796 = vmul.bf16 %v778, %v369
    %v797 = vmul.bf16 %v779, %v381
    %v798 = vmul.bf16 %v780, %v393
    %v799 = vmul.bf16 %v781, %v405
    %v800 = vmul.bf16 %v782, %v417
    %v801 = vmul.bf16 %v783, %v429
    %v802 = vmul.bf16 %v784, %v441
    %v803 = vmul.bf16 %v785, %v453
    %v804 = vmul.bf16 %v786, %v465
    %v805 = vmul.bf16 %v787, %v477
    %v806 = vmul.bf16 %v788, %v489
    %v807 = vmul.bf16 %v789, %v501
    %v808 = vmul.bf16 %v790, %v513
    %v809 = vmul.bf16 %v791, %v525
    %v810 = vmul.bf16 %v792, %v537
    %v811 = vmul.bf16 %v793, %v549
    %v830 = vunpack.c.l.b16 %v794
    %v831 = vunpack.c.l.b16 %v795
    %v832 = vunpack.c.l.b16 %v796
    %v833 = vunpack.c.l.b16 %v797
    %v834 = vunpack.c.l.b16 %v798
    %v835 = vunpack.c.l.b16 %v799
    %v836 = vunpack.c.l.b16 %v800
    %v837 = vunpack.c.l.b16 %v801
    %v838 = vunpack.c.l.b16 %v802
    %v839 = vunpack.c.l.b16 %v803
    %v840 = vunpack.c.l.b16 %v804
    %v841 = vunpack.c.l.b16 %v805
    %v842 = vunpack.c.l.b16 %v806
    %v843 = vunpack.c.l.b16 %v807
    %v844 = vunpack.c.l.b16 %v808
    %v845 = vunpack.c.l.b16 %v809
    %v846 = vunpack.c.l.b16 %v810
    %v847 = vunpack.c.l.b16 %v811
    %v848 = vpack.c.b16 %v831, %v830
    %v849 = vpack.c.b16 %v833, %v832
    %v850 = vpack.c.b16 %v835, %v834
    %v851 = vpack.c.b16 %v837, %v836
    %v852 = vpack.c.b16 %v839, %v838
    %v853 = vpack.c.b16 %v841, %v840
    %v854 = vpack.c.b16 %v843, %v842
    %v855 = vpack.c.b16 %v845, %v844
    %v856 = vpack.c.b16 %v847, %v846
    %v875 = vunpack.c.l.b16 %v776
    %v876 = vunpack.c.l.b16 %v777
    %v877 = vunpack.c.l.b16 %v778
    %v878 = vunpack.c.l.b16 %v779
    %v879 = vunpack.c.l.b16 %v780
    %v880 = vunpack.c.l.b16 %v781
    %v881 = vunpack.c.l.b16 %v782
    %v882 = vunpack.c.l.b16 %v783
    %v883 = vunpack.c.l.b16 %v784
    %v884 = vunpack.c.l.b16 %v785
    %v885 = vunpack.c.l.b16 %v786
    %v886 = vunpack.c.l.b16 %v787
    %v887 = vunpack.c.l.b16 %v788
    %v888 = vunpack.c.l.b16 %v789
    %v889 = vunpack.c.l.b16 %v790
    %v890 = vunpack.c.l.b16 %v791
    %v891 = vunpack.c.l.b16 %v792
    %v892 = vunpack.c.l.b16 %v793
    %v893 = vpack.c.b16 %v876, %v875
    %v894 = vpack.c.b16 %v878, %v877
    %v895 = vpack.c.b16 %v880, %v879
    %v896 = vpack.c.b16 %v882, %v881
    %v897 = vpack.c.b16 %v884, %v883
    %v898 = vpack.c.b16 %v886, %v885
    %v899 = vpack.c.b16 %v888, %v887
    %v900 = vpack.c.b16 %v890, %v889
    %v901 = vpack.c.b16 %v892, %v891
    %v903 = vshrl.u32 %v893, 16
    %v905 = vshll.u32 %v893, 16
    %v907 = vrot.slane %v905, 1
    %v908 = vor.u32 %v903, %v907
    %v910 = vshll.u32 %v894, 16
    %v912 = vrot.slane %v910, 1
    %v913 = vsel %vm658, %v908, %v912
    %v914 = vshrl.u32 %v894, 16
    %v916 = vor.u32 %v914, %v912
    %v918 = vshll.u32 %v895, 16
    %v920 = vrot.slane %v918, 1
    %v921 = vsel %vm658, %v916, %v920
    %v922 = vshrl.u32 %v895, 16
    %v924 = vor.u32 %v922, %v920
    %v926 = vshll.u32 %v896, 16
    %v928 = vrot.slane %v926, 1
    %v929 = vsel %vm658, %v924, %v928
    %v930 = vshrl.u32 %v896, 16
    %v932 = vor.u32 %v930, %v928
    %v934 = vshll.u32 %v897, 16
    %v936 = vrot.slane %v934, 1
    %v937 = vsel %vm658, %v932, %v936
    %v938 = vshrl.u32 %v897, 16
    %v940 = vor.u32 %v938, %v936
    %v942 = vshll.u32 %v898, 16
    %v944 = vrot.slane %v942, 1
    %v945 = vsel %vm658, %v940, %v944
    %v946 = vshrl.u32 %v898, 16
    %v948 = vor.u32 %v946, %v944
    %v950 = vshll.u32 %v899, 16
    %v952 = vrot.slane %v950, 1
    %v953 = vsel %vm658, %v948, %v952
    %v954 = vshrl.u32 %v899, 16
    %v956 = vor.u32 %v954, %v952
    %v958 = vshll.u32 %v900, 16
    %v960 = vrot.slane %v958, 1
    %v961 = vsel %vm658, %v956, %v960
    %v962 = vshrl.u32 %v900, 16
    %v964 = vor.u32 %v962, %v960
    %v966 = vshll.u32 %v901, 16
    %v968 = vrot.slane %v966, 1
    %v969 = vsel %vm658, %v964, %v968
    %v970 = vshrl.u32 %v901, 16
    %v972 = vor.u32 %v970, %v968
    %973 = vrot.lane.b32.xlu0 %v913, 16
    %v974 = vpop.permute.xlu0 %973
    %975 = vrot.lane.b32.xlu0 %v921, 16
    %v976 = vpop.permute.xlu0 %975
    %977 = vrot.lane.b32.xlu0 %v929, 16
    %v978 = vpop.permute.xlu0 %977
    %979 = vrot.lane.b32.xlu0 %v937, 16
    %v980 = vpop.permute.xlu0 %979
    %981 = vrot.lane.b32.xlu0 %v945, 16
    %v982 = vpop.permute.xlu0 %981
    %983 = vrot.lane.b32.xlu0 %v953, 16
    %v984 = vpop.permute.xlu0 %983
    %985 = vrot.lane.b32.xlu0 %v961, 16
    %v986 = vpop.permute.xlu0 %985
    %987 = vrot.lane.b32.xlu0 %v969, 16
    %v988 = vpop.permute.xlu0 %987
    %989 = vrot.lane.b32.xlu0 %v972, 16
    %v990 = vpop.permute.xlu0 %989
    %v993 = vsel %vm748, %v848, %v974
    %v996 = vsel %vm748, %v849, %v976
    %v999 = vsel %vm748, %v850, %v978
    %v1002 = vsel %vm748, %v851, %v980
    %v1005 = vsel %vm748, %v852, %v982
    %v1008 = vsel %vm748, %v853, %v984
    %v1011 = vsel %vm748, %v854, %v986
    %v1014 = vsel %vm748, %v855, %v988
    %v1017 = vsel %vm748, %v856, %v990
    %1027 = vrot.lane.b32.xlu0 %v993, 32
    %v1028 = vpop.permute.xlu0 %1027
    %1029 = vrot.lane.b32.xlu0 %v996, 32
    %v1030 = vpop.permute.xlu0 %1029
    %1031 = vrot.lane.b32.xlu0 %v999, 32
    %v1032 = vpop.permute.xlu0 %1031
    %1033 = vrot.lane.b32.xlu0 %v1002, 32
    %v1034 = vpop.permute.xlu0 %1033
    %1035 = vrot.lane.b32.xlu0 %v1005, 32
    %v1036 = vpop.permute.xlu0 %1035
    %1037 = vrot.lane.b32.xlu0 %v1008, 32
    %v1038 = vpop.permute.xlu0 %1037
    %1039 = vrot.lane.b32.xlu0 %v1011, 32
    %v1040 = vpop.permute.xlu0 %1039
    %1041 = vrot.lane.b32.xlu0 %v1014, 32
    %v1042 = vpop.permute.xlu0 %1041
    %1043 = vrot.lane.b32.xlu0 %v1017, 32
    %v1044 = vpop.permute.xlu0 %1043
    %vm1045 = vcmask 261120
    %v1047 = vsel %vm1045, %v751, %v1028
    %v1049 = vsel %vm1045, %v754, %v1030
    %v1051 = vsel %vm1045, %v757, %v1032
    %v1053 = vsel %vm1045, %v760, %v1034
    %v1055 = vsel %vm1045, %v763, %v1036
    %v1057 = vsel %vm1045, %v766, %v1038
    %v1059 = vsel %vm1045, %v769, %v1040
    %v1061 = vsel %vm1045, %v772, %v1042
    %v1063 = vsel %vm1045, %v775, %v1044
    %v1065 = vlaneseq
    %v1066 = vshrl.u32 %v1065, 7
    %v1067 = vsub.s32 0, %v1066
    %v1068 = vrot.slane %v315, %v1067
    %v1078 = vunpack.c.l.b16 %v307
    %v1079 = vunpack.c.l.b16 %v308
    %v1080 = vunpack.c.l.b16 %v309
    %v1081 = vunpack.c.l.b16 %v310
    %v1082 = vunpack.c.l.b16 %v311
    %v1083 = vunpack.c.l.b16 %v312
    %v1084 = vunpack.c.l.b16 %v313
    %v1085 = vunpack.c.l.b16 %v314
    %v1086 = vpack.c.b16 %v1079, %v1078
    %v1087 = vpack.c.b16 %v1081, %v1080
    %v1088 = vpack.c.b16 %v1083, %v1082
    %v1089 = vpack.c.b16 %v1085, %v1084
    %vm1094 = vcmask 523264
    %v1095 = vsel %vm1094, %v1047, 0
    %v1097 = vsel %vm1094, %v1049, 0
    %v1099 = vsel %vm1094, %v1051, 0
    %v1101 = vsel %vm1094, %v1053, 0
    %v1103 = vsel %vm1094, %v1055, 0
    %v1105 = vsel %vm1094, %v1057, 0
    %v1107 = vsel %vm1094, %v1059, 0
    %v1109 = vsel %vm1094, %v1061, 0
    %v1111 = vsel %vm1094, %v1063, 0
    %1113 = vmatprep.subr.bf16.mxu0 0
    %1114 = vmatpush1.bf16.msra.mxu0 %v1086
    %1115 = vmatprep.subr.bf16.mxu0 0
    %1116 = vmatpush1.bf16.msra.mxu0 %v1087
    %1117 = vmatprep.subr.bf16.mxu0 0
    %1118 = vmatpush1.bf16.msra.mxu0 %v1088
    %1119 = vmatprep.subr.bf16.mxu0 0
    %1120 = vmatpush1.bf16.msra.mxu0 %v1089
    %1121 = vmatprep.subr.bf16.mxu0 0
    %1122 = vmatpush1.bf16.msra.mxu0 0
    %1123 = vmatprep.subr.bf16.mxu0 0
    %1124 = vmatpush1.bf16.msra.mxu0 0
    %1125 = vmatprep.subr.bf16.mxu0 0
    %1126 = vmatpush1.bf16.msra.mxu0 0
    %1127 = vmatprep.subr.bf16.mxu0 0
    %1128 = vmatpush1.bf16.msra.mxu0 0
    %1129 = vmatprep.subr.bf16.mxu0 0
    %1130 = vmatpush1.bf16.msra.mxu0 0
    %1131 = vmatprep.subr.bf16.mxu0 0
    %1132 = vmatpush1.bf16.msra.mxu0 0
    %1133 = vmatprep.subr.bf16.mxu0 0
    %1134 = vmatpush1.bf16.msra.mxu0 0
    %1135 = vmatprep.subr.bf16.mxu0 0
    %1136 = vmatpush1.bf16.msra.mxu0 0
    %1137 = vmatprep.subr.bf16.mxu0 0
    %1138 = vmatpush1.bf16.msra.mxu0 0
    %1139 = vmatprep.subr.bf16.mxu0 0
    %1140 = vmatpush1.bf16.msra.mxu0 0
    %1141 = vmatprep.subr.bf16.mxu0 0
    %1142 = vmatpush1.bf16.msra.mxu0 0
    %1143 = vmatprep.subr.bf16.mxu0 0
    %1144 = vmatpush1.bf16.msra.mxu0 0
    %1145 = vmatprep.mubr.bf16.mxu0 0
    %1146 = vmatmul.mubr.bf16.gmra.mrb[0].mxu0 %v1095
    %v1147 = vpop.f32.mrb[0].mxu0
    %v1148 = vadd.f32 %v1068, %v1147
    %v1149 = vpop.f32.mrb[0].mxu0
    %v1150 = vpop.f32.mrb[0].mxu0
    %v1151 = vadd.f32 %v1068, %v1150
    %v1152 = vpop.f32.mrb[0].mxu0
    %1153 = vmatprep.mubr.bf16.mxu0 0
    %1154 = vmatmul.mubr.bf16.gmra.mrb[0].mxu0 %v1097
    %v1155 = vpop.f32.mrb[0].mxu0
    %v1156 = vadd.f32 %v1068, %v1155
    %v1157 = vpop.f32.mrb[0].mxu0
    %v1158 = vpop.f32.mrb[0].mxu0
    %v1159 = vadd.f32 %v1068, %v1158
    %v1160 = vpop.f32.mrb[0].mxu0
    %1161 = vmatprep.mubr.bf16.mxu0 0
    %1162 = vmatmul.mubr.bf16.gmra.mrb[0].mxu0 %v1099
    %v1163 = vpop.f32.mrb[0].mxu0
    %v1164 = vadd.f32 %v1068, %v1163
    %v1165 = vpop.f32.mrb[0].mxu0
    %v1166 = vpop.f32.mrb[0].mxu0
    %v1167 = vadd.f32 %v1068, %v1166
    %v1168 = vpop.f32.mrb[0].mxu0
    %1169 = vmatprep.mubr.bf16.mxu0 0
    %1170 = vmatmul.mubr.bf16.gmra.mrb[0].mxu0 %v1101
    %v1171 = vpop.f32.mrb[0].mxu0
    %v1172 = vadd.f32 %v1068, %v1171
    %v1173 = vpop.f32.mrb[0].mxu0
    %v1174 = vpop.f32.mrb[0].mxu0
    %v1175 = vadd.f32 %v1068, %v1174
    %v1176 = vpop.f32.mrb[0].mxu0
    %1177 = vmatprep.mubr.bf16.mxu0 0
    %1178 = vmatmul.mubr.bf16.gmra.mrb[0].mxu0 %v1103
    %v1179 = vpop.f32.mrb[0].mxu0
    %v1180 = vpop.f32.mrb[0].mxu0
    %v1181 = vpop.f32.mrb[0].mxu0
    %v1182 = vadd.f32 %v1068, %v1181
    %v1183 = vpop.f32.mrb[0].mxu0
    %1184 = vmatprep.mubr.bf16.mxu0 0
    %1185 = vmatmul.mubr.bf16.gmra.mrb[0].mxu0 %v1105
    %v1186 = vpop.f32.mrb[0].mxu0
    %v1187 = vadd.f32 %v1068, %v1186
    %v1188 = vpop.f32.mrb[0].mxu0
    %v1189 = vpop.f32.mrb[0].mxu0
    %v1190 = vadd.f32 %v1068, %v1189
    %v1191 = vpop.f32.mrb[0].mxu0
    %1192 = vmatprep.mubr.bf16.mxu0 0
    %1193 = vmatmul.mubr.bf16.gmra.mrb[0].mxu0 %v1107
    %v1194 = vpop.f32.mrb[0].mxu0
    %v1195 = vadd.f32 %v1068, %v1194
    %v1196 = vpop.f32.mrb[0].mxu0
    %v1197 = vpop.f32.mrb[0].mxu0
    %v1198 = vadd.f32 %v1068, %v1197
    %v1199 = vpop.f32.mrb[0].mxu0
    %1200 = vmatprep.mubr.bf16.mxu0 0
    %1201 = vmatmul.mubr.bf16.gmra.mrb[0].mxu0 %v1109
    %v1202 = vpop.f32.mrb[0].mxu0
    %v1203 = vadd.f32 %v1068, %v1202
    %v1204 = vpop.f32.mrb[0].mxu0
    %v1205 = vpop.f32.mrb[0].mxu0
    %v1206 = vadd.f32 %v1068, %v1205
    %v1207 = vpop.f32.mrb[0].mxu0
    %1208 = vmatprep.mubr.bf16.mxu0 0
    %1209 = vmatmul.mubr.bf16.gmra.mrb[0].mxu0 %v1111
    %v1210 = vpop.f32.mrb[0].mxu0
    %v1211 = vadd.f32 %v1068, %v1210
    %v1212 = vpop.f32.mrb[0].mxu0
    %v1213 = vpop.f32.mrb[0].mxu0
    %v1214 = vadd.f32 %v1068, %v1213
    %v1215 = vpop.f32.mrb[0].mxu0
    %1216 = vdwg.mxu0
    %v1217 = vpack.c.bf16 %v1151, %v1148
    %v1218 = vpack.c.bf16 %v1159, %v1156
    %v1219 = vpack.c.bf16 %v1167, %v1164
    %v1220 = vpack.c.bf16 %v1175, %v1172
    %v1225 = vunpack.c.l.b16 %v1217
    %v1226 = vunpack.c.h.b16 %v1217
    %v1227 = vunpack.c.l.b16 %v1218
    %v1228 = vunpack.c.h.b16 %v1218
    %v1229 = vunpack.c.l.b16 %v1219
    %v1230 = vunpack.c.h.b16 %v1219
    %v1231 = vunpack.c.l.b16 %v1220
    %v1232 = vunpack.c.h.b16 %v1220
    %v1233 = vpack.c.b16 %v1225, %v1225
    %v1234 = vpack.c.b16 %v1226, %v1226
    %v1235 = vpack.c.b16 %v1227, %v1227
    %v1236 = vpack.c.b16 %v1228, %v1228
    %v1237 = vpack.c.b16 %v1229, %v1229
    %v1238 = vpack.c.b16 %v1230, %v1230
    %v1239 = vpack.c.b16 %v1231, %v1231
    %v1240 = vpack.c.b16 %v1232, %v1232
    %v1242 = vshrl.u32 %v1233, 16
    %v1244 = vrot.slane %v1242, 7
    %v1245 = vshll.u32 %v1233, 16
    %v1247 = vor.u32 %v1244, %v1245
    %v1248 = vrot.slane %v1244, 4
    %v1250 = vshrl.u32 %v1234, 16
    %v1252 = vrot.slane %v1250, 7
    %v1253 = vshll.u32 %v1234, 16
    %v1255 = vor.u32 %v1252, %v1253
    %v1256 = vsel %vm152, %v1248, %v1255
    %v1257 = vrot.slane %v1252, 4
    %v1259 = vshrl.u32 %v1235, 16
    %v1261 = vrot.slane %v1259, 7
    %v1262 = vshll.u32 %v1235, 16
    %v1264 = vor.u32 %v1261, %v1262
    %v1265 = vsel %vm152, %v1257, %v1264
    %v1266 = vrot.slane %v1261, 4
    %v1268 = vshrl.u32 %v1236, 16
    %v1270 = vrot.slane %v1268, 7
    %v1271 = vshll.u32 %v1236, 16
    %v1273 = vor.u32 %v1270, %v1271
    %v1274 = vsel %vm152, %v1266, %v1273
    %v1275 = vrot.slane %v1270, 4
    %v1277 = vshrl.u32 %v1237, 16
    %v1279 = vrot.slane %v1277, 7
    %v1280 = vshll.u32 %v1237, 16
    %v1282 = vor.u32 %v1279, %v1280
    %v1283 = vsel %vm152, %v1275, %v1282
    %v1284 = vrot.slane %v1279, 4
    %v1286 = vshrl.u32 %v1238, 16
    %v1288 = vrot.slane %v1286, 7
    %v1289 = vshll.u32 %v1238, 16
    %v1291 = vor.u32 %v1288, %v1289
    %v1292 = vsel %vm152, %v1284, %v1291
    %v1293 = vrot.slane %v1288, 4
    %v1295 = vshrl.u32 %v1239, 16
    %v1297 = vrot.slane %v1295, 7
    %v1298 = vshll.u32 %v1239, 16
    %v1300 = vor.u32 %v1297, %v1298
    %v1301 = vsel %vm152, %v1293, %v1300
    %v1302 = vrot.slane %v1297, 4
    %v1304 = vshrl.u32 %v1240, 16
    %v1306 = vrot.slane %v1304, 7
    %v1307 = vshll.u32 %v1240, 16
    %v1309 = vor.u32 %v1306, %v1307
    %v1310 = vsel %vm152, %v1302, %v1309
    %v1311 = vrot.slane %v1306, 4
    %v1321 = vld [vmem:[#allocation3 + $0x4] sm:$0xf]
    %v1322 = vsel %vm78, %v1247, %v1321
    %1323 = vst [vmem:[#allocation3 + $0x4] sm:$0xf] %v1322
    %1324 = vst.msk [vmem:[#allocation3 + $0x8] sm:$0xf] %vm58, %v1256
    %1325 = vst.msk [vmem:[#allocation3 + $0xc] sm:$0xf] %vm58, %v1265
    %1326 = vst.msk [vmem:[#allocation3 + $0x10] sm:$0xf] %vm58, %v1274
    %1327 = vst.msk [vmem:[#allocation3 + $0x14] sm:$0xf] %vm58, %v1283
    %1328 = vst.msk [vmem:[#allocation3 + $0x18] sm:$0xf] %vm58, %v1292
    %1329 = vst.msk [vmem:[#allocation3 + $0x1c] sm:$0xf] %vm58, %v1301
    %1330 = vst.msk [vmem:[#allocation3 + $0x20] sm:$0xf] %vm58, %v1310
    %v1331 = vld [vmem:[#allocation3 + $0x24] sm:$0x1]
    %v1332 = vsel %vm61, %v1311, %v1331
    %1333 = vst [vmem:[#allocation3 + $0x24] sm:$0x1] %v1332
    %v1334 = vpack.c.bf16 %v1187, %v1182
    %v1335 = vpack.c.bf16 %v1195, %v1190
    %v1336 = vpack.c.bf16 %v1203, %v1198
    %v1337 = vpack.c.bf16 %v1211, %v1206
    %v1338 = vpack.c.bf16 %v1214, %v1214
    %v1344 = vunpack.c.l.b16 %v1334
    %v1345 = vunpack.c.h.b16 %v1334
    %v1346 = vunpack.c.l.b16 %v1335
    %v1347 = vunpack.c.h.b16 %v1335
    %v1348 = vunpack.c.l.b16 %v1336
    %v1349 = vunpack.c.h.b16 %v1336
    %v1350 = vunpack.c.l.b16 %v1337
    %v1351 = vunpack.c.h.b16 %v1337
    %v1352 = vunpack.c.l.b16 %v1338
    %v1353 = vpack.c.b16 %v1344, %v1344
    %v1354 = vpack.c.b16 %v1345, %v1345
    %v1355 = vpack.c.b16 %v1346, %v1346
    %v1356 = vpack.c.b16 %v1347, %v1347
    %v1357 = vpack.c.b16 %v1348, %v1348
    %v1358 = vpack.c.b16 %v1349, %v1349
    %v1359 = vpack.c.b16 %v1350, %v1350
    %v1360 = vpack.c.b16 %v1351, %v1351
    %v1361 = vpack.c.b16 %v1352, %v1352
    %v1363 = vshrl.u32 %v1353, 16
    %v1365 = vrot.slane %v1363, 7
    %v1366 = vshll.u32 %v1353, 16
    %v1368 = vor.u32 %v1365, %v1366
    %v1369 = vrot.slane %v1365, 4
    %v1371 = vshrl.u32 %v1354, 16
    %v1373 = vrot.slane %v1371, 7
    %v1374 = vshll.u32 %v1354, 16
    %v1376 = vor.u32 %v1373, %v1374
    %v1377 = vsel %vm152, %v1369, %v1376
    %v1378 = vrot.slane %v1373, 4
    %v1380 = vshrl.u32 %v1355, 16
    %v1382 = vrot.slane %v1380, 7
    %v1383 = vshll.u32 %v1355, 16
    %v1385 = vor.u32 %v1382, %v1383
    %v1386 = vsel %vm152, %v1378, %v1385
    %v1387 = vrot.slane %v1382, 4
    %v1389 = vshrl.u32 %v1356, 16
    %v1391 = vrot.slane %v1389, 7
    %v1392 = vshll.u32 %v1356, 16
    %v1394 = vor.u32 %v1391, %v1392
    %v1395 = vsel %vm152, %v1387, %v1394
    %v1396 = vrot.slane %v1391, 4
    %v1398 = vshrl.u32 %v1357, 16
    %v1400 = vrot.slane %v1398, 7
    %v1401 = vshll.u32 %v1357, 16
    %v1403 = vor.u32 %v1400, %v1401
    %v1404 = vsel %vm152, %v1396, %v1403
    %v1405 = vrot.slane %v1400, 4
    %v1407 = vshrl.u32 %v1358, 16
    %v1409 = vrot.slane %v1407, 7
    %v1410 = vshll.u32 %v1358, 16
    %v1412 = vor.u32 %v1409, %v1410
    %v1413 = vsel %vm152, %v1405, %v1412
    %v1414 = vrot.slane %v1409, 4
    %v1416 = vshrl.u32 %v1359, 16
    %v1418 = vrot.slane %v1416, 7
    %v1419 = vshll.u32 %v1359, 16
    %v1421 = vor.u32 %v1418, %v1419
    %v1422 = vsel %vm152, %v1414, %v1421
    %v1423 = vrot.slane %v1418, 4
    %v1425 = vshrl.u32 %v1360, 16
    %v1427 = vrot.slane %v1425, 7
    %v1428 = vshll.u32 %v1360, 16
    %v1430 = vor.u32 %v1427, %v1428
    %v1431 = vsel %vm152, %v1423, %v1430
    %v1432 = vrot.slane %v1427, 4
    %v1434 = vshll.u32 %v1361, 16
    %v1436 = vsel %vm152, %v1432, %v1434
    %1446 = vst.msk [vmem:[#allocation3 + $0x28] sm:$0xe] %vm96, %v1368
    %1447 = vst.msk [vmem:[#allocation3 + $0x2c] sm:$0xf] %vm58, %v1377
    %1448 = vst.msk [vmem:[#allocation3 + $0x30] sm:$0xf] %vm58, %v1386
    %1449 = vst.msk [vmem:[#allocation3 + $0x34] sm:$0xf] %vm58, %v1395
    %1450 = vst.msk [vmem:[#allocation3 + $0x38] sm:$0xf] %vm58, %v1404
    %1451 = vst.msk [vmem:[#allocation3 + $0x3c] sm:$0xf] %vm58, %v1413
    %1452 = vst.msk [vmem:[#allocation3 + $0x40] sm:$0xf] %vm58, %v1422
    %1453 = vst.msk [vmem:[#allocation3 + $0x44] sm:$0xf] %vm58, %v1431
    %1454 = vst.msk [vmem:[#allocation3 + $0x48] sm:$0x1] %vm82, %v1436
    %v1455 = vld [vmem:[%s5] sm:$0xf]
    %v1456 = vld [vmem:[%s5 + $0x4] sm:$0xf]
    %v1457 = vld [vmem:[%s5 + $0x8] sm:$0xf]
    %v1458 = vld [vmem:[%s5 + $0xc] sm:$0xf]
    %v1459 = vld [vmem:[%s5 + $0x10] sm:$0xf]
    %v1460 = vld [vmem:[%s5 + $0x14] sm:$0xf]
    %v1461 = vld [vmem:[%s5 + $0x18] sm:$0xf]
    %v1462 = vld [vmem:[%s5 + $0x1c] sm:$0xf]
    %v1463 = vld [vmem:[%s5 + $0x20] sm:$0xf]
    %v1464 = vld [vmem:[%s5 + $0x24] sm:$0xf]
    %v1465 = vld [vmem:[%s5 + $0x28] sm:$0xf]
    %v1466 = vld [vmem:[%s5 + $0x2c] sm:$0xf]
    %v1467 = vld [vmem:[%s5 + $0x30] sm:$0xf]
    %v1468 = vld [vmem:[%s5 + $0x34] sm:$0xf]
    %v1469 = vld [vmem:[%s5 + $0x38] sm:$0xf]
    %v1470 = vld [vmem:[%s5 + $0x3c] sm:$0xf]
    %v1471 = vld [vmem:[%s5 + $0x40] sm:$0xf]
    %v1472 = vld [vmem:[%s5 + $0x44] sm:$0xf]
    %v1473 = vld [vmem:[%s5 + $0x48] sm:$0xf]
    %v1474 = vld [vmem:[%s5 + $0x4c] sm:$0xf]
    %v1475 = vld [vmem:[%s5 + $0x50] sm:$0xf]
    %v1476 = vld [vmem:[%s5 + $0x54] sm:$0xf]
    %v1477 = vld [vmem:[%s5 + $0x58] sm:$0xf]
    %v1478 = vld [vmem:[%s5 + $0x5c] sm:$0xf]
    %v1479 = vld [vmem:[%s5 + $0x60] sm:$0xf]
    %v1480 = vld [vmem:[%s5 + $0x64] sm:$0xf]
    %v1481 = vld [vmem:[%s5 + $0x68] sm:$0xf]
    %v1482 = vld [vmem:[%s5 + $0x6c] sm:$0xf]
    %v1483 = vld [vmem:[%s5 + $0x70] sm:$0xf]
    %v1484 = vld [vmem:[%s5 + $0x74] sm:$0xf]
    %v1485 = vld [vmem:[%s5 + $0x78] sm:$0xf]
    %v1486 = vld [vmem:[%s5 + $0x7c] sm:$0xf]
    %v1487 = vld [vmem:[%s5 + $0x80] sm:$0xf]
    %v1488 = vld [vmem:[%s5 + $0x84] sm:$0xf]
    %v1489 = vld [vmem:[%s5 + $0x88] sm:$0xf]
    %v1490 = vld [vmem:[%s5 + $0x8c] sm:$0xf]
    %v1491 = vld [vmem:[%s6] sm:$0x1]
    %v1492 = vld [vmem:[#allocation3] sm:$0xf]
    %v1493 = vld [vmem:[#allocation3 + $0x4] sm:$0xf]
    %v1494 = vld [vmem:[#allocation3 + $0x8] sm:$0xf]
    %v1495 = vld [vmem:[#allocation3 + $0xc] sm:$0xf]
    %v1496 = vld [vmem:[#allocation3 + $0x10] sm:$0xf]
    %v1497 = vld [vmem:[#allocation3 + $0x14] sm:$0xf]
    %v1498 = vld [vmem:[#allocation3 + $0x18] sm:$0xf]
    %v1499 = vld [vmem:[#allocation3 + $0x1c] sm:$0xf]
    %v1500 = vld [vmem:[#allocation3 + $0x20] sm:$0xf]
    %v1501 = vld [vmem:[#allocation3 + $0x24] sm:$0xf]
    %v1502 = vld [vmem:[#allocation3 + $0x28] sm:$0xf]
    %v1503 = vld [vmem:[#allocation3 + $0x2c] sm:$0xf]
    %v1504 = vld [vmem:[#allocation3 + $0x30] sm:$0xf]
    %v1505 = vld [vmem:[#allocation3 + $0x34] sm:$0xf]
    %v1506 = vld [vmem:[#allocation3 + $0x38] sm:$0xf]
    %v1507 = vld [vmem:[#allocation3 + $0x3c] sm:$0xf]
    %v1508 = vld [vmem:[#allocation3 + $0x40] sm:$0xf]
    %v1509 = vld [vmem:[#allocation3 + $0x44] sm:$0x1]
    %v1510 = vmul.bf16 %v1492, %v345
    %v1511 = vmul.bf16 %v1493, %v357
    %v1512 = vmul.bf16 %v1494, %v369
    %v1513 = vmul.bf16 %v1495, %v381
    %v1514 = vmul.bf16 %v1496, %v393
    %v1515 = vmul.bf16 %v1497, %v405
    %v1516 = vmul.bf16 %v1498, %v417
    %v1517 = vmul.bf16 %v1499, %v429
    %v1518 = vmul.bf16 %v1500, %v441
    %v1519 = vmul.bf16 %v1501, %v453
    %v1520 = vmul.bf16 %v1502, %v465
    %v1521 = vmul.bf16 %v1503, %v477
    %v1522 = vmul.bf16 %v1504, %v489
    %v1523 = vmul.bf16 %v1505, %v501
    %v1524 = vmul.bf16 %v1506, %v513
    %v1525 = vmul.bf16 %v1507, %v525
    %v1526 = vmul.bf16 %v1508, %v537
    %v1527 = vmul.bf16 %v1509, %v549
    %v1528 = vld [vmem:[#allocation3] sm:$0xe]
    %v1529 = vld [vmem:[#allocation3 + $0x44] sm:$0x3]
    %1531 = vset.pattern.permute.xlu0 0
    %1532 = vperm.xlu0 %1531, %v125
    %v1533 = vpop.permute.xlu0 %1532
    %v1536 = vunpack.c.l.s4 839922192
    %v1537 = vunpack.c.0.s8 %v1536
    %v1538 = vlaneseq
    %v1539 = vshrl.u32 %v1538, 7
    %v1540 = vsub.s32 %v1537, %v1539
    %v1541 = vrot.slane %v1533, %v1540
    %1543 = vset.pattern.permute.xlu0 0
    %1544 = vperm.xlu0 %1543, %v126
    %v1545 = vpop.permute.xlu0 %1544
    %v1548 = vunpack.c.l.s4 839922192
    %v1549 = vunpack.c.0.s8 %v1548
    %v1550 = vlaneseq
    %v1551 = vshrl.u32 %v1550, 7
    %v1552 = vsub.s32 %v1549, %v1551
    %v1553 = vrot.slane %v1545, %v1552
    %1555 = vset.pattern.permute.xlu0 0
    %1556 = vperm.xlu0 %1555, %v127
    %v1557 = vpop.permute.xlu0 %1556
    %v1560 = vunpack.c.l.s4 839922192
    %v1561 = vunpack.c.0.s8 %v1560
    %v1562 = vlaneseq
    %v1563 = vshrl.u32 %v1562, 7
    %v1564 = vsub.s32 %v1561, %v1563
    %v1565 = vrot.slane %v1557, %v1564
    %1567 = vset.pattern.permute.xlu0 0
    %1568 = vperm.xlu0 %1567, %v128
    %v1569 = vpop.permute.xlu0 %1568
    %v1572 = vunpack.c.l.s4 839922192
    %v1573 = vunpack.c.0.s8 %v1572
    %v1574 = vlaneseq
    %v1575 = vshrl.u32 %v1574, 7
    %v1576 = vsub.s32 %v1573, %v1575
    %v1577 = vrot.slane %v1569, %v1576
    %1579 = vset.pattern.permute.xlu0 0
    %1580 = vperm.xlu0 %1579, %v129
    %v1581 = vpop.permute.xlu0 %1580
    %v1584 = vunpack.c.l.s4 839922192
    %v1585 = vunpack.c.0.s8 %v1584
    %v1586 = vlaneseq
    %v1587 = vshrl.u32 %v1586, 7
    %v1588 = vsub.s32 %v1585, %v1587
    %v1589 = vrot.slane %v1581, %v1588
    %1591 = vset.pattern.permute.xlu0 0
    %1592 = vperm.xlu0 %1591, %v130
    %v1593 = vpop.permute.xlu0 %1592
    %v1596 = vunpack.c.l.s4 839922192
    %v1597 = vunpack.c.0.s8 %v1596
    %v1598 = vlaneseq
    %v1599 = vshrl.u32 %v1598, 7
    %v1600 = vsub.s32 %v1597, %v1599
    %v1601 = vrot.slane %v1593, %v1600
    %1603 = vset.pattern.permute.xlu0 0
    %1604 = vperm.xlu0 %1603, %v131
    %v1605 = vpop.permute.xlu0 %1604
    %v1608 = vunpack.c.l.s4 839922192
    %v1609 = vunpack.c.0.s8 %v1608
    %v1610 = vlaneseq
    %v1611 = vshrl.u32 %v1610, 7
    %v1612 = vsub.s32 %v1609, %v1611
    %v1613 = vrot.slane %v1605, %v1612
    %1615 = vset.pattern.permute.xlu0 0
    %1616 = vperm.xlu0 %1615, %v132
    %v1617 = vpop.permute.xlu0 %1616
    %v1620 = vunpack.c.l.s4 839922192
    %v1621 = vunpack.c.0.s8 %v1620
    %v1622 = vlaneseq
    %v1623 = vshrl.u32 %v1622, 7
    %v1624 = vsub.s32 %v1621, %v1623
    %v1625 = vrot.slane %v1617, %v1624
    %1627 = vset.pattern.permute.xlu0 0
    %1628 = vperm.xlu0 %1627, %v133
    %v1629 = vpop.permute.xlu0 %1628
    %v1632 = vunpack.c.l.s4 839922192
    %v1633 = vunpack.c.0.s8 %v1632
    %v1634 = vlaneseq
    %v1635 = vshrl.u32 %v1634, 7
    %v1636 = vsub.s32 %v1633, %v1635
    %v1637 = vrot.slane %v1629, %v1636
    %1639 = vset.pattern.permute.xlu0 0
    %1640 = vperm.xlu0 %1639, %v134
    %v1641 = vpop.permute.xlu0 %1640
    %v1644 = vunpack.c.l.s4 839922192
    %v1645 = vunpack.c.0.s8 %v1644
    %v1646 = vlaneseq
    %v1647 = vshrl.u32 %v1646, 7
    %v1648 = vsub.s32 %v1645, %v1647
    %v1649 = vrot.slane %v1641, %v1648
    %1651 = vset.pattern.permute.xlu0 0
    %1652 = vperm.xlu0 %1651, %v135
    %v1653 = vpop.permute.xlu0 %1652
    %v1656 = vunpack.c.l.s4 839922192
    %v1657 = vunpack.c.0.s8 %v1656
    %v1658 = vlaneseq
    %v1659 = vshrl.u32 %v1658, 7
    %v1660 = vsub.s32 %v1657, %v1659
    %v1661 = vrot.slane %v1653, %v1660
    %1663 = vset.pattern.permute.xlu0 0
    %1664 = vperm.xlu0 %1663, %v136
    %v1665 = vpop.permute.xlu0 %1664
    %v1668 = vunpack.c.l.s4 839922192
    %v1669 = vunpack.c.0.s8 %v1668
    %v1670 = vlaneseq
    %v1671 = vshrl.u32 %v1670, 7
    %v1672 = vsub.s32 %v1669, %v1671
    %v1673 = vrot.slane %v1665, %v1672
    %1675 = vset.pattern.permute.xlu0 0
    %1676 = vperm.xlu0 %1675, %v137
    %v1677 = vpop.permute.xlu0 %1676
    %v1680 = vunpack.c.l.s4 839922192
    %v1681 = vunpack.c.0.s8 %v1680
    %v1682 = vlaneseq
    %v1683 = vshrl.u32 %v1682, 7
    %v1684 = vsub.s32 %v1681, %v1683
    %v1685 = vrot.slane %v1677, %v1684
    %1687 = vset.pattern.permute.xlu0 0
    %1688 = vperm.xlu0 %1687, %v138
    %v1689 = vpop.permute.xlu0 %1688
    %v1692 = vunpack.c.l.s4 839922192
    %v1693 = vunpack.c.0.s8 %v1692
    %v1694 = vlaneseq
    %v1695 = vshrl.u32 %v1694, 7
    %v1696 = vsub.s32 %v1693, %v1695
    %v1697 = vrot.slane %v1689, %v1696
    %1699 = vset.pattern.permute.xlu0 0
    %1700 = vperm.xlu0 %1699, %v139
    %v1701 = vpop.permute.xlu0 %1700
    %v1704 = vunpack.c.l.s4 839922192
    %v1705 = vunpack.c.0.s8 %v1704
    %v1706 = vlaneseq
    %v1707 = vshrl.u32 %v1706, 7
    %v1708 = vsub.s32 %v1705, %v1707
    %v1709 = vrot.slane %v1701, %v1708
    %1711 = vset.pattern.permute.xlu0 0
    %1712 = vperm.xlu0 %1711, %v140
    %v1713 = vpop.permute.xlu0 %1712
    %v1716 = vunpack.c.l.s4 839922192
    %v1717 = vunpack.c.0.s8 %v1716
    %v1718 = vlaneseq
    %v1719 = vshrl.u32 %v1718, 7
    %v1720 = vsub.s32 %v1717, %v1719
    %v1721 = vrot.slane %v1713, %v1720
    %1723 = vset.pattern.permute.xlu0 0
    %1724 = vperm.xlu0 %1723, %v141
    %v1725 = vpop.permute.xlu0 %1724
    %v1728 = vunpack.c.l.s4 839922192
    %v1729 = vunpack.c.0.s8 %v1728
    %v1730 = vlaneseq
    %v1731 = vshrl.u32 %v1730, 7
    %v1732 = vsub.s32 %v1729, %v1731
    %v1733 = vrot.slane %v1725, %v1732
    %1735 = vset.pattern.permute.xlu0 0
    %1736 = vperm.xlu0 %1735, %v142
    %v1737 = vpop.permute.xlu0 %1736
    %v1740 = vunpack.c.l.s4 839922192
    %v1741 = vunpack.c.0.s8 %v1740
    %v1742 = vlaneseq
    %v1743 = vshrl.u32 %v1742, 7
    %v1744 = vsub.s32 %v1741, %v1743
    %v1745 = vrot.slane %v1737, %v1744
    %v1764 = vrot.slane %v1541, 7
    %v1765 = vrot.slane %v1764, 4
    %v1766 = vrot.slane %v1553, 7
    %v1767 = vsel %vm265, %v1765, %v1766
    %v1768 = vrot.slane %v1766, 4
    %v1769 = vrot.slane %v1565, 7
    %v1770 = vsel %vm265, %v1768, %v1769
    %v1771 = vrot.slane %v1769, 4
    %v1772 = vrot.slane %v1577, 7
    %v1773 = vsel %vm265, %v1771, %v1772
    %v1774 = vrot.slane %v1772, 4
    %v1775 = vrot.slane %v1589, 7
    %v1776 = vsel %vm265, %v1774, %v1775
    %v1777 = vrot.slane %v1775, 4
    %v1778 = vrot.slane %v1601, 7
    %v1779 = vsel %vm265, %v1777, %v1778
    %v1780 = vrot.slane %v1778, 4
    %v1781 = vrot.slane %v1613, 7
    %v1782 = vsel %vm265, %v1780, %v1781
    %v1783 = vrot.slane %v1781, 4
    %v1784 = vrot.slane %v1625, 7
    %v1785 = vsel %vm265, %v1783, %v1784
    %v1786 = vrot.slane %v1784, 4
    %v1787 = vrot.slane %v1637, 7
    %v1788 = vsel %vm265, %v1786, %v1787
    %v1789 = vrot.slane %v1787, 4
    %v1790 = vrot.slane %v1649, 7
    %v1791 = vsel %vm265, %v1789, %v1790
    %v1792 = vrot.slane %v1790, 4
    %v1793 = vrot.slane %v1661, 7
    %v1794 = vsel %vm265, %v1792, %v1793
    %v1795 = vrot.slane %v1793, 4
    %v1796 = vrot.slane %v1673, 7
    %v1797 = vsel %vm265, %v1795, %v1796
    %v1798 = vrot.slane %v1796, 4
    %v1799 = vrot.slane %v1685, 7
    %v1800 = vsel %vm265, %v1798, %v1799
    %v1801 = vrot.slane %v1799, 4
    %v1802 = vrot.slane %v1697, 7
    %v1803 = vsel %vm265, %v1801, %v1802
    %v1804 = vrot.slane %v1802, 4
    %v1805 = vrot.slane %v1709, 7
    %v1806 = vsel %vm265, %v1804, %v1805
    %v1807 = vrot.slane %v1805, 4
    %v1808 = vrot.slane %v1721, 7
    %v1809 = vsel %vm265, %v1807, %v1808
    %v1810 = vrot.slane %v1808, 4
    %v1811 = vrot.slane %v1733, 7
    %v1812 = vsel %vm265, %v1810, %v1811
    %v1813 = vrot.slane %v1811, 4
    %v1814 = vrot.slane %v1745, 7
    %v1815 = vsel %vm265, %v1813, %v1814
    %v1834 = vmul.bf16 %v1528, %v1764
    %v1835 = vmul.bf16 %v1493, %v1767
    %v1836 = vmul.bf16 %v1494, %v1770
    %v1837 = vmul.bf16 %v1495, %v1773
    %v1838 = vmul.bf16 %v1496, %v1776
    %v1839 = vmul.bf16 %v1497, %v1779
    %v1840 = vmul.bf16 %v1498, %v1782
    %v1841 = vmul.bf16 %v1499, %v1785
    %v1842 = vmul.bf16 %v1500, %v1788
    %v1843 = vmul.bf16 %v1501, %v1791
    %v1844 = vmul.bf16 %v1502, %v1794
    %v1845 = vmul.bf16 %v1503, %v1797
    %v1846 = vmul.bf16 %v1504, %v1800
    %v1847 = vmul.bf16 %v1505, %v1803
    %v1848 = vmul.bf16 %v1506, %v1806
    %v1849 = vmul.bf16 %v1507, %v1809
    %v1850 = vmul.bf16 %v1508, %v1812
    %v1851 = vmul.bf16 %v1529, %v1815
    %v1870 = vunpack.c.l.b16 %v1510
    %v1871 = vunpack.c.l.b16 %v1511
    %v1872 = vunpack.c.l.b16 %v1512
    %v1873 = vunpack.c.l.b16 %v1513
    %v1874 = vunpack.c.l.b16 %v1514
    %v1875 = vunpack.c.l.b16 %v1515
    %v1876 = vunpack.c.l.b16 %v1516
    %v1877 = vunpack.c.l.b16 %v1517
    %v1878 = vunpack.c.l.b16 %v1518
    %v1879 = vunpack.c.l.b16 %v1519
    %v1880 = vunpack.c.l.b16 %v1520
    %v1881 = vunpack.c.l.b16 %v1521
    %v1882 = vunpack.c.l.b16 %v1522
    %v1883 = vunpack.c.l.b16 %v1523
    %v1884 = vunpack.c.l.b16 %v1524
    %v1885 = vunpack.c.l.b16 %v1525
    %v1886 = vunpack.c.l.b16 %v1526
    %v1887 = vunpack.c.l.b16 %v1527
    %v1888 = vpack.c.b16 %v1871, %v1870
    %v1889 = vpack.c.b16 %v1873, %v1872
    %v1890 = vpack.c.b16 %v1875, %v1874
    %v1891 = vpack.c.b16 %v1877, %v1876
    %v1892 = vpack.c.b16 %v1879, %v1878
    %v1893 = vpack.c.b16 %v1881, %v1880
    %v1894 = vpack.c.b16 %v1883, %v1882
    %v1895 = vpack.c.b16 %v1885, %v1884
    %v1896 = vpack.c.b16 %v1887, %v1886
    %v1915 = vunpack.c.l.b16 %v1492
    %v1916 = vunpack.c.l.b16 %v1493
    %v1917 = vunpack.c.l.b16 %v1494
    %v1918 = vunpack.c.l.b16 %v1495
    %v1919 = vunpack.c.l.b16 %v1496
    %v1920 = vunpack.c.l.b16 %v1497
    %v1921 = vunpack.c.l.b16 %v1498
    %v1922 = vunpack.c.l.b16 %v1499
    %v1923 = vunpack.c.l.b16 %v1500
    %v1924 = vunpack.c.l.b16 %v1501
    %v1925 = vunpack.c.l.b16 %v1502
    %v1926 = vunpack.c.l.b16 %v1503
    %v1927 = vunpack.c.l.b16 %v1504
    %v1928 = vunpack.c.l.b16 %v1505
    %v1929 = vunpack.c.l.b16 %v1506
    %v1930 = vunpack.c.l.b16 %v1507
    %v1931 = vunpack.c.l.b16 %v1508
    %v1932 = vunpack.c.l.b16 %v1509
    %v1933 = vpack.c.b16 %v1916, %v1915
    %v1934 = vpack.c.b16 %v1918, %v1917
    %v1935 = vpack.c.b16 %v1920, %v1919
    %v1936 = vpack.c.b16 %v1922, %v1921
    %v1937 = vpack.c.b16 %v1924, %v1923
    %v1938 = vpack.c.b16 %v1926, %v1925
    %v1939 = vpack.c.b16 %v1928, %v1927
    %v1940 = vpack.c.b16 %v1930, %v1929
    %v1941 = vpack.c.b16 %v1932, %v1931
    %v1943 = vshrl.u32 %v1933, 16
    %v1945 = vshll.u32 %v1933, 16
    %v1947 = vrot.slane %v1945, 1
    %v1948 = vor.u32 %v1943, %v1947
    %v1950 = vshll.u32 %v1934, 16
    %v1952 = vrot.slane %v1950, 1
    %v1953 = vsel %vm658, %v1948, %v1952
    %v1954 = vshrl.u32 %v1934, 16
    %v1956 = vor.u32 %v1954, %v1952
    %v1958 = vshll.u32 %v1935, 16
    %v1960 = vrot.slane %v1958, 1
    %v1961 = vsel %vm658, %v1956, %v1960
    %v1962 = vshrl.u32 %v1935, 16
    %v1964 = vor.u32 %v1962, %v1960
    %v1966 = vshll.u32 %v1936, 16
    %v1968 = vrot.slane %v1966, 1
    %v1969 = vsel %vm658, %v1964, %v1968
    %v1970 = vshrl.u32 %v1936, 16
    %v1972 = vor.u32 %v1970, %v1968
    %v1974 = vshll.u32 %v1937, 16
    %v1976 = vrot.slane %v1974, 1
    %v1977 = vsel %vm658, %v1972, %v1976
    %v1978 = vshrl.u32 %v1937, 16
    %v1980 = vor.u32 %v1978, %v1976
    %v1982 = vshll.u32 %v1938, 16
    %v1984 = vrot.slane %v1982, 1
    %v1985 = vsel %vm658, %v1980, %v1984
    %v1986 = vshrl.u32 %v1938, 16
    %v1988 = vor.u32 %v1986, %v1984
    %v1990 = vshll.u32 %v1939, 16
    %v1992 = vrot.slane %v1990, 1
    %v1993 = vsel %vm658, %v1988, %v1992
    %v1994 = vshrl.u32 %v1939, 16
    %v1996 = vor.u32 %v1994, %v1992
    %v1998 = vshll.u32 %v1940, 16
    %v2000 = vrot.slane %v1998, 1
    %v2001 = vsel %vm658, %v1996, %v2000
    %v2002 = vshrl.u32 %v1940, 16
    %v2004 = vor.u32 %v2002, %v2000
    %v2006 = vshll.u32 %v1941, 16
    %v2008 = vrot.slane %v2006, 1
    %v2009 = vsel %vm658, %v2004, %v2008
    %v2010 = vshrl.u32 %v1941, 16
    %v2012 = vor.u32 %v2010, %v2008
    %2013 = vrot.lane.b32.xlu0 %v1953, 32
    %v2014 = vpop.permute.xlu0 %2013
    %2015 = vrot.lane.b32.xlu0 %v1961, 32
    %v2016 = vpop.permute.xlu0 %2015
    %2017 = vrot.lane.b32.xlu0 %v1969, 32
    %v2018 = vpop.permute.xlu0 %2017
    %2019 = vrot.lane.b32.xlu0 %v1977, 32
    %v2020 = vpop.permute.xlu0 %2019
    %2021 = vrot.lane.b32.xlu0 %v1985, 32
    %v2022 = vpop.permute.xlu0 %2021
    %2023 = vrot.lane.b32.xlu0 %v1993, 32
    %v2024 = vpop.permute.xlu0 %2023
    %2025 = vrot.lane.b32.xlu0 %v2001, 32
    %v2026 = vpop.permute.xlu0 %2025
    %2027 = vrot.lane.b32.xlu0 %v2009, 32
    %v2028 = vpop.permute.xlu0 %2027
    %2029 = vrot.lane.b32.xlu0 %v2012, 32
    %v2030 = vpop.permute.xlu0 %2029
    %v2049 = vunpack.c.l.b16 %v1834
    %v2050 = vunpack.c.l.b16 %v1835
    %v2051 = vunpack.c.l.b16 %v1836
    %v2052 = vunpack.c.l.b16 %v1837
    %v2053 = vunpack.c.l.b16 %v1838
    %v2054 = vunpack.c.l.b16 %v1839
    %v2055 = vunpack.c.l.b16 %v1840
    %v2056 = vunpack.c.l.b16 %v1841
    %v2057 = vunpack.c.l.b16 %v1842
    %v2058 = vunpack.c.l.b16 %v1843
    %v2059 = vunpack.c.l.b16 %v1844
    %v2060 = vunpack.c.l.b16 %v1845
    %v2061 = vunpack.c.l.b16 %v1846
    %v2062 = vunpack.c.l.b16 %v1847
    %v2063 = vunpack.c.l.b16 %v1848
    %v2064 = vunpack.c.l.b16 %v1849
    %v2065 = vunpack.c.l.b16 %v1850
    %v2066 = vunpack.c.l.b16 %v1851
    %v2067 = vpack.c.b16 %v2050, %v2049
    %v2068 = vpack.c.b16 %v2052, %v2051
    %v2069 = vpack.c.b16 %v2054, %v2053
    %v2070 = vpack.c.b16 %v2056, %v2055
    %v2071 = vpack.c.b16 %v2058, %v2057
    %v2072 = vpack.c.b16 %v2060, %v2059
    %v2073 = vpack.c.b16 %v2062, %v2061
    %v2074 = vpack.c.b16 %v2064, %v2063
    %v2075 = vpack.c.b16 %v2066, %v2065
    %vm2076 = vcmask 1046528
    %v2077 = vrot.slane %v2067, 1
    %v2078 = vrot.slane %v2068, 1
    %v2079 = vsel %vm2076, %v2077, %v2078
    %v2080 = vrot.slane %v2069, 1
    %v2081 = vsel %vm2076, %v2078, %v2080
    %v2082 = vrot.slane %v2070, 1
    %v2083 = vsel %vm2076, %v2080, %v2082
    %v2084 = vrot.slane %v2071, 1
    %v2085 = vsel %vm2076, %v2082, %v2084
    %v2086 = vrot.slane %v2072, 1
    %v2087 = vsel %vm2076, %v2084, %v2086
    %v2088 = vrot.slane %v2073, 1
    %v2089 = vsel %vm2076, %v2086, %v2088
    %v2090 = vrot.slane %v2074, 1
    %v2091 = vsel %vm2076, %v2088, %v2090
    %v2092 = vrot.slane %v2075, 1
    %v2093 = vsel %vm2076, %v2090, %v2092
    %2094 = vrot.lane.b32.xlu0 %v2079, 64
    %v2095 = vpop.permute.xlu0 %2094
    %2096 = vrot.lane.b32.xlu0 %v2081, 64
    %v2097 = vpop.permute.xlu0 %2096
    %2098 = vrot.lane.b32.xlu0 %v2083, 64
    %v2099 = vpop.permute.xlu0 %2098
    %2100 = vrot.lane.b32.xlu0 %v2085, 64
    %v2101 = vpop.permute.xlu0 %2100
    %2102 = vrot.lane.b32.xlu0 %v2087, 64
    %v2103 = vpop.permute.xlu0 %2102
    %2104 = vrot.lane.b32.xlu0 %v2089, 64
    %v2105 = vpop.permute.xlu0 %2104
    %2106 = vrot.lane.b32.xlu0 %v2091, 64
    %v2107 = vpop.permute.xlu0 %2106
    %2108 = vrot.lane.b32.xlu0 %v2093, 64
    %v2109 = vpop.permute.xlu0 %2108
    %2110 = vrot.lane.b32.xlu0 %v2092, 64
    %v2111 = vpop.permute.xlu0 %2110
    %v2114 = vsel %vm1045, %v1888, %v2014
    %v2117 = vsel %vm1045, %v1889, %v2016
    %v2120 = vsel %vm1045, %v1890, %v2018
    %v2123 = vsel %vm1045, %v1891, %v2020
    %v2126 = vsel %vm1045, %v1892, %v2022
    %v2129 = vsel %vm1045, %v1893, %v2024
    %v2132 = vsel %vm1045, %v1894, %v2026
    %v2135 = vsel %vm1045, %v1895, %v2028
    %v2138 = vsel %vm1045, %v1896, %v2030
    %v2140 = vsel %vm1094, %v2114, %v2095
    %v2142 = vsel %vm1094, %v2117, %v2097
    %v2144 = vsel %vm1094, %v2120, %v2099
    %v2146 = vsel %vm1094, %v2123, %v2101
    %v2148 = vsel %vm1094, %v2126, %v2103
    %v2150 = vsel %vm1094, %v2129, %v2105
    %v2152 = vsel %vm1094, %v2132, %v2107
    %v2154 = vsel %vm1094, %v2135, %v2109
    %v2156 = vsel %vm1094, %v2138, %v2111
    %v2157 = vld [vmem:[#allocation3 + $0x4] sm:$0xf]
    %v2158 = vld [vmem:[#allocation3 + $0x8] sm:$0xf]
    %v2159 = vld [vmem:[#allocation3 + $0xc] sm:$0xf]
    %v2160 = vld [vmem:[#allocation3 + $0x10] sm:$0xf]
    %v2161 = vld [vmem:[#allocation3 + $0x14] sm:$0xf]
    %v2162 = vld [vmem:[#allocation3 + $0x18] sm:$0xf]
    %v2163 = vld [vmem:[#allocation3 + $0x1c] sm:$0xf]
    %v2164 = vld [vmem:[#allocation3 + $0x20] sm:$0xf]
    %v2165 = vld [vmem:[#allocation3 + $0x24] sm:$0xf]
    %v2166 = vld [vmem:[#allocation3 + $0x28] sm:$0xf]
    %v2167 = vld [vmem:[#allocation3 + $0x2c] sm:$0xf]
    %v2168 = vld [vmem:[#allocation3 + $0x30] sm:$0xf]
    %v2169 = vld [vmem:[#allocation3 + $0x34] sm:$0xf]
    %v2170 = vld [vmem:[#allocation3 + $0x38] sm:$0xf]
    %v2171 = vld [vmem:[#allocation3 + $0x3c] sm:$0xf]
    %v2172 = vld [vmem:[#allocation3 + $0x40] sm:$0xf]
    %v2173 = vld [vmem:[#allocation3 + $0x44] sm:$0xf]
    %v2174 = vld [vmem:[#allocation3 + $0x48] sm:$0x1]
    %v2175 = vmul.bf16 %v2157, %v345
    %v2176 = vmul.bf16 %v2158, %v357
    %v2177 = vmul.bf16 %v2159, %v369
    %v2178 = vmul.bf16 %v2160, %v381
    %v2179 = vmul.bf16 %v2161, %v393
    %v2180 = vmul.bf16 %v2162, %v405
    %v2181 = vmul.bf16 %v2163, %v417
    %v2182 = vmul.bf16 %v2164, %v429
    %v2183 = vmul.bf16 %v2165, %v441
    %v2184 = vmul.bf16 %v2166, %v453
    %v2185 = vmul.bf16 %v2167, %v465
    %v2186 = vmul.bf16 %v2168, %v477
    %v2187 = vmul.bf16 %v2169, %v489
    %v2188 = vmul.bf16 %v2170, %v501
    %v2189 = vmul.bf16 %v2171, %v513
    %v2190 = vmul.bf16 %v2172, %v525
    %v2191 = vmul.bf16 %v2173, %v537
    %v2192 = vmul.bf16 %v2174, %v549
    %v2193 = vld [vmem:[#allocation3 + $0x4] sm:$0xe]
    %v2194 = vld [vmem:[#allocation3 + $0x48] sm:$0x3]
    %v2195 = vmul.bf16 %v2193, %v1764
    %v2196 = vmul.bf16 %v2158, %v1767
    %v2197 = vmul.bf16 %v2159, %v1770
    %v2198 = vmul.bf16 %v2160, %v1773
    %v2199 = vmul.bf16 %v2161, %v1776
    %v2200 = vmul.bf16 %v2162, %v1779
    %v2201 = vmul.bf16 %v2163, %v1782
    %v2202 = vmul.bf16 %v2164, %v1785
    %v2203 = vmul.bf16 %v2165, %v1788
    %v2204 = vmul.bf16 %v2166, %v1791
    %v2205 = vmul.bf16 %v2167, %v1794
    %v2206 = vmul.bf16 %v2168, %v1797
    %v2207 = vmul.bf16 %v2169, %v1800
    %v2208 = vmul.bf16 %v2170, %v1803
    %v2209 = vmul.bf16 %v2171, %v1806
    %v2210 = vmul.bf16 %v2172, %v1809
    %v2211 = vmul.bf16 %v2173, %v1812
    %v2212 = vmul.bf16 %v2194, %v1815
    %v2231 = vunpack.c.l.b16 %v2175
    %v2232 = vunpack.c.l.b16 %v2176
    %v2233 = vunpack.c.l.b16 %v2177
    %v2234 = vunpack.c.l.b16 %v2178
    %v2235 = vunpack.c.l.b16 %v2179
    %v2236 = vunpack.c.l.b16 %v2180
    %v2237 = vunpack.c.l.b16 %v2181
    %v2238 = vunpack.c.l.b16 %v2182
    %v2239 = vunpack.c.l.b16 %v2183
    %v2240 = vunpack.c.l.b16 %v2184
    %v2241 = vunpack.c.l.b16 %v2185
    %v2242 = vunpack.c.l.b16 %v2186
    %v2243 = vunpack.c.l.b16 %v2187
    %v2244 = vunpack.c.l.b16 %v2188
    %v2245 = vunpack.c.l.b16 %v2189
    %v2246 = vunpack.c.l.b16 %v2190
    %v2247 = vunpack.c.l.b16 %v2191
    %v2248 = vunpack.c.l.b16 %v2192
    %v2249 = vpack.c.b16 %v2232, %v2231
    %v2250 = vpack.c.b16 %v2234, %v2233
    %v2251 = vpack.c.b16 %v2236, %v2235
    %v2252 = vpack.c.b16 %v2238, %v2237
    %v2253 = vpack.c.b16 %v2240, %v2239
    %v2254 = vpack.c.b16 %v2242, %v2241
    %v2255 = vpack.c.b16 %v2244, %v2243
    %v2256 = vpack.c.b16 %v2246, %v2245
    %v2257 = vpack.c.b16 %v2248, %v2247
    %v2276 = vunpack.c.l.b16 %v2157
    %v2277 = vunpack.c.l.b16 %v2158
    %v2278 = vunpack.c.l.b16 %v2159
    %v2279 = vunpack.c.l.b16 %v2160
    %v2280 = vunpack.c.l.b16 %v2161
    %v2281 = vunpack.c.l.b16 %v2162
    %v2282 = vunpack.c.l.b16 %v2163
    %v2283 = vunpack.c.l.b16 %v2164
    %v2284 = vunpack.c.l.b16 %v2165
    %v2285 = vunpack.c.l.b16 %v2166
    %v2286 = vunpack.c.l.b16 %v2167
    %v2287 = vunpack.c.l.b16 %v2168
    %v2288 = vunpack.c.l.b16 %v2169
    %v2289 = vunpack.c.l.b16 %v2170
    %v2290 = vunpack.c.l.b16 %v2171
    %v2291 = vunpack.c.l.b16 %v2172
    %v2292 = vunpack.c.l.b16 %v2173
    %v2293 = vunpack.c.l.b16 %v2174
    %v2294 = vpack.c.b16 %v2277, %v2276
    %v2295 = vpack.c.b16 %v2279, %v2278
    %v2296 = vpack.c.b16 %v2281, %v2280
    %v2297 = vpack.c.b16 %v2283, %v2282
    %v2298 = vpack.c.b16 %v2285, %v2284
    %v2299 = vpack.c.b16 %v2287, %v2286
    %v2300 = vpack.c.b16 %v2289, %v2288
    %v2301 = vpack.c.b16 %v2291, %v2290
    %v2302 = vpack.c.b16 %v2293, %v2292
    %v2304 = vshrl.u32 %v2294, 16
    %v2306 = vshll.u32 %v2294, 16
    %v2308 = vrot.slane %v2306, 1
    %v2309 = vor.u32 %v2304, %v2308
    %v2311 = vshll.u32 %v2295, 16
    %v2313 = vrot.slane %v2311, 1
    %v2314 = vsel %vm658, %v2309, %v2313
    %v2315 = vshrl.u32 %v2295, 16
    %v2317 = vor.u32 %v2315, %v2313
    %v2319 = vshll.u32 %v2296, 16
    %v2321 = vrot.slane %v2319, 1
    %v2322 = vsel %vm658, %v2317, %v2321
    %v2323 = vshrl.u32 %v2296, 16
    %v2325 = vor.u32 %v2323, %v2321
    %v2327 = vshll.u32 %v2297, 16
    %v2329 = vrot.slane %v2327, 1
    %v2330 = vsel %vm658, %v2325, %v2329
    %v2331 = vshrl.u32 %v2297, 16
    %v2333 = vor.u32 %v2331, %v2329
    %v2335 = vshll.u32 %v2298, 16
    %v2337 = vrot.slane %v2335, 1
    %v2338 = vsel %vm658, %v2333, %v2337
    %v2339 = vshrl.u32 %v2298, 16
    %v2341 = vor.u32 %v2339, %v2337
    %v2343 = vshll.u32 %v2299, 16
    %v2345 = vrot.slane %v2343, 1
    %v2346 = vsel %vm658, %v2341, %v2345
    %v2347 = vshrl.u32 %v2299, 16
    %v2349 = vor.u32 %v2347, %v2345
    %v2351 = vshll.u32 %v2300, 16
    %v2353 = vrot.slane %v2351, 1
    %v2354 = vsel %vm658, %v2349, %v2353
    %v2355 = vshrl.u32 %v2300, 16
    %v2357 = vor.u32 %v2355, %v2353
    %v2359 = vshll.u32 %v2301, 16
    %v2361 = vrot.slane %v2359, 1
    %v2362 = vsel %vm658, %v2357, %v2361
    %v2363 = vshrl.u32 %v2301, 16
    %v2365 = vor.u32 %v2363, %v2361
    %v2367 = vshll.u32 %v2302, 16
    %v2369 = vrot.slane %v2367, 1
    %v2370 = vsel %vm658, %v2365, %v2369
    %v2371 = vshrl.u32 %v2302, 16
    %v2373 = vor.u32 %v2371, %v2369
    %2374 = vrot.lane.b32.xlu0 %v2314, 32
    %v2375 = vpop.permute.xlu0 %2374
    %2376 = vrot.lane.b32.xlu0 %v2322, 32
    %v2377 = vpop.permute.xlu0 %2376
    %2378 = vrot.lane.b32.xlu0 %v2330, 32
    %v2379 = vpop.permute.xlu0 %2378
    %2380 = vrot.lane.b32.xlu0 %v2338, 32
    %v2381 = vpop.permute.xlu0 %2380
    %2382 = vrot.lane.b32.xlu0 %v2346, 32
    %v2383 = vpop.permute.xlu0 %2382
    %2384 = vrot.lane.b32.xlu0 %v2354, 32
    %v2385 = vpop.permute.xlu0 %2384
    %2386 = vrot.lane.b32.xlu0 %v2362, 32
    %v2387 = vpop.permute.xlu0 %2386
    %2388 = vrot.lane.b32.xlu0 %v2370, 32
    %v2389 = vpop.permute.xlu0 %2388
    %2390 = vrot.lane.b32.xlu0 %v2373, 32
    %v2391 = vpop.permute.xlu0 %2390
    %v2410 = vunpack.c.l.b16 %v2195
    %v2411 = vunpack.c.l.b16 %v2196
    %v2412 = vunpack.c.l.b16 %v2197
    %v2413 = vunpack.c.l.b16 %v2198
    %v2414 = vunpack.c.l.b16 %v2199
    %v2415 = vunpack.c.l.b16 %v2200
    %v2416 = vunpack.c.l.b16 %v2201
    %v2417 = vunpack.c.l.b16 %v2202
    %v2418 = vunpack.c.l.b16 %v2203
    %v2419 = vunpack.c.l.b16 %v2204
    %v2420 = vunpack.c.l.b16 %v2205
    %v2421 = vunpack.c.l.b16 %v2206
    %v2422 = vunpack.c.l.b16 %v2207
    %v2423 = vunpack.c.l.b16 %v2208
    %v2424 = vunpack.c.l.b16 %v2209
    %v2425 = vunpack.c.l.b16 %v2210
    %v2426 = vunpack.c.l.b16 %v2211
    %v2427 = vunpack.c.l.b16 %v2212
    %v2428 = vpack.c.b16 %v2411, %v2410
    %v2429 = vpack.c.b16 %v2413, %v2412
    %v2430 = vpack.c.b16 %v2415, %v2414
    %v2431 = vpack.c.b16 %v2417, %v2416
    %v2432 = vpack.c.b16 %v2419, %v2418
    %v2433 = vpack.c.b16 %v2421, %v2420
    %v2434 = vpack.c.b16 %v2423, %v2422
    %v2435 = vpack.c.b16 %v2425, %v2424
    %v2436 = vpack.c.b16 %v2427, %v2426
    %v2437 = vrot.slane %v2428, 1
    %v2438 = vrot.slane %v2429, 1
    %v2439 = vsel %vm2076, %v2437, %v2438
    %v2440 = vrot.slane %v2430, 1
    %v2441 = vsel %vm2076, %v2438, %v2440
    %v2442 = vrot.slane %v2431, 1
    %v2443 = vsel %vm2076, %v2440, %v2442
    %v2444 = vrot.slane %v2432, 1
    %v2445 = vsel %vm2076, %v2442, %v2444
    %v2446 = vrot.slane %v2433, 1
    %v2447 = vsel %vm2076, %v2444, %v2446
    %v2448 = vrot.slane %v2434, 1
    %v2449 = vsel %vm2076, %v2446, %v2448
    %v2450 = vrot.slane %v2435, 1
    %v2451 = vsel %vm2076, %v2448, %v2450
    %v2452 = vrot.slane %v2436, 1
    %v2453 = vsel %vm2076, %v2450, %v2452
    %2454 = vrot.lane.b32.xlu0 %v2439, 64
    %v2455 = vpop.permute.xlu0 %2454
    %2456 = vrot.lane.b32.xlu0 %v2441, 64
    %v2457 = vpop.permute.xlu0 %2456
    %2458 = vrot.lane.b32.xlu0 %v2443, 64
    %v2459 = vpop.permute.xlu0 %2458
    %2460 = vrot.lane.b32.xlu0 %v2445, 64
    %v2461 = vpop.permute.xlu0 %2460
    %2462 = vrot.lane.b32.xlu0 %v2447, 64
    %v2463 = vpop.permute.xlu0 %2462
    %2464 = vrot.lane.b32.xlu0 %v2449, 64
    %v2465 = vpop.permute.xlu0 %2464
    %2466 = vrot.lane.b32.xlu0 %v2451, 64
    %v2467 = vpop.permute.xlu0 %2466
    %2468 = vrot.lane.b32.xlu0 %v2453, 64
    %v2469 = vpop.permute.xlu0 %2468
    %2470 = vrot.lane.b32.xlu0 %v2452, 64
    %v2471 = vpop.permute.xlu0 %2470
    %v2474 = vsel %vm1045, %v2249, %v2375
    %v2477 = vsel %vm1045, %v2250, %v2377
    %v2480 = vsel %vm1045, %v2251, %v2379
    %v2483 = vsel %vm1045, %v2252, %v2381
    %v2486 = vsel %vm1045, %v2253, %v2383
    %v2489 = vsel %vm1045, %v2254, %v2385
    %v2492 = vsel %vm1045, %v2255, %v2387
    %v2495 = vsel %vm1045, %v2256, %v2389
    %v2498 = vsel %vm1045, %v2257, %v2391
    %v2500 = vsel %vm1094, %v2474, %v2455
    %v2502 = vsel %vm1094, %v2477, %v2457
    %v2504 = vsel %vm1094, %v2480, %v2459
    %v2506 = vsel %vm1094, %v2483, %v2461
    %v2508 = vsel %vm1094, %v2486, %v2463
    %v2510 = vsel %vm1094, %v2489, %v2465
    %v2512 = vsel %vm1094, %v2492, %v2467
    %v2514 = vsel %vm1094, %v2495, %v2469
    %v2516 = vsel %vm1094, %v2498, %v2471
    %v2517 = vld [vmem:[#allocation3 + $0x48] sm:$0xf]
    %v2518 = vld [vmem:[#allocation3 + $0x4c] sm:$0x1]
    %v2519 = vmul.bf16 %v2158, %v345
    %v2520 = vmul.bf16 %v2159, %v357
    %v2521 = vmul.bf16 %v2160, %v369
    %v2522 = vmul.bf16 %v2161, %v381
    %v2523 = vmul.bf16 %v2162, %v393
    %v2524 = vmul.bf16 %v2163, %v405
    %v2525 = vmul.bf16 %v2164, %v417
    %v2526 = vmul.bf16 %v2165, %v429
    %v2527 = vmul.bf16 %v2166, %v441
    %v2528 = vmul.bf16 %v2167, %v453
    %v2529 = vmul.bf16 %v2168, %v465
    %v2530 = vmul.bf16 %v2169, %v477
    %v2531 = vmul.bf16 %v2170, %v489
    %v2532 = vmul.bf16 %v2171, %v501
    %v2533 = vmul.bf16 %v2172, %v513
    %v2534 = vmul.bf16 %v2173, %v525
    %v2535 = vmul.bf16 %v2517, %v537
    %v2536 = vmul.bf16 %v2518, %v549
    %v2537 = vld [vmem:[#allocation3 + $0x8] sm:$0xe]
    %v2538 = vld [vmem:[#allocation3 + $0x4c] sm:$0x3]
    %v2539 = vmul.bf16 %v2537, %v1764
    %v2540 = vmul.bf16 %v2159, %v1767
    %v2541 = vmul.bf16 %v2160, %v1770
    %v2542 = vmul.bf16 %v2161, %v1773
    %v2543 = vmul.bf16 %v2162, %v1776
    %v2544 = vmul.bf16 %v2163, %v1779
    %v2545 = vmul.bf16 %v2164, %v1782
    %v2546 = vmul.bf16 %v2165, %v1785
    %v2547 = vmul.bf16 %v2166, %v1788
    %v2548 = vmul.bf16 %v2167, %v1791
    %v2549 = vmul.bf16 %v2168, %v1794
    %v2550 = vmul.bf16 %v2169, %v1797
    %v2551 = vmul.bf16 %v2170, %v1800
    %v2552 = vmul.bf16 %v2171, %v1803
    %v2553 = vmul.bf16 %v2172, %v1806
    %v2554 = vmul.bf16 %v2173, %v1809
    %v2555 = vmul.bf16 %v2517, %v1812
    %v2556 = vmul.bf16 %v2538, %v1815
    %v2575 = vunpack.c.l.b16 %v2519
    %v2576 = vunpack.c.l.b16 %v2520
    %v2577 = vunpack.c.l.b16 %v2521
    %v2578 = vunpack.c.l.b16 %v2522
    %v2579 = vunpack.c.l.b16 %v2523
    %v2580 = vunpack.c.l.b16 %v2524
    %v2581 = vunpack.c.l.b16 %v2525
    %v2582 = vunpack.c.l.b16 %v2526
    %v2583 = vunpack.c.l.b16 %v2527
    %v2584 = vunpack.c.l.b16 %v2528
    %v2585 = vunpack.c.l.b16 %v2529
    %v2586 = vunpack.c.l.b16 %v2530
    %v2587 = vunpack.c.l.b16 %v2531
    %v2588 = vunpack.c.l.b16 %v2532
    %v2589 = vunpack.c.l.b16 %v2533
    %v2590 = vunpack.c.l.b16 %v2534
    %v2591 = vunpack.c.l.b16 %v2535
    %v2592 = vunpack.c.l.b16 %v2536
    %v2593 = vpack.c.b16 %v2576, %v2575
    %v2594 = vpack.c.b16 %v2578, %v2577
    %v2595 = vpack.c.b16 %v2580, %v2579
    %v2596 = vpack.c.b16 %v2582, %v2581
    %v2597 = vpack.c.b16 %v2584, %v2583
    %v2598 = vpack.c.b16 %v2586, %v2585
    %v2599 = vpack.c.b16 %v2588, %v2587
    %v2600 = vpack.c.b16 %v2590, %v2589
    %v2601 = vpack.c.b16 %v2592, %v2591
    %v2604 = vunpack.c.l.b16 %v2517
    %v2605 = vunpack.c.l.b16 %v2518
    %v2606 = vpack.c.b16 %v2278, %v2277
    %v2607 = vpack.c.b16 %v2280, %v2279
    %v2608 = vpack.c.b16 %v2282, %v2281
    %v2609 = vpack.c.b16 %v2284, %v2283
    %v2610 = vpack.c.b16 %v2286, %v2285
    %v2611 = vpack.c.b16 %v2288, %v2287
    %v2612 = vpack.c.b16 %v2290, %v2289
    %v2613 = vpack.c.b16 %v2292, %v2291
    %v2614 = vpack.c.b16 %v2605, %v2604
    %v2616 = vshrl.u32 %v2606, 16
    %v2618 = vshll.u32 %v2606, 16
    %v2620 = vrot.slane %v2618, 1
    %v2621 = vor.u32 %v2616, %v2620
    %v2623 = vshll.u32 %v2607, 16
    %v2625 = vrot.slane %v2623, 1
    %v2626 = vsel %vm658, %v2621, %v2625
    %v2627 = vshrl.u32 %v2607, 16
    %v2629 = vor.u32 %v2627, %v2625
    %v2631 = vshll.u32 %v2608, 16
    %v2633 = vrot.slane %v2631, 1
    %v2634 = vsel %vm658, %v2629, %v2633
    %v2635 = vshrl.u32 %v2608, 16
    %v2637 = vor.u32 %v2635, %v2633
    %v2639 = vshll.u32 %v2609, 16
    %v2641 = vrot.slane %v2639, 1
    %v2642 = vsel %vm658, %v2637, %v2641
    %v2643 = vshrl.u32 %v2609, 16
    %v2645 = vor.u32 %v2643, %v2641
    %v2647 = vshll.u32 %v2610, 16
    %v2649 = vrot.slane %v2647, 1
    %v2650 = vsel %vm658, %v2645, %v2649
    %v2651 = vshrl.u32 %v2610, 16
    %v2653 = vor.u32 %v2651, %v2649
    %v2655 = vshll.u32 %v2611, 16
    %v2657 = vrot.slane %v2655, 1
    %v2658 = vsel %vm658, %v2653, %v2657
    %v2659 = vshrl.u32 %v2611, 16
    %v2661 = vor.u32 %v2659, %v2657
    %v2663 = vshll.u32 %v2612, 16
    %v2665 = vrot.slane %v2663, 1
    %v2666 = vsel %vm658, %v2661, %v2665
    %v2667 = vshrl.u32 %v2612, 16
    %v2669 = vor.u32 %v2667, %v2665
    %v2671 = vshll.u32 %v2613, 16
    %v2673 = vrot.slane %v2671, 1
    %v2674 = vsel %vm658, %v2669, %v2673
    %v2675 = vshrl.u32 %v2613, 16
    %v2677 = vor.u32 %v2675, %v2673
    %v2679 = vshll.u32 %v2614, 16
    %v2681 = vrot.slane %v2679, 1
    %v2682 = vsel %vm658, %v2677, %v2681
    %v2683 = vshrl.u32 %v2614, 16
    %v2685 = vor.u32 %v2683, %v2681
    %2686 = vrot.lane.b32.xlu0 %v2626, 32
    %v2687 = vpop.permute.xlu0 %2686
    %2688 = vrot.lane.b32.xlu0 %v2634, 32
    %v2689 = vpop.permute.xlu0 %2688
    %2690 = vrot.lane.b32.xlu0 %v2642, 32
    %v2691 = vpop.permute.xlu0 %2690
    %2692 = vrot.lane.b32.xlu0 %v2650, 32
    %v2693 = vpop.permute.xlu0 %2692
    %2694 = vrot.lane.b32.xlu0 %v2658, 32
    %v2695 = vpop.permute.xlu0 %2694
    %2696 = vrot.lane.b32.xlu0 %v2666, 32
    %v2697 = vpop.permute.xlu0 %2696
    %2698 = vrot.lane.b32.xlu0 %v2674, 32
    %v2699 = vpop.permute.xlu0 %2698
    %2700 = vrot.lane.b32.xlu0 %v2682, 32
    %v2701 = vpop.permute.xlu0 %2700
    %2702 = vrot.lane.b32.xlu0 %v2685, 32
    %v2703 = vpop.permute.xlu0 %2702
    %v2722 = vunpack.c.l.b16 %v2539
    %v2723 = vunpack.c.l.b16 %v2540
    %v2724 = vunpack.c.l.b16 %v2541
    %v2725 = vunpack.c.l.b16 %v2542
    %v2726 = vunpack.c.l.b16 %v2543
    %v2727 = vunpack.c.l.b16 %v2544
    %v2728 = vunpack.c.l.b16 %v2545
    %v2729 = vunpack.c.l.b16 %v2546
    %v2730 = vunpack.c.l.b16 %v2547
    %v2731 = vunpack.c.l.b16 %v2548
    %v2732 = vunpack.c.l.b16 %v2549
    %v2733 = vunpack.c.l.b16 %v2550
    %v2734 = vunpack.c.l.b16 %v2551
    %v2735 = vunpack.c.l.b16 %v2552
    %v2736 = vunpack.c.l.b16 %v2553
    %v2737 = vunpack.c.l.b16 %v2554
    %v2738 = vunpack.c.l.b16 %v2555
    %v2739 = vunpack.c.l.b16 %v2556
    %v2740 = vpack.c.b16 %v2723, %v2722
    %v2741 = vpack.c.b16 %v2725, %v2724
    %v2742 = vpack.c.b16 %v2727, %v2726
    %v2743 = vpack.c.b16 %v2729, %v2728
    %v2744 = vpack.c.b16 %v2731, %v2730
    %v2745 = vpack.c.b16 %v2733, %v2732
    %v2746 = vpack.c.b16 %v2735, %v2734
    %v2747 = vpack.c.b16 %v2737, %v2736
    %v2748 = vpack.c.b16 %v2739, %v2738
    %v2749 = vrot.slane %v2740, 1
    %v2750 = vrot.slane %v2741, 1
    %v2751 = vsel %vm2076, %v2749, %v2750
    %v2752 = vrot.slane %v2742, 1
    %v2753 = vsel %vm2076, %v2750, %v2752
    %v2754 = vrot.slane %v2743, 1
    %v2755 = vsel %vm2076, %v2752, %v2754
    %v2756 = vrot.slane %v2744, 1
    %v2757 = vsel %vm2076, %v2754, %v2756
    %v2758 = vrot.slane %v2745, 1
    %v2759 = vsel %vm2076, %v2756, %v2758
    %v2760 = vrot.slane %v2746, 1
    %v2761 = vsel %vm2076, %v2758, %v2760
    %v2762 = vrot.slane %v2747, 1
    %v2763 = vsel %vm2076, %v2760, %v2762
    %v2764 = vrot.slane %v2748, 1
    %v2765 = vsel %vm2076, %v2762, %v2764
    %2766 = vrot.lane.b32.xlu0 %v2751, 64
    %v2767 = vpop.permute.xlu0 %2766
    %2768 = vrot.lane.b32.xlu0 %v2753, 64
    %v2769 = vpop.permute.xlu0 %2768
    %2770 = vrot.lane.b32.xlu0 %v2755, 64
    %v2771 = vpop.permute.xlu0 %2770
    %2772 = vrot.lane.b32.xlu0 %v2757, 64
    %v2773 = vpop.permute.xlu0 %2772
    %2774 = vrot.lane.b32.xlu0 %v2759, 64
    %v2775 = vpop.permute.xlu0 %2774
    %2776 = vrot.lane.b32.xlu0 %v2761, 64
    %v2777 = vpop.permute.xlu0 %2776
    %2778 = vrot.lane.b32.xlu0 %v2763, 64
    %v2779 = vpop.permute.xlu0 %2778
    %2780 = vrot.lane.b32.xlu0 %v2765, 64
    %v2781 = vpop.permute.xlu0 %2780
    %2782 = vrot.lane.b32.xlu0 %v2764, 64
    %v2783 = vpop.permute.xlu0 %2782
    %v2786 = vsel %vm1045, %v2593, %v2687
    %v2789 = vsel %vm1045, %v2594, %v2689
    %v2792 = vsel %vm1045, %v2595, %v2691
    %v2795 = vsel %vm1045, %v2596, %v2693
    %v2798 = vsel %vm1045, %v2597, %v2695
    %v2801 = vsel %vm1045, %v2598, %v2697
    %v2804 = vsel %vm1045, %v2599, %v2699
    %v2807 = vsel %vm1045, %v2600, %v2701
    %v2810 = vsel %vm1045, %v2601, %v2703
    %v2812 = vsel %vm1094, %v2786, %v2767
    %v2814 = vsel %vm1094, %v2789, %v2769
    %v2816 = vsel %vm1094, %v2792, %v2771
    %v2818 = vsel %vm1094, %v2795, %v2773
    %v2820 = vsel %vm1094, %v2798, %v2775
    %v2822 = vsel %vm1094, %v2801, %v2777
    %v2824 = vsel %vm1094, %v2804, %v2779
    %v2826 = vsel %vm1094, %v2807, %v2781
    %v2828 = vsel %vm1094, %v2810, %v2783
    %2838 = vrot.lane.b32.xlu0 %v2500, 96
    %v2839 = vpop.permute.xlu0 %2838
    %2840 = vrot.lane.b32.xlu0 %v2502, 96
    %v2841 = vpop.permute.xlu0 %2840
    %2842 = vrot.lane.b32.xlu0 %v2504, 96
    %v2843 = vpop.permute.xlu0 %2842
    %2844 = vrot.lane.b32.xlu0 %v2506, 96
    %v2845 = vpop.permute.xlu0 %2844
    %2846 = vrot.lane.b32.xlu0 %v2508, 96
    %v2847 = vpop.permute.xlu0 %2846
    %2848 = vrot.lane.b32.xlu0 %v2510, 96
    %v2849 = vpop.permute.xlu0 %2848
    %2850 = vrot.lane.b32.xlu0 %v2512, 96
    %v2851 = vpop.permute.xlu0 %2850
    %2852 = vrot.lane.b32.xlu0 %v2514, 96
    %v2853 = vpop.permute.xlu0 %2852
    %2854 = vrot.lane.b32.xlu0 %v2516, 96
    %v2855 = vpop.permute.xlu0 %2854
    %2865 = vrot.lane.b32.xlu0 %v2812, 64
    %v2866 = vpop.permute.xlu0 %2865
    %2867 = vrot.lane.b32.xlu0 %v2814, 64
    %v2868 = vpop.permute.xlu0 %2867
    %2869 = vrot.lane.b32.xlu0 %v2816, 64
    %v2870 = vpop.permute.xlu0 %2869
    %2871 = vrot.lane.b32.xlu0 %v2818, 64
    %v2872 = vpop.permute.xlu0 %2871
    %2873 = vrot.lane.b32.xlu0 %v2820, 64
    %v2874 = vpop.permute.xlu0 %2873
    %2875 = vrot.lane.b32.xlu0 %v2822, 64
    %v2876 = vpop.permute.xlu0 %2875
    %2877 = vrot.lane.b32.xlu0 %v2824, 64
    %v2878 = vpop.permute.xlu0 %2877
    %2879 = vrot.lane.b32.xlu0 %v2826, 64
    %v2880 = vpop.permute.xlu0 %2879
    %2881 = vrot.lane.b32.xlu0 %v2828, 64
    %v2882 = vpop.permute.xlu0 %2881
    %vm2883 = vcmask 785408
    %v2885 = vsel %vm2883, %v2140, %v2839
    %v2888 = vsel %vm2883, %v2142, %v2841
    %v2891 = vsel %vm2883, %v2144, %v2843
    %v2894 = vsel %vm2883, %v2146, %v2845
    %v2897 = vsel %vm2883, %v2148, %v2847
    %v2900 = vsel %vm2883, %v2150, %v2849
    %v2903 = vsel %vm2883, %v2152, %v2851
    %v2906 = vsel %vm2883, %v2154, %v2853
    %v2909 = vsel %vm2883, %v2156, %v2855
    %v2912 = vsel %vm1094, %v2839, %v2866
    %v2915 = vsel %vm1094, %v2841, %v2868
    %v2918 = vsel %vm1094, %v2843, %v2870
    %v2921 = vsel %vm1094, %v2845, %v2872
    %v2924 = vsel %vm1094, %v2847, %v2874
    %v2927 = vsel %vm1094, %v2849, %v2876
    %v2930 = vsel %vm1094, %v2851, %v2878
    %v2933 = vsel %vm1094, %v2853, %v2880
    %v2936 = vsel %vm1094, %v2855, %v2882
    %v2939 = vlaneseq
    %v2940 = vshrl.u32 %v2939, 7
    %v2941 = vsub.s32 0, %v2940
    %v2942 = vrot.slane %v1491, %v2941
    %v2980 = vunpack.c.l.b16 %v1455
    %v2981 = vunpack.c.l.b16 %v1456
    %v2982 = vunpack.c.l.b16 %v1457
    %v2983 = vunpack.c.l.b16 %v1458
    %v2984 = vunpack.c.l.b16 %v1459
    %v2985 = vunpack.c.l.b16 %v1460
    %v2986 = vunpack.c.l.b16 %v1461
    %v2987 = vunpack.c.l.b16 %v1462
    %v2988 = vunpack.c.l.b16 %v1463
    %v2989 = vunpack.c.l.b16 %v1464
    %v2990 = vunpack.c.l.b16 %v1465
    %v2991 = vunpack.c.l.b16 %v1466
    %v2992 = vunpack.c.l.b16 %v1467
    %v2993 = vunpack.c.l.b16 %v1468
    %v2994 = vunpack.c.l.b16 %v1469
    %v2995 = vunpack.c.l.b16 %v1470
    %v2996 = vunpack.c.l.b16 %v1471
    %v2997 = vunpack.c.l.b16 %v1472
    %v2998 = vunpack.c.l.b16 %v1473
    %v2999 = vunpack.c.l.b16 %v1474
    %v3000 = vunpack.c.l.b16 %v1475
    %v3001 = vunpack.c.l.b16 %v1476
    %v3002 = vunpack.c.l.b16 %v1477
    %v3003 = vunpack.c.l.b16 %v1478
    %v3004 = vunpack.c.l.b16 %v1479
    %v3005 = vunpack.c.l.b16 %v1480
    %v3006 = vunpack.c.l.b16 %v1481
    %v3007 = vunpack.c.l.b16 %v1482
    %v3008 = vunpack.c.l.b16 %v1483
    %v3009 = vunpack.c.l.b16 %v1484
    %v3010 = vunpack.c.l.b16 %v1485
    %v3011 = vunpack.c.l.b16 %v1486
    %v3012 = vunpack.c.l.b16 %v1487
    %v3013 = vunpack.c.l.b16 %v1488
    %v3014 = vunpack.c.l.b16 %v1489
    %v3015 = vunpack.c.l.b16 %v1490
    %v3016 = vpack.c.b16 %v2981, %v2980
    %v3017 = vpack.c.b16 %v2983, %v2982
    %v3018 = vpack.c.b16 %v2985, %v2984
    %v3019 = vpack.c.b16 %v2987, %v2986
    %v3020 = vpack.c.b16 %v2989, %v2988
    %v3021 = vpack.c.b16 %v2991, %v2990
    %v3022 = vpack.c.b16 %v2993, %v2992
    %v3023 = vpack.c.b16 %v2995, %v2994
    %v3024 = vpack.c.b16 %v2997, %v2996
    %v3025 = vpack.c.b16 %v2999, %v2998
    %v3026 = vpack.c.b16 %v3001, %v3000
    %v3027 = vpack.c.b16 %v3003, %v3002
    %v3028 = vpack.c.b16 %v3005, %v3004
    %v3029 = vpack.c.b16 %v3007, %v3006
    %v3030 = vpack.c.b16 %v3009, %v3008
    %v3031 = vpack.c.b16 %v3011, %v3010
    %v3032 = vpack.c.b16 %v3013, %v3012
    %v3033 = vpack.c.b16 %v3015, %v3014
    %v3052 = vsel %vm1045, %v2866, 0
    %v3054 = vsel %vm1045, %v2868, 0
    %v3056 = vsel %vm1045, %v2870, 0
    %v3058 = vsel %vm1045, %v2872, 0
    %v3060 = vsel %vm1045, %v2874, 0
    %v3062 = vsel %vm1045, %v2876, 0
    %v3064 = vsel %vm1045, %v2878, 0
    %v3066 = vsel %vm1045, %v2880, 0
    %v3068 = vsel %vm1045, %v2882, 0
    %3070 = vmatprep.subr.bf16.mxu0 0
    %3071 = vmatpush1.bf16.msra.mxu0 %v3016
    %3072 = vmatprep.subr.bf16.mxu0 0
    %3073 = vmatpush1.bf16.msra.mxu0 %v3017
    %3074 = vmatprep.subr.bf16.mxu0 0
    %3075 = vmatpush1.bf16.msra.mxu0 %v3018
    %3076 = vmatprep.subr.bf16.mxu0 0
    %3077 = vmatpush1.bf16.msra.mxu0 %v3019
    %3078 = vmatprep.subr.bf16.mxu0 0
    %3079 = vmatpush1.bf16.msra.mxu0 %v3020
    %3080 = vmatprep.subr.bf16.mxu0 0
    %3081 = vmatpush1.bf16.msra.mxu0 %v3021
    %3082 = vmatprep.subr.bf16.mxu0 0
    %3083 = vmatpush1.bf16.msra.mxu0 %v3022
    %3084 = vmatprep.subr.bf16.mxu0 0
    %3085 = vmatpush1.bf16.msra.mxu0 %v3023
    %3086 = vmatprep.subr.bf16.mxu0 0
    %3087 = vmatpush1.bf16.msra.mxu0 %v3024
    %3088 = vmatprep.subr.bf16.mxu0 0
    %3089 = vmatpush1.bf16.msra.mxu0 %v3025
    %3090 = vmatprep.subr.bf16.mxu0 0
    %3091 = vmatpush1.bf16.msra.mxu0 %v3026
    %3092 = vmatprep.subr.bf16.mxu0 0
    %3093 = vmatpush1.bf16.msra.mxu0 %v3027
    %3094 = vmatprep.subr.bf16.mxu0 0
    %3095 = vmatpush1.bf16.msra.mxu0 %v3028
    %3096 = vmatprep.subr.bf16.mxu0 0
    %3097 = vmatpush1.bf16.msra.mxu0 %v3029
    %3098 = vmatprep.subr.bf16.mxu0 0
    %3099 = vmatpush1.bf16.msra.mxu0 %v3030
    %3100 = vmatprep.subr.bf16.mxu0 0
    %3101 = vmatpush1.bf16.msra.mxu0 %v3031
    %3102 = vmatprep.mubr.bf16.mxu0 %v2912
    %3103 = vmatmul.mubr.bf16.gmra.mrb[0].mxu0 %v2885
    %v3104 = vpop.f32.mrb[0].mxu0
    %v3105 = vadd.f32 %v2942, %v3104
    %v3106 = vpop.f32.mrb[0].mxu0
    %v3107 = vpop.f32.mrb[0].mxu0
    %v3108 = vadd.f32 %v2942, %v3107
    %v3109 = vpop.f32.mrb[0].mxu0
    %3110 = vmatprep.mubr.bf16.mxu0 %v2915
    %3111 = vmatmul.mubr.bf16.gmra.mrb[0].mxu0 %v2888
    %v3112 = vpop.f32.mrb[0].mxu0
    %v3113 = vadd.f32 %v2942, %v3112
    %v3114 = vpop.f32.mrb[0].mxu0
    %v3115 = vpop.f32.mrb[0].mxu0
    %v3116 = vadd.f32 %v2942, %v3115
    %v3117 = vpop.f32.mrb[0].mxu0
    %3118 = vmatprep.mubr.bf16.mxu0 %v2918
    %3119 = vmatmul.mubr.bf16.gmra.mrb[0].mxu0 %v2891
    %v3120 = vpop.f32.mrb[0].mxu0
    %v3121 = vadd.f32 %v2942, %v3120
    %v3122 = vpop.f32.mrb[0].mxu0
    %v3123 = vpop.f32.mrb[0].mxu0
    %v3124 = vadd.f32 %v2942, %v3123
    %v3125 = vpop.f32.mrb[0].mxu0
    %3126 = vmatprep.mubr.bf16.mxu0 %v2921
    %3127 = vmatmul.mubr.bf16.gmra.mrb[0].mxu0 %v2894
    %v3128 = vpop.f32.mrb[0].mxu0
    %v3129 = vadd.f32 %v2942, %v3128
    %v3130 = vpop.f32.mrb[0].mxu0
    %v3131 = vpop.f32.mrb[0].mxu0
    %v3132 = vadd.f32 %v2942, %v3131
    %v3133 = vpop.f32.mrb[0].mxu0
    %3134 = vmatprep.mubr.bf16.mxu0 %v2924
    %3135 = vmatmul.mubr.bf16.gmra.mrb[0].mxu0 %v2897
    %v3136 = vpop.f32.mrb[0].mxu0
    %v3137 = vpop.f32.mrb[0].mxu0
    %v3138 = vpop.f32.mrb[0].mxu0
    %v3139 = vadd.f32 %v2942, %v3138
    %v3140 = vpop.f32.mrb[0].mxu0
    %3141 = vmatprep.mubr.bf16.mxu0 %v2927
    %3142 = vmatmul.mubr.bf16.gmra.mrb[0].mxu0 %v2900
    %v3143 = vpop.f32.mrb[0].mxu0
    %v3144 = vadd.f32 %v2942, %v3143
    %v3145 = vpop.f32.mrb[0].mxu0
    %v3146 = vpop.f32.mrb[0].mxu0
    %v3147 = vadd.f32 %v2942, %v3146
    %v3148 = vpop.f32.mrb[0].mxu0
    %3149 = vmatprep.mubr.bf16.mxu0 %v2930
    %3150 = vmatmul.mubr.bf16.gmra.mrb[0].mxu0 %v2903
    %v3151 = vpop.f32.mrb[0].mxu0
    %v3152 = vadd.f32 %v2942, %v3151
    %v3153 = vpop.f32.mrb[0].mxu0
    %v3154 = vpop.f32.mrb[0].mxu0
    %v3155 = vadd.f32 %v2942, %v3154
    %v3156 = vpop.f32.mrb[0].mxu0
    %3157 = vmatprep.mubr.bf16.mxu0 %v2933
    %3158 = vmatmul.mubr.bf16.gmra.mrb[0].mxu0 %v2906
    %v3159 = vpop.f32.mrb[0].mxu0
    %v3160 = vadd.f32 %v2942, %v3159
    %v3161 = vpop.f32.mrb[0].mxu0
    %v3162 = vpop.f32.mrb[0].mxu0
    %v3163 = vadd.f32 %v2942, %v3162
    %v3164 = vpop.f32.mrb[0].mxu0
    %3165 = vmatprep.mubr.bf16.mxu0 %v2936
    %3166 = vmatmul.mubr.bf16.gmra.mrb[0].mxu0 %v2909
    %v3167 = vpop.f32.mrb[0].mxu0
    %v3168 = vadd.f32 %v2942, %v3167
    %v3169 = vpop.f32.mrb[0].mxu0
    %v3170 = vpop.f32.mrb[0].mxu0
    %v3171 = vadd.f32 %v2942, %v3170
    %v3172 = vpop.f32.mrb[0].mxu0
    %3173 = vdwg.mxu0
    %3174 = vmatprep.subr.bf16.mxu0 0
    %3175 = vmatpush1.bf16.msra.mxu0 %v3032
    %3176 = vmatprep.subr.bf16.mxu0 0
    %3177 = vmatpush1.bf16.msra.mxu0 %v3033
    %3178 = vmatprep.subr.bf16.mxu0 0
    %3179 = vmatpush1.bf16.msra.mxu0 0
    %3180 = vmatprep.subr.bf16.mxu0 0
    %3181 = vmatpush1.bf16.msra.mxu0 0
    %3182 = vmatprep.subr.bf16.mxu0 0
    %3183 = vmatpush1.bf16.msra.mxu0 0
    %3184 = vmatprep.subr.bf16.mxu0 0
    %3185 = vmatpush1.bf16.msra.mxu0 0
    %3186 = vmatprep.subr.bf16.mxu0 0
    %3187 = vmatpush1.bf16.msra.mxu0 0
    %3188 = vmatprep.subr.bf16.mxu0 0
    %3189 = vmatpush1.bf16.msra.mxu0 0
    %3190 = vmatprep.subr.bf16.mxu0 0
    %3191 = vmatpush1.bf16.msra.mxu0 0
    %3192 = vmatprep.subr.bf16.mxu0 0
    %3193 = vmatpush1.bf16.msra.mxu0 0
    %3194 = vmatprep.subr.bf16.mxu0 0
    %3195 = vmatpush1.bf16.msra.mxu0 0
    %3196 = vmatprep.subr.bf16.mxu0 0
    %3197 = vmatpush1.bf16.msra.mxu0 0
    %3198 = vmatprep.subr.bf16.mxu0 0
    %3199 = vmatpush1.bf16.msra.mxu0 0
    %3200 = vmatprep.subr.bf16.mxu0 0
    %3201 = vmatpush1.bf16.msra.mxu0 0
    %3202 = vmatprep.subr.bf16.mxu0 0
    %3203 = vmatpush1.bf16.msra.mxu0 0
    %3204 = vmatprep.subr.bf16.mxu0 0
    %3205 = vmatpush1.bf16.msra.mxu0 0
    %3206 = vmatprep.mubr.bf16.mxu0 0
    %3207 = vmatmul.mubr.bf16.gmra.mrb[0].mxu0 %v3052
    %v3208 = vpop.f32.mrb[0].mxu0
    %v3209 = vadd.f32 %v3105, %v3208
    %v3210 = vpop.f32.mrb[0].mxu0
    %v3211 = vpop.f32.mrb[0].mxu0
    %v3212 = vadd.f32 %v3108, %v3211
    %v3213 = vpop.f32.mrb[0].mxu0
    %3214 = vmatprep.mubr.bf16.mxu0 0
    %3215 = vmatmul.mubr.bf16.gmra.mrb[0].mxu0 %v3054
    %v3216 = vpop.f32.mrb[0].mxu0
    %v3217 = vadd.f32 %v3113, %v3216
    %v3218 = vpop.f32.mrb[0].mxu0
    %v3219 = vpop.f32.mrb[0].mxu0
    %v3220 = vadd.f32 %v3116, %v3219
    %v3221 = vpop.f32.mrb[0].mxu0
    %3222 = vmatprep.mubr.bf16.mxu0 0
    %3223 = vmatmul.mubr.bf16.gmra.mrb[0].mxu0 %v3056
    %v3224 = vpop.f32.mrb[0].mxu0
    %v3225 = vadd.f32 %v3121, %v3224
    %v3226 = vpop.f32.mrb[0].mxu0
    %v3227 = vpop.f32.mrb[0].mxu0
    %v3228 = vadd.f32 %v3124, %v3227
    %v3229 = vpop.f32.mrb[0].mxu0
    %3230 = vmatprep.mubr.bf16.mxu0 0
    %3231 = vmatmul.mubr.bf16.gmra.mrb[0].mxu0 %v3058
    %v3232 = vpop.f32.mrb[0].mxu0
    %v3233 = vadd.f32 %v3129, %v3232
    %v3234 = vpop.f32.mrb[0].mxu0
    %v3235 = vpop.f32.mrb[0].mxu0
    %v3236 = vadd.f32 %v3132, %v3235
    %v3237 = vpop.f32.mrb[0].mxu0
    %3238 = vmatprep.mubr.bf16.mxu0 0
    %3239 = vmatmul.mubr.bf16.gmra.mrb[0].mxu0 %v3060
    %v3240 = vpop.f32.mrb[0].mxu0
    %v3241 = vpop.f32.mrb[0].mxu0
    %v3242 = vpop.f32.mrb[0].mxu0
    %v3243 = vadd.f32 %v3139, %v3242
    %v3244 = vpop.f32.mrb[0].mxu0
    %3245 = vmatprep.mubr.bf16.mxu0 0
    %3246 = vmatmul.mubr.bf16.gmra.mrb[0].mxu0 %v3062
    %v3247 = vpop.f32.mrb[0].mxu0
    %v3248 = vadd.f32 %v3144, %v3247
    %v3249 = vpop.f32.mrb[0].mxu0
    %v3250 = vpop.f32.mrb[0].mxu0
    %v3251 = vadd.f32 %v3147, %v3250
    %v3252 = vpop.f32.mrb[0].mxu0
    %3253 = vmatprep.mubr.bf16.mxu0 0
    %3254 = vmatmul.mubr.bf16.gmra.mrb[0].mxu0 %v3064
    %v3255 = vpop.f32.mrb[0].mxu0
    %v3256 = vadd.f32 %v3152, %v3255
    %v3257 = vpop.f32.mrb[0].mxu0
    %v3258 = vpop.f32.mrb[0].mxu0
    %v3259 = vadd.f32 %v3155, %v3258
    %v3260 = vpop.f32.mrb[0].mxu0
    %3261 = vmatprep.mubr.bf16.mxu0 0
    %3262 = vmatmul.mubr.bf16.gmra.mrb[0].mxu0 %v3066
    %v3263 = vpop.f32.mrb[0].mxu0
    %v3264 = vadd.f32 %v3160, %v3263
    %v3265 = vpop.f32.mrb[0].mxu0
    %v3266 = vpop.f32.mrb[0].mxu0
    %v3267 = vadd.f32 %v3163, %v3266
    %v3268 = vpop.f32.mrb[0].mxu0
    %3269 = vmatprep.mubr.bf16.mxu0 0
    %3270 = vmatmul.mubr.bf16.gmra.mrb[0].mxu0 %v3068
    %v3271 = vpop.f32.mrb[0].mxu0
    %v3272 = vadd.f32 %v3168, %v3271
    %v3273 = vpop.f32.mrb[0].mxu0
    %v3274 = vpop.f32.mrb[0].mxu0
    %v3275 = vadd.f32 %v3171, %v3274
    %v3276 = vpop.f32.mrb[0].mxu0
    %3277 = vdwg.mxu0
    %vm3278 = vcmp.gt.f32.partialorder %v3209, 0.0
    %vm3279 = vcmp.gt.f32.partialorder %v3212, 0.0
    %vm3280 = vcmp.gt.f32.partialorder %v3217, 0.0
    %vm3281 = vcmp.gt.f32.partialorder %v3220, 0.0
    %vm3282 = vcmp.gt.f32.partialorder %v3225, 0.0
    %vm3283 = vcmp.gt.f32.partialorder %v3228, 0.0
    %vm3284 = vcmp.gt.f32.partialorder %v3233, 0.0
    %vm3285 = vcmp.gt.f32.partialorder %v3236, 0.0
    %vm3286 = vcmp.gt.f32.partialorder %v3243, 0.0
    %vm3287 = vcmp.gt.f32.partialorder %v3248, 0.0
    %vm3288 = vcmp.gt.f32.partialorder %v3251, 0.0
    %vm3289 = vcmp.gt.f32.partialorder %v3256, 0.0
    %vm3290 = vcmp.gt.f32.partialorder %v3259, 0.0
    %vm3291 = vcmp.gt.f32.partialorder %v3264, 0.0
    %vm3292 = vcmp.gt.f32.partialorder %v3267, 0.0
    %vm3293 = vcmp.gt.f32.partialorder %v3272, 0.0
    %vm3294 = vcmp.gt.f32.partialorder %v3275, 0.0
    %v3295 = vmin.f32 %v3209, 0.0
    %v3296 = vmin.f32 %v3212, 0.0
    %v3297 = vmin.f32 %v3217, 0.0
    %v3298 = vmin.f32 %v3220, 0.0
    %v3299 = vmin.f32 %v3225, 0.0
    %v3300 = vmin.f32 %v3228, 0.0
    %v3301 = vmin.f32 %v3233, 0.0
    %v3302 = vmin.f32 %v3236, 0.0
    %v3303 = vmin.f32 %v3243, 0.0
    %v3304 = vmin.f32 %v3248, 0.0
    %v3305 = vmin.f32 %v3251, 0.0
    %v3306 = vmin.f32 %v3256, 0.0
    %v3307 = vmin.f32 %v3259, 0.0
    %v3308 = vmin.f32 %v3264, 0.0
    %v3309 = vmin.f32 %v3267, 0.0
    %v3310 = vmin.f32 %v3272, 0.0
    %v3311 = vmin.f32 %v3275, 0.0
    %v3312 = vmul.f32 %v3295, 1.442695
    %v3313 = vpow.pop %v3312
    %v3314 = vmul.f32 %v3296, 1.442695
    %v3315 = vpow.pop %v3314
    %v3316 = vmul.f32 %v3297, 1.442695
    %v3317 = vpow.pop %v3316
    %v3318 = vmul.f32 %v3298, 1.442695
    %v3319 = vpow.pop %v3318
    %v3320 = vmul.f32 %v3299, 1.442695
    %v3321 = vpow.pop %v3320
    %v3322 = vmul.f32 %v3300, 1.442695
    %v3323 = vpow.pop %v3322
    %v3324 = vmul.f32 %v3301, 1.442695
    %v3325 = vpow.pop %v3324
    %v3326 = vmul.f32 %v3302, 1.442695
    %v3327 = vpow.pop %v3326
    %v3328 = vmul.f32 %v3303, 1.442695
    %v3329 = vpow.pop %v3328
    %v3330 = vmul.f32 %v3304, 1.442695
    %v3331 = vpow.pop %v3330
    %v3332 = vmul.f32 %v3305, 1.442695
    %v3333 = vpow.pop %v3332
    %v3334 = vmul.f32 %v3306, 1.442695
    %v3335 = vpow.pop %v3334
    %v3336 = vmul.f32 %v3307, 1.442695
    %v3337 = vpow.pop %v3336
    %v3338 = vmul.f32 %v3308, 1.442695
    %v3339 = vpow.pop %v3338
    %v3340 = vmul.f32 %v3309, 1.442695
    %v3341 = vpow.pop %v3340
    %v3342 = vmul.f32 %v3310, 1.442695
    %v3343 = vpow.pop %v3342
    %v3344 = vmul.f32 %v3311, 1.442695
    %v3345 = vpow.pop %v3344
    %v3346 = vsub.f32 %v3313, 1.0
    %v3347 = vsub.f32 %v3315, 1.0
    %v3348 = vsub.f32 %v3317, 1.0
    %v3349 = vsub.f32 %v3319, 1.0
    %v3350 = vsub.f32 %v3321, 1.0
    %v3351 = vsub.f32 %v3323, 1.0
    %v3352 = vsub.f32 %v3325, 1.0
    %v3353 = vsub.f32 %v3327, 1.0
    %v3354 = vsub.f32 %v3329, 1.0
    %v3355 = vsub.f32 %v3331, 1.0
    %v3356 = vsub.f32 %v3333, 1.0
    %v3357 = vsub.f32 %v3335, 1.0
    %v3358 = vsub.f32 %v3337, 1.0
    %v3359 = vsub.f32 %v3339, 1.0
    %v3360 = vsub.f32 %v3341, 1.0
    %v3361 = vsub.f32 %v3343, 1.0
    %v3362 = vsub.f32 %v3345, 1.0
    %v3363 = vsel %vm3278, %v3209, %v3346
    %v3364 = vsel %vm3279, %v3212, %v3347
    %v3365 = vsel %vm3280, %v3217, %v3348
    %v3366 = vsel %vm3281, %v3220, %v3349
    %v3367 = vsel %vm3282, %v3225, %v3350
    %v3368 = vsel %vm3283, %v3228, %v3351
    %v3369 = vsel %vm3284, %v3233, %v3352
    %v3370 = vsel %vm3285, %v3236, %v3353
    %v3371 = vsel %vm3286, %v3243, %v3354
    %v3372 = vsel %vm3287, %v3248, %v3355
    %v3373 = vsel %vm3288, %v3251, %v3356
    %v3374 = vsel %vm3289, %v3256, %v3357
    %v3375 = vsel %vm3290, %v3259, %v3358
    %v3376 = vsel %vm3291, %v3264, %v3359
    %v3377 = vsel %vm3292, %v3267, %v3360
    %v3378 = vsel %vm3293, %v3272, %v3361
    %v3379 = vsel %vm3294, %v3275, %v3362
    %v3380 = vpack.c.bf16 %v3364, %v3363
    %v3381 = vpack.c.bf16 %v3366, %v3365
    %v3382 = vpack.c.bf16 %v3368, %v3367
    %v3383 = vpack.c.bf16 %v3370, %v3369
    %v3388 = vunpack.c.l.b16 %v3380
    %v3389 = vunpack.c.h.b16 %v3380
    %v3390 = vunpack.c.l.b16 %v3381
    %v3391 = vunpack.c.h.b16 %v3381
    %v3392 = vunpack.c.l.b16 %v3382
    %v3393 = vunpack.c.h.b16 %v3382
    %v3394 = vunpack.c.l.b16 %v3383
    %v3395 = vunpack.c.h.b16 %v3383
    %v3396 = vpack.c.b16 %v3388, %v3388
    %v3397 = vpack.c.b16 %v3389, %v3389
    %v3398 = vpack.c.b16 %v3390, %v3390
    %v3399 = vpack.c.b16 %v3391, %v3391
    %v3400 = vpack.c.b16 %v3392, %v3392
    %v3401 = vpack.c.b16 %v3393, %v3393
    %v3402 = vpack.c.b16 %v3394, %v3394
    %v3403 = vpack.c.b16 %v3395, %v3395
    %v3405 = vshrl.u32 %v3396, 16
    %v3407 = vrot.slane %v3405, 7
    %v3408 = vshll.u32 %v3396, 16
    %v3410 = vor.u32 %v3407, %v3408
    %v3411 = vrot.slane %v3407, 4
    %v3413 = vshrl.u32 %v3397, 16
    %v3415 = vrot.slane %v3413, 7
    %v3416 = vshll.u32 %v3397, 16
    %v3418 = vor.u32 %v3415, %v3416
    %v3419 = vsel %vm152, %v3411, %v3418
    %v3420 = vrot.slane %v3415, 4
    %v3422 = vshrl.u32 %v3398, 16
    %v3424 = vrot.slane %v3422, 7
    %v3425 = vshll.u32 %v3398, 16
    %v3427 = vor.u32 %v3424, %v3425
    %v3428 = vsel %vm152, %v3420, %v3427
    %v3429 = vrot.slane %v3424, 4
    %v3431 = vshrl.u32 %v3399, 16
    %v3433 = vrot.slane %v3431, 7
    %v3434 = vshll.u32 %v3399, 16
    %v3436 = vor.u32 %v3433, %v3434
    %v3437 = vsel %vm152, %v3429, %v3436
    %v3438 = vrot.slane %v3433, 4
    %v3440 = vshrl.u32 %v3400, 16
    %v3442 = vrot.slane %v3440, 7
    %v3443 = vshll.u32 %v3400, 16
    %v3445 = vor.u32 %v3442, %v3443
    %v3446 = vsel %vm152, %v3438, %v3445
    %v3447 = vrot.slane %v3442, 4
    %v3449 = vshrl.u32 %v3401, 16
    %v3451 = vrot.slane %v3449, 7
    %v3452 = vshll.u32 %v3401, 16
    %v3454 = vor.u32 %v3451, %v3452
    %v3455 = vsel %vm152, %v3447, %v3454
    %v3456 = vrot.slane %v3451, 4
    %v3458 = vshrl.u32 %v3402, 16
    %v3460 = vrot.slane %v3458, 7
    %v3461 = vshll.u32 %v3402, 16
    %v3463 = vor.u32 %v3460, %v3461
    %v3464 = vsel %vm152, %v3456, %v3463
    %v3465 = vrot.slane %v3460, 4
    %v3467 = vshrl.u32 %v3403, 16
    %v3469 = vrot.slane %v3467, 7
    %v3470 = vshll.u32 %v3403, 16
    %v3472 = vor.u32 %v3469, %v3470
    %v3473 = vsel %vm152, %v3465, %v3472
    %v3474 = vrot.slane %v3469, 4
    %v3484 = vld [vmem:[#allocation4 + $0x4] sm:$0xf]
    %v3485 = vsel %vm78, %v3410, %v3484
    %3486 = vst [vmem:[#allocation4 + $0x4] sm:$0xf] %v3485
    %3487 = vst.msk [vmem:[#allocation4 + $0x8] sm:$0xf] %vm58, %v3419
    %3488 = vst.msk [vmem:[#allocation4 + $0xc] sm:$0xf] %vm58, %v3428
    %3489 = vst.msk [vmem:[#allocation4 + $0x10] sm:$0xf] %vm58, %v3437
    %3490 = vst.msk [vmem:[#allocation4 + $0x14] sm:$0xf] %vm58, %v3446
    %3491 = vst.msk [vmem:[#allocation4 + $0x18] sm:$0xf] %vm58, %v3455
    %3492 = vst.msk [vmem:[#allocation4 + $0x1c] sm:$0xf] %vm58, %v3464
    %3493 = vst.msk [vmem:[#allocation4 + $0x20] sm:$0xf] %vm58, %v3473
    %v3494 = vld [vmem:[#allocation4 + $0x24] sm:$0x1]
    %v3495 = vsel %vm61, %v3474, %v3494
    %3496 = vst [vmem:[#allocation4 + $0x24] sm:$0x1] %v3495
    %v3497 = vpack.c.bf16 %v3372, %v3371
    %v3498 = vpack.c.bf16 %v3374, %v3373
    %v3499 = vpack.c.bf16 %v3376, %v3375
    %v3500 = vpack.c.bf16 %v3378, %v3377
    %v3501 = vpack.c.bf16 %v3379, %v3379
    %v3507 = vunpack.c.l.b16 %v3497
    %v3508 = vunpack.c.h.b16 %v3497
    %v3509 = vunpack.c.l.b16 %v3498
    %v3510 = vunpack.c.h.b16 %v3498
    %v3511 = vunpack.c.l.b16 %v3499
    %v3512 = vunpack.c.h.b16 %v3499
    %v3513 = vunpack.c.l.b16 %v3500
    %v3514 = vunpack.c.h.b16 %v3500
    %v3515 = vunpack.c.l.b16 %v3501
    %v3516 = vpack.c.b16 %v3507, %v3507
    %v3517 = vpack.c.b16 %v3508, %v3508
    %v3518 = vpack.c.b16 %v3509, %v3509
    %v3519 = vpack.c.b16 %v3510, %v3510
    %v3520 = vpack.c.b16 %v3511, %v3511
    %v3521 = vpack.c.b16 %v3512, %v3512
    %v3522 = vpack.c.b16 %v3513, %v3513
    %v3523 = vpack.c.b16 %v3514, %v3514
    %v3524 = vpack.c.b16 %v3515, %v3515
    %v3526 = vshrl.u32 %v3516, 16
    %v3528 = vrot.slane %v3526, 7
    %v3529 = vshll.u32 %v3516, 16
    %v3531 = vor.u32 %v3528, %v3529
    %v3532 = vrot.slane %v3528, 4
    %v3534 = vshrl.u32 %v3517, 16
    %v3536 = vrot.slane %v3534, 7
    %v3537 = vshll.u32 %v3517, 16
    %v3539 = vor.u32 %v3536, %v3537
    %v3540 = vsel %vm152, %v3532, %v3539
    %v3541 = vrot.slane %v3536, 4
    %v3543 = vshrl.u32 %v3518, 16
    %v3545 = vrot.slane %v3543, 7
    %v3546 = vshll.u32 %v3518, 16
    %v3548 = vor.u32 %v3545, %v3546
    %v3549 = vsel %vm152, %v3541, %v3548
    %v3550 = vrot.slane %v3545, 4
    %v3552 = vshrl.u32 %v3519, 16
    %v3554 = vrot.slane %v3552, 7
    %v3555 = vshll.u32 %v3519, 16
    %v3557 = vor.u32 %v3554, %v3555
    %v3558 = vsel %vm152, %v3550, %v3557
    %v3559 = vrot.slane %v3554, 4
    %v3561 = vshrl.u32 %v3520, 16
    %v3563 = vrot.slane %v3561, 7
    %v3564 = vshll.u32 %v3520, 16
    %v3566 = vor.u32 %v3563, %v3564
    %v3567 = vsel %vm152, %v3559, %v3566
    %v3568 = vrot.slane %v3563, 4
    %v3570 = vshrl.u32 %v3521, 16
    %v3572 = vrot.slane %v3570, 7
    %v3573 = vshll.u32 %v3521, 16
    %v3575 = vor.u32 %v3572, %v3573
    %v3576 = vsel %vm152, %v3568, %v3575
    %v3577 = vrot.slane %v3572, 4
    %v3579 = vshrl.u32 %v3522, 16
    %v3581 = vrot.slane %v3579, 7
    %v3582 = vshll.u32 %v3522, 16
    %v3584 = vor.u32 %v3581, %v3582
    %v3585 = vsel %vm152, %v3577, %v3584
    %v3586 = vrot.slane %v3581, 4
    %v3588 = vshrl.u32 %v3523, 16
    %v3590 = vrot.slane %v3588, 7
    %v3591 = vshll.u32 %v3523, 16
    %v3593 = vor.u32 %v3590, %v3591
    %v3594 = vsel %vm152, %v3586, %v3593
    %v3595 = vrot.slane %v3590, 4
    %v3597 = vshll.u32 %v3524, 16
    %v3599 = vsel %vm152, %v3595, %v3597
    %3609 = vst.msk [vmem:[#allocation4 + $0x28] sm:$0xe] %vm96, %v3531
    %3610 = vst.msk [vmem:[#allocation4 + $0x2c] sm:$0xf] %vm58, %v3540
    %3611 = vst.msk [vmem:[#allocation4 + $0x30] sm:$0xf] %vm58, %v3549
    %3612 = vst.msk [vmem:[#allocation4 + $0x34] sm:$0xf] %vm58, %v3558
    %3613 = vst.msk [vmem:[#allocation4 + $0x38] sm:$0xf] %vm58, %v3567
    %3614 = vst.msk [vmem:[#allocation4 + $0x3c] sm:$0xf] %vm58, %v3576
    %3615 = vst.msk [vmem:[#allocation4 + $0x40] sm:$0xf] %vm58, %v3585
    %3616 = vst.msk [vmem:[#allocation4 + $0x44] sm:$0xf] %vm58, %v3594
    %3617 = vst.msk [vmem:[#allocation4 + $0x48] sm:$0x1] %vm82, %v3599
    %v3618 = vld [vmem:[%s7] sm:$0xf]
    %v3619 = vld [vmem:[%s7 + $0x4] sm:$0xf]
    %v3620 = vld [vmem:[%s7 + $0x8] sm:$0xf]
    %v3621 = vld [vmem:[%s7 + $0xc] sm:$0xf]
    %v3622 = vld [vmem:[%s7 + $0x10] sm:$0xf]
    %v3623 = vld [vmem:[%s7 + $0x14] sm:$0xf]
    %v3624 = vld [vmem:[%s7 + $0x18] sm:$0xf]
    %v3625 = vld [vmem:[%s7 + $0x1c] sm:$0xf]
    %v3626 = vld [vmem:[%s7 + $0x20] sm:$0xf]
    %v3627 = vld [vmem:[%s7 + $0x24] sm:$0xf]
    %v3628 = vld [vmem:[%s7 + $0x28] sm:$0xf]
    %v3629 = vld [vmem:[%s7 + $0x2c] sm:$0xf]
    %v3630 = vld [vmem:[%s7 + $0x30] sm:$0xf]
    %v3631 = vld [vmem:[%s7 + $0x34] sm:$0xf]
    %v3632 = vld [vmem:[%s7 + $0x38] sm:$0xf]
    %v3633 = vld [vmem:[%s7 + $0x3c] sm:$0xf]
    %v3634 = vld [vmem:[%s7 + $0x40] sm:$0xf]
    %v3635 = vld [vmem:[%s7 + $0x44] sm:$0xf]
    %v3636 = vld [vmem:[%s7 + $0x48] sm:$0xf]
    %v3637 = vld [vmem:[%s7 + $0x4c] sm:$0xf]
    %v3638 = vld [vmem:[%s7 + $0x50] sm:$0xf]
    %v3639 = vld [vmem:[%s7 + $0x54] sm:$0xf]
    %v3640 = vld [vmem:[%s7 + $0x58] sm:$0xf]
    %v3641 = vld [vmem:[%s7 + $0x5c] sm:$0xf]
    %v3642 = vld [vmem:[%s7 + $0x60] sm:$0xf]
    %v3643 = vld [vmem:[%s7 + $0x64] sm:$0xf]
    %v3644 = vld [vmem:[%s7 + $0x68] sm:$0xf]
    %v3645 = vld [vmem:[%s7 + $0x6c] sm:$0xf]
    %v3646 = vld [vmem:[%s7 + $0x70] sm:$0xf]
    %v3647 = vld [vmem:[%s7 + $0x74] sm:$0xf]
    %v3648 = vld [vmem:[%s7 + $0x78] sm:$0xf]
    %v3649 = vld [vmem:[%s7 + $0x7c] sm:$0xf]
    %v3650 = vld [vmem:[%s7 + $0x80] sm:$0xf]
    %v3651 = vld [vmem:[%s7 + $0x84] sm:$0xf]
    %v3652 = vld [vmem:[%s7 + $0x88] sm:$0xf]
    %v3653 = vld [vmem:[%s7 + $0x8c] sm:$0xf]
    %v3654 = vld [vmem:[%s8] sm:$0x1]
    %v3655 = vld [vmem:[#allocation4] sm:$0xf]
    %v3656 = vld [vmem:[#allocation4 + $0x4] sm:$0xf]
    %v3657 = vld [vmem:[#allocation4 + $0x8] sm:$0xf]
    %v3658 = vld [vmem:[#allocation4 + $0xc] sm:$0xf]
    %v3659 = vld [vmem:[#allocation4 + $0x10] sm:$0xf]
    %v3660 = vld [vmem:[#allocation4 + $0x14] sm:$0xf]
    %v3661 = vld [vmem:[#allocation4 + $0x18] sm:$0xf]
    %v3662 = vld [vmem:[#allocation4 + $0x1c] sm:$0xf]
    %v3663 = vld [vmem:[#allocation4 + $0x20] sm:$0xf]
    %v3664 = vld [vmem:[#allocation4 + $0x24] sm:$0xf]
    %v3665 = vld [vmem:[#allocation4 + $0x28] sm:$0xf]
    %v3666 = vld [vmem:[#allocation4 + $0x2c] sm:$0xf]
    %v3667 = vld [vmem:[#allocation4 + $0x30] sm:$0xf]
    %v3668 = vld [vmem:[#allocation4 + $0x34] sm:$0xf]
    %v3669 = vld [vmem:[#allocation4 + $0x38] sm:$0xf]
    %v3670 = vld [vmem:[#allocation4 + $0x3c] sm:$0xf]
    %v3671 = vld [vmem:[#allocation4 + $0x40] sm:$0xf]
    %v3672 = vld [vmem:[#allocation4 + $0x44] sm:$0x1]
    %v3673 = vmul.bf16 %v3655, %v345
    %v3674 = vmul.bf16 %v3656, %v357
    %v3675 = vmul.bf16 %v3657, %v369
    %v3676 = vmul.bf16 %v3658, %v381
    %v3677 = vmul.bf16 %v3659, %v393
    %v3678 = vmul.bf16 %v3660, %v405
    %v3679 = vmul.bf16 %v3661, %v417
    %v3680 = vmul.bf16 %v3662, %v429
    %v3681 = vmul.bf16 %v3663, %v441
    %v3682 = vmul.bf16 %v3664, %v453
    %v3683 = vmul.bf16 %v3665, %v465
    %v3684 = vmul.bf16 %v3666, %v477
    %v3685 = vmul.bf16 %v3667, %v489
    %v3686 = vmul.bf16 %v3668, %v501
    %v3687 = vmul.bf16 %v3669, %v513
    %v3688 = vmul.bf16 %v3670, %v525
    %v3689 = vmul.bf16 %v3671, %v537
    %v3690 = vmul.bf16 %v3672, %v549
    %v3691 = vld [vmem:[#allocation4] sm:$0xe]
    %v3692 = vld [vmem:[#allocation4 + $0x44] sm:$0x3]
    %v3693 = vmul.bf16 %v3691, %v1764
    %v3694 = vmul.bf16 %v3656, %v1767
    %v3695 = vmul.bf16 %v3657, %v1770
    %v3696 = vmul.bf16 %v3658, %v1773
    %v3697 = vmul.bf16 %v3659, %v1776
    %v3698 = vmul.bf16 %v3660, %v1779
    %v3699 = vmul.bf16 %v3661, %v1782
    %v3700 = vmul.bf16 %v3662, %v1785
    %v3701 = vmul.bf16 %v3663, %v1788
    %v3702 = vmul.bf16 %v3664, %v1791
    %v3703 = vmul.bf16 %v3665, %v1794
    %v3704 = vmul.bf16 %v3666, %v1797
    %v3705 = vmul.bf16 %v3667, %v1800
    %v3706 = vmul.bf16 %v3668, %v1803
    %v3707 = vmul.bf16 %v3669, %v1806
    %v3708 = vmul.bf16 %v3670, %v1809
    %v3709 = vmul.bf16 %v3671, %v1812
    %v3710 = vmul.bf16 %v3692, %v1815
    %v3729 = vunpack.c.l.b16 %v3673
    %v3730 = vunpack.c.l.b16 %v3674
    %v3731 = vunpack.c.l.b16 %v3675
    %v3732 = vunpack.c.l.b16 %v3676
    %v3733 = vunpack.c.l.b16 %v3677
    %v3734 = vunpack.c.l.b16 %v3678
    %v3735 = vunpack.c.l.b16 %v3679
    %v3736 = vunpack.c.l.b16 %v3680
    %v3737 = vunpack.c.l.b16 %v3681
    %v3738 = vunpack.c.l.b16 %v3682
    %v3739 = vunpack.c.l.b16 %v3683
    %v3740 = vunpack.c.l.b16 %v3684
    %v3741 = vunpack.c.l.b16 %v3685
    %v3742 = vunpack.c.l.b16 %v3686
    %v3743 = vunpack.c.l.b16 %v3687
    %v3744 = vunpack.c.l.b16 %v3688
    %v3745 = vunpack.c.l.b16 %v3689
    %v3746 = vunpack.c.l.b16 %v3690
    %v3747 = vpack.c.b16 %v3730, %v3729
    %v3748 = vpack.c.b16 %v3732, %v3731
    %v3749 = vpack.c.b16 %v3734, %v3733
    %v3750 = vpack.c.b16 %v3736, %v3735
    %v3751 = vpack.c.b16 %v3738, %v3737
    %v3752 = vpack.c.b16 %v3740, %v3739
    %v3753 = vpack.c.b16 %v3742, %v3741
    %v3754 = vpack.c.b16 %v3744, %v3743
    %v3755 = vpack.c.b16 %v3746, %v3745
    %v3774 = vunpack.c.l.b16 %v3655
    %v3775 = vunpack.c.l.b16 %v3656
    %v3776 = vunpack.c.l.b16 %v3657
    %v3777 = vunpack.c.l.b16 %v3658
    %v3778 = vunpack.c.l.b16 %v3659
    %v3779 = vunpack.c.l.b16 %v3660
    %v3780 = vunpack.c.l.b16 %v3661
    %v3781 = vunpack.c.l.b16 %v3662
    %v3782 = vunpack.c.l.b16 %v3663
    %v3783 = vunpack.c.l.b16 %v3664
    %v3784 = vunpack.c.l.b16 %v3665
    %v3785 = vunpack.c.l.b16 %v3666
    %v3786 = vunpack.c.l.b16 %v3667
    %v3787 = vunpack.c.l.b16 %v3668
    %v3788 = vunpack.c.l.b16 %v3669
    %v3789 = vunpack.c.l.b16 %v3670
    %v3790 = vunpack.c.l.b16 %v3671
    %v3791 = vunpack.c.l.b16 %v3672
    %v3792 = vpack.c.b16 %v3775, %v3774
    %v3793 = vpack.c.b16 %v3777, %v3776
    %v3794 = vpack.c.b16 %v3779, %v3778
    %v3795 = vpack.c.b16 %v3781, %v3780
    %v3796 = vpack.c.b16 %v3783, %v3782
    %v3797 = vpack.c.b16 %v3785, %v3784
    %v3798 = vpack.c.b16 %v3787, %v3786
    %v3799 = vpack.c.b16 %v3789, %v3788
    %v3800 = vpack.c.b16 %v3791, %v3790
    %v3802 = vshrl.u32 %v3792, 16
    %v3804 = vshll.u32 %v3792, 16
    %v3806 = vrot.slane %v3804, 1
    %v3807 = vor.u32 %v3802, %v3806
    %v3809 = vshll.u32 %v3793, 16
    %v3811 = vrot.slane %v3809, 1
    %v3812 = vsel %vm658, %v3807, %v3811
    %v3813 = vshrl.u32 %v3793, 16
    %v3815 = vor.u32 %v3813, %v3811
    %v3817 = vshll.u32 %v3794, 16
    %v3819 = vrot.slane %v3817, 1
    %v3820 = vsel %vm658, %v3815, %v3819
    %v3821 = vshrl.u32 %v3794, 16
    %v3823 = vor.u32 %v3821, %v3819
    %v3825 = vshll.u32 %v3795, 16
    %v3827 = vrot.slane %v3825, 1
    %v3828 = vsel %vm658, %v3823, %v3827
    %v3829 = vshrl.u32 %v3795, 16
    %v3831 = vor.u32 %v3829, %v3827
    %v3833 = vshll.u32 %v3796, 16
    %v3835 = vrot.slane %v3833, 1
    %v3836 = vsel %vm658, %v3831, %v3835
    %v3837 = vshrl.u32 %v3796, 16
    %v3839 = vor.u32 %v3837, %v3835
    %v3841 = vshll.u32 %v3797, 16
    %v3843 = vrot.slane %v3841, 1
    %v3844 = vsel %vm658, %v3839, %v3843
    %v3845 = vshrl.u32 %v3797, 16
    %v3847 = vor.u32 %v3845, %v3843
    %v3849 = vshll.u32 %v3798, 16
    %v3851 = vrot.slane %v3849, 1
    %v3852 = vsel %vm658, %v3847, %v3851
    %v3853 = vshrl.u32 %v3798, 16
    %v3855 = vor.u32 %v3853, %v3851
    %v3857 = vshll.u32 %v3799, 16
    %v3859 = vrot.slane %v3857, 1
    %v3860 = vsel %vm658, %v3855, %v3859
    %v3861 = vshrl.u32 %v3799, 16
    %v3863 = vor.u32 %v3861, %v3859
    %v3865 = vshll.u32 %v3800, 16
    %v3867 = vrot.slane %v3865, 1
    %v3868 = vsel %vm658, %v3863, %v3867
    %v3869 = vshrl.u32 %v3800, 16
    %v3871 = vor.u32 %v3869, %v3867
    %3872 = vrot.lane.b32.xlu0 %v3812, 32
    %v3873 = vpop.permute.xlu0 %3872
    %3874 = vrot.lane.b32.xlu0 %v3820, 32
    %v3875 = vpop.permute.xlu0 %3874
    %3876 = vrot.lane.b32.xlu0 %v3828, 32
    %v3877 = vpop.permute.xlu0 %3876
    %3878 = vrot.lane.b32.xlu0 %v3836, 32
    %v3879 = vpop.permute.xlu0 %3878
    %3880 = vrot.lane.b32.xlu0 %v3844, 32
    %v3881 = vpop.permute.xlu0 %3880
    %3882 = vrot.lane.b32.xlu0 %v3852, 32
    %v3883 = vpop.permute.xlu0 %3882
    %3884 = vrot.lane.b32.xlu0 %v3860, 32
    %v3885 = vpop.permute.xlu0 %3884
    %3886 = vrot.lane.b32.xlu0 %v3868, 32
    %v3887 = vpop.permute.xlu0 %3886
    %3888 = vrot.lane.b32.xlu0 %v3871, 32
    %v3889 = vpop.permute.xlu0 %3888
    %v3908 = vunpack.c.l.b16 %v3693
    %v3909 = vunpack.c.l.b16 %v3694
    %v3910 = vunpack.c.l.b16 %v3695
    %v3911 = vunpack.c.l.b16 %v3696
    %v3912 = vunpack.c.l.b16 %v3697
    %v3913 = vunpack.c.l.b16 %v3698
    %v3914 = vunpack.c.l.b16 %v3699
    %v3915 = vunpack.c.l.b16 %v3700
    %v3916 = vunpack.c.l.b16 %v3701
    %v3917 = vunpack.c.l.b16 %v3702
    %v3918 = vunpack.c.l.b16 %v3703
    %v3919 = vunpack.c.l.b16 %v3704
    %v3920 = vunpack.c.l.b16 %v3705
    %v3921 = vunpack.c.l.b16 %v3706
    %v3922 = vunpack.c.l.b16 %v3707
    %v3923 = vunpack.c.l.b16 %v3708
    %v3924 = vunpack.c.l.b16 %v3709
    %v3925 = vunpack.c.l.b16 %v3710
    %v3926 = vpack.c.b16 %v3909, %v3908
    %v3927 = vpack.c.b16 %v3911, %v3910
    %v3928 = vpack.c.b16 %v3913, %v3912
    %v3929 = vpack.c.b16 %v3915, %v3914
    %v3930 = vpack.c.b16 %v3917, %v3916
    %v3931 = vpack.c.b16 %v3919, %v3918
    %v3932 = vpack.c.b16 %v3921, %v3920
    %v3933 = vpack.c.b16 %v3923, %v3922
    %v3934 = vpack.c.b16 %v3925, %v3924
    %v3935 = vrot.slane %v3926, 1
    %v3936 = vrot.slane %v3927, 1
    %v3937 = vsel %vm2076, %v3935, %v3936
    %v3938 = vrot.slane %v3928, 1
    %v3939 = vsel %vm2076, %v3936, %v3938
    %v3940 = vrot.slane %v3929, 1
    %v3941 = vsel %vm2076, %v3938, %v3940
    %v3942 = vrot.slane %v3930, 1
    %v3943 = vsel %vm2076, %v3940, %v3942
    %v3944 = vrot.slane %v3931, 1
    %v3945 = vsel %vm2076, %v3942, %v3944
    %v3946 = vrot.slane %v3932, 1
    %v3947 = vsel %vm2076, %v3944, %v3946
    %v3948 = vrot.slane %v3933, 1
    %v3949 = vsel %vm2076, %v3946, %v3948
    %v3950 = vrot.slane %v3934, 1
    %v3951 = vsel %vm2076, %v3948, %v3950
    %3952 = vrot.lane.b32.xlu0 %v3937, 64
    %v3953 = vpop.permute.xlu0 %3952
    %3954 = vrot.lane.b32.xlu0 %v3939, 64
    %v3955 = vpop.permute.xlu0 %3954
    %3956 = vrot.lane.b32.xlu0 %v3941, 64
    %v3957 = vpop.permute.xlu0 %3956
    %3958 = vrot.lane.b32.xlu0 %v3943, 64
    %v3959 = vpop.permute.xlu0 %3958
    %3960 = vrot.lane.b32.xlu0 %v3945, 64
    %v3961 = vpop.permute.xlu0 %3960
    %3962 = vrot.lane.b32.xlu0 %v3947, 64
    %v3963 = vpop.permute.xlu0 %3962
    %3964 = vrot.lane.b32.xlu0 %v3949, 64
    %v3965 = vpop.permute.xlu0 %3964
    %3966 = vrot.lane.b32.xlu0 %v3951, 64
    %v3967 = vpop.permute.xlu0 %3966
    %3968 = vrot.lane.b32.xlu0 %v3950, 64
    %v3969 = vpop.permute.xlu0 %3968
    %v3972 = vsel %vm1045, %v3747, %v3873
    %v3975 = vsel %vm1045, %v3748, %v3875
    %v3978 = vsel %vm1045, %v3749, %v3877
    %v3981 = vsel %vm1045, %v3750, %v3879
    %v3984 = vsel %vm1045, %v3751, %v3881
    %v3987 = vsel %vm1045, %v3752, %v3883
    %v3990 = vsel %vm1045, %v3753, %v3885
    %v3993 = vsel %vm1045, %v3754, %v3887
    %v3996 = vsel %vm1045, %v3755, %v3889
    %v3998 = vsel %vm1094, %v3972, %v3953
    %v4000 = vsel %vm1094, %v3975, %v3955
    %v4002 = vsel %vm1094, %v3978, %v3957
    %v4004 = vsel %vm1094, %v3981, %v3959
    %v4006 = vsel %vm1094, %v3984, %v3961
    %v4008 = vsel %vm1094, %v3987, %v3963
    %v4010 = vsel %vm1094, %v3990, %v3965
    %v4012 = vsel %vm1094, %v3993, %v3967
    %v4014 = vsel %vm1094, %v3996, %v3969
    %v4015 = vld [vmem:[#allocation4 + $0x44] sm:$0xf]
    %v4016 = vld [vmem:[#allocation4 + $0x48] sm:$0x1]
    %v4017 = vmul.bf16 %v3656, %v345
    %v4018 = vmul.bf16 %v3657, %v357
    %v4019 = vmul.bf16 %v3658, %v369
    %v4020 = vmul.bf16 %v3659, %v381
    %v4021 = vmul.bf16 %v3660, %v393
    %v4022 = vmul.bf16 %v3661, %v405
    %v4023 = vmul.bf16 %v3662, %v417
    %v4024 = vmul.bf16 %v3663, %v429
    %v4025 = vmul.bf16 %v3664, %v441
    %v4026 = vmul.bf16 %v3665, %v453
    %v4027 = vmul.bf16 %v3666, %v465
    %v4028 = vmul.bf16 %v3667, %v477
    %v4029 = vmul.bf16 %v3668, %v489
    %v4030 = vmul.bf16 %v3669, %v501
    %v4031 = vmul.bf16 %v3670, %v513
    %v4032 = vmul.bf16 %v3671, %v525
    %v4033 = vmul.bf16 %v4015, %v537
    %v4034 = vmul.bf16 %v4016, %v549
    %v4035 = vld [vmem:[#allocation4 + $0x4] sm:$0xe]
    %v4036 = vld [vmem:[#allocation4 + $0x48] sm:$0x3]
    %v4037 = vmul.bf16 %v4035, %v1764
    %v4038 = vmul.bf16 %v3657, %v1767
    %v4039 = vmul.bf16 %v3658, %v1770
    %v4040 = vmul.bf16 %v3659, %v1773
    %v4041 = vmul.bf16 %v3660, %v1776
    %v4042 = vmul.bf16 %v3661, %v1779
    %v4043 = vmul.bf16 %v3662, %v1782
    %v4044 = vmul.bf16 %v3663, %v1785
    %v4045 = vmul.bf16 %v3664, %v1788
    %v4046 = vmul.bf16 %v3665, %v1791
    %v4047 = vmul.bf16 %v3666, %v1794
    %v4048 = vmul.bf16 %v3667, %v1797
    %v4049 = vmul.bf16 %v3668, %v1800
    %v4050 = vmul.bf16 %v3669, %v1803
    %v4051 = vmul.bf16 %v3670, %v1806
    %v4052 = vmul.bf16 %v3671, %v1809
    %v4053 = vmul.bf16 %v4015, %v1812
    %v4054 = vmul.bf16 %v4036, %v1815
    %v4073 = vunpack.c.l.b16 %v4017
    %v4074 = vunpack.c.l.b16 %v4018
    %v4075 = vunpack.c.l.b16 %v4019
    %v4076 = vunpack.c.l.b16 %v4020
    %v4077 = vunpack.c.l.b16 %v4021
    %v4078 = vunpack.c.l.b16 %v4022
    %v4079 = vunpack.c.l.b16 %v4023
    %v4080 = vunpack.c.l.b16 %v4024
    %v4081 = vunpack.c.l.b16 %v4025
    %v4082 = vunpack.c.l.b16 %v4026
    %v4083 = vunpack.c.l.b16 %v4027
    %v4084 = vunpack.c.l.b16 %v4028
    %v4085 = vunpack.c.l.b16 %v4029
    %v4086 = vunpack.c.l.b16 %v4030
    %v4087 = vunpack.c.l.b16 %v4031
    %v4088 = vunpack.c.l.b16 %v4032
    %v4089 = vunpack.c.l.b16 %v4033
    %v4090 = vunpack.c.l.b16 %v4034
    %v4091 = vpack.c.b16 %v4074, %v4073
    %v4092 = vpack.c.b16 %v4076, %v4075
    %v4093 = vpack.c.b16 %v4078, %v4077
    %v4094 = vpack.c.b16 %v4080, %v4079
    %v4095 = vpack.c.b16 %v4082, %v4081
    %v4096 = vpack.c.b16 %v4084, %v4083
    %v4097 = vpack.c.b16 %v4086, %v4085
    %v4098 = vpack.c.b16 %v4088, %v4087
    %v4099 = vpack.c.b16 %v4090, %v4089
    %v4102 = vunpack.c.l.b16 %v4015
    %v4103 = vunpack.c.l.b16 %v4016
    %v4104 = vpack.c.b16 %v3776, %v3775
    %v4105 = vpack.c.b16 %v3778, %v3777
    %v4106 = vpack.c.b16 %v3780, %v3779
    %v4107 = vpack.c.b16 %v3782, %v3781
    %v4108 = vpack.c.b16 %v3784, %v3783
    %v4109 = vpack.c.b16 %v3786, %v3785
    %v4110 = vpack.c.b16 %v3788, %v3787
    %v4111 = vpack.c.b16 %v3790, %v3789
    %v4112 = vpack.c.b16 %v4103, %v4102
    %v4114 = vshrl.u32 %v4104, 16
    %v4116 = vshll.u32 %v4104, 16
    %v4118 = vrot.slane %v4116, 1
    %v4119 = vor.u32 %v4114, %v4118
    %v4121 = vshll.u32 %v4105, 16
    %v4123 = vrot.slane %v4121, 1
    %v4124 = vsel %vm658, %v4119, %v4123
    %v4125 = vshrl.u32 %v4105, 16
    %v4127 = vor.u32 %v4125, %v4123
    %v4129 = vshll.u32 %v4106, 16
    %v4131 = vrot.slane %v4129, 1
    %v4132 = vsel %vm658, %v4127, %v4131
    %v4133 = vshrl.u32 %v4106, 16
    %v4135 = vor.u32 %v4133, %v4131
    %v4137 = vshll.u32 %v4107, 16
    %v4139 = vrot.slane %v4137, 1
    %v4140 = vsel %vm658, %v4135, %v4139
    %v4141 = vshrl.u32 %v4107, 16
    %v4143 = vor.u32 %v4141, %v4139
    %v4145 = vshll.u32 %v4108, 16
    %v4147 = vrot.slane %v4145, 1
    %v4148 = vsel %vm658, %v4143, %v4147
    %v4149 = vshrl.u32 %v4108, 16
    %v4151 = vor.u32 %v4149, %v4147
    %v4153 = vshll.u32 %v4109, 16
    %v4155 = vrot.slane %v4153, 1
    %v4156 = vsel %vm658, %v4151, %v4155
    %v4157 = vshrl.u32 %v4109, 16
    %v4159 = vor.u32 %v4157, %v4155
    %v4161 = vshll.u32 %v4110, 16
    %v4163 = vrot.slane %v4161, 1
    %v4164 = vsel %vm658, %v4159, %v4163
    %v4165 = vshrl.u32 %v4110, 16
    %v4167 = vor.u32 %v4165, %v4163
    %v4169 = vshll.u32 %v4111, 16
    %v4171 = vrot.slane %v4169, 1
    %v4172 = vsel %vm658, %v4167, %v4171
    %v4173 = vshrl.u32 %v4111, 16
    %v4175 = vor.u32 %v4173, %v4171
    %v4177 = vshll.u32 %v4112, 16
    %v4179 = vrot.slane %v4177, 1
    %v4180 = vsel %vm658, %v4175, %v4179
    %v4181 = vshrl.u32 %v4112, 16
    %v4183 = vor.u32 %v4181, %v4179
    %4184 = vrot.lane.b32.xlu0 %v4124, 32
    %v4185 = vpop.permute.xlu0 %4184
    %4186 = vrot.lane.b32.xlu0 %v4132, 32
    %v4187 = vpop.permute.xlu0 %4186
    %4188 = vrot.lane.b32.xlu0 %v4140, 32
    %v4189 = vpop.permute.xlu0 %4188
    %4190 = vrot.lane.b32.xlu0 %v4148, 32
    %v4191 = vpop.permute.xlu0 %4190
    %4192 = vrot.lane.b32.xlu0 %v4156, 32
    %v4193 = vpop.permute.xlu0 %4192
    %4194 = vrot.lane.b32.xlu0 %v4164, 32
    %v4195 = vpop.permute.xlu0 %4194
    %4196 = vrot.lane.b32.xlu0 %v4172, 32
    %v4197 = vpop.permute.xlu0 %4196
    %4198 = vrot.lane.b32.xlu0 %v4180, 32
    %v4199 = vpop.permute.xlu0 %4198
    %4200 = vrot.lane.b32.xlu0 %v4183, 32
    %v4201 = vpop.permute.xlu0 %4200
    %v4220 = vunpack.c.l.b16 %v4037
    %v4221 = vunpack.c.l.b16 %v4038
    %v4222 = vunpack.c.l.b16 %v4039
    %v4223 = vunpack.c.l.b16 %v4040
    %v4224 = vunpack.c.l.b16 %v4041
    %v4225 = vunpack.c.l.b16 %v4042
    %v4226 = vunpack.c.l.b16 %v4043
    %v4227 = vunpack.c.l.b16 %v4044
    %v4228 = vunpack.c.l.b16 %v4045
    %v4229 = vunpack.c.l.b16 %v4046
    %v4230 = vunpack.c.l.b16 %v4047
    %v4231 = vunpack.c.l.b16 %v4048
    %v4232 = vunpack.c.l.b16 %v4049
    %v4233 = vunpack.c.l.b16 %v4050
    %v4234 = vunpack.c.l.b16 %v4051
    %v4235 = vunpack.c.l.b16 %v4052
    %v4236 = vunpack.c.l.b16 %v4053
    %v4237 = vunpack.c.l.b16 %v4054
    %v4238 = vpack.c.b16 %v4221, %v4220
    %v4239 = vpack.c.b16 %v4223, %v4222
    %v4240 = vpack.c.b16 %v4225, %v4224
    %v4241 = vpack.c.b16 %v4227, %v4226
    %v4242 = vpack.c.b16 %v4229, %v4228
    %v4243 = vpack.c.b16 %v4231, %v4230
    %v4244 = vpack.c.b16 %v4233, %v4232
    %v4245 = vpack.c.b16 %v4235, %v4234
    %v4246 = vpack.c.b16 %v4237, %v4236
    %v4247 = vrot.slane %v4238, 1
    %v4248 = vrot.slane %v4239, 1
    %v4249 = vsel %vm2076, %v4247, %v4248
    %v4250 = vrot.slane %v4240, 1
    %v4251 = vsel %vm2076, %v4248, %v4250
    %v4252 = vrot.slane %v4241, 1
    %v4253 = vsel %vm2076, %v4250, %v4252
    %v4254 = vrot.slane %v4242, 1
    %v4255 = vsel %vm2076, %v4252, %v4254
    %v4256 = vrot.slane %v4243, 1
    %v4257 = vsel %vm2076, %v4254, %v4256
    %v4258 = vrot.slane %v4244, 1
    %v4259 = vsel %vm2076, %v4256, %v4258
    %v4260 = vrot.slane %v4245, 1
    %v4261 = vsel %vm2076, %v4258, %v4260
    %v4262 = vrot.slane %v4246, 1
    %v4263 = vsel %vm2076, %v4260, %v4262
    %4264 = vrot.lane.b32.xlu0 %v4249, 64
    %v4265 = vpop.permute.xlu0 %4264
    %4266 = vrot.lane.b32.xlu0 %v4251, 64
    %v4267 = vpop.permute.xlu0 %4266
    %4268 = vrot.lane.b32.xlu0 %v4253, 64
    %v4269 = vpop.permute.xlu0 %4268
    %4270 = vrot.lane.b32.xlu0 %v4255, 64
    %v4271 = vpop.permute.xlu0 %4270
    %4272 = vrot.lane.b32.xlu0 %v4257, 64
    %v4273 = vpop.permute.xlu0 %4272
    %4274 = vrot.lane.b32.xlu0 %v4259, 64
    %v4275 = vpop.permute.xlu0 %4274
    %4276 = vrot.lane.b32.xlu0 %v4261, 64
    %v4277 = vpop.permute.xlu0 %4276
    %4278 = vrot.lane.b32.xlu0 %v4263, 64
    %v4279 = vpop.permute.xlu0 %4278
    %4280 = vrot.lane.b32.xlu0 %v4262, 64
    %v4281 = vpop.permute.xlu0 %4280
    %v4284 = vsel %vm1045, %v4091, %v4185
    %v4287 = vsel %vm1045, %v4092, %v4187
    %v4290 = vsel %vm1045, %v4093, %v4189
    %v4293 = vsel %vm1045, %v4094, %v4191
    %v4296 = vsel %vm1045, %v4095, %v4193
    %v4299 = vsel %vm1045, %v4096, %v4195
    %v4302 = vsel %vm1045, %v4097, %v4197
    %v4305 = vsel %vm1045, %v4098, %v4199
    %v4308 = vsel %vm1045, %v4099, %v4201
    %v4310 = vsel %vm1094, %v4284, %v4265
    %v4312 = vsel %vm1094, %v4287, %v4267
    %v4314 = vsel %vm1094, %v4290, %v4269
    %v4316 = vsel %vm1094, %v4293, %v4271
    %v4318 = vsel %vm1094, %v4296, %v4273
    %v4320 = vsel %vm1094, %v4299, %v4275
    %v4322 = vsel %vm1094, %v4302, %v4277
    %v4324 = vsel %vm1094, %v4305, %v4279
    %v4326 = vsel %vm1094, %v4308, %v4281
    %v4327 = vld [vmem:[#allocation4 + $0x48] sm:$0xf]
    %v4328 = vld [vmem:[#allocation4 + $0x4c] sm:$0x1]
    %v4329 = vmul.bf16 %v3657, %v345
    %v4330 = vmul.bf16 %v3658, %v357
    %v4331 = vmul.bf16 %v3659, %v369
    %v4332 = vmul.bf16 %v3660, %v381
    %v4333 = vmul.bf16 %v3661, %v393
    %v4334 = vmul.bf16 %v3662, %v405
    %v4335 = vmul.bf16 %v3663, %v417
    %v4336 = vmul.bf16 %v3664, %v429
    %v4337 = vmul.bf16 %v3665, %v441
    %v4338 = vmul.bf16 %v3666, %v453
    %v4339 = vmul.bf16 %v3667, %v465
    %v4340 = vmul.bf16 %v3668, %v477
    %v4341 = vmul.bf16 %v3669, %v489
    %v4342 = vmul.bf16 %v3670, %v501
    %v4343 = vmul.bf16 %v3671, %v513
    %v4344 = vmul.bf16 %v4015, %v525
    %v4345 = vmul.bf16 %v4327, %v537
    %v4346 = vmul.bf16 %v4328, %v549
    %v4347 = vld [vmem:[#allocation4 + $0x8] sm:$0xe]
    %v4348 = vld [vmem:[#allocation4 + $0x4c] sm:$0x3]
    %v4349 = vmul.bf16 %v4347, %v1764
    %v4350 = vmul.bf16 %v3658, %v1767
    %v4351 = vmul.bf16 %v3659, %v1770
    %v4352 = vmul.bf16 %v3660, %v1773
    %v4353 = vmul.bf16 %v3661, %v1776
    %v4354 = vmul.bf16 %v3662, %v1779
    %v4355 = vmul.bf16 %v3663, %v1782
    %v4356 = vmul.bf16 %v3664, %v1785
    %v4357 = vmul.bf16 %v3665, %v1788
    %v4358 = vmul.bf16 %v3666, %v1791
    %v4359 = vmul.bf16 %v3667, %v1794
    %v4360 = vmul.bf16 %v3668, %v1797
    %v4361 = vmul.bf16 %v3669, %v1800
    %v4362 = vmul.bf16 %v3670, %v1803
    %v4363 = vmul.bf16 %v3671, %v1806
    %v4364 = vmul.bf16 %v4015, %v1809
    %v4365 = vmul.bf16 %v4327, %v1812
    %v4366 = vmul.bf16 %v4348, %v1815
    %v4385 = vunpack.c.l.b16 %v4329
    %v4386 = vunpack.c.l.b16 %v4330
    %v4387 = vunpack.c.l.b16 %v4331
    %v4388 = vunpack.c.l.b16 %v4332
    %v4389 = vunpack.c.l.b16 %v4333
    %v4390 = vunpack.c.l.b16 %v4334
    %v4391 = vunpack.c.l.b16 %v4335
    %v4392 = vunpack.c.l.b16 %v4336
    %v4393 = vunpack.c.l.b16 %v4337
    %v4394 = vunpack.c.l.b16 %v4338
    %v4395 = vunpack.c.l.b16 %v4339
    %v4396 = vunpack.c.l.b16 %v4340
    %v4397 = vunpack.c.l.b16 %v4341
    %v4398 = vunpack.c.l.b16 %v4342
    %v4399 = vunpack.c.l.b16 %v4343
    %v4400 = vunpack.c.l.b16 %v4344
    %v4401 = vunpack.c.l.b16 %v4345
    %v4402 = vunpack.c.l.b16 %v4346
    %v4403 = vpack.c.b16 %v4386, %v4385
    %v4404 = vpack.c.b16 %v4388, %v4387
    %v4405 = vpack.c.b16 %v4390, %v4389
    %v4406 = vpack.c.b16 %v4392, %v4391
    %v4407 = vpack.c.b16 %v4394, %v4393
    %v4408 = vpack.c.b16 %v4396, %v4395
    %v4409 = vpack.c.b16 %v4398, %v4397
    %v4410 = vpack.c.b16 %v4400, %v4399
    %v4411 = vpack.c.b16 %v4402, %v4401
    %v4414 = vunpack.c.l.b16 %v4327
    %v4415 = vunpack.c.l.b16 %v4328
    %v4416 = vpack.c.b16 %v4102, %v3790
    %v4417 = vpack.c.b16 %v4415, %v4414
    %v4419 = vshll.u32 %v4416, 16
    %v4421 = vrot.slane %v4419, 1
    %v4422 = vsel %vm658, %v3863, %v4421
    %v4423 = vshrl.u32 %v4416, 16
    %v4425 = vor.u32 %v4423, %v4421
    %v4427 = vshll.u32 %v4417, 16
    %v4429 = vrot.slane %v4427, 1
    %v4430 = vsel %vm658, %v4425, %v4429
    %v4431 = vshrl.u32 %v4417, 16
    %v4433 = vor.u32 %v4431, %v4429
    %4434 = vrot.lane.b32.xlu0 %v4422, 32
    %v4435 = vpop.permute.xlu0 %4434
    %4436 = vrot.lane.b32.xlu0 %v4430, 32
    %v4437 = vpop.permute.xlu0 %4436
    %4438 = vrot.lane.b32.xlu0 %v4433, 32
    %v4439 = vpop.permute.xlu0 %4438
    %v4458 = vunpack.c.l.b16 %v4349
    %v4459 = vunpack.c.l.b16 %v4350
    %v4460 = vunpack.c.l.b16 %v4351
    %v4461 = vunpack.c.l.b16 %v4352
    %v4462 = vunpack.c.l.b16 %v4353
    %v4463 = vunpack.c.l.b16 %v4354
    %v4464 = vunpack.c.l.b16 %v4355
    %v4465 = vunpack.c.l.b16 %v4356
    %v4466 = vunpack.c.l.b16 %v4357
    %v4467 = vunpack.c.l.b16 %v4358
    %v4468 = vunpack.c.l.b16 %v4359
    %v4469 = vunpack.c.l.b16 %v4360
    %v4470 = vunpack.c.l.b16 %v4361
    %v4471 = vunpack.c.l.b16 %v4362
    %v4472 = vunpack.c.l.b16 %v4363
    %v4473 = vunpack.c.l.b16 %v4364
    %v4474 = vunpack.c.l.b16 %v4365
    %v4475 = vunpack.c.l.b16 %v4366
    %v4476 = vpack.c.b16 %v4459, %v4458
    %v4477 = vpack.c.b16 %v4461, %v4460
    %v4478 = vpack.c.b16 %v4463, %v4462
    %v4479 = vpack.c.b16 %v4465, %v4464
    %v4480 = vpack.c.b16 %v4467, %v4466
    %v4481 = vpack.c.b16 %v4469, %v4468
    %v4482 = vpack.c.b16 %v4471, %v4470
    %v4483 = vpack.c.b16 %v4473, %v4472
    %v4484 = vpack.c.b16 %v4475, %v4474
    %v4485 = vrot.slane %v4476, 1
    %v4486 = vrot.slane %v4477, 1
    %v4487 = vsel %vm2076, %v4485, %v4486
    %v4488 = vrot.slane %v4478, 1
    %v4489 = vsel %vm2076, %v4486, %v4488
    %v4490 = vrot.slane %v4479, 1
    %v4491 = vsel %vm2076, %v4488, %v4490
    %v4492 = vrot.slane %v4480, 1
    %v4493 = vsel %vm2076, %v4490, %v4492
    %v4494 = vrot.slane %v4481, 1
    %v4495 = vsel %vm2076, %v4492, %v4494
    %v4496 = vrot.slane %v4482, 1
    %v4497 = vsel %vm2076, %v4494, %v4496
    %v4498 = vrot.slane %v4483, 1
    %v4499 = vsel %vm2076, %v4496, %v4498
    %v4500 = vrot.slane %v4484, 1
    %v4501 = vsel %vm2076, %v4498, %v4500
    %4502 = vrot.lane.b32.xlu0 %v4487, 64
    %v4503 = vpop.permute.xlu0 %4502
    %4504 = vrot.lane.b32.xlu0 %v4489, 64
    %v4505 = vpop.permute.xlu0 %4504
    %4506 = vrot.lane.b32.xlu0 %v4491, 64
    %v4507 = vpop.permute.xlu0 %4506
    %4508 = vrot.lane.b32.xlu0 %v4493, 64
    %v4509 = vpop.permute.xlu0 %4508
    %4510 = vrot.lane.b32.xlu0 %v4495, 64
    %v4511 = vpop.permute.xlu0 %4510
    %4512 = vrot.lane.b32.xlu0 %v4497, 64
    %v4513 = vpop.permute.xlu0 %4512
    %4514 = vrot.lane.b32.xlu0 %v4499, 64
    %v4515 = vpop.permute.xlu0 %4514
    %4516 = vrot.lane.b32.xlu0 %v4501, 64
    %v4517 = vpop.permute.xlu0 %4516
    %4518 = vrot.lane.b32.xlu0 %v4500, 64
    %v4519 = vpop.permute.xlu0 %4518
    %v4521 = vsel %vm1045, %v4403, %v3875
    %v4523 = vsel %vm1045, %v4404, %v3877
    %v4525 = vsel %vm1045, %v4405, %v3879
    %v4527 = vsel %vm1045, %v4406, %v3881
    %v4529 = vsel %vm1045, %v4407, %v3883
    %v4531 = vsel %vm1045, %v4408, %v3885
    %v4534 = vsel %vm1045, %v4409, %v4435
    %v4537 = vsel %vm1045, %v4410, %v4437
    %v4540 = vsel %vm1045, %v4411, %v4439
    %v4542 = vsel %vm1094, %v4521, %v4503
    %v4544 = vsel %vm1094, %v4523, %v4505
    %v4546 = vsel %vm1094, %v4525, %v4507
    %v4548 = vsel %vm1094, %v4527, %v4509
    %v4550 = vsel %vm1094, %v4529, %v4511
    %v4552 = vsel %vm1094, %v4531, %v4513
    %v4554 = vsel %vm1094, %v4534, %v4515
    %v4556 = vsel %vm1094, %v4537, %v4517
    %v4558 = vsel %vm1094, %v4540, %v4519
    %4568 = vrot.lane.b32.xlu0 %v4310, 96
    %v4569 = vpop.permute.xlu0 %4568
    %4570 = vrot.lane.b32.xlu0 %v4312, 96
    %v4571 = vpop.permute.xlu0 %4570
    %4572 = vrot.lane.b32.xlu0 %v4314, 96
    %v4573 = vpop.permute.xlu0 %4572
    %4574 = vrot.lane.b32.xlu0 %v4316, 96
    %v4575 = vpop.permute.xlu0 %4574
    %4576 = vrot.lane.b32.xlu0 %v4318, 96
    %v4577 = vpop.permute.xlu0 %4576
    %4578 = vrot.lane.b32.xlu0 %v4320, 96
    %v4579 = vpop.permute.xlu0 %4578
    %4580 = vrot.lane.b32.xlu0 %v4322, 96
    %v4581 = vpop.permute.xlu0 %4580
    %4582 = vrot.lane.b32.xlu0 %v4324, 96
    %v4583 = vpop.permute.xlu0 %4582
    %4584 = vrot.lane.b32.xlu0 %v4326, 96
    %v4585 = vpop.permute.xlu0 %4584
    %4595 = vrot.lane.b32.xlu0 %v4542, 64
    %v4596 = vpop.permute.xlu0 %4595
    %4597 = vrot.lane.b32.xlu0 %v4544, 64
    %v4598 = vpop.permute.xlu0 %4597
    %4599 = vrot.lane.b32.xlu0 %v4546, 64
    %v4600 = vpop.permute.xlu0 %4599
    %4601 = vrot.lane.b32.xlu0 %v4548, 64
    %v4602 = vpop.permute.xlu0 %4601
    %4603 = vrot.lane.b32.xlu0 %v4550, 64
    %v4604 = vpop.permute.xlu0 %4603
    %4605 = vrot.lane.b32.xlu0 %v4552, 64
    %v4606 = vpop.permute.xlu0 %4605
    %4607 = vrot.lane.b32.xlu0 %v4554, 64
    %v4608 = vpop.permute.xlu0 %4607
    %4609 = vrot.lane.b32.xlu0 %v4556, 64
    %v4610 = vpop.permute.xlu0 %4609
    %4611 = vrot.lane.b32.xlu0 %v4558, 64
    %v4612 = vpop.permute.xlu0 %4611
    %v4614 = vsel %vm2883, %v3998, %v4569
    %v4617 = vsel %vm2883, %v4000, %v4571
    %v4620 = vsel %vm2883, %v4002, %v4573
    %v4623 = vsel %vm2883, %v4004, %v4575
    %v4626 = vsel %vm2883, %v4006, %v4577
    %v4629 = vsel %vm2883, %v4008, %v4579
    %v4632 = vsel %vm2883, %v4010, %v4581
    %v4635 = vsel %vm2883, %v4012, %v4583
    %v4638 = vsel %vm2883, %v4014, %v4585
    %v4641 = vsel %vm1094, %v4569, %v4596
    %v4644 = vsel %vm1094, %v4571, %v4598
    %v4647 = vsel %vm1094, %v4573, %v4600
    %v4650 = vsel %vm1094, %v4575, %v4602
    %v4653 = vsel %vm1094, %v4577, %v4604
    %v4656 = vsel %vm1094, %v4579, %v4606
    %v4659 = vsel %vm1094, %v4581, %v4608
    %v4662 = vsel %vm1094, %v4583, %v4610
    %v4665 = vsel %vm1094, %v4585, %v4612
    %v4668 = vlaneseq
    %v4669 = vshrl.u32 %v4668, 7
    %v4670 = vsub.s32 0, %v4669
    %v4671 = vrot.slane %v3654, %v4670
    %v4709 = vunpack.c.l.b16 %v3618
    %v4710 = vunpack.c.l.b16 %v3619
    %v4711 = vunpack.c.l.b16 %v3620
    %v4712 = vunpack.c.l.b16 %v3621
    %v4713 = vunpack.c.l.b16 %v3622
    %v4714 = vunpack.c.l.b16 %v3623
    %v4715 = vunpack.c.l.b16 %v3624
    %v4716 = vunpack.c.l.b16 %v3625
    %v4717 = vunpack.c.l.b16 %v3626
    %v4718 = vunpack.c.l.b16 %v3627
    %v4719 = vunpack.c.l.b16 %v3628
    %v4720 = vunpack.c.l.b16 %v3629
    %v4721 = vunpack.c.l.b16 %v3630
    %v4722 = vunpack.c.l.b16 %v3631
    %v4723 = vunpack.c.l.b16 %v3632
    %v4724 = vunpack.c.l.b16 %v3633
    %v4725 = vunpack.c.l.b16 %v3634
    %v4726 = vunpack.c.l.b16 %v3635
    %v4727 = vunpack.c.l.b16 %v3636
    %v4728 = vunpack.c.l.b16 %v3637
    %v4729 = vunpack.c.l.b16 %v3638
    %v4730 = vunpack.c.l.b16 %v3639
    %v4731 = vunpack.c.l.b16 %v3640
    %v4732 = vunpack.c.l.b16 %v3641
    %v4733 = vunpack.c.l.b16 %v3642
    %v4734 = vunpack.c.l.b16 %v3643
    %v4735 = vunpack.c.l.b16 %v3644
    %v4736 = vunpack.c.l.b16 %v3645
    %v4737 = vunpack.c.l.b16 %v3646
    %v4738 = vunpack.c.l.b16 %v3647
    %v4739 = vunpack.c.l.b16 %v3648
    %v4740 = vunpack.c.l.b16 %v3649
    %v4741 = vunpack.c.l.b16 %v3650
    %v4742 = vunpack.c.l.b16 %v3651
    %v4743 = vunpack.c.l.b16 %v3652
    %v4744 = vunpack.c.l.b16 %v3653
    %v4745 = vpack.c.b16 %v4710, %v4709
    %v4746 = vpack.c.b16 %v4712, %v4711
    %v4747 = vpack.c.b16 %v4714, %v4713
    %v4748 = vpack.c.b16 %v4716, %v4715
    %v4749 = vpack.c.b16 %v4718, %v4717
    %v4750 = vpack.c.b16 %v4720, %v4719
    %v4751 = vpack.c.b16 %v4722, %v4721
    %v4752 = vpack.c.b16 %v4724, %v4723
    %v4753 = vpack.c.b16 %v4726, %v4725
    %v4754 = vpack.c.b16 %v4728, %v4727
    %v4755 = vpack.c.b16 %v4730, %v4729
    %v4756 = vpack.c.b16 %v4732, %v4731
    %v4757 = vpack.c.b16 %v4734, %v4733
    %v4758 = vpack.c.b16 %v4736, %v4735
    %v4759 = vpack.c.b16 %v4738, %v4737
    %v4760 = vpack.c.b16 %v4740, %v4739
    %v4761 = vpack.c.b16 %v4742, %v4741
    %v4762 = vpack.c.b16 %v4744, %v4743
    %v4781 = vsel %vm1045, %v4596, 0
    %v4783 = vsel %vm1045, %v4598, 0
    %v4785 = vsel %vm1045, %v4600, 0
    %v4787 = vsel %vm1045, %v4602, 0
    %v4789 = vsel %vm1045, %v4604, 0
    %v4791 = vsel %vm1045, %v4606, 0
    %v4793 = vsel %vm1045, %v4608, 0
    %v4795 = vsel %vm1045, %v4610, 0
    %v4797 = vsel %vm1045, %v4612, 0
    %4799 = vmatprep.subr.bf16.mxu0 0
    %4800 = vmatpush1.bf16.msra.mxu0 %v4745
    %4801 = vmatprep.subr.bf16.mxu0 0
    %4802 = vmatpush1.bf16.msra.mxu0 %v4746
    %4803 = vmatprep.subr.bf16.mxu0 0
    %4804 = vmatpush1.bf16.msra.mxu0 %v4747
    %4805 = vmatprep.subr.bf16.mxu0 0
    %4806 = vmatpush1.bf16.msra.mxu0 %v4748
    %4807 = vmatprep.subr.bf16.mxu0 0
    %4808 = vmatpush1.bf16.msra.mxu0 %v4749
    %4809 = vmatprep.subr.bf16.mxu0 0
    %4810 = vmatpush1.bf16.msra.mxu0 %v4750
    %4811 = vmatprep.subr.bf16.mxu0 0
    %4812 = vmatpush1.bf16.msra.mxu0 %v4751
    %4813 = vmatprep.subr.bf16.mxu0 0
    %4814 = vmatpush1.bf16.msra.mxu0 %v4752
    %4815 = vmatprep.subr.bf16.mxu0 0
    %4816 = vmatpush1.bf16.msra.mxu0 %v4753
    %4817 = vmatprep.subr.bf16.mxu0 0
    %4818 = vmatpush1.bf16.msra.mxu0 %v4754
    %4819 = vmatprep.subr.bf16.mxu0 0
    %4820 = vmatpush1.bf16.msra.mxu0 %v4755
    %4821 = vmatprep.subr.bf16.mxu0 0
    %4822 = vmatpush1.bf16.msra.mxu0 %v4756
    %4823 = vmatprep.subr.bf16.mxu0 0
    %4824 = vmatpush1.bf16.msra.mxu0 %v4757
    %4825 = vmatprep.subr.bf16.mxu0 0
    %4826 = vmatpush1.bf16.msra.mxu0 %v4758
    %4827 = vmatprep.subr.bf16.mxu0 0
    %4828 = vmatpush1.bf16.msra.mxu0 %v4759
    %4829 = vmatprep.subr.bf16.mxu0 0
    %4830 = vmatpush1.bf16.msra.mxu0 %v4760
    %4831 = vmatprep.mubr.bf16.mxu0 %v4641
    %4832 = vmatmul.mubr.bf16.gmra.mrb[0].mxu0 %v4614
    %v4833 = vpop.f32.mrb[0].mxu0
    %v4834 = vadd.f32 %v4671, %v4833
    %v4835 = vpop.f32.mrb[0].mxu0
    %v4836 = vpop.f32.mrb[0].mxu0
    %v4837 = vadd.f32 %v4671, %v4836
    %v4838 = vpop.f32.mrb[0].mxu0
    %4839 = vmatprep.mubr.bf16.mxu0 %v4644
    %4840 = vmatmul.mubr.bf16.gmra.mrb[0].mxu0 %v4617
    %v4841 = vpop.f32.mrb[0].mxu0
    %v4842 = vadd.f32 %v4671, %v4841
    %v4843 = vpop.f32.mrb[0].mxu0
    %v4844 = vpop.f32.mrb[0].mxu0
    %v4845 = vadd.f32 %v4671, %v4844
    %v4846 = vpop.f32.mrb[0].mxu0
    %4847 = vmatprep.mubr.bf16.mxu0 %v4647
    %4848 = vmatmul.mubr.bf16.gmra.mrb[0].mxu0 %v4620
    %v4849 = vpop.f32.mrb[0].mxu0
    %v4850 = vadd.f32 %v4671, %v4849
    %v4851 = vpop.f32.mrb[0].mxu0
    %v4852 = vpop.f32.mrb[0].mxu0
    %v4853 = vadd.f32 %v4671, %v4852
    %v4854 = vpop.f32.mrb[0].mxu0
    %4855 = vmatprep.mubr.bf16.mxu0 %v4650
    %4856 = vmatmul.mubr.bf16.gmra.mrb[0].mxu0 %v4623
    %v4857 = vpop.f32.mrb[0].mxu0
    %v4858 = vadd.f32 %v4671, %v4857
    %v4859 = vpop.f32.mrb[0].mxu0
    %v4860 = vpop.f32.mrb[0].mxu0
    %v4861 = vadd.f32 %v4671, %v4860
    %v4862 = vpop.f32.mrb[0].mxu0
    %4863 = vmatprep.mubr.bf16.mxu0 %v4653
    %4864 = vmatmul.mubr.bf16.gmra.mrb[0].mxu0 %v4626
    %v4865 = vpop.f32.mrb[0].mxu0
    %v4866 = vpop.f32.mrb[0].mxu0
    %v4867 = vpop.f32.mrb[0].mxu0
    %v4868 = vadd.f32 %v4671, %v4867
    %v4869 = vpop.f32.mrb[0].mxu0
    %4870 = vmatprep.mubr.bf16.mxu0 %v4656
    %4871 = vmatmul.mubr.bf16.gmra.mrb[0].mxu0 %v4629
    %v4872 = vpop.f32.mrb[0].mxu0
    %v4873 = vadd.f32 %v4671, %v4872
    %v4874 = vpop.f32.mrb[0].mxu0
    %v4875 = vpop.f32.mrb[0].mxu0
    %v4876 = vadd.f32 %v4671, %v4875
    %v4877 = vpop.f32.mrb[0].mxu0
    %4878 = vmatprep.mubr.bf16.mxu0 %v4659
    %4879 = vmatmul.mubr.bf16.gmra.mrb[0].mxu0 %v4632
    %v4880 = vpop.f32.mrb[0].mxu0
    %v4881 = vadd.f32 %v4671, %v4880
    %v4882 = vpop.f32.mrb[0].mxu0
    %v4883 = vpop.f32.mrb[0].mxu0
    %v4884 = vadd.f32 %v4671, %v4883
    %v4885 = vpop.f32.mrb[0].mxu0
    %4886 = vmatprep.mubr.bf16.mxu0 %v4662
    %4887 = vmatmul.mubr.bf16.gmra.mrb[0].mxu0 %v4635
    %v4888 = vpop.f32.mrb[0].mxu0
    %v4889 = vadd.f32 %v4671, %v4888
    %v4890 = vpop.f32.mrb[0].mxu0
    %v4891 = vpop.f32.mrb[0].mxu0
    %v4892 = vadd.f32 %v4671, %v4891
    %v4893 = vpop.f32.mrb[0].mxu0
    %4894 = vmatprep.mubr.bf16.mxu0 %v4665
    %4895 = vmatmul.mubr.bf16.gmra.mrb[0].mxu0 %v4638
    %v4896 = vpop.f32.mrb[0].mxu0
    %v4897 = vadd.f32 %v4671, %v4896
    %v4898 = vpop.f32.mrb[0].mxu0
    %v4899 = vpop.f32.mrb[0].mxu0
    %v4900 = vadd.f32 %v4671, %v4899
    %v4901 = vpop.f32.mrb[0].mxu0
    %4902 = vdwg.mxu0
    %4903 = vmatprep.subr.bf16.mxu0 0
    %4904 = vmatpush1.bf16.msra.mxu0 %v4761
    %4905 = vmatprep.subr.bf16.mxu0 0
    %4906 = vmatpush1.bf16.msra.mxu0 %v4762
    %4907 = vmatprep.subr.bf16.mxu0 0
    %4908 = vmatpush1.bf16.msra.mxu0 0
    %4909 = vmatprep.subr.bf16.mxu0 0
    %4910 = vmatpush1.bf16.msra.mxu0 0
    %4911 = vmatprep.subr.bf16.mxu0 0
    %4912 = vmatpush1.bf16.msra.mxu0 0
    %4913 = vmatprep.subr.bf16.mxu0 0
    %4914 = vmatpush1.bf16.msra.mxu0 0
    %4915 = vmatprep.subr.bf16.mxu0 0
    %4916 = vmatpush1.bf16.msra.mxu0 0
    %4917 = vmatprep.subr.bf16.mxu0 0
    %4918 = vmatpush1.bf16.msra.mxu0 0
    %4919 = vmatprep.subr.bf16.mxu0 0
    %4920 = vmatpush1.bf16.msra.mxu0 0
    %4921 = vmatprep.subr.bf16.mxu0 0
    %4922 = vmatpush1.bf16.msra.mxu0 0
    %4923 = vmatprep.subr.bf16.mxu0 0
    %4924 = vmatpush1.bf16.msra.mxu0 0
    %4925 = vmatprep.subr.bf16.mxu0 0
    %4926 = vmatpush1.bf16.msra.mxu0 0
    %4927 = vmatprep.subr.bf16.mxu0 0
    %4928 = vmatpush1.bf16.msra.mxu0 0
    %4929 = vmatprep.subr.bf16.mxu0 0
    %4930 = vmatpush1.bf16.msra.mxu0 0
    %4931 = vmatprep.subr.bf16.mxu0 0
    %4932 = vmatpush1.bf16.msra.mxu0 0
    %4933 = vmatprep.subr.bf16.mxu0 0
    %4934 = vmatpush1.bf16.msra.mxu0 0
    %4935 = vmatprep.mubr.bf16.mxu0 0
    %4936 = vmatmul.mubr.bf16.gmra.mrb[0].mxu0 %v4781
    %v4937 = vpop.f32.mrb[0].mxu0
    %v4938 = vadd.f32 %v4834, %v4937
    %v4939 = vpop.f32.mrb[0].mxu0
    %v4940 = vpop.f32.mrb[0].mxu0
    %v4941 = vadd.f32 %v4837, %v4940
    %v4942 = vpop.f32.mrb[0].mxu0
    %4943 = vmatprep.mubr.bf16.mxu0 0
    %4944 = vmatmul.mubr.bf16.gmra.mrb[0].mxu0 %v4783
    %v4945 = vpop.f32.mrb[0].mxu0
    %v4946 = vadd.f32 %v4842, %v4945
    %v4947 = vpop.f32.mrb[0].mxu0
    %v4948 = vpop.f32.mrb[0].mxu0
    %v4949 = vadd.f32 %v4845, %v4948
    %v4950 = vpop.f32.mrb[0].mxu0
    %4951 = vmatprep.mubr.bf16.mxu0 0
    %4952 = vmatmul.mubr.bf16.gmra.mrb[0].mxu0 %v4785
    %v4953 = vpop.f32.mrb[0].mxu0
    %v4954 = vadd.f32 %v4850, %v4953
    %v4955 = vpop.f32.mrb[0].mxu0
    %v4956 = vpop.f32.mrb[0].mxu0
    %v4957 = vadd.f32 %v4853, %v4956
    %v4958 = vpop.f32.mrb[0].mxu0
    %4959 = vmatprep.mubr.bf16.mxu0 0
    %4960 = vmatmul.mubr.bf16.gmra.mrb[0].mxu0 %v4787
    %v4961 = vpop.f32.mrb[0].mxu0
    %v4962 = vadd.f32 %v4858, %v4961
    %v4963 = vpop.f32.mrb[0].mxu0
    %v4964 = vpop.f32.mrb[0].mxu0
    %v4965 = vadd.f32 %v4861, %v4964
    %v4966 = vpop.f32.mrb[0].mxu0
    %4967 = vmatprep.mubr.bf16.mxu0 0
    %4968 = vmatmul.mubr.bf16.gmra.mrb[0].mxu0 %v4789
    %v4969 = vpop.f32.mrb[0].mxu0
    %v4970 = vpop.f32.mrb[0].mxu0
    %v4971 = vpop.f32.mrb[0].mxu0
    %v4972 = vadd.f32 %v4868, %v4971
    %v4973 = vpop.f32.mrb[0].mxu0
    %4974 = vmatprep.mubr.bf16.mxu0 0
    %4975 = vmatmul.mubr.bf16.gmra.mrb[0].mxu0 %v4791
    %v4976 = vpop.f32.mrb[0].mxu0
    %v4977 = vadd.f32 %v4873, %v4976
    %v4978 = vpop.f32.mrb[0].mxu0
    %v4979 = vpop.f32.mrb[0].mxu0
    %v4980 = vadd.f32 %v4876, %v4979
    %v4981 = vpop.f32.mrb[0].mxu0
    %4982 = vmatprep.mubr.bf16.mxu0 0
    %4983 = vmatmul.mubr.bf16.gmra.mrb[0].mxu0 %v4793
    %v4984 = vpop.f32.mrb[0].mxu0
    %v4985 = vadd.f32 %v4881, %v4984
    %v4986 = vpop.f32.mrb[0].mxu0
    %v4987 = vpop.f32.mrb[0].mxu0
    %v4988 = vadd.f32 %v4884, %v4987
    %v4989 = vpop.f32.mrb[0].mxu0
    %4990 = vmatprep.mubr.bf16.mxu0 0
    %4991 = vmatmul.mubr.bf16.gmra.mrb[0].mxu0 %v4795
    %v4992 = vpop.f32.mrb[0].mxu0
    %v4993 = vadd.f32 %v4889, %v4992
    %v4994 = vpop.f32.mrb[0].mxu0
    %v4995 = vpop.f32.mrb[0].mxu0
    %v4996 = vadd.f32 %v4892, %v4995
    %v4997 = vpop.f32.mrb[0].mxu0
    %4998 = vmatprep.mubr.bf16.mxu0 0
    %4999 = vmatmul.mubr.bf16.gmra.mrb[0].mxu0 %v4797
    %v5000 = vpop.f32.mrb[0].mxu0
    %v5001 = vadd.f32 %v4897, %v5000
    %v5002 = vpop.f32.mrb[0].mxu0
    %v5003 = vpop.f32.mrb[0].mxu0
    %v5004 = vadd.f32 %v4900, %v5003
    %v5005 = vpop.f32.mrb[0].mxu0
    %5006 = vdwg.mxu0
    %vm5007 = vcmp.gt.f32.partialorder %v4938, 0.0
    %vm5008 = vcmp.gt.f32.partialorder %v4941, 0.0
    %vm5009 = vcmp.gt.f32.partialorder %v4946, 0.0
    %vm5010 = vcmp.gt.f32.partialorder %v4949, 0.0
    %vm5011 = vcmp.gt.f32.partialorder %v4954, 0.0
    %vm5012 = vcmp.gt.f32.partialorder %v4957, 0.0
    %vm5013 = vcmp.gt.f32.partialorder %v4962, 0.0
    %vm5014 = vcmp.gt.f32.partialorder %v4965, 0.0
    %vm5015 = vcmp.gt.f32.partialorder %v4972, 0.0
    %vm5016 = vcmp.gt.f32.partialorder %v4977, 0.0
    %vm5017 = vcmp.gt.f32.partialorder %v4980, 0.0
    %vm5018 = vcmp.gt.f32.partialorder %v4985, 0.0
    %vm5019 = vcmp.gt.f32.partialorder %v4988, 0.0
    %vm5020 = vcmp.gt.f32.partialorder %v4993, 0.0
    %vm5021 = vcmp.gt.f32.partialorder %v4996, 0.0
    %vm5022 = vcmp.gt.f32.partialorder %v5001, 0.0
    %vm5023 = vcmp.gt.f32.partialorder %v5004, 0.0
    %v5024 = vmin.f32 %v4938, 0.0
    %v5025 = vmin.f32 %v4941, 0.0
    %v5026 = vmin.f32 %v4946, 0.0
    %v5027 = vmin.f32 %v4949, 0.0
    %v5028 = vmin.f32 %v4954, 0.0
    %v5029 = vmin.f32 %v4957, 0.0
    %v5030 = vmin.f32 %v4962, 0.0
    %v5031 = vmin.f32 %v4965, 0.0
    %v5032 = vmin.f32 %v4972, 0.0
    %v5033 = vmin.f32 %v4977, 0.0
    %v5034 = vmin.f32 %v4980, 0.0
    %v5035 = vmin.f32 %v4985, 0.0
    %v5036 = vmin.f32 %v4988, 0.0
    %v5037 = vmin.f32 %v4993, 0.0
    %v5038 = vmin.f32 %v4996, 0.0
    %v5039 = vmin.f32 %v5001, 0.0
    %v5040 = vmin.f32 %v5004, 0.0
    %v5041 = vmul.f32 %v5024, 1.442695
    %v5042 = vpow.pop %v5041
    %v5043 = vmul.f32 %v5025, 1.442695
    %v5044 = vpow.pop %v5043
    %v5045 = vmul.f32 %v5026, 1.442695
    %v5046 = vpow.pop %v5045
    %v5047 = vmul.f32 %v5027, 1.442695
    %v5048 = vpow.pop %v5047
    %v5049 = vmul.f32 %v5028, 1.442695
    %v5050 = vpow.pop %v5049
    %v5051 = vmul.f32 %v5029, 1.442695
    %v5052 = vpow.pop %v5051
    %v5053 = vmul.f32 %v5030, 1.442695
    %v5054 = vpow.pop %v5053
    %v5055 = vmul.f32 %v5031, 1.442695
    %v5056 = vpow.pop %v5055
    %v5057 = vmul.f32 %v5032, 1.442695
    %v5058 = vpow.pop %v5057
    %v5059 = vmul.f32 %v5033, 1.442695
    %v5060 = vpow.pop %v5059
    %v5061 = vmul.f32 %v5034, 1.442695
    %v5062 = vpow.pop %v5061
    %v5063 = vmul.f32 %v5035, 1.442695
    %v5064 = vpow.pop %v5063
    %v5065 = vmul.f32 %v5036, 1.442695
    %v5066 = vpow.pop %v5065
    %v5067 = vmul.f32 %v5037, 1.442695
    %v5068 = vpow.pop %v5067
    %v5069 = vmul.f32 %v5038, 1.442695
    %v5070 = vpow.pop %v5069
    %v5071 = vmul.f32 %v5039, 1.442695
    %v5072 = vpow.pop %v5071
    %v5073 = vmul.f32 %v5040, 1.442695
    %v5074 = vpow.pop %v5073
    %v5075 = vsub.f32 %v5042, 1.0
    %v5076 = vsub.f32 %v5044, 1.0
    %v5077 = vsub.f32 %v5046, 1.0
    %v5078 = vsub.f32 %v5048, 1.0
    %v5079 = vsub.f32 %v5050, 1.0
    %v5080 = vsub.f32 %v5052, 1.0
    %v5081 = vsub.f32 %v5054, 1.0
    %v5082 = vsub.f32 %v5056, 1.0
    %v5083 = vsub.f32 %v5058, 1.0
    %v5084 = vsub.f32 %v5060, 1.0
    %v5085 = vsub.f32 %v5062, 1.0
    %v5086 = vsub.f32 %v5064, 1.0
    %v5087 = vsub.f32 %v5066, 1.0
    %v5088 = vsub.f32 %v5068, 1.0
    %v5089 = vsub.f32 %v5070, 1.0
    %v5090 = vsub.f32 %v5072, 1.0
    %v5091 = vsub.f32 %v5074, 1.0
    %v5092 = vsel %vm5007, %v4938, %v5075
    %v5093 = vsel %vm5008, %v4941, %v5076
    %v5094 = vsel %vm5009, %v4946, %v5077
    %v5095 = vsel %vm5010, %v4949, %v5078
    %v5096 = vsel %vm5011, %v4954, %v5079
    %v5097 = vsel %vm5012, %v4957, %v5080
    %v5098 = vsel %vm5013, %v4962, %v5081
    %v5099 = vsel %vm5014, %v4965, %v5082
    %v5100 = vsel %vm5015, %v4972, %v5083
    %v5101 = vsel %vm5016, %v4977, %v5084
    %v5102 = vsel %vm5017, %v4980, %v5085
    %v5103 = vsel %vm5018, %v4985, %v5086
    %v5104 = vsel %vm5019, %v4988, %v5087
    %v5105 = vsel %vm5020, %v4993, %v5088
    %v5106 = vsel %vm5021, %v4996, %v5089
    %v5107 = vsel %vm5022, %v5001, %v5090
    %v5108 = vsel %vm5023, %v5004, %v5091
    %s5109 = sld [smem:[#allocation5]]
    %v5110 = vstv %s5109
    %v5111 = vmul.f32 %v5092, %v5110
    %v5112 = vmul.f32 %v5093, %v5110
    %v5113 = vmul.f32 %v5094, %v5110
    %v5114 = vmul.f32 %v5095, %v5110
    %v5115 = vmul.f32 %v5096, %v5110
    %v5116 = vmul.f32 %v5097, %v5110
    %v5117 = vmul.f32 %v5098, %v5110
    %v5118 = vmul.f32 %v5099, %v5110
    %v5119 = vmul.f32 %v5100, %v5110
    %v5120 = vmul.f32 %v5101, %v5110
    %v5121 = vmul.f32 %v5102, %v5110
    %v5122 = vmul.f32 %v5103, %v5110
    %v5123 = vmul.f32 %v5104, %v5110
    %v5124 = vmul.f32 %v5105, %v5110
    %v5125 = vmul.f32 %v5106, %v5110
    %v5126 = vmul.f32 %v5107, %v5110
    %v5127 = vmul.f32 %v5108, %v5110
    %v5128 = vadd.f32 %v5111, %v1148
    %v5129 = vadd.f32 %v5112, %v1151
    %v5130 = vadd.f32 %v5113, %v1156
    %v5131 = vadd.f32 %v5114, %v1159
    %v5132 = vadd.f32 %v5115, %v1164
    %v5133 = vadd.f32 %v5116, %v1167
    %v5134 = vadd.f32 %v5117, %v1172
    %v5135 = vadd.f32 %v5118, %v1175
    %v5136 = vadd.f32 %v5119, %v1182
    %v5137 = vadd.f32 %v5120, %v1187
    %v5138 = vadd.f32 %v5121, %v1190
    %v5139 = vadd.f32 %v5122, %v1195
    %v5140 = vadd.f32 %v5123, %v1198
    %v5141 = vadd.f32 %v5124, %v1203
    %v5142 = vadd.f32 %v5125, %v1206
    %v5143 = vadd.f32 %v5126, %v1211
    %v5144 = vadd.f32 %v5127, %v1214
    %v5145 = vpack.c.bf16 %v5129, %v5128
    %v5146 = vpack.c.bf16 %v5131, %v5130
    %v5147 = vpack.c.bf16 %v5133, %v5132
    %v5148 = vpack.c.bf16 %v5135, %v5134
    %v5153 = vunpack.c.l.b16 %v5145
    %v5154 = vunpack.c.h.b16 %v5145
    %v5155 = vunpack.c.l.b16 %v5146
    %v5156 = vunpack.c.h.b16 %v5146
    %v5157 = vunpack.c.l.b16 %v5147
    %v5158 = vunpack.c.h.b16 %v5147
    %v5159 = vunpack.c.l.b16 %v5148
    %v5160 = vunpack.c.h.b16 %v5148
    %v5161 = vpack.c.b16 %v5153, %v5153
    %v5162 = vpack.c.b16 %v5154, %v5154
    %v5163 = vpack.c.b16 %v5155, %v5155
    %v5164 = vpack.c.b16 %v5156, %v5156
    %v5165 = vpack.c.b16 %v5157, %v5157
    %v5166 = vpack.c.b16 %v5158, %v5158
    %v5167 = vpack.c.b16 %v5159, %v5159
    %v5168 = vpack.c.b16 %v5160, %v5160
    %v5170 = vshrl.u32 %v5161, 16
    %v5172 = vrot.slane %v5170, 7
    %v5173 = vshll.u32 %v5161, 16
    %v5175 = vor.u32 %v5172, %v5173
    %v5176 = vrot.slane %v5172, 4
    %v5178 = vshrl.u32 %v5162, 16
    %v5180 = vrot.slane %v5178, 7
    %v5181 = vshll.u32 %v5162, 16
    %v5183 = vor.u32 %v5180, %v5181
    %v5184 = vsel %vm152, %v5176, %v5183
    %v5185 = vrot.slane %v5180, 4
    %v5187 = vshrl.u32 %v5163, 16
    %v5189 = vrot.slane %v5187, 7
    %v5190 = vshll.u32 %v5163, 16
    %v5192 = vor.u32 %v5189, %v5190
    %v5193 = vsel %vm152, %v5185, %v5192
    %v5194 = vrot.slane %v5189, 4
    %v5196 = vshrl.u32 %v5164, 16
    %v5198 = vrot.slane %v5196, 7
    %v5199 = vshll.u32 %v5164, 16
    %v5201 = vor.u32 %v5198, %v5199
    %v5202 = vsel %vm152, %v5194, %v5201
    %v5203 = vrot.slane %v5198, 4
    %v5205 = vshrl.u32 %v5165, 16
    %v5207 = vrot.slane %v5205, 7
    %v5208 = vshll.u32 %v5165, 16
    %v5210 = vor.u32 %v5207, %v5208
    %v5211 = vsel %vm152, %v5203, %v5210
    %v5212 = vrot.slane %v5207, 4
    %v5214 = vshrl.u32 %v5166, 16
    %v5216 = vrot.slane %v5214, 7
    %v5217 = vshll.u32 %v5166, 16
    %v5219 = vor.u32 %v5216, %v5217
    %v5220 = vsel %vm152, %v5212, %v5219
    %v5221 = vrot.slane %v5216, 4
    %v5223 = vshrl.u32 %v5167, 16
    %v5225 = vrot.slane %v5223, 7
    %v5226 = vshll.u32 %v5167, 16
    %v5228 = vor.u32 %v5225, %v5226
    %v5229 = vsel %vm152, %v5221, %v5228
    %v5230 = vrot.slane %v5225, 4
    %v5232 = vshrl.u32 %v5168, 16
    %v5234 = vrot.slane %v5232, 7
    %v5235 = vshll.u32 %v5168, 16
    %v5237 = vor.u32 %v5234, %v5235
    %v5238 = vsel %vm152, %v5230, %v5237
    %v5239 = vrot.slane %v5234, 4
    %v5249 = vld [vmem:[#allocation3 + $0x4] sm:$0xf]
    %v5250 = vsel %vm78, %v5175, %v5249
    %5251 = vst [vmem:[#allocation3 + $0x4] sm:$0xf] %v5250
    %5252 = vst.msk [vmem:[#allocation3 + $0x8] sm:$0xf] %vm58, %v5184
    %5253 = vst.msk [vmem:[#allocation3 + $0xc] sm:$0xf] %vm58, %v5193
    %5254 = vst.msk [vmem:[#allocation3 + $0x10] sm:$0xf] %vm58, %v5202
    %5255 = vst.msk [vmem:[#allocation3 + $0x14] sm:$0xf] %vm58, %v5211
    %5256 = vst.msk [vmem:[#allocation3 + $0x18] sm:$0xf] %vm58, %v5220
    %5257 = vst.msk [vmem:[#allocation3 + $0x1c] sm:$0xf] %vm58, %v5229
    %5258 = vst.msk [vmem:[#allocation3 + $0x20] sm:$0xf] %vm58, %v5238
    %v5259 = vld [vmem:[#allocation3 + $0x24] sm:$0x1]
    %v5260 = vsel %vm61, %v5239, %v5259
    %5261 = vst [vmem:[#allocation3 + $0x24] sm:$0x1] %v5260
    %v5262 = vpack.c.bf16 %v5137, %v5136
    %v5263 = vpack.c.bf16 %v5139, %v5138
    %v5264 = vpack.c.bf16 %v5141, %v5140
    %v5265 = vpack.c.bf16 %v5143, %v5142
    %v5266 = vpack.c.bf16 %v5144, %v5144
    %v5272 = vunpack.c.l.b16 %v5262
    %v5273 = vunpack.c.h.b16 %v5262
    %v5274 = vunpack.c.l.b16 %v5263
    %v5275 = vunpack.c.h.b16 %v5263
    %v5276 = vunpack.c.l.b16 %v5264
    %v5277 = vunpack.c.h.b16 %v5264
    %v5278 = vunpack.c.l.b16 %v5265
    %v5279 = vunpack.c.h.b16 %v5265
    %v5280 = vunpack.c.l.b16 %v5266
    %v5281 = vpack.c.b16 %v5272, %v5272
    %v5282 = vpack.c.b16 %v5273, %v5273
    %v5283 = vpack.c.b16 %v5274, %v5274
    %v5284 = vpack.c.b16 %v5275, %v5275
    %v5285 = vpack.c.b16 %v5276, %v5276
    %v5286 = vpack.c.b16 %v5277, %v5277
    %v5287 = vpack.c.b16 %v5278, %v5278
    %v5288 = vpack.c.b16 %v5279, %v5279
    %v5289 = vpack.c.b16 %v5280, %v5280
    %v5291 = vshrl.u32 %v5281, 16
    %v5293 = vrot.slane %v5291, 7
    %v5294 = vshll.u32 %v5281, 16
    %v5296 = vor.u32 %v5293, %v5294
    %v5297 = vrot.slane %v5293, 4
    %v5299 = vshrl.u32 %v5282, 16
    %v5301 = vrot.slane %v5299, 7
    %v5302 = vshll.u32 %v5282, 16
    %v5304 = vor.u32 %v5301, %v5302
    %v5305 = vsel %vm152, %v5297, %v5304
    %v5306 = vrot.slane %v5301, 4
    %v5308 = vshrl.u32 %v5283, 16
    %v5310 = vrot.slane %v5308, 7
    %v5311 = vshll.u32 %v5283, 16
    %v5313 = vor.u32 %v5310, %v5311
    %v5314 = vsel %vm152, %v5306, %v5313
    %v5315 = vrot.slane %v5310, 4
    %v5317 = vshrl.u32 %v5284, 16
    %v5319 = vrot.slane %v5317, 7
    %v5320 = vshll.u32 %v5284, 16
    %v5322 = vor.u32 %v5319, %v5320
    %v5323 = vsel %vm152, %v5315, %v5322
    %v5324 = vrot.slane %v5319, 4
    %v5326 = vshrl.u32 %v5285, 16
    %v5328 = vrot.slane %v5326, 7
    %v5329 = vshll.u32 %v5285, 16
    %v5331 = vor.u32 %v5328, %v5329
    %v5332 = vsel %vm152, %v5324, %v5331
    %v5333 = vrot.slane %v5328, 4
    %v5335 = vshrl.u32 %v5286, 16
    %v5337 = vrot.slane %v5335, 7
    %v5338 = vshll.u32 %v5286, 16
    %v5340 = vor.u32 %v5337, %v5338
    %v5341 = vsel %vm152, %v5333, %v5340
    %v5342 = vrot.slane %v5337, 4
    %v5344 = vshrl.u32 %v5287, 16
    %v5346 = vrot.slane %v5344, 7
    %v5347 = vshll.u32 %v5287, 16
    %v5349 = vor.u32 %v5346, %v5347
    %v5350 = vsel %vm152, %v5342, %v5349
    %v5351 = vrot.slane %v5346, 4
    %v5353 = vshrl.u32 %v5288, 16
    %v5355 = vrot.slane %v5353, 7
    %v5356 = vshll.u32 %v5288, 16
    %v5358 = vor.u32 %v5355, %v5356
    %v5359 = vsel %vm152, %v5351, %v5358
    %v5360 = vrot.slane %v5355, 4
    %v5362 = vshll.u32 %v5289, 16
    %v5364 = vsel %vm152, %v5360, %v5362
    %5374 = vst.msk [vmem:[#allocation3 + $0x28] sm:$0xe] %vm96, %v5296
    %5375 = vst.msk [vmem:[#allocation3 + $0x2c] sm:$0xf] %vm58, %v5305
    %5376 = vst.msk [vmem:[#allocation3 + $0x30] sm:$0xf] %vm58, %v5314
    %5377 = vst.msk [vmem:[#allocation3 + $0x34] sm:$0xf] %vm58, %v5323
    %5378 = vst.msk [vmem:[#allocation3 + $0x38] sm:$0xf] %vm58, %v5332
    %5379 = vst.msk [vmem:[#allocation3 + $0x3c] sm:$0xf] %vm58, %v5341
    %5380 = vst.msk [vmem:[#allocation3 + $0x40] sm:$0xf] %vm58, %v5350
    %5381 = vst.msk [vmem:[#allocation3 + $0x44] sm:$0xf] %vm58, %v5359
    %5382 = vst.msk [vmem:[#allocation3 + $0x48] sm:$0x1] %vm82, %v5364
    %s5383 = scalar_lea.vmem %s5, 144
    %v5384 = vld [vmem:[%s5383] sm:$0xf]
    %v5385 = vld [vmem:[%s5383 + $0x4] sm:$0xf]
    %v5386 = vld [vmem:[%s5383 + $0x8] sm:$0xf]
    %v5387 = vld [vmem:[%s5383 + $0xc] sm:$0xf]
    %v5388 = vld [vmem:[%s5383 + $0x10] sm:$0xf]
    %v5389 = vld [vmem:[%s5383 + $0x14] sm:$0xf]
    %v5390 = vld [vmem:[%s5383 + $0x18] sm:$0xf]
    %v5391 = vld [vmem:[%s5383 + $0x1c] sm:$0xf]
    %v5392 = vld [vmem:[%s5383 + $0x20] sm:$0xf]
    %v5393 = vld [vmem:[%s5383 + $0x24] sm:$0xf]
    %v5394 = vld [vmem:[%s5383 + $0x28] sm:$0xf]
    %v5395 = vld [vmem:[%s5383 + $0x2c] sm:$0xf]
    %v5396 = vld [vmem:[%s5383 + $0x30] sm:$0xf]
    %v5397 = vld [vmem:[%s5383 + $0x34] sm:$0xf]
    %v5398 = vld [vmem:[%s5383 + $0x38] sm:$0xf]
    %v5399 = vld [vmem:[%s5383 + $0x3c] sm:$0xf]
    %v5400 = vld [vmem:[%s5383 + $0x40] sm:$0xf]
    %v5401 = vld [vmem:[%s5383 + $0x44] sm:$0xf]
    %v5402 = vld [vmem:[%s5383 + $0x48] sm:$0xf]
    %v5403 = vld [vmem:[%s5383 + $0x4c] sm:$0xf]
    %v5404 = vld [vmem:[%s5383 + $0x50] sm:$0xf]
    %v5405 = vld [vmem:[%s5383 + $0x54] sm:$0xf]
    %v5406 = vld [vmem:[%s5383 + $0x58] sm:$0xf]
    %v5407 = vld [vmem:[%s5383 + $0x5c] sm:$0xf]
    %v5408 = vld [vmem:[%s5383 + $0x60] sm:$0xf]
    %v5409 = vld [vmem:[%s5383 + $0x64] sm:$0xf]
    %v5410 = vld [vmem:[%s5383 + $0x68] sm:$0xf]
    %v5411 = vld [vmem:[%s5383 + $0x6c] sm:$0xf]
    %v5412 = vld [vmem:[%s5383 + $0x70] sm:$0xf]
    %v5413 = vld [vmem:[%s5383 + $0x74] sm:$0xf]
    %v5414 = vld [vmem:[%s5383 + $0x78] sm:$0xf]
    %v5415 = vld [vmem:[%s5383 + $0x7c] sm:$0xf]
    %v5416 = vld [vmem:[%s5383 + $0x80] sm:$0xf]
    %v5417 = vld [vmem:[%s5383 + $0x84] sm:$0xf]
    %v5418 = vld [vmem:[%s5383 + $0x88] sm:$0xf]
    %v5419 = vld [vmem:[%s5383 + $0x8c] sm:$0xf]
    %s5420 = scalar_lea.vmem %s6, 1
    %v5421 = vld [vmem:[%s5420] sm:$0x1]
    %v5422 = vld [vmem:[#allocation3] sm:$0xf]
    %v5423 = vld [vmem:[#allocation3 + $0x4] sm:$0xf]
    %v5424 = vld [vmem:[#allocation3 + $0x8] sm:$0xf]
    %v5425 = vld [vmem:[#allocation3 + $0xc] sm:$0xf]
    %v5426 = vld [vmem:[#allocation3 + $0x10] sm:$0xf]
    %v5427 = vld [vmem:[#allocation3 + $0x14] sm:$0xf]
    %v5428 = vld [vmem:[#allocation3 + $0x18] sm:$0xf]
    %v5429 = vld [vmem:[#allocation3 + $0x1c] sm:$0xf]
    %v5430 = vld [vmem:[#allocation3 + $0x20] sm:$0xf]
    %v5431 = vld [vmem:[#allocation3 + $0x24] sm:$0xf]
    %v5432 = vld [vmem:[#allocation3 + $0x28] sm:$0xf]
    %v5433 = vld [vmem:[#allocation3 + $0x2c] sm:$0xf]
    %v5434 = vld [vmem:[#allocation3 + $0x30] sm:$0xf]
    %v5435 = vld [vmem:[#allocation3 + $0x34] sm:$0xf]
    %v5436 = vld [vmem:[#allocation3 + $0x38] sm:$0xf]
    %v5437 = vld [vmem:[#allocation3 + $0x3c] sm:$0xf]
    %v5438 = vld [vmem:[#allocation3 + $0x40] sm:$0xf]
    %v5439 = vld [vmem:[#allocation3 + $0x44] sm:$0x1]
    %v5440 = vmul.bf16 %v5422, %v345
    %v5441 = vmul.bf16 %v5423, %v357
    %v5442 = vmul.bf16 %v5424, %v369
    %v5443 = vmul.bf16 %v5425, %v381
    %v5444 = vmul.bf16 %v5426, %v393
    %v5445 = vmul.bf16 %v5427, %v405
    %v5446 = vmul.bf16 %v5428, %v417
    %v5447 = vmul.bf16 %v5429, %v429
    %v5448 = vmul.bf16 %v5430, %v441
    %v5449 = vmul.bf16 %v5431, %v453
    %v5450 = vmul.bf16 %v5432, %v465
    %v5451 = vmul.bf16 %v5433, %v477
    %v5452 = vmul.bf16 %v5434, %v489
    %v5453 = vmul.bf16 %v5435, %v501
    %v5454 = vmul.bf16 %v5436, %v513
    %v5455 = vmul.bf16 %v5437, %v525
    %v5456 = vmul.bf16 %v5438, %v537
    %v5457 = vmul.bf16 %v5439, %v549
    %v5458 = vld [vmem:[#allocation3] sm:$0xe]
    %v5459 = vld [vmem:[#allocation3 + $0x44] sm:$0x3]
    %v5460 = vmul.bf16 %v5458, %v1764
    %v5461 = vmul.bf16 %v5423, %v1767
    %v5462 = vmul.bf16 %v5424, %v1770
    %v5463 = vmul.bf16 %v5425, %v1773
    %v5464 = vmul.bf16 %v5426, %v1776
    %v5465 = vmul.bf16 %v5427, %v1779
    %v5466 = vmul.bf16 %v5428, %v1782
    %v5467 = vmul.bf16 %v5429, %v1785
    %v5468 = vmul.bf16 %v5430, %v1788
    %v5469 = vmul.bf16 %v5431, %v1791
    %v5470 = vmul.bf16 %v5432, %v1794
    %v5471 = vmul.bf16 %v5433, %v1797
    %v5472 = vmul.bf16 %v5434, %v1800
    %v5473 = vmul.bf16 %v5435, %v1803
    %v5474 = vmul.bf16 %v5436, %v1806
    %v5475 = vmul.bf16 %v5437, %v1809
    %v5476 = vmul.bf16 %v5438, %v1812
    %v5477 = vmul.bf16 %v5459, %v1815
    %v5496 = vunpack.c.l.b16 %v5440
    %v5497 = vunpack.c.l.b16 %v5441
    %v5498 = vunpack.c.l.b16 %v5442
    %v5499 = vunpack.c.l.b16 %v5443
    %v5500 = vunpack.c.l.b16 %v5444
    %v5501 = vunpack.c.l.b16 %v5445
    %v5502 = vunpack.c.l.b16 %v5446
    %v5503 = vunpack.c.l.b16 %v5447
    %v5504 = vunpack.c.l.b16 %v5448
    %v5505 = vunpack.c.l.b16 %v5449
    %v5506 = vunpack.c.l.b16 %v5450
    %v5507 = vunpack.c.l.b16 %v5451
    %v5508 = vunpack.c.l.b16 %v5452
    %v5509 = vunpack.c.l.b16 %v5453
    %v5510 = vunpack.c.l.b16 %v5454
    %v5511 = vunpack.c.l.b16 %v5455
    %v5512 = vunpack.c.l.b16 %v5456
    %v5513 = vunpack.c.l.b16 %v5457
    %v5514 = vpack.c.b16 %v5497, %v5496
    %v5515 = vpack.c.b16 %v5499, %v5498
    %v5516 = vpack.c.b16 %v5501, %v5500
    %v5517 = vpack.c.b16 %v5503, %v5502
    %v5518 = vpack.c.b16 %v5505, %v5504
    %v5519 = vpack.c.b16 %v5507, %v5506
    %v5520 = vpack.c.b16 %v5509, %v5508
    %v5521 = vpack.c.b16 %v5511, %v5510
    %v5522 = vpack.c.b16 %v5513, %v5512
    %v5541 = vunpack.c.l.b16 %v5422
    %v5542 = vunpack.c.l.b16 %v5423
    %v5543 = vunpack.c.l.b16 %v5424
    %v5544 = vunpack.c.l.b16 %v5425
    %v5545 = vunpack.c.l.b16 %v5426
    %v5546 = vunpack.c.l.b16 %v5427
    %v5547 = vunpack.c.l.b16 %v5428
    %v5548 = vunpack.c.l.b16 %v5429
    %v5549 = vunpack.c.l.b16 %v5430
    %v5550 = vunpack.c.l.b16 %v5431
    %v5551 = vunpack.c.l.b16 %v5432
    %v5552 = vunpack.c.l.b16 %v5433
    %v5553 = vunpack.c.l.b16 %v5434
    %v5554 = vunpack.c.l.b16 %v5435
    %v5555 = vunpack.c.l.b16 %v5436
    %v5556 = vunpack.c.l.b16 %v5437
    %v5557 = vunpack.c.l.b16 %v5438
    %v5558 = vunpack.c.l.b16 %v5439
    %v5559 = vpack.c.b16 %v5542, %v5541
    %v5560 = vpack.c.b16 %v5544, %v5543
    %v5561 = vpack.c.b16 %v5546, %v5545
    %v5562 = vpack.c.b16 %v5548, %v5547
    %v5563 = vpack.c.b16 %v5550, %v5549
    %v5564 = vpack.c.b16 %v5552, %v5551
    %v5565 = vpack.c.b16 %v5554, %v5553
    %v5566 = vpack.c.b16 %v5556, %v5555
    %v5567 = vpack.c.b16 %v5558, %v5557
    %v5569 = vshrl.u32 %v5559, 16
    %v5571 = vshll.u32 %v5559, 16
    %v5573 = vrot.slane %v5571, 1
    %v5574 = vor.u32 %v5569, %v5573
    %v5576 = vshll.u32 %v5560, 16
    %v5578 = vrot.slane %v5576, 1
    %v5579 = vsel %vm658, %v5574, %v5578
    %v5580 = vshrl.u32 %v5560, 16
    %v5582 = vor.u32 %v5580, %v5578
    %v5584 = vshll.u32 %v5561, 16
    %v5586 = vrot.slane %v5584, 1
    %v5587 = vsel %vm658, %v5582, %v5586
    %v5588 = vshrl.u32 %v5561, 16
    %v5590 = vor.u32 %v5588, %v5586
    %v5592 = vshll.u32 %v5562, 16
    %v5594 = vrot.slane %v5592, 1
    %v5595 = vsel %vm658, %v5590, %v5594
    %v5596 = vshrl.u32 %v5562, 16
    %v5598 = vor.u32 %v5596, %v5594
    %v5600 = vshll.u32 %v5563, 16
    %v5602 = vrot.slane %v5600, 1
    %v5603 = vsel %vm658, %v5598, %v5602
    %v5604 = vshrl.u32 %v5563, 16
    %v5606 = vor.u32 %v5604, %v5602
    %v5608 = vshll.u32 %v5564, 16
    %v5610 = vrot.slane %v5608, 1
    %v5611 = vsel %vm658, %v5606, %v5610
    %v5612 = vshrl.u32 %v5564, 16
    %v5614 = vor.u32 %v5612, %v5610
    %v5616 = vshll.u32 %v5565, 16
    %v5618 = vrot.slane %v5616, 1
    %v5619 = vsel %vm658, %v5614, %v5618
    %v5620 = vshrl.u32 %v5565, 16
    %v5622 = vor.u32 %v5620, %v5618
    %v5624 = vshll.u32 %v5566, 16
    %v5626 = vrot.slane %v5624, 1
    %v5627 = vsel %vm658, %v5622, %v5626
    %v5628 = vshrl.u32 %v5566, 16
    %v5630 = vor.u32 %v5628, %v5626
    %v5632 = vshll.u32 %v5567, 16
    %v5634 = vrot.slane %v5632, 1
    %v5635 = vsel %vm658, %v5630, %v5634
    %v5636 = vshrl.u32 %v5567, 16
    %v5638 = vor.u32 %v5636, %v5634
    %5639 = vrot.lane.b32.xlu0 %v5579, 32
    %v5640 = vpop.permute.xlu0 %5639
    %5641 = vrot.lane.b32.xlu0 %v5587, 32
    %v5642 = vpop.permute.xlu0 %5641
    %5643 = vrot.lane.b32.xlu0 %v5595, 32
    %v5644 = vpop.permute.xlu0 %5643
    %5645 = vrot.lane.b32.xlu0 %v5603, 32
    %v5646 = vpop.permute.xlu0 %5645
    %5647 = vrot.lane.b32.xlu0 %v5611, 32
    %v5648 = vpop.permute.xlu0 %5647
    %5649 = vrot.lane.b32.xlu0 %v5619, 32
    %v5650 = vpop.permute.xlu0 %5649
    %5651 = vrot.lane.b32.xlu0 %v5627, 32
    %v5652 = vpop.permute.xlu0 %5651
    %5653 = vrot.lane.b32.xlu0 %v5635, 32
    %v5654 = vpop.permute.xlu0 %5653
    %5655 = vrot.lane.b32.xlu0 %v5638, 32
    %v5656 = vpop.permute.xlu0 %5655
    %v5675 = vunpack.c.l.b16 %v5460
    %v5676 = vunpack.c.l.b16 %v5461
    %v5677 = vunpack.c.l.b16 %v5462
    %v5678 = vunpack.c.l.b16 %v5463
    %v5679 = vunpack.c.l.b16 %v5464
    %v5680 = vunpack.c.l.b16 %v5465
    %v5681 = vunpack.c.l.b16 %v5466
    %v5682 = vunpack.c.l.b16 %v5467
    %v5683 = vunpack.c.l.b16 %v5468
    %v5684 = vunpack.c.l.b16 %v5469
    %v5685 = vunpack.c.l.b16 %v5470
    %v5686 = vunpack.c.l.b16 %v5471
    %v5687 = vunpack.c.l.b16 %v5472
    %v5688 = vunpack.c.l.b16 %v5473
    %v5689 = vunpack.c.l.b16 %v5474
    %v5690 = vunpack.c.l.b16 %v5475
    %v5691 = vunpack.c.l.b16 %v5476
    %v5692 = vunpack.c.l.b16 %v5477
    %v5693 = vpack.c.b16 %v5676, %v5675
    %v5694 = vpack.c.b16 %v5678, %v5677
    %v5695 = vpack.c.b16 %v5680, %v5679
    %v5696 = vpack.c.b16 %v5682, %v5681
    %v5697 = vpack.c.b16 %v5684, %v5683
    %v5698 = vpack.c.b16 %v5686, %v5685
    %v5699 = vpack.c.b16 %v5688, %v5687
    %v5700 = vpack.c.b16 %v5690, %v5689
    %v5701 = vpack.c.b16 %v5692, %v5691
    %v5702 = vrot.slane %v5693, 1
    %v5703 = vrot.slane %v5694, 1
    %v5704 = vsel %vm2076, %v5702, %v5703
    %v5705 = vrot.slane %v5695, 1
    %v5706 = vsel %vm2076, %v5703, %v5705
    %v5707 = vrot.slane %v5696, 1
    %v5708 = vsel %vm2076, %v5705, %v5707
    %v5709 = vrot.slane %v5697, 1
    %v5710 = vsel %vm2076, %v5707, %v5709
    %v5711 = vrot.slane %v5698, 1
    %v5712 = vsel %vm2076, %v5709, %v5711
    %v5713 = vrot.slane %v5699, 1
    %v5714 = vsel %vm2076, %v5711, %v5713
    %v5715 = vrot.slane %v5700, 1
    %v5716 = vsel %vm2076, %v5713, %v5715
    %v5717 = vrot.slane %v5701, 1
    %v5718 = vsel %vm2076, %v5715, %v5717
    %5719 = vrot.lane.b32.xlu0 %v5704, 64
    %v5720 = vpop.permute.xlu0 %5719
    %5721 = vrot.lane.b32.xlu0 %v5706, 64
    %v5722 = vpop.permute.xlu0 %5721
    %5723 = vrot.lane.b32.xlu0 %v5708, 64
    %v5724 = vpop.permute.xlu0 %5723
    %5725 = vrot.lane.b32.xlu0 %v5710, 64
    %v5726 = vpop.permute.xlu0 %5725
    %5727 = vrot.lane.b32.xlu0 %v5712, 64
    %v5728 = vpop.permute.xlu0 %5727
    %5729 = vrot.lane.b32.xlu0 %v5714, 64
    %v5730 = vpop.permute.xlu0 %5729
    %5731 = vrot.lane.b32.xlu0 %v5716, 64
    %v5732 = vpop.permute.xlu0 %5731
    %5733 = vrot.lane.b32.xlu0 %v5718, 64
    %v5734 = vpop.permute.xlu0 %5733
    %5735 = vrot.lane.b32.xlu0 %v5717, 64
    %v5736 = vpop.permute.xlu0 %5735
    %v5739 = vsel %vm1045, %v5514, %v5640
    %v5742 = vsel %vm1045, %v5515, %v5642
    %v5745 = vsel %vm1045, %v5516, %v5644
    %v5748 = vsel %vm1045, %v5517, %v5646
    %v5751 = vsel %vm1045, %v5518, %v5648
    %v5754 = vsel %vm1045, %v5519, %v5650
    %v5757 = vsel %vm1045, %v5520, %v5652
    %v5760 = vsel %vm1045, %v5521, %v5654
    %v5763 = vsel %vm1045, %v5522, %v5656
    %v5765 = vsel %vm1094, %v5739, %v5720
    %v5767 = vsel %vm1094, %v5742, %v5722
    %v5769 = vsel %vm1094, %v5745, %v5724
    %v5771 = vsel %vm1094, %v5748, %v5726
    %v5773 = vsel %vm1094, %v5751, %v5728
    %v5775 = vsel %vm1094, %v5754, %v5730
    %v5777 = vsel %vm1094, %v5757, %v5732
    %v5779 = vsel %vm1094, %v5760, %v5734
    %v5781 = vsel %vm1094, %v5763, %v5736
    %v5782 = vld [vmem:[#allocation3 + $0x44] sm:$0xf]
    %v5783 = vld [vmem:[#allocation3 + $0x48] sm:$0x1]
    %v5784 = vmul.bf16 %v5423, %v345
    %v5785 = vmul.bf16 %v5424, %v357
    %v5786 = vmul.bf16 %v5425, %v369
    %v5787 = vmul.bf16 %v5426, %v381
    %v5788 = vmul.bf16 %v5427, %v393
    %v5789 = vmul.bf16 %v5428, %v405
    %v5790 = vmul.bf16 %v5429, %v417
    %v5791 = vmul.bf16 %v5430, %v429
    %v5792 = vmul.bf16 %v5431, %v441
    %v5793 = vmul.bf16 %v5432, %v453
    %v5794 = vmul.bf16 %v5433, %v465
    %v5795 = vmul.bf16 %v5434, %v477
    %v5796 = vmul.bf16 %v5435, %v489
    %v5797 = vmul.bf16 %v5436, %v501
    %v5798 = vmul.bf16 %v5437, %v513
    %v5799 = vmul.bf16 %v5438, %v525
    %v5800 = vmul.bf16 %v5782, %v537
    %v5801 = vmul.bf16 %v5783, %v549
    %v5802 = vld [vmem:[#allocation3 + $0x4] sm:$0xe]
    %v5803 = vld [vmem:[#allocation3 + $0x48] sm:$0x3]
    %v5804 = vmul.bf16 %v5802, %v1764
    %v5805 = vmul.bf16 %v5424, %v1767
    %v5806 = vmul.bf16 %v5425, %v1770
    %v5807 = vmul.bf16 %v5426, %v1773
    %v5808 = vmul.bf16 %v5427, %v1776
    %v5809 = vmul.bf16 %v5428, %v1779
    %v5810 = vmul.bf16 %v5429, %v1782
    %v5811 = vmul.bf16 %v5430, %v1785
    %v5812 = vmul.bf16 %v5431, %v1788
    %v5813 = vmul.bf16 %v5432, %v1791
    %v5814 = vmul.bf16 %v5433, %v1794
    %v5815 = vmul.bf16 %v5434, %v1797
    %v5816 = vmul.bf16 %v5435, %v1800
    %v5817 = vmul.bf16 %v5436, %v1803
    %v5818 = vmul.bf16 %v5437, %v1806
    %v5819 = vmul.bf16 %v5438, %v1809
    %v5820 = vmul.bf16 %v5782, %v1812
    %v5821 = vmul.bf16 %v5803, %v1815
    %v5840 = vunpack.c.l.b16 %v5784
    %v5841 = vunpack.c.l.b16 %v5785
    %v5842 = vunpack.c.l.b16 %v5786
    %v5843 = vunpack.c.l.b16 %v5787
    %v5844 = vunpack.c.l.b16 %v5788
    %v5845 = vunpack.c.l.b16 %v5789
    %v5846 = vunpack.c.l.b16 %v5790
    %v5847 = vunpack.c.l.b16 %v5791
    %v5848 = vunpack.c.l.b16 %v5792
    %v5849 = vunpack.c.l.b16 %v5793
    %v5850 = vunpack.c.l.b16 %v5794
    %v5851 = vunpack.c.l.b16 %v5795
    %v5852 = vunpack.c.l.b16 %v5796
    %v5853 = vunpack.c.l.b16 %v5797
    %v5854 = vunpack.c.l.b16 %v5798
    %v5855 = vunpack.c.l.b16 %v5799
    %v5856 = vunpack.c.l.b16 %v5800
    %v5857 = vunpack.c.l.b16 %v5801
    %v5858 = vpack.c.b16 %v5841, %v5840
    %v5859 = vpack.c.b16 %v5843, %v5842
    %v5860 = vpack.c.b16 %v5845, %v5844
    %v5861 = vpack.c.b16 %v5847, %v5846
    %v5862 = vpack.c.b16 %v5849, %v5848
    %v5863 = vpack.c.b16 %v5851, %v5850
    %v5864 = vpack.c.b16 %v5853, %v5852
    %v5865 = vpack.c.b16 %v5855, %v5854
    %v5866 = vpack.c.b16 %v5857, %v5856
    %v5869 = vunpack.c.l.b16 %v5782
    %v5870 = vunpack.c.l.b16 %v5783
    %v5871 = vpack.c.b16 %v5543, %v5542
    %v5872 = vpack.c.b16 %v5545, %v5544
    %v5873 = vpack.c.b16 %v5547, %v5546
    %v5874 = vpack.c.b16 %v5549, %v5548
    %v5875 = vpack.c.b16 %v5551, %v5550
    %v5876 = vpack.c.b16 %v5553, %v5552
    %v5877 = vpack.c.b16 %v5555, %v5554
    %v5878 = vpack.c.b16 %v5557, %v5556
    %v5879 = vpack.c.b16 %v5870, %v5869
    %v5881 = vshrl.u32 %v5871, 16
    %v5883 = vshll.u32 %v5871, 16
    %v5885 = vrot.slane %v5883, 1
    %v5886 = vor.u32 %v5881, %v5885
    %v5888 = vshll.u32 %v5872, 16
    %v5890 = vrot.slane %v5888, 1
    %v5891 = vsel %vm658, %v5886, %v5890
    %v5892 = vshrl.u32 %v5872, 16
    %v5894 = vor.u32 %v5892, %v5890
    %v5896 = vshll.u32 %v5873, 16
    %v5898 = vrot.slane %v5896, 1
    %v5899 = vsel %vm658, %v5894, %v5898
    %v5900 = vshrl.u32 %v5873, 16
    %v5902 = vor.u32 %v5900, %v5898
    %v5904 = vshll.u32 %v5874, 16
    %v5906 = vrot.slane %v5904, 1
    %v5907 = vsel %vm658, %v5902, %v5906
    %v5908 = vshrl.u32 %v5874, 16
    %v5910 = vor.u32 %v5908, %v5906
    %v5912 = vshll.u32 %v5875, 16
    %v5914 = vrot.slane %v5912, 1
    %v5915 = vsel %vm658, %v5910, %v5914
    %v5916 = vshrl.u32 %v5875, 16
    %v5918 = vor.u32 %v5916, %v5914
    %v5920 = vshll.u32 %v5876, 16
    %v5922 = vrot.slane %v5920, 1
    %v5923 = vsel %vm658, %v5918, %v5922
    %v5924 = vshrl.u32 %v5876, 16
    %v5926 = vor.u32 %v5924, %v5922
    %v5928 = vshll.u32 %v5877, 16
    %v5930 = vrot.slane %v5928, 1
    %v5931 = vsel %vm658, %v5926, %v5930
    %v5932 = vshrl.u32 %v5877, 16
    %v5934 = vor.u32 %v5932, %v5930
    %v5936 = vshll.u32 %v5878, 16
    %v5938 = vrot.slane %v5936, 1
    %v5939 = vsel %vm658, %v5934, %v5938
    %v5940 = vshrl.u32 %v5878, 16
    %v5942 = vor.u32 %v5940, %v5938
    %v5944 = vshll.u32 %v5879, 16
    %v5946 = vrot.slane %v5944, 1
    %v5947 = vsel %vm658, %v5942, %v5946
    %v5948 = vshrl.u32 %v5879, 16
    %v5950 = vor.u32 %v5948, %v5946
    %5951 = vrot.lane.b32.xlu0 %v5891, 32
    %v5952 = vpop.permute.xlu0 %5951
    %5953 = vrot.lane.b32.xlu0 %v5899, 32
    %v5954 = vpop.permute.xlu0 %5953
    %5955 = vrot.lane.b32.xlu0 %v5907, 32
    %v5956 = vpop.permute.xlu0 %5955
    %5957 = vrot.lane.b32.xlu0 %v5915, 32
    %v5958 = vpop.permute.xlu0 %5957
    %5959 = vrot.lane.b32.xlu0 %v5923, 32
    %v5960 = vpop.permute.xlu0 %5959
    %5961 = vrot.lane.b32.xlu0 %v5931, 32
    %v5962 = vpop.permute.xlu0 %5961
    %5963 = vrot.lane.b32.xlu0 %v5939, 32
    %v5964 = vpop.permute.xlu0 %5963
    %5965 = vrot.lane.b32.xlu0 %v5947, 32
    %v5966 = vpop.permute.xlu0 %5965
    %5967 = vrot.lane.b32.xlu0 %v5950, 32
    %v5968 = vpop.permute.xlu0 %5967
    %v5987 = vunpack.c.l.b16 %v5804
    %v5988 = vunpack.c.l.b16 %v5805
    %v5989 = vunpack.c.l.b16 %v5806
    %v5990 = vunpack.c.l.b16 %v5807
    %v5991 = vunpack.c.l.b16 %v5808
    %v5992 = vunpack.c.l.b16 %v5809
    %v5993 = vunpack.c.l.b16 %v5810
    %v5994 = vunpack.c.l.b16 %v5811
    %v5995 = vunpack.c.l.b16 %v5812
    %v5996 = vunpack.c.l.b16 %v5813
    %v5997 = vunpack.c.l.b16 %v5814
    %v5998 = vunpack.c.l.b16 %v5815
    %v5999 = vunpack.c.l.b16 %v5816
    %v6000 = vunpack.c.l.b16 %v5817
    %v6001 = vunpack.c.l.b16 %v5818
    %v6002 = vunpack.c.l.b16 %v5819
    %v6003 = vunpack.c.l.b16 %v5820
    %v6004 = vunpack.c.l.b16 %v5821
    %v6005 = vpack.c.b16 %v5988, %v5987
    %v6006 = vpack.c.b16 %v5990, %v5989
    %v6007 = vpack.c.b16 %v5992, %v5991
    %v6008 = vpack.c.b16 %v5994, %v5993
    %v6009 = vpack.c.b16 %v5996, %v5995
    %v6010 = vpack.c.b16 %v5998, %v5997
    %v6011 = vpack.c.b16 %v6000, %v5999
    %v6012 = vpack.c.b16 %v6002, %v6001
    %v6013 = vpack.c.b16 %v6004, %v6003
    %v6014 = vrot.slane %v6005, 1
    %v6015 = vrot.slane %v6006, 1
    %v6016 = vsel %vm2076, %v6014, %v6015
    %v6017 = vrot.slane %v6007, 1
    %v6018 = vsel %vm2076, %v6015, %v6017
    %v6019 = vrot.slane %v6008, 1
    %v6020 = vsel %vm2076, %v6017, %v6019
    %v6021 = vrot.slane %v6009, 1
    %v6022 = vsel %vm2076, %v6019, %v6021
    %v6023 = vrot.slane %v6010, 1
    %v6024 = vsel %vm2076, %v6021, %v6023
    %v6025 = vrot.slane %v6011, 1
    %v6026 = vsel %vm2076, %v6023, %v6025
    %v6027 = vrot.slane %v6012, 1
    %v6028 = vsel %vm2076, %v6025, %v6027
    %v6029 = vrot.slane %v6013, 1
    %v6030 = vsel %vm2076, %v6027, %v6029
    %6031 = vrot.lane.b32.xlu0 %v6016, 64
    %v6032 = vpop.permute.xlu0 %6031
    %6033 = vrot.lane.b32.xlu0 %v6018, 64
    %v6034 = vpop.permute.xlu0 %6033
    %6035 = vrot.lane.b32.xlu0 %v6020, 64
    %v6036 = vpop.permute.xlu0 %6035
    %6037 = vrot.lane.b32.xlu0 %v6022, 64
    %v6038 = vpop.permute.xlu0 %6037
    %6039 = vrot.lane.b32.xlu0 %v6024, 64
    %v6040 = vpop.permute.xlu0 %6039
    %6041 = vrot.lane.b32.xlu0 %v6026, 64
    %v6042 = vpop.permute.xlu0 %6041
    %6043 = vrot.lane.b32.xlu0 %v6028, 64
    %v6044 = vpop.permute.xlu0 %6043
    %6045 = vrot.lane.b32.xlu0 %v6030, 64
    %v6046 = vpop.permute.xlu0 %6045
    %6047 = vrot.lane.b32.xlu0 %v6029, 64
    %v6048 = vpop.permute.xlu0 %6047
    %v6051 = vsel %vm1045, %v5858, %v5952
    %v6054 = vsel %vm1045, %v5859, %v5954
    %v6057 = vsel %vm1045, %v5860, %v5956
    %v6060 = vsel %vm1045, %v5861, %v5958
    %v6063 = vsel %vm1045, %v5862, %v5960
    %v6066 = vsel %vm1045, %v5863, %v5962
    %v6069 = vsel %vm1045, %v5864, %v5964
    %v6072 = vsel %vm1045, %v5865, %v5966
    %v6075 = vsel %vm1045, %v5866, %v5968
    %v6077 = vsel %vm1094, %v6051, %v6032
    %v6079 = vsel %vm1094, %v6054, %v6034
    %v6081 = vsel %vm1094, %v6057, %v6036
    %v6083 = vsel %vm1094, %v6060, %v6038
    %v6085 = vsel %vm1094, %v6063, %v6040
    %v6087 = vsel %vm1094, %v6066, %v6042
    %v6089 = vsel %vm1094, %v6069, %v6044
    %v6091 = vsel %vm1094, %v6072, %v6046
    %v6093 = vsel %vm1094, %v6075, %v6048
    %v6094 = vld [vmem:[#allocation3 + $0x48] sm:$0xf]
    %v6095 = vld [vmem:[#allocation3 + $0x4c] sm:$0x1]
    %v6096 = vmul.bf16 %v5424, %v345
    %v6097 = vmul.bf16 %v5425, %v357
    %v6098 = vmul.bf16 %v5426, %v369
    %v6099 = vmul.bf16 %v5427, %v381
    %v6100 = vmul.bf16 %v5428, %v393
    %v6101 = vmul.bf16 %v5429, %v405
    %v6102 = vmul.bf16 %v5430, %v417
    %v6103 = vmul.bf16 %v5431, %v429
    %v6104 = vmul.bf16 %v5432, %v441
    %v6105 = vmul.bf16 %v5433, %v453
    %v6106 = vmul.bf16 %v5434, %v465
    %v6107 = vmul.bf16 %v5435, %v477
    %v6108 = vmul.bf16 %v5436, %v489
    %v6109 = vmul.bf16 %v5437, %v501
    %v6110 = vmul.bf16 %v5438, %v513
    %v6111 = vmul.bf16 %v5782, %v525
    %v6112 = vmul.bf16 %v6094, %v537
    %v6113 = vmul.bf16 %v6095, %v549
    %v6114 = vld [vmem:[#allocation3 + $0x8] sm:$0xe]
    %v6115 = vld [vmem:[#allocation3 + $0x4c] sm:$0x3]
    %v6116 = vmul.bf16 %v6114, %v1764
    %v6117 = vmul.bf16 %v5425, %v1767
    %v6118 = vmul.bf16 %v5426, %v1770
    %v6119 = vmul.bf16 %v5427, %v1773
    %v6120 = vmul.bf16 %v5428, %v1776
    %v6121 = vmul.bf16 %v5429, %v1779
    %v6122 = vmul.bf16 %v5430, %v1782
    %v6123 = vmul.bf16 %v5431, %v1785
    %v6124 = vmul.bf16 %v5432, %v1788
    %v6125 = vmul.bf16 %v5433, %v1791
    %v6126 = vmul.bf16 %v5434, %v1794
    %v6127 = vmul.bf16 %v5435, %v1797
    %v6128 = vmul.bf16 %v5436, %v1800
    %v6129 = vmul.bf16 %v5437, %v1803
    %v6130 = vmul.bf16 %v5438, %v1806
    %v6131 = vmul.bf16 %v5782, %v1809
    %v6132 = vmul.bf16 %v6094, %v1812
    %v6133 = vmul.bf16 %v6115, %v1815
    %v6152 = vunpack.c.l.b16 %v6096
    %v6153 = vunpack.c.l.b16 %v6097
    %v6154 = vunpack.c.l.b16 %v6098
    %v6155 = vunpack.c.l.b16 %v6099
    %v6156 = vunpack.c.l.b16 %v6100
    %v6157 = vunpack.c.l.b16 %v6101
    %v6158 = vunpack.c.l.b16 %v6102
    %v6159 = vunpack.c.l.b16 %v6103
    %v6160 = vunpack.c.l.b16 %v6104
    %v6161 = vunpack.c.l.b16 %v6105
    %v6162 = vunpack.c.l.b16 %v6106
    %v6163 = vunpack.c.l.b16 %v6107
    %v6164 = vunpack.c.l.b16 %v6108
    %v6165 = vunpack.c.l.b16 %v6109
    %v6166 = vunpack.c.l.b16 %v6110
    %v6167 = vunpack.c.l.b16 %v6111
    %v6168 = vunpack.c.l.b16 %v6112
    %v6169 = vunpack.c.l.b16 %v6113
    %v6170 = vpack.c.b16 %v6153, %v6152
    %v6171 = vpack.c.b16 %v6155, %v6154
    %v6172 = vpack.c.b16 %v6157, %v6156
    %v6173 = vpack.c.b16 %v6159, %v6158
    %v6174 = vpack.c.b16 %v6161, %v6160
    %v6175 = vpack.c.b16 %v6163, %v6162
    %v6176 = vpack.c.b16 %v6165, %v6164
    %v6177 = vpack.c.b16 %v6167, %v6166
    %v6178 = vpack.c.b16 %v6169, %v6168
    %v6181 = vunpack.c.l.b16 %v6094
    %v6182 = vunpack.c.l.b16 %v6095
    %v6183 = vpack.c.b16 %v5869, %v5557
    %v6184 = vpack.c.b16 %v6182, %v6181
    %v6186 = vshll.u32 %v6183, 16
    %v6188 = vrot.slane %v6186, 1
    %v6189 = vsel %vm658, %v5630, %v6188
    %v6190 = vshrl.u32 %v6183, 16
    %v6192 = vor.u32 %v6190, %v6188
    %v6194 = vshll.u32 %v6184, 16
    %v6196 = vrot.slane %v6194, 1
    %v6197 = vsel %vm658, %v6192, %v6196
    %v6198 = vshrl.u32 %v6184, 16
    %v6200 = vor.u32 %v6198, %v6196
    %6201 = vrot.lane.b32.xlu0 %v6189, 32
    %v6202 = vpop.permute.xlu0 %6201
    %6203 = vrot.lane.b32.xlu0 %v6197, 32
    %v6204 = vpop.permute.xlu0 %6203
    %6205 = vrot.lane.b32.xlu0 %v6200, 32
    %v6206 = vpop.permute.xlu0 %6205
    %v6225 = vunpack.c.l.b16 %v6116
    %v6226 = vunpack.c.l.b16 %v6117
    %v6227 = vunpack.c.l.b16 %v6118
    %v6228 = vunpack.c.l.b16 %v6119
    %v6229 = vunpack.c.l.b16 %v6120
    %v6230 = vunpack.c.l.b16 %v6121
    %v6231 = vunpack.c.l.b16 %v6122
    %v6232 = vunpack.c.l.b16 %v6123
    %v6233 = vunpack.c.l.b16 %v6124
    %v6234 = vunpack.c.l.b16 %v6125
    %v6235 = vunpack.c.l.b16 %v6126
    %v6236 = vunpack.c.l.b16 %v6127
    %v6237 = vunpack.c.l.b16 %v6128
    %v6238 = vunpack.c.l.b16 %v6129
    %v6239 = vunpack.c.l.b16 %v6130
    %v6240 = vunpack.c.l.b16 %v6131
    %v6241 = vunpack.c.l.b16 %v6132
    %v6242 = vunpack.c.l.b16 %v6133
    %v6243 = vpack.c.b16 %v6226, %v6225
    %v6244 = vpack.c.b16 %v6228, %v6227
    %v6245 = vpack.c.b16 %v6230, %v6229
    %v6246 = vpack.c.b16 %v6232, %v6231
    %v6247 = vpack.c.b16 %v6234, %v6233
    %v6248 = vpack.c.b16 %v6236, %v6235
    %v6249 = vpack.c.b16 %v6238, %v6237
    %v6250 = vpack.c.b16 %v6240, %v6239
    %v6251 = vpack.c.b16 %v6242, %v6241
    %v6252 = vrot.slane %v6243, 1
    %v6253 = vrot.slane %v6244, 1
    %v6254 = vsel %vm2076, %v6252, %v6253
    %v6255 = vrot.slane %v6245, 1
    %v6256 = vsel %vm2076, %v6253, %v6255
    %v6257 = vrot.slane %v6246, 1
    %v6258 = vsel %vm2076, %v6255, %v6257
    %v6259 = vrot.slane %v6247, 1
    %v6260 = vsel %vm2076, %v6257, %v6259
    %v6261 = vrot.slane %v6248, 1
    %v6262 = vsel %vm2076, %v6259, %v6261
    %v6263 = vrot.slane %v6249, 1
    %v6264 = vsel %vm2076, %v6261, %v6263
    %v6265 = vrot.slane %v6250, 1
    %v6266 = vsel %vm2076, %v6263, %v6265
    %v6267 = vrot.slane %v6251, 1
    %v6268 = vsel %vm2076, %v6265, %v6267
    %6269 = vrot.lane.b32.xlu0 %v6254, 64
    %v6270 = vpop.permute.xlu0 %6269
    %6271 = vrot.lane.b32.xlu0 %v6256, 64
    %v6272 = vpop.permute.xlu0 %6271
    %6273 = vrot.lane.b32.xlu0 %v6258, 64
    %v6274 = vpop.permute.xlu0 %6273
    %6275 = vrot.lane.b32.xlu0 %v6260, 64
    %v6276 = vpop.permute.xlu0 %6275
    %6277 = vrot.lane.b32.xlu0 %v6262, 64
    %v6278 = vpop.permute.xlu0 %6277
    %6279 = vrot.lane.b32.xlu0 %v6264, 64
    %v6280 = vpop.permute.xlu0 %6279
    %6281 = vrot.lane.b32.xlu0 %v6266, 64
    %v6282 = vpop.permute.xlu0 %6281
    %6283 = vrot.lane.b32.xlu0 %v6268, 64
    %v6284 = vpop.permute.xlu0 %6283
    %6285 = vrot.lane.b32.xlu0 %v6267, 64
    %v6286 = vpop.permute.xlu0 %6285
    %v6288 = vsel %vm1045, %v6170, %v5642
    %v6290 = vsel %vm1045, %v6171, %v5644
    %v6292 = vsel %vm1045, %v6172, %v5646
    %v6294 = vsel %vm1045, %v6173, %v5648
    %v6296 = vsel %vm1045, %v6174, %v5650
    %v6298 = vsel %vm1045, %v6175, %v5652
    %v6301 = vsel %vm1045, %v6176, %v6202
    %v6304 = vsel %vm1045, %v6177, %v6204
    %v6307 = vsel %vm1045, %v6178, %v6206
    %v6309 = vsel %vm1094, %v6288, %v6270
    %v6311 = vsel %vm1094, %v6290, %v6272
    %v6313 = vsel %vm1094, %v6292, %v6274
    %v6315 = vsel %vm1094, %v6294, %v6276
    %v6317 = vsel %vm1094, %v6296, %v6278
    %v6319 = vsel %vm1094, %v6298, %v6280
    %v6321 = vsel %vm1094, %v6301, %v6282
    %v6323 = vsel %vm1094, %v6304, %v6284
    %v6325 = vsel %vm1094, %v6307, %v6286
    %6335 = vrot.lane.b32.xlu0 %v6077, 96
    %v6336 = vpop.permute.xlu0 %6335
    %6337 = vrot.lane.b32.xlu0 %v6079, 96
    %v6338 = vpop.permute.xlu0 %6337
    %6339 = vrot.lane.b32.xlu0 %v6081, 96
    %v6340 = vpop.permute.xlu0 %6339
    %6341 = vrot.lane.b32.xlu0 %v6083, 96
    %v6342 = vpop.permute.xlu0 %6341
    %6343 = vrot.lane.b32.xlu0 %v6085, 96
    %v6344 = vpop.permute.xlu0 %6343
    %6345 = vrot.lane.b32.xlu0 %v6087, 96
    %v6346 = vpop.permute.xlu0 %6345
    %6347 = vrot.lane.b32.xlu0 %v6089, 96
    %v6348 = vpop.permute.xlu0 %6347
    %6349 = vrot.lane.b32.xlu0 %v6091, 96
    %v6350 = vpop.permute.xlu0 %6349
    %6351 = vrot.lane.b32.xlu0 %v6093, 96
    %v6352 = vpop.permute.xlu0 %6351
    %6362 = vrot.lane.b32.xlu0 %v6309, 64
    %v6363 = vpop.permute.xlu0 %6362
    %6364 = vrot.lane.b32.xlu0 %v6311, 64
    %v6365 = vpop.permute.xlu0 %6364
    %6366 = vrot.lane.b32.xlu0 %v6313, 64
    %v6367 = vpop.permute.xlu0 %6366
    %6368 = vrot.lane.b32.xlu0 %v6315, 64
    %v6369 = vpop.permute.xlu0 %6368
    %6370 = vrot.lane.b32.xlu0 %v6317, 64
    %v6371 = vpop.permute.xlu0 %6370
    %6372 = vrot.lane.b32.xlu0 %v6319, 64
    %v6373 = vpop.permute.xlu0 %6372
    %6374 = vrot.lane.b32.xlu0 %v6321, 64
    %v6375 = vpop.permute.xlu0 %6374
    %6376 = vrot.lane.b32.xlu0 %v6323, 64
    %v6377 = vpop.permute.xlu0 %6376
    %6378 = vrot.lane.b32.xlu0 %v6325, 64
    %v6379 = vpop.permute.xlu0 %6378
    %v6381 = vsel %vm2883, %v5765, %v6336
    %v6384 = vsel %vm2883, %v5767, %v6338
    %v6387 = vsel %vm2883, %v5769, %v6340
    %v6390 = vsel %vm2883, %v5771, %v6342
    %v6393 = vsel %vm2883, %v5773, %v6344
    %v6396 = vsel %vm2883, %v5775, %v6346
    %v6399 = vsel %vm2883, %v5777, %v6348
    %v6402 = vsel %vm2883, %v5779, %v6350
    %v6405 = vsel %vm2883, %v5781, %v6352
    %v6408 = vsel %vm1094, %v6336, %v6363
    %v6411 = vsel %vm1094, %v6338, %v6365
    %v6414 = vsel %vm1094, %v6340, %v6367
    %v6417 = vsel %vm1094, %v6342, %v6369
    %v6420 = vsel %vm1094, %v6344, %v6371
    %v6423 = vsel %vm1094, %v6346, %v6373
    %v6426 = vsel %vm1094, %v6348, %v6375
    %v6429 = vsel %vm1094, %v6350, %v6377
    %v6432 = vsel %vm1094, %v6352, %v6379
    %v6435 = vlaneseq
    %v6436 = vshrl.u32 %v6435, 7
    %v6437 = vsub.s32 0, %v6436
    %v6438 = vrot.slane %v5421, %v6437
    %v6476 = vunpack.c.l.b16 %v5384
    %v6477 = vunpack.c.l.b16 %v5385
    %v6478 = vunpack.c.l.b16 %v5386
    %v6479 = vunpack.c.l.b16 %v5387
    %v6480 = vunpack.c.l.b16 %v5388
    %v6481 = vunpack.c.l.b16 %v5389
    %v6482 = vunpack.c.l.b16 %v5390
    %v6483 = vunpack.c.l.b16 %v5391
    %v6484 = vunpack.c.l.b16 %v5392
    %v6485 = vunpack.c.l.b16 %v5393
    %v6486 = vunpack.c.l.b16 %v5394
    %v6487 = vunpack.c.l.b16 %v5395
    %v6488 = vunpack.c.l.b16 %v5396
    %v6489 = vunpack.c.l.b16 %v5397
    %v6490 = vunpack.c.l.b16 %v5398
    %v6491 = vunpack.c.l.b16 %v5399
    %v6492 = vunpack.c.l.b16 %v5400
    %v6493 = vunpack.c.l.b16 %v5401
    %v6494 = vunpack.c.l.b16 %v5402
    %v6495 = vunpack.c.l.b16 %v5403
    %v6496 = vunpack.c.l.b16 %v5404
    %v6497 = vunpack.c.l.b16 %v5405
    %v6498 = vunpack.c.l.b16 %v5406
    %v6499 = vunpack.c.l.b16 %v5407
    %v6500 = vunpack.c.l.b16 %v5408
    %v6501 = vunpack.c.l.b16 %v5409
    %v6502 = vunpack.c.l.b16 %v5410
    %v6503 = vunpack.c.l.b16 %v5411
    %v6504 = vunpack.c.l.b16 %v5412
    %v6505 = vunpack.c.l.b16 %v5413
    %v6506 = vunpack.c.l.b16 %v5414
    %v6507 = vunpack.c.l.b16 %v5415
    %v6508 = vunpack.c.l.b16 %v5416
    %v6509 = vunpack.c.l.b16 %v5417
    %v6510 = vunpack.c.l.b16 %v5418
    %v6511 = vunpack.c.l.b16 %v5419
    %v6512 = vpack.c.b16 %v6477, %v6476
    %v6513 = vpack.c.b16 %v6479, %v6478
    %v6514 = vpack.c.b16 %v6481, %v6480
    %v6515 = vpack.c.b16 %v6483, %v6482
    %v6516 = vpack.c.b16 %v6485, %v6484
    %v6517 = vpack.c.b16 %v6487, %v6486
    %v6518 = vpack.c.b16 %v6489, %v6488
    %v6519 = vpack.c.b16 %v6491, %v6490
    %v6520 = vpack.c.b16 %v6493, %v6492
    %v6521 = vpack.c.b16 %v6495, %v6494
    %v6522 = vpack.c.b16 %v6497, %v6496
    %v6523 = vpack.c.b16 %v6499, %v6498
    %v6524 = vpack.c.b16 %v6501, %v6500
    %v6525 = vpack.c.b16 %v6503, %v6502
    %v6526 = vpack.c.b16 %v6505, %v6504
    %v6527 = vpack.c.b16 %v6507, %v6506
    %v6528 = vpack.c.b16 %v6509, %v6508
    %v6529 = vpack.c.b16 %v6511, %v6510
    %v6548 = vsel %vm1045, %v6363, 0
    %v6550 = vsel %vm1045, %v6365, 0
    %v6552 = vsel %vm1045, %v6367, 0
    %v6554 = vsel %vm1045, %v6369, 0
    %v6556 = vsel %vm1045, %v6371, 0
    %v6558 = vsel %vm1045, %v6373, 0
    %v6560 = vsel %vm1045, %v6375, 0
    %v6562 = vsel %vm1045, %v6377, 0
    %v6564 = vsel %vm1045, %v6379, 0
    %6566 = vmatprep.subr.bf16.mxu0 0
    %6567 = vmatpush1.bf16.msra.mxu0 %v6512
    %6568 = vmatprep.subr.bf16.mxu0 0
    %6569 = vmatpush1.bf16.msra.mxu0 %v6513
    %6570 = vmatprep.subr.bf16.mxu0 0
    %6571 = vmatpush1.bf16.msra.mxu0 %v6514
    %6572 = vmatprep.subr.bf16.mxu0 0
    %6573 = vmatpush1.bf16.msra.mxu0 %v6515
    %6574 = vmatprep.subr.bf16.mxu0 0
    %6575 = vmatpush1.bf16.msra.mxu0 %v6516
    %6576 = vmatprep.subr.bf16.mxu0 0
    %6577 = vmatpush1.bf16.msra.mxu0 %v6517
    %6578 = vmatprep.subr.bf16.mxu0 0
    %6579 = vmatpush1.bf16.msra.mxu0 %v6518
    %6580 = vmatprep.subr.bf16.mxu0 0
    %6581 = vmatpush1.bf16.msra.mxu0 %v6519
    %6582 = vmatprep.subr.bf16.mxu0 0
    %6583 = vmatpush1.bf16.msra.mxu0 %v6520
    %6584 = vmatprep.subr.bf16.mxu0 0
    %6585 = vmatpush1.bf16.msra.mxu0 %v6521
    %6586 = vmatprep.subr.bf16.mxu0 0
    %6587 = vmatpush1.bf16.msra.mxu0 %v6522
    %6588 = vmatprep.subr.bf16.mxu0 0
    %6589 = vmatpush1.bf16.msra.mxu0 %v6523
    %6590 = vmatprep.subr.bf16.mxu0 0
    %6591 = vmatpush1.bf16.msra.mxu0 %v6524
    %6592 = vmatprep.subr.bf16.mxu0 0
    %6593 = vmatpush1.bf16.msra.mxu0 %v6525
    %6594 = vmatprep.subr.bf16.mxu0 0
    %6595 = vmatpush1.bf16.msra.mxu0 %v6526
    %6596 = vmatprep.subr.bf16.mxu0 0
    %6597 = vmatpush1.bf16.msra.mxu0 %v6527
    %6598 = vmatprep.mubr.bf16.mxu0 %v6408
    %6599 = vmatmul.mubr.bf16.gmra.mrb[0].mxu0 %v6381
    %v6600 = vpop.f32.mrb[0].mxu0
    %v6601 = vadd.f32 %v6438, %v6600
    %v6602 = vpop.f32.mrb[0].mxu0
    %v6603 = vpop.f32.mrb[0].mxu0
    %v6604 = vadd.f32 %v6438, %v6603
    %v6605 = vpop.f32.mrb[0].mxu0
    %6606 = vmatprep.mubr.bf16.mxu0 %v6411
    %6607 = vmatmul.mubr.bf16.gmra.mrb[0].mxu0 %v6384
    %v6608 = vpop.f32.mrb[0].mxu0
    %v6609 = vadd.f32 %v6438, %v6608
    %v6610 = vpop.f32.mrb[0].mxu0
    %v6611 = vpop.f32.mrb[0].mxu0
    %v6612 = vadd.f32 %v6438, %v6611
    %v6613 = vpop.f32.mrb[0].mxu0
    %6614 = vmatprep.mubr.bf16.mxu0 %v6414
    %6615 = vmatmul.mubr.bf16.gmra.mrb[0].mxu0 %v6387
    %v6616 = vpop.f32.mrb[0].mxu0
    %v6617 = vadd.f32 %v6438, %v6616
    %v6618 = vpop.f32.mrb[0].mxu0
    %v6619 = vpop.f32.mrb[0].mxu0
    %v6620 = vadd.f32 %v6438, %v6619
    %v6621 = vpop.f32.mrb[0].mxu0
    %6622 = vmatprep.mubr.bf16.mxu0 %v6417
    %6623 = vmatmul.mubr.bf16.gmra.mrb[0].mxu0 %v6390
    %v6624 = vpop.f32.mrb[0].mxu0
    %v6625 = vadd.f32 %v6438, %v6624
    %v6626 = vpop.f32.mrb[0].mxu0
    %v6627 = vpop.f32.mrb[0].mxu0
    %v6628 = vadd.f32 %v6438, %v6627
    %v6629 = vpop.f32.mrb[0].mxu0
    %6630 = vmatprep.mubr.bf16.mxu0 %v6420
    %6631 = vmatmul.mubr.bf16.gmra.mrb[0].mxu0 %v6393
    %v6632 = vpop.f32.mrb[0].mxu0
    %v6633 = vpop.f32.mrb[0].mxu0
    %v6634 = vpop.f32.mrb[0].mxu0
    %v6635 = vadd.f32 %v6438, %v6634
    %v6636 = vpop.f32.mrb[0].mxu0
    %6637 = vmatprep.mubr.bf16.mxu0 %v6423
    %6638 = vmatmul.mubr.bf16.gmra.mrb[0].mxu0 %v6396
    %v6639 = vpop.f32.mrb[0].mxu0
    %v6640 = vadd.f32 %v6438, %v6639
    %v6641 = vpop.f32.mrb[0].mxu0
    %v6642 = vpop.f32.mrb[0].mxu0
    %v6643 = vadd.f32 %v6438, %v6642
    %v6644 = vpop.f32.mrb[0].mxu0
    %6645 = vmatprep.mubr.bf16.mxu0 %v6426
    %6646 = vmatmul.mubr.bf16.gmra.mrb[0].mxu0 %v6399
    %v6647 = vpop.f32.mrb[0].mxu0
    %v6648 = vadd.f32 %v6438, %v6647
    %v6649 = vpop.f32.mrb[0].mxu0
    %v6650 = vpop.f32.mrb[0].mxu0
    %v6651 = vadd.f32 %v6438, %v6650
    %v6652 = vpop.f32.mrb[0].mxu0
    %6653 = vmatprep.mubr.bf16.mxu0 %v6429
    %6654 = vmatmul.mubr.bf16.gmra.mrb[0].mxu0 %v6402
    %v6655 = vpop.f32.mrb[0].mxu0
    %v6656 = vadd.f32 %v6438, %v6655
    %v6657 = vpop.f32.mrb[0].mxu0
    %v6658 = vpop.f32.mrb[0].mxu0
    %v6659 = vadd.f32 %v6438, %v6658
    %v6660 = vpop.f32.mrb[0].mxu0
    %6661 = vmatprep.mubr.bf16.mxu0 %v6432
    %6662 = vmatmul.mubr.bf16.gmra.mrb[0].mxu0 %v6405
    %v6663 = vpop.f32.mrb[0].mxu0
    %v6664 = vadd.f32 %v6438, %v6663
    %v6665 = vpop.f32.mrb[0].mxu0
    %v6666 = vpop.f32.mrb[0].mxu0
    %v6667 = vadd.f32 %v6438, %v6666
    %v6668 = vpop.f32.mrb[0].mxu0
    %6669 = vdwg.mxu0
    %6670 = vmatprep.subr.bf16.mxu0 0
    %6671 = vmatpush1.bf16.msra.mxu0 %v6528
    %6672 = vmatprep.subr.bf16.mxu0 0
    %6673 = vmatpush1.bf16.msra.mxu0 %v6529
    %6674 = vmatprep.subr.bf16.mxu0 0
    %6675 = vmatpush1.bf16.msra.mxu0 0
    %6676 = vmatprep.subr.bf16.mxu0 0
    %6677 = vmatpush1.bf16.msra.mxu0 0
    %6678 = vmatprep.subr.bf16.mxu0 0
    %6679 = vmatpush1.bf16.msra.mxu0 0
    %6680 = vmatprep.subr.bf16.mxu0 0
    %6681 = vmatpush1.bf16.msra.mxu0 0
    %6682 = vmatprep.subr.bf16.mxu0 0
    %6683 = vmatpush1.bf16.msra.mxu0 0
    %6684 = vmatprep.subr.bf16.mxu0 0
    %6685 = vmatpush1.bf16.msra.mxu0 0
    %6686 = vmatprep.subr.bf16.mxu0 0
    %6687 = vmatpush1.bf16.msra.mxu0 0
    %6688 = vmatprep.subr.bf16.mxu0 0
    %6689 = vmatpush1.bf16.msra.mxu0 0
    %6690 = vmatprep.subr.bf16.mxu0 0
    %6691 = vmatpush1.bf16.msra.mxu0 0
    %6692 = vmatprep.subr.bf16.mxu0 0
    %6693 = vmatpush1.bf16.msra.mxu0 0
    %6694 = vmatprep.subr.bf16.mxu0 0
    %6695 = vmatpush1.bf16.msra.mxu0 0
    %6696 = vmatprep.subr.bf16.mxu0 0
    %6697 = vmatpush1.bf16.msra.mxu0 0
    %6698 = vmatprep.subr.bf16.mxu0 0
    %6699 = vmatpush1.bf16.msra.mxu0 0
    %6700 = vmatprep.subr.bf16.mxu0 0
    %6701 = vmatpush1.bf16.msra.mxu0 0
    %6702 = vmatprep.mubr.bf16.mxu0 0
    %6703 = vmatmul.mubr.bf16.gmra.mrb[0].mxu0 %v6548
    %v6704 = vpop.f32.mrb[0].mxu0
    %v6705 = vadd.f32 %v6601, %v6704
    %v6706 = vpop.f32.mrb[0].mxu0
    %v6707 = vpop.f32.mrb[0].mxu0
    %v6708 = vadd.f32 %v6604, %v6707
    %v6709 = vpop.f32.mrb[0].mxu0
    %6710 = vmatprep.mubr.bf16.mxu0 0
    %6711 = vmatmul.mubr.bf16.gmra.mrb[0].mxu0 %v6550
    %v6712 = vpop.f32.mrb[0].mxu0
    %v6713 = vadd.f32 %v6609, %v6712
    %v6714 = vpop.f32.mrb[0].mxu0
    %v6715 = vpop.f32.mrb[0].mxu0
    %v6716 = vadd.f32 %v6612, %v6715
    %v6717 = vpop.f32.mrb[0].mxu0
    %6718 = vmatprep.mubr.bf16.mxu0 0
    %6719 = vmatmul.mubr.bf16.gmra.mrb[0].mxu0 %v6552
    %v6720 = vpop.f32.mrb[0].mxu0
    %v6721 = vadd.f32 %v6617, %v6720
    %v6722 = vpop.f32.mrb[0].mxu0
    %v6723 = vpop.f32.mrb[0].mxu0
    %v6724 = vadd.f32 %v6620, %v6723
    %v6725 = vpop.f32.mrb[0].mxu0
    %6726 = vmatprep.mubr.bf16.mxu0 0
    %6727 = vmatmul.mubr.bf16.gmra.mrb[0].mxu0 %v6554
    %v6728 = vpop.f32.mrb[0].mxu0
    %v6729 = vadd.f32 %v6625, %v6728
    %v6730 = vpop.f32.mrb[0].mxu0
    %v6731 = vpop.f32.mrb[0].mxu0
    %v6732 = vadd.f32 %v6628, %v6731
    %v6733 = vpop.f32.mrb[0].mxu0
    %6734 = vmatprep.mubr.bf16.mxu0 0
    %6735 = vmatmul.mubr.bf16.gmra.mrb[0].mxu0 %v6556
    %v6736 = vpop.f32.mrb[0].mxu0
    %v6737 = vpop.f32.mrb[0].mxu0
    %v6738 = vpop.f32.mrb[0].mxu0
    %v6739 = vadd.f32 %v6635, %v6738
    %v6740 = vpop.f32.mrb[0].mxu0
    %6741 = vmatprep.mubr.bf16.mxu0 0
    %6742 = vmatmul.mubr.bf16.gmra.mrb[0].mxu0 %v6558
    %v6743 = vpop.f32.mrb[0].mxu0
    %v6744 = vadd.f32 %v6640, %v6743
    %v6745 = vpop.f32.mrb[0].mxu0
    %v6746 = vpop.f32.mrb[0].mxu0
    %v6747 = vadd.f32 %v6643, %v6746
    %v6748 = vpop.f32.mrb[0].mxu0
    %6749 = vmatprep.mubr.bf16.mxu0 0
    %6750 = vmatmul.mubr.bf16.gmra.mrb[0].mxu0 %v6560
    %v6751 = vpop.f32.mrb[0].mxu0
    %v6752 = vadd.f32 %v6648, %v6751
    %v6753 = vpop.f32.mrb[0].mxu0
    %v6754 = vpop.f32.mrb[0].mxu0
    %v6755 = vadd.f32 %v6651, %v6754
    %v6756 = vpop.f32.mrb[0].mxu0
    %6757 = vmatprep.mubr.bf16.mxu0 0
    %6758 = vmatmul.mubr.bf16.gmra.mrb[0].mxu0 %v6562
    %v6759 = vpop.f32.mrb[0].mxu0
    %v6760 = vadd.f32 %v6656, %v6759
    %v6761 = vpop.f32.mrb[0].mxu0
    %v6762 = vpop.f32.mrb[0].mxu0
    %v6763 = vadd.f32 %v6659, %v6762
    %v6764 = vpop.f32.mrb[0].mxu0
    %6765 = vmatprep.mubr.bf16.mxu0 0
    %6766 = vmatmul.mubr.bf16.gmra.mrb[0].mxu0 %v6564
    %v6767 = vpop.f32.mrb[0].mxu0
    %v6768 = vadd.f32 %v6664, %v6767
    %v6769 = vpop.f32.mrb[0].mxu0
    %v6770 = vpop.f32.mrb[0].mxu0
    %v6771 = vadd.f32 %v6667, %v6770
    %v6772 = vpop.f32.mrb[0].mxu0
    %6773 = vdwg.mxu0
    %vm6774 = vcmp.gt.f32.partialorder %v6705, 0.0
    %vm6775 = vcmp.gt.f32.partialorder %v6708, 0.0
    %vm6776 = vcmp.gt.f32.partialorder %v6713, 0.0
    %vm6777 = vcmp.gt.f32.partialorder %v6716, 0.0
    %vm6778 = vcmp.gt.f32.partialorder %v6721, 0.0
    %vm6779 = vcmp.gt.f32.partialorder %v6724, 0.0
    %vm6780 = vcmp.gt.f32.partialorder %v6729, 0.0
    %vm6781 = vcmp.gt.f32.partialorder %v6732, 0.0
    %vm6782 = vcmp.gt.f32.partialorder %v6739, 0.0
    %vm6783 = vcmp.gt.f32.partialorder %v6744, 0.0
    %vm6784 = vcmp.gt.f32.partialorder %v6747, 0.0
    %vm6785 = vcmp.gt.f32.partialorder %v6752, 0.0
    %vm6786 = vcmp.gt.f32.partialorder %v6755, 0.0
    %vm6787 = vcmp.gt.f32.partialorder %v6760, 0.0
    %vm6788 = vcmp.gt.f32.partialorder %v6763, 0.0
    %vm6789 = vcmp.gt.f32.partialorder %v6768, 0.0
    %vm6790 = vcmp.gt.f32.partialorder %v6771, 0.0
    %v6791 = vmin.f32 %v6705, 0.0
    %v6792 = vmin.f32 %v6708, 0.0
    %v6793 = vmin.f32 %v6713, 0.0
    %v6794 = vmin.f32 %v6716, 0.0
    %v6795 = vmin.f32 %v6721, 0.0
    %v6796 = vmin.f32 %v6724, 0.0
    %v6797 = vmin.f32 %v6729, 0.0
    %v6798 = vmin.f32 %v6732, 0.0
    %v6799 = vmin.f32 %v6739, 0.0
    %v6800 = vmin.f32 %v6744, 0.0
    %v6801 = vmin.f32 %v6747, 0.0
    %v6802 = vmin.f32 %v6752, 0.0
    %v6803 = vmin.f32 %v6755, 0.0
    %v6804 = vmin.f32 %v6760, 0.0
    %v6805 = vmin.f32 %v6763, 0.0
    %v6806 = vmin.f32 %v6768, 0.0
    %v6807 = vmin.f32 %v6771, 0.0
    %v6808 = vmul.f32 %v6791, 1.442695
    %v6809 = vpow.pop %v6808
    %v6810 = vmul.f32 %v6792, 1.442695
    %v6811 = vpow.pop %v6810
    %v6812 = vmul.f32 %v6793, 1.442695
    %v6813 = vpow.pop %v6812
    %v6814 = vmul.f32 %v6794, 1.442695
    %v6815 = vpow.pop %v6814
    %v6816 = vmul.f32 %v6795, 1.442695
    %v6817 = vpow.pop %v6816
    %v6818 = vmul.f32 %v6796, 1.442695
    %v6819 = vpow.pop %v6818
    %v6820 = vmul.f32 %v6797, 1.442695
    %v6821 = vpow.pop %v6820
    %v6822 = vmul.f32 %v6798, 1.442695
    %v6823 = vpow.pop %v6822
    %v6824 = vmul.f32 %v6799, 1.442695
    %v6825 = vpow.pop %v6824
    %v6826 = vmul.f32 %v6800, 1.442695
    %v6827 = vpow.pop %v6826
    %v6828 = vmul.f32 %v6801, 1.442695
    %v6829 = vpow.pop %v6828
    %v6830 = vmul.f32 %v6802, 1.442695
    %v6831 = vpow.pop %v6830
    %v6832 = vmul.f32 %v6803, 1.442695
    %v6833 = vpow.pop %v6832
    %v6834 = vmul.f32 %v6804, 1.442695
    %v6835 = vpow.pop %v6834
    %v6836 = vmul.f32 %v6805, 1.442695
    %v6837 = vpow.pop %v6836
    %v6838 = vmul.f32 %v6806, 1.442695
    %v6839 = vpow.pop %v6838
    %v6840 = vmul.f32 %v6807, 1.442695
    %v6841 = vpow.pop %v6840
    %v6842 = vsub.f32 %v6809, 1.0
    %v6843 = vsub.f32 %v6811, 1.0
    %v6844 = vsub.f32 %v6813, 1.0
    %v6845 = vsub.f32 %v6815, 1.0
    %v6846 = vsub.f32 %v6817, 1.0
    %v6847 = vsub.f32 %v6819, 1.0
    %v6848 = vsub.f32 %v6821, 1.0
    %v6849 = vsub.f32 %v6823, 1.0
    %v6850 = vsub.f32 %v6825, 1.0
    %v6851 = vsub.f32 %v6827, 1.0
    %v6852 = vsub.f32 %v6829, 1.0
    %v6853 = vsub.f32 %v6831, 1.0
    %v6854 = vsub.f32 %v6833, 1.0
    %v6855 = vsub.f32 %v6835, 1.0
    %v6856 = vsub.f32 %v6837, 1.0
    %v6857 = vsub.f32 %v6839, 1.0
    %v6858 = vsub.f32 %v6841, 1.0
    %v6859 = vsel %vm6774, %v6705, %v6842
    %v6860 = vsel %vm6775, %v6708, %v6843
    %v6861 = vsel %vm6776, %v6713, %v6844
    %v6862 = vsel %vm6777, %v6716, %v6845
    %v6863 = vsel %vm6778, %v6721, %v6846
    %v6864 = vsel %vm6779, %v6724, %v6847
    %v6865 = vsel %vm6780, %v6729, %v6848
    %v6866 = vsel %vm6781, %v6732, %v6849
    %v6867 = vsel %vm6782, %v6739, %v6850
    %v6868 = vsel %vm6783, %v6744, %v6851
    %v6869 = vsel %vm6784, %v6747, %v6852
    %v6870 = vsel %vm6785, %v6752, %v6853
    %v6871 = vsel %vm6786, %v6755, %v6854
    %v6872 = vsel %vm6787, %v6760, %v6855
    %v6873 = vsel %vm6788, %v6763, %v6856
    %v6874 = vsel %vm6789, %v6768, %v6857
    %v6875 = vsel %vm6790, %v6771, %v6858
    %v6876 = vpack.c.bf16 %v6860, %v6859
    %v6877 = vpack.c.bf16 %v6862, %v6861
    %v6878 = vpack.c.bf16 %v6864, %v6863
    %v6879 = vpack.c.bf16 %v6866, %v6865
    %v6884 = vunpack.c.l.b16 %v6876
    %v6885 = vunpack.c.h.b16 %v6876
    %v6886 = vunpack.c.l.b16 %v6877
    %v6887 = vunpack.c.h.b16 %v6877
    %v6888 = vunpack.c.l.b16 %v6878
    %v6889 = vunpack.c.h.b16 %v6878
    %v6890 = vunpack.c.l.b16 %v6879
    %v6891 = vunpack.c.h.b16 %v6879
    %v6892 = vpack.c.b16 %v6884, %v6884
    %v6893 = vpack.c.b16 %v6885, %v6885
    %v6894 = vpack.c.b16 %v6886, %v6886
    %v6895 = vpack.c.b16 %v6887, %v6887
    %v6896 = vpack.c.b16 %v6888, %v6888
    %v6897 = vpack.c.b16 %v6889, %v6889
    %v6898 = vpack.c.b16 %v6890, %v6890
    %v6899 = vpack.c.b16 %v6891, %v6891
    %v6901 = vshrl.u32 %v6892, 16
    %v6903 = vrot.slane %v6901, 7
    %v6904 = vshll.u32 %v6892, 16
    %v6906 = vor.u32 %v6903, %v6904
    %v6907 = vrot.slane %v6903, 4
    %v6909 = vshrl.u32 %v6893, 16
    %v6911 = vrot.slane %v6909, 7
    %v6912 = vshll.u32 %v6893, 16
    %v6914 = vor.u32 %v6911, %v6912
    %v6915 = vsel %vm152, %v6907, %v6914
    %v6916 = vrot.slane %v6911, 4
    %v6918 = vshrl.u32 %v6894, 16
    %v6920 = vrot.slane %v6918, 7
    %v6921 = vshll.u32 %v6894, 16
    %v6923 = vor.u32 %v6920, %v6921
    %v6924 = vsel %vm152, %v6916, %v6923
    %v6925 = vrot.slane %v6920, 4
    %v6927 = vshrl.u32 %v6895, 16
    %v6929 = vrot.slane %v6927, 7
    %v6930 = vshll.u32 %v6895, 16
    %v6932 = vor.u32 %v6929, %v6930
    %v6933 = vsel %vm152, %v6925, %v6932
    %v6934 = vrot.slane %v6929, 4
    %v6936 = vshrl.u32 %v6896, 16
    %v6938 = vrot.slane %v6936, 7
    %v6939 = vshll.u32 %v6896, 16
    %v6941 = vor.u32 %v6938, %v6939
    %v6942 = vsel %vm152, %v6934, %v6941
    %v6943 = vrot.slane %v6938, 4
    %v6945 = vshrl.u32 %v6897, 16
    %v6947 = vrot.slane %v6945, 7
    %v6948 = vshll.u32 %v6897, 16
    %v6950 = vor.u32 %v6947, %v6948
    %v6951 = vsel %vm152, %v6943, %v6950
    %v6952 = vrot.slane %v6947, 4
    %v6954 = vshrl.u32 %v6898, 16
    %v6956 = vrot.slane %v6954, 7
    %v6957 = vshll.u32 %v6898, 16
    %v6959 = vor.u32 %v6956, %v6957
    %v6960 = vsel %vm152, %v6952, %v6959
    %v6961 = vrot.slane %v6956, 4
    %v6963 = vshrl.u32 %v6899, 16
    %v6965 = vrot.slane %v6963, 7
    %v6966 = vshll.u32 %v6899, 16
    %v6968 = vor.u32 %v6965, %v6966
    %v6969 = vsel %vm152, %v6961, %v6968
    %v6970 = vrot.slane %v6965, 4
    %v6980 = vld [vmem:[#allocation4 + $0x4] sm:$0xf]
    %v6981 = vsel %vm78, %v6906, %v6980
    %6982 = vst [vmem:[#allocation4 + $0x4] sm:$0xf] %v6981
    %6983 = vst.msk [vmem:[#allocation4 + $0x8] sm:$0xf] %vm58, %v6915
    %6984 = vst.msk [vmem:[#allocation4 + $0xc] sm:$0xf] %vm58, %v6924
    %6985 = vst.msk [vmem:[#allocation4 + $0x10] sm:$0xf] %vm58, %v6933
    %6986 = vst.msk [vmem:[#allocation4 + $0x14] sm:$0xf] %vm58, %v6942
    %6987 = vst.msk [vmem:[#allocation4 + $0x18] sm:$0xf] %vm58, %v6951
    %6988 = vst.msk [vmem:[#allocation4 + $0x1c] sm:$0xf] %vm58, %v6960
    %6989 = vst.msk [vmem:[#allocation4 + $0x20] sm:$0xf] %vm58, %v6969
    %v6990 = vld [vmem:[#allocation4 + $0x24] sm:$0x1]
    %v6991 = vsel %vm61, %v6970, %v6990
    %6992 = vst [vmem:[#allocation4 + $0x24] sm:$0x1] %v6991
    %v6993 = vpack.c.bf16 %v6868, %v6867
    %v6994 = vpack.c.bf16 %v6870, %v6869
    %v6995 = vpack.c.bf16 %v6872, %v6871
    %v6996 = vpack.c.bf16 %v6874, %v6873
    %v6997 = vpack.c.bf16 %v6875, %v6875
    %v7003 = vunpack.c.l.b16 %v6993
    %v7004 = vunpack.c.h.b16 %v6993
    %v7005 = vunpack.c.l.b16 %v6994
    %v7006 = vunpack.c.h.b16 %v6994
    %v7007 = vunpack.c.l.b16 %v6995
    %v7008 = vunpack.c.h.b16 %v6995
    %v7009 = vunpack.c.l.b16 %v6996
    %v7010 = vunpack.c.h.b16 %v6996
    %v7011 = vunpack.c.l.b16 %v6997
    %v7012 = vpack.c.b16 %v7003, %v7003
    %v7013 = vpack.c.b16 %v7004, %v7004
    %v7014 = vpack.c.b16 %v7005, %v7005
    %v7015 = vpack.c.b16 %v7006, %v7006
    %v7016 = vpack.c.b16 %v7007, %v7007
    %v7017 = vpack.c.b16 %v7008, %v7008
    %v7018 = vpack.c.b16 %v7009, %v7009
    %v7019 = vpack.c.b16 %v7010, %v7010
    %v7020 = vpack.c.b16 %v7011, %v7011
    %v7022 = vshrl.u32 %v7012, 16
    %v7024 = vrot.slane %v7022, 7
    %v7025 = vshll.u32 %v7012, 16
    %v7027 = vor.u32 %v7024, %v7025
    %v7028 = vrot.slane %v7024, 4
    %v7030 = vshrl.u32 %v7013, 16
    %v7032 = vrot.slane %v7030, 7
    %v7033 = vshll.u32 %v7013, 16
    %v7035 = vor.u32 %v7032, %v7033
    %v7036 = vsel %vm152, %v7028, %v7035
    %v7037 = vrot.slane %v7032, 4
    %v7039 = vshrl.u32 %v7014, 16
    %v7041 = vrot.slane %v7039, 7
    %v7042 = vshll.u32 %v7014, 16
    %v7044 = vor.u32 %v7041, %v7042
    %v7045 = vsel %vm152, %v7037, %v7044
    %v7046 = vrot.slane %v7041, 4
    %v7048 = vshrl.u32 %v7015, 16
    %v7050 = vrot.slane %v7048, 7
    %v7051 = vshll.u32 %v7015, 16
    %v7053 = vor.u32 %v7050, %v7051
    %v7054 = vsel %vm152, %v7046, %v7053
    %v7055 = vrot.slane %v7050, 4
    %v7057 = vshrl.u32 %v7016, 16
    %v7059 = vrot.slane %v7057, 7
    %v7060 = vshll.u32 %v7016, 16
    %v7062 = vor.u32 %v7059, %v7060
    %v7063 = vsel %vm152, %v7055, %v7062
    %v7064 = vrot.slane %v7059, 4
    %v7066 = vshrl.u32 %v7017, 16
    %v7068 = vrot.slane %v7066, 7
    %v7069 = vshll.u32 %v7017, 16
    %v7071 = vor.u32 %v7068, %v7069
    %v7072 = vsel %vm152, %v7064, %v7071
    %v7073 = vrot.slane %v7068, 4
    %v7075 = vshrl.u32 %v7018, 16
    %v7077 = vrot.slane %v7075, 7
    %v7078 = vshll.u32 %v7018, 16
    %v7080 = vor.u32 %v7077, %v7078
    %v7081 = vsel %vm152, %v7073, %v7080
    %v7082 = vrot.slane %v7077, 4
    %v7084 = vshrl.u32 %v7019, 16
    %v7086 = vrot.slane %v7084, 7
    %v7087 = vshll.u32 %v7019, 16
    %v7089 = vor.u32 %v7086, %v7087
    %v7090 = vsel %vm152, %v7082, %v7089
    %v7091 = vrot.slane %v7086, 4
    %v7093 = vshll.u32 %v7020, 16
    %v7095 = vsel %vm152, %v7091, %v7093
    %7105 = vst.msk [vmem:[#allocation4 + $0x28] sm:$0xe] %vm96, %v7027
    %7106 = vst.msk [vmem:[#allocation4 + $0x2c] sm:$0xf] %vm58, %v7036
    %7107 = vst.msk [vmem:[#allocation4 + $0x30] sm:$0xf] %vm58, %v7045
    %7108 = vst.msk [vmem:[#allocation4 + $0x34] sm:$0xf] %vm58, %v7054
    %7109 = vst.msk [vmem:[#allocation4 + $0x38] sm:$0xf] %vm58, %v7063
    %7110 = vst.msk [vmem:[#allocation4 + $0x3c] sm:$0xf] %vm58, %v7072
    %7111 = vst.msk [vmem:[#allocation4 + $0x40] sm:$0xf] %vm58, %v7081
    %7112 = vst.msk [vmem:[#allocation4 + $0x44] sm:$0xf] %vm58, %v7090
    %7113 = vst.msk [vmem:[#allocation4 + $0x48] sm:$0x1] %vm82, %v7095
    %s7114 = scalar_lea.vmem %s7, 144
    %v7115 = vld [vmem:[%s7114] sm:$0xf]
    %v7116 = vld [vmem:[%s7114 + $0x4] sm:$0xf]
    %v7117 = vld [vmem:[%s7114 + $0x8] sm:$0xf]
    %v7118 = vld [vmem:[%s7114 + $0xc] sm:$0xf]
    %v7119 = vld [vmem:[%s7114 + $0x10] sm:$0xf]
    %v7120 = vld [vmem:[%s7114 + $0x14] sm:$0xf]
    %v7121 = vld [vmem:[%s7114 + $0x18] sm:$0xf]
    %v7122 = vld [vmem:[%s7114 + $0x1c] sm:$0xf]
    %v7123 = vld [vmem:[%s7114 + $0x20] sm:$0xf]
    %v7124 = vld [vmem:[%s7114 + $0x24] sm:$0xf]
    %v7125 = vld [vmem:[%s7114 + $0x28] sm:$0xf]
    %v7126 = vld [vmem:[%s7114 + $0x2c] sm:$0xf]
    %v7127 = vld [vmem:[%s7114 + $0x30] sm:$0xf]
    %v7128 = vld [vmem:[%s7114 + $0x34] sm:$0xf]
    %v7129 = vld [vmem:[%s7114 + $0x38] sm:$0xf]
    %v7130 = vld [vmem:[%s7114 + $0x3c] sm:$0xf]
    %v7131 = vld [vmem:[%s7114 + $0x40] sm:$0xf]
    %v7132 = vld [vmem:[%s7114 + $0x44] sm:$0xf]
    %v7133 = vld [vmem:[%s7114 + $0x48] sm:$0xf]
    %v7134 = vld [vmem:[%s7114 + $0x4c] sm:$0xf]
    %v7135 = vld [vmem:[%s7114 + $0x50] sm:$0xf]
    %v7136 = vld [vmem:[%s7114 + $0x54] sm:$0xf]
    %v7137 = vld [vmem:[%s7114 + $0x58] sm:$0xf]
    %v7138 = vld [vmem:[%s7114 + $0x5c] sm:$0xf]
    %v7139 = vld [vmem:[%s7114 + $0x60] sm:$0xf]
    %v7140 = vld [vmem:[%s7114 + $0x64] sm:$0xf]
    %v7141 = vld [vmem:[%s7114 + $0x68] sm:$0xf]
    %v7142 = vld [vmem:[%s7114 + $0x6c] sm:$0xf]
    %v7143 = vld [vmem:[%s7114 + $0x70] sm:$0xf]
    %v7144 = vld [vmem:[%s7114 + $0x74] sm:$0xf]
    %v7145 = vld [vmem:[%s7114 + $0x78] sm:$0xf]
    %v7146 = vld [vmem:[%s7114 + $0x7c] sm:$0xf]
    %v7147 = vld [vmem:[%s7114 + $0x80] sm:$0xf]
    %v7148 = vld [vmem:[%s7114 + $0x84] sm:$0xf]
    %v7149 = vld [vmem:[%s7114 + $0x88] sm:$0xf]
    %v7150 = vld [vmem:[%s7114 + $0x8c] sm:$0xf]
    %s7151 = scalar_lea.vmem %s8, 1
    %v7152 = vld [vmem:[%s7151] sm:$0x1]
    %v7153 = vld [vmem:[#allocation4] sm:$0xf]
    %v7154 = vld [vmem:[#allocation4 + $0x4] sm:$0xf]
    %v7155 = vld [vmem:[#allocation4 + $0x8] sm:$0xf]
    %v7156 = vld [vmem:[#allocation4 + $0xc] sm:$0xf]
    %v7157 = vld [vmem:[#allocation4 + $0x10] sm:$0xf]
    %v7158 = vld [vmem:[#allocation4 + $0x14] sm:$0xf]
    %v7159 = vld [vmem:[#allocation4 + $0x18] sm:$0xf]
    %v7160 = vld [vmem:[#allocation4 + $0x1c] sm:$0xf]
    %v7161 = vld [vmem:[#allocation4 + $0x20] sm:$0xf]
    %v7162 = vld [vmem:[#allocation4 + $0x24] sm:$0xf]
    %v7163 = vld [vmem:[#allocation4 + $0x28] sm:$0xf]
    %v7164 = vld [vmem:[#allocation4 + $0x2c] sm:$0xf]
    %v7165 = vld [vmem:[#allocation4 + $0x30] sm:$0xf]
    %v7166 = vld [vmem:[#allocation4 + $0x34] sm:$0xf]
    %v7167 = vld [vmem:[#allocation4 + $0x38] sm:$0xf]
    %v7168 = vld [vmem:[#allocation4 + $0x3c] sm:$0xf]
    %v7169 = vld [vmem:[#allocation4 + $0x40] sm:$0xf]
    %v7170 = vld [vmem:[#allocation4 + $0x44] sm:$0x1]
    %v7171 = vmul.bf16 %v7153, %v345
    %v7172 = vmul.bf16 %v7154, %v357
    %v7173 = vmul.bf16 %v7155, %v369
    %v7174 = vmul.bf16 %v7156, %v381
    %v7175 = vmul.bf16 %v7157, %v393
    %v7176 = vmul.bf16 %v7158, %v405
    %v7177 = vmul.bf16 %v7159, %v417
    %v7178 = vmul.bf16 %v7160, %v429
    %v7179 = vmul.bf16 %v7161, %v441
    %v7180 = vmul.bf16 %v7162, %v453
    %v7181 = vmul.bf16 %v7163, %v465
    %v7182 = vmul.bf16 %v7164, %v477
    %v7183 = vmul.bf16 %v7165, %v489
    %v7184 = vmul.bf16 %v7166, %v501
    %v7185 = vmul.bf16 %v7167, %v513
    %v7186 = vmul.bf16 %v7168, %v525
    %v7187 = vmul.bf16 %v7169, %v537
    %v7188 = vmul.bf16 %v7170, %v549
    %v7189 = vld [vmem:[#allocation4] sm:$0xe]
    %v7190 = vld [vmem:[#allocation4 + $0x44] sm:$0x3]
    %v7191 = vmul.bf16 %v7189, %v1764
    %v7192 = vmul.bf16 %v7154, %v1767
    %v7193 = vmul.bf16 %v7155, %v1770
    %v7194 = vmul.bf16 %v7156, %v1773
    %v7195 = vmul.bf16 %v7157, %v1776
    %v7196 = vmul.bf16 %v7158, %v1779
    %v7197 = vmul.bf16 %v7159, %v1782
    %v7198 = vmul.bf16 %v7160, %v1785
    %v7199 = vmul.bf16 %v7161, %v1788
    %v7200 = vmul.bf16 %v7162, %v1791
    %v7201 = vmul.bf16 %v7163, %v1794
    %v7202 = vmul.bf16 %v7164, %v1797
    %v7203 = vmul.bf16 %v7165, %v1800
    %v7204 = vmul.bf16 %v7166, %v1803
    %v7205 = vmul.bf16 %v7167, %v1806
    %v7206 = vmul.bf16 %v7168, %v1809
    %v7207 = vmul.bf16 %v7169, %v1812
    %v7208 = vmul.bf16 %v7190, %v1815
    %v7227 = vunpack.c.l.b16 %v7171
    %v7228 = vunpack.c.l.b16 %v7172
    %v7229 = vunpack.c.l.b16 %v7173
    %v7230 = vunpack.c.l.b16 %v7174
    %v7231 = vunpack.c.l.b16 %v7175
    %v7232 = vunpack.c.l.b16 %v7176
    %v7233 = vunpack.c.l.b16 %v7177
    %v7234 = vunpack.c.l.b16 %v7178
    %v7235 = vunpack.c.l.b16 %v7179
    %v7236 = vunpack.c.l.b16 %v7180
    %v7237 = vunpack.c.l.b16 %v7181
    %v7238 = vunpack.c.l.b16 %v7182
    %v7239 = vunpack.c.l.b16 %v7183
    %v7240 = vunpack.c.l.b16 %v7184
    %v7241 = vunpack.c.l.b16 %v7185
    %v7242 = vunpack.c.l.b16 %v7186
    %v7243 = vunpack.c.l.b16 %v7187
    %v7244 = vunpack.c.l.b16 %v7188
    %v7245 = vpack.c.b16 %v7228, %v7227
    %v7246 = vpack.c.b16 %v7230, %v7229
    %v7247 = vpack.c.b16 %v7232, %v7231
    %v7248 = vpack.c.b16 %v7234, %v7233
    %v7249 = vpack.c.b16 %v7236, %v7235
    %v7250 = vpack.c.b16 %v7238, %v7237
    %v7251 = vpack.c.b16 %v7240, %v7239
    %v7252 = vpack.c.b16 %v7242, %v7241
    %v7253 = vpack.c.b16 %v7244, %v7243
    %v7272 = vunpack.c.l.b16 %v7153
    %v7273 = vunpack.c.l.b16 %v7154
    %v7274 = vunpack.c.l.b16 %v7155
    %v7275 = vunpack.c.l.b16 %v7156
    %v7276 = vunpack.c.l.b16 %v7157
    %v7277 = vunpack.c.l.b16 %v7158
    %v7278 = vunpack.c.l.b16 %v7159
    %v7279 = vunpack.c.l.b16 %v7160
    %v7280 = vunpack.c.l.b16 %v7161
    %v7281 = vunpack.c.l.b16 %v7162
    %v7282 = vunpack.c.l.b16 %v7163
    %v7283 = vunpack.c.l.b16 %v7164
    %v7284 = vunpack.c.l.b16 %v7165
    %v7285 = vunpack.c.l.b16 %v7166
    %v7286 = vunpack.c.l.b16 %v7167
    %v7287 = vunpack.c.l.b16 %v7168
    %v7288 = vunpack.c.l.b16 %v7169
    %v7289 = vunpack.c.l.b16 %v7170
    %v7290 = vpack.c.b16 %v7273, %v7272
    %v7291 = vpack.c.b16 %v7275, %v7274
    %v7292 = vpack.c.b16 %v7277, %v7276
    %v7293 = vpack.c.b16 %v7279, %v7278
    %v7294 = vpack.c.b16 %v7281, %v7280
    %v7295 = vpack.c.b16 %v7283, %v7282
    %v7296 = vpack.c.b16 %v7285, %v7284
    %v7297 = vpack.c.b16 %v7287, %v7286
    %v7298 = vpack.c.b16 %v7289, %v7288
    %v7300 = vshrl.u32 %v7290, 16
    %v7302 = vshll.u32 %v7290, 16
    %v7304 = vrot.slane %v7302, 1
    %v7305 = vor.u32 %v7300, %v7304
    %v7307 = vshll.u32 %v7291, 16
    %v7309 = vrot.slane %v7307, 1
    %v7310 = vsel %vm658, %v7305, %v7309
    %v7311 = vshrl.u32 %v7291, 16
    %v7313 = vor.u32 %v7311, %v7309
    %v7315 = vshll.u32 %v7292, 16
    %v7317 = vrot.slane %v7315, 1
    %v7318 = vsel %vm658, %v7313, %v7317
    %v7319 = vshrl.u32 %v7292, 16
    %v7321 = vor.u32 %v7319, %v7317
    %v7323 = vshll.u32 %v7293, 16
    %v7325 = vrot.slane %v7323, 1
    %v7326 = vsel %vm658, %v7321, %v7325
    %v7327 = vshrl.u32 %v7293, 16
    %v7329 = vor.u32 %v7327, %v7325
    %v7331 = vshll.u32 %v7294, 16
    %v7333 = vrot.slane %v7331, 1
    %v7334 = vsel %vm658, %v7329, %v7333
    %v7335 = vshrl.u32 %v7294, 16
    %v7337 = vor.u32 %v7335, %v7333
    %v7339 = vshll.u32 %v7295, 16
    %v7341 = vrot.slane %v7339, 1
    %v7342 = vsel %vm658, %v7337, %v7341
    %v7343 = vshrl.u32 %v7295, 16
    %v7345 = vor.u32 %v7343, %v7341
    %v7347 = vshll.u32 %v7296, 16
    %v7349 = vrot.slane %v7347, 1
    %v7350 = vsel %vm658, %v7345, %v7349
    %v7351 = vshrl.u32 %v7296, 16
    %v7353 = vor.u32 %v7351, %v7349
    %v7355 = vshll.u32 %v7297, 16
    %v7357 = vrot.slane %v7355, 1
    %v7358 = vsel %vm658, %v7353, %v7357
    %v7359 = vshrl.u32 %v7297, 16
    %v7361 = vor.u32 %v7359, %v7357
    %v7363 = vshll.u32 %v7298, 16
    %v7365 = vrot.slane %v7363, 1
    %v7366 = vsel %vm658, %v7361, %v7365
    %v7367 = vshrl.u32 %v7298, 16
    %v7369 = vor.u32 %v7367, %v7365
    %7370 = vrot.lane.b32.xlu0 %v7310, 32
    %v7371 = vpop.permute.xlu0 %7370
    %7372 = vrot.lane.b32.xlu0 %v7318, 32
    %v7373 = vpop.permute.xlu0 %7372
    %7374 = vrot.lane.b32.xlu0 %v7326, 32
    %v7375 = vpop.permute.xlu0 %7374
    %7376 = vrot.lane.b32.xlu0 %v7334, 32
    %v7377 = vpop.permute.xlu0 %7376
    %7378 = vrot.lane.b32.xlu0 %v7342, 32
    %v7379 = vpop.permute.xlu0 %7378
    %7380 = vrot.lane.b32.xlu0 %v7350, 32
    %v7381 = vpop.permute.xlu0 %7380
    %7382 = vrot.lane.b32.xlu0 %v7358, 32
    %v7383 = vpop.permute.xlu0 %7382
    %7384 = vrot.lane.b32.xlu0 %v7366, 32
    %v7385 = vpop.permute.xlu0 %7384
    %7386 = vrot.lane.b32.xlu0 %v7369, 32
    %v7387 = vpop.permute.xlu0 %7386
    %v7406 = vunpack.c.l.b16 %v7191
    %v7407 = vunpack.c.l.b16 %v7192
    %v7408 = vunpack.c.l.b16 %v7193
    %v7409 = vunpack.c.l.b16 %v7194
    %v7410 = vunpack.c.l.b16 %v7195
    %v7411 = vunpack.c.l.b16 %v7196
    %v7412 = vunpack.c.l.b16 %v7197
    %v7413 = vunpack.c.l.b16 %v7198
    %v7414 = vunpack.c.l.b16 %v7199
    %v7415 = vunpack.c.l.b16 %v7200
    %v7416 = vunpack.c.l.b16 %v7201
    %v7417 = vunpack.c.l.b16 %v7202
    %v7418 = vunpack.c.l.b16 %v7203
    %v7419 = vunpack.c.l.b16 %v7204
    %v7420 = vunpack.c.l.b16 %v7205
    %v7421 = vunpack.c.l.b16 %v7206
    %v7422 = vunpack.c.l.b16 %v7207
    %v7423 = vunpack.c.l.b16 %v7208
    %v7424 = vpack.c.b16 %v7407, %v7406
    %v7425 = vpack.c.b16 %v7409, %v7408
    %v7426 = vpack.c.b16 %v7411, %v7410
    %v7427 = vpack.c.b16 %v7413, %v7412
    %v7428 = vpack.c.b16 %v7415, %v7414
    %v7429 = vpack.c.b16 %v7417, %v7416
    %v7430 = vpack.c.b16 %v7419, %v7418
    %v7431 = vpack.c.b16 %v7421, %v7420
    %v7432 = vpack.c.b16 %v7423, %v7422
    %v7433 = vrot.slane %v7424, 1
    %v7434 = vrot.slane %v7425, 1
    %v7435 = vsel %vm2076, %v7433, %v7434
    %v7436 = vrot.slane %v7426, 1
    %v7437 = vsel %vm2076, %v7434, %v7436
    %v7438 = vrot.slane %v7427, 1
    %v7439 = vsel %vm2076, %v7436, %v7438
    %v7440 = vrot.slane %v7428, 1
    %v7441 = vsel %vm2076, %v7438, %v7440
    %v7442 = vrot.slane %v7429, 1
    %v7443 = vsel %vm2076, %v7440, %v7442
    %v7444 = vrot.slane %v7430, 1
    %v7445 = vsel %vm2076, %v7442, %v7444
    %v7446 = vrot.slane %v7431, 1
    %v7447 = vsel %vm2076, %v7444, %v7446
    %v7448 = vrot.slane %v7432, 1
    %v7449 = vsel %vm2076, %v7446, %v7448
    %7450 = vrot.lane.b32.xlu0 %v7435, 64
    %v7451 = vpop.permute.xlu0 %7450
    %7452 = vrot.lane.b32.xlu0 %v7437, 64
    %v7453 = vpop.permute.xlu0 %7452
    %7454 = vrot.lane.b32.xlu0 %v7439, 64
    %v7455 = vpop.permute.xlu0 %7454
    %7456 = vrot.lane.b32.xlu0 %v7441, 64
    %v7457 = vpop.permute.xlu0 %7456
    %7458 = vrot.lane.b32.xlu0 %v7443, 64
    %v7459 = vpop.permute.xlu0 %7458
    %7460 = vrot.lane.b32.xlu0 %v7445, 64
    %v7461 = vpop.permute.xlu0 %7460
    %7462 = vrot.lane.b32.xlu0 %v7447, 64
    %v7463 = vpop.permute.xlu0 %7462
    %7464 = vrot.lane.b32.xlu0 %v7449, 64
    %v7465 = vpop.permute.xlu0 %7464
    %7466 = vrot.lane.b32.xlu0 %v7448, 64
    %v7467 = vpop.permute.xlu0 %7466
    %v7470 = vsel %vm1045, %v7245, %v7371
    %v7473 = vsel %vm1045, %v7246, %v7373
    %v7476 = vsel %vm1045, %v7247, %v7375
    %v7479 = vsel %vm1045, %v7248, %v7377
    %v7482 = vsel %vm1045, %v7249, %v7379
    %v7485 = vsel %vm1045, %v7250, %v7381
    %v7488 = vsel %vm1045, %v7251, %v7383
    %v7491 = vsel %vm1045, %v7252, %v7385
    %v7494 = vsel %vm1045, %v7253, %v7387
    %v7496 = vsel %vm1094, %v7470, %v7451
    %v7498 = vsel %vm1094, %v7473, %v7453
    %v7500 = vsel %vm1094, %v7476, %v7455
    %v7502 = vsel %vm1094, %v7479, %v7457
    %v7504 = vsel %vm1094, %v7482, %v7459
    %v7506 = vsel %vm1094, %v7485, %v7461
    %v7508 = vsel %vm1094, %v7488, %v7463
    %v7510 = vsel %vm1094, %v7491, %v7465
    %v7512 = vsel %vm1094, %v7494, %v7467
    %v7513 = vld [vmem:[#allocation4 + $0x44] sm:$0xf]
    %v7514 = vld [vmem:[#allocation4 + $0x48] sm:$0x1]
    %v7515 = vmul.bf16 %v7154, %v345
    %v7516 = vmul.bf16 %v7155, %v357
    %v7517 = vmul.bf16 %v7156, %v369
    %v7518 = vmul.bf16 %v7157, %v381
    %v7519 = vmul.bf16 %v7158, %v393
    %v7520 = vmul.bf16 %v7159, %v405
    %v7521 = vmul.bf16 %v7160, %v417
    %v7522 = vmul.bf16 %v7161, %v429
    %v7523 = vmul.bf16 %v7162, %v441
    %v7524 = vmul.bf16 %v7163, %v453
    %v7525 = vmul.bf16 %v7164, %v465
    %v7526 = vmul.bf16 %v7165, %v477
    %v7527 = vmul.bf16 %v7166, %v489
    %v7528 = vmul.bf16 %v7167, %v501
    %v7529 = vmul.bf16 %v7168, %v513
    %v7530 = vmul.bf16 %v7169, %v525
    %v7531 = vmul.bf16 %v7513, %v537
    %v7532 = vmul.bf16 %v7514, %v549
    %v7533 = vld [vmem:[#allocation4 + $0x4] sm:$0xe]
    %v7534 = vld [vmem:[#allocation4 + $0x48] sm:$0x3]
    %v7535 = vmul.bf16 %v7533, %v1764
    %v7536 = vmul.bf16 %v7155, %v1767
    %v7537 = vmul.bf16 %v7156, %v1770
    %v7538 = vmul.bf16 %v7157, %v1773
    %v7539 = vmul.bf16 %v7158, %v1776
    %v7540 = vmul.bf16 %v7159, %v1779
    %v7541 = vmul.bf16 %v7160, %v1782
    %v7542 = vmul.bf16 %v7161, %v1785
    %v7543 = vmul.bf16 %v7162, %v1788
    %v7544 = vmul.bf16 %v7163, %v1791
    %v7545 = vmul.bf16 %v7164, %v1794
    %v7546 = vmul.bf16 %v7165, %v1797
    %v7547 = vmul.bf16 %v7166, %v1800
    %v7548 = vmul.bf16 %v7167, %v1803
    %v7549 = vmul.bf16 %v7168, %v1806
    %v7550 = vmul.bf16 %v7169, %v1809
    %v7551 = vmul.bf16 %v7513, %v1812
    %v7552 = vmul.bf16 %v7534, %v1815
    %v7571 = vunpack.c.l.b16 %v7515
    %v7572 = vunpack.c.l.b16 %v7516
    %v7573 = vunpack.c.l.b16 %v7517
    %v7574 = vunpack.c.l.b16 %v7518
    %v7575 = vunpack.c.l.b16 %v7519
    %v7576 = vunpack.c.l.b16 %v7520
    %v7577 = vunpack.c.l.b16 %v7521
    %v7578 = vunpack.c.l.b16 %v7522
    %v7579 = vunpack.c.l.b16 %v7523
    %v7580 = vunpack.c.l.b16 %v7524
    %v7581 = vunpack.c.l.b16 %v7525
    %v7582 = vunpack.c.l.b16 %v7526
    %v7583 = vunpack.c.l.b16 %v7527
    %v7584 = vunpack.c.l.b16 %v7528
    %v7585 = vunpack.c.l.b16 %v7529
    %v7586 = vunpack.c.l.b16 %v7530
    %v7587 = vunpack.c.l.b16 %v7531
    %v7588 = vunpack.c.l.b16 %v7532
    %v7589 = vpack.c.b16 %v7572, %v7571
    %v7590 = vpack.c.b16 %v7574, %v7573
    %v7591 = vpack.c.b16 %v7576, %v7575
    %v7592 = vpack.c.b16 %v7578, %v7577
    %v7593 = vpack.c.b16 %v7580, %v7579
    %v7594 = vpack.c.b16 %v7582, %v7581
    %v7595 = vpack.c.b16 %v7584, %v7583
    %v7596 = vpack.c.b16 %v7586, %v7585
    %v7597 = vpack.c.b16 %v7588, %v7587
    %v7600 = vunpack.c.l.b16 %v7513
    %v7601 = vunpack.c.l.b16 %v7514
    %v7602 = vpack.c.b16 %v7274, %v7273
    %v7603 = vpack.c.b16 %v7276, %v7275
    %v7604 = vpack.c.b16 %v7278, %v7277
    %v7605 = vpack.c.b16 %v7280, %v7279
    %v7606 = vpack.c.b16 %v7282, %v7281
    %v7607 = vpack.c.b16 %v7284, %v7283
    %v7608 = vpack.c.b16 %v7286, %v7285
    %v7609 = vpack.c.b16 %v7288, %v7287
    %v7610 = vpack.c.b16 %v7601, %v7600
    %v7612 = vshrl.u32 %v7602, 16
    %v7614 = vshll.u32 %v7602, 16
    %v7616 = vrot.slane %v7614, 1
    %v7617 = vor.u32 %v7612, %v7616
    %v7619 = vshll.u32 %v7603, 16
    %v7621 = vrot.slane %v7619, 1
    %v7622 = vsel %vm658, %v7617, %v7621
    %v7623 = vshrl.u32 %v7603, 16
    %v7625 = vor.u32 %v7623, %v7621
    %v7627 = vshll.u32 %v7604, 16
    %v7629 = vrot.slane %v7627, 1
    %v7630 = vsel %vm658, %v7625, %v7629
    %v7631 = vshrl.u32 %v7604, 16
    %v7633 = vor.u32 %v7631, %v7629
    %v7635 = vshll.u32 %v7605, 16
    %v7637 = vrot.slane %v7635, 1
    %v7638 = vsel %vm658, %v7633, %v7637
    %v7639 = vshrl.u32 %v7605, 16
    %v7641 = vor.u32 %v7639, %v7637
    %v7643 = vshll.u32 %v7606, 16
    %v7645 = vrot.slane %v7643, 1
    %v7646 = vsel %vm658, %v7641, %v7645
    %v7647 = vshrl.u32 %v7606, 16
    %v7649 = vor.u32 %v7647, %v7645
    %v7651 = vshll.u32 %v7607, 16
    %v7653 = vrot.slane %v7651, 1
    %v7654 = vsel %vm658, %v7649, %v7653
    %v7655 = vshrl.u32 %v7607, 16
    %v7657 = vor.u32 %v7655, %v7653
    %v7659 = vshll.u32 %v7608, 16
    %v7661 = vrot.slane %v7659, 1
    %v7662 = vsel %vm658, %v7657, %v7661
    %v7663 = vshrl.u32 %v7608, 16
    %v7665 = vor.u32 %v7663, %v7661
    %v7667 = vshll.u32 %v7609, 16
    %v7669 = vrot.slane %v7667, 1
    %v7670 = vsel %vm658, %v7665, %v7669
    %v7671 = vshrl.u32 %v7609, 16
    %v7673 = vor.u32 %v7671, %v7669
    %v7675 = vshll.u32 %v7610, 16
    %v7677 = vrot.slane %v7675, 1
    %v7678 = vsel %vm658, %v7673, %v7677
    %v7679 = vshrl.u32 %v7610, 16
    %v7681 = vor.u32 %v7679, %v7677
    %7682 = vrot.lane.b32.xlu0 %v7622, 32
    %v7683 = vpop.permute.xlu0 %7682
    %7684 = vrot.lane.b32.xlu0 %v7630, 32
    %v7685 = vpop.permute.xlu0 %7684
    %7686 = vrot.lane.b32.xlu0 %v7638, 32
    %v7687 = vpop.permute.xlu0 %7686
    %7688 = vrot.lane.b32.xlu0 %v7646, 32
    %v7689 = vpop.permute.xlu0 %7688
    %7690 = vrot.lane.b32.xlu0 %v7654, 32
    %v7691 = vpop.permute.xlu0 %7690
    %7692 = vrot.lane.b32.xlu0 %v7662, 32
    %v7693 = vpop.permute.xlu0 %7692
    %7694 = vrot.lane.b32.xlu0 %v7670, 32
    %v7695 = vpop.permute.xlu0 %7694
    %7696 = vrot.lane.b32.xlu0 %v7678, 32
    %v7697 = vpop.permute.xlu0 %7696
    %7698 = vrot.lane.b32.xlu0 %v7681, 32
    %v7699 = vpop.permute.xlu0 %7698
    %v7718 = vunpack.c.l.b16 %v7535
    %v7719 = vunpack.c.l.b16 %v7536
    %v7720 = vunpack.c.l.b16 %v7537
    %v7721 = vunpack.c.l.b16 %v7538
    %v7722 = vunpack.c.l.b16 %v7539
    %v7723 = vunpack.c.l.b16 %v7540
    %v7724 = vunpack.c.l.b16 %v7541
    %v7725 = vunpack.c.l.b16 %v7542
    %v7726 = vunpack.c.l.b16 %v7543
    %v7727 = vunpack.c.l.b16 %v7544
    %v7728 = vunpack.c.l.b16 %v7545
    %v7729 = vunpack.c.l.b16 %v7546
    %v7730 = vunpack.c.l.b16 %v7547
    %v7731 = vunpack.c.l.b16 %v7548
    %v7732 = vunpack.c.l.b16 %v7549
    %v7733 = vunpack.c.l.b16 %v7550
    %v7734 = vunpack.c.l.b16 %v7551
    %v7735 = vunpack.c.l.b16 %v7552
    %v7736 = vpack.c.b16 %v7719, %v7718
    %v7737 = vpack.c.b16 %v7721, %v7720
    %v7738 = vpack.c.b16 %v7723, %v7722
    %v7739 = vpack.c.b16 %v7725, %v7724
    %v7740 = vpack.c.b16 %v7727, %v7726
    %v7741 = vpack.c.b16 %v7729, %v7728
    %v7742 = vpack.c.b16 %v7731, %v7730
    %v7743 = vpack.c.b16 %v7733, %v7732
    %v7744 = vpack.c.b16 %v7735, %v7734
    %v7745 = vrot.slane %v7736, 1
    %v7746 = vrot.slane %v7737, 1
    %v7747 = vsel %vm2076, %v7745, %v7746
    %v7748 = vrot.slane %v7738, 1
    %v7749 = vsel %vm2076, %v7746, %v7748
    %v7750 = vrot.slane %v7739, 1
    %v7751 = vsel %vm2076, %v7748, %v7750
    %v7752 = vrot.slane %v7740, 1
    %v7753 = vsel %vm2076, %v7750, %v7752
    %v7754 = vrot.slane %v7741, 1
    %v7755 = vsel %vm2076, %v7752, %v7754
    %v7756 = vrot.slane %v7742, 1
    %v7757 = vsel %vm2076, %v7754, %v7756
    %v7758 = vrot.slane %v7743, 1
    %v7759 = vsel %vm2076, %v7756, %v7758
    %v7760 = vrot.slane %v7744, 1
    %v7761 = vsel %vm2076, %v7758, %v7760
    %7762 = vrot.lane.b32.xlu0 %v7747, 64
    %v7763 = vpop.permute.xlu0 %7762
    %7764 = vrot.lane.b32.xlu0 %v7749, 64
    %v7765 = vpop.permute.xlu0 %7764
    %7766 = vrot.lane.b32.xlu0 %v7751, 64
    %v7767 = vpop.permute.xlu0 %7766
    %7768 = vrot.lane.b32.xlu0 %v7753, 64
    %v7769 = vpop.permute.xlu0 %7768
    %7770 = vrot.lane.b32.xlu0 %v7755, 64
    %v7771 = vpop.permute.xlu0 %7770
    %7772 = vrot.lane.b32.xlu0 %v7757, 64
    %v7773 = vpop.permute.xlu0 %7772
    %7774 = vrot.lane.b32.xlu0 %v7759, 64
    %v7775 = vpop.permute.xlu0 %7774
    %7776 = vrot.lane.b32.xlu0 %v7761, 64
    %v7777 = vpop.permute.xlu0 %7776
    %7778 = vrot.lane.b32.xlu0 %v7760, 64
    %v7779 = vpop.permute.xlu0 %7778
    %v7782 = vsel %vm1045, %v7589, %v7683
    %v7785 = vsel %vm1045, %v7590, %v7685
    %v7788 = vsel %vm1045, %v7591, %v7687
    %v7791 = vsel %vm1045, %v7592, %v7689
    %v7794 = vsel %vm1045, %v7593, %v7691
    %v7797 = vsel %vm1045, %v7594, %v7693
    %v7800 = vsel %vm1045, %v7595, %v7695
    %v7803 = vsel %vm1045, %v7596, %v7697
    %v7806 = vsel %vm1045, %v7597, %v7699
    %v7808 = vsel %vm1094, %v7782, %v7763
    %v7810 = vsel %vm1094, %v7785, %v7765
    %v7812 = vsel %vm1094, %v7788, %v7767
    %v7814 = vsel %vm1094, %v7791, %v7769
    %v7816 = vsel %vm1094, %v7794, %v7771
    %v7818 = vsel %vm1094, %v7797, %v7773
    %v7820 = vsel %vm1094, %v7800, %v7775
    %v7822 = vsel %vm1094, %v7803, %v7777
    %v7824 = vsel %vm1094, %v7806, %v7779
    %v7825 = vld [vmem:[#allocation4 + $0x48] sm:$0xf]
    %v7826 = vld [vmem:[#allocation4 + $0x4c] sm:$0x1]
    %v7827 = vmul.bf16 %v7155, %v345
    %v7828 = vmul.bf16 %v7156, %v357
    %v7829 = vmul.bf16 %v7157, %v369
    %v7830 = vmul.bf16 %v7158, %v381
    %v7831 = vmul.bf16 %v7159, %v393
    %v7832 = vmul.bf16 %v7160, %v405
    %v7833 = vmul.bf16 %v7161, %v417
    %v7834 = vmul.bf16 %v7162, %v429
    %v7835 = vmul.bf16 %v7163, %v441
    %v7836 = vmul.bf16 %v7164, %v453
    %v7837 = vmul.bf16 %v7165, %v465
    %v7838 = vmul.bf16 %v7166, %v477
    %v7839 = vmul.bf16 %v7167, %v489
    %v7840 = vmul.bf16 %v7168, %v501
    %v7841 = vmul.bf16 %v7169, %v513
    %v7842 = vmul.bf16 %v7513, %v525
    %v7843 = vmul.bf16 %v7825, %v537
    %v7844 = vmul.bf16 %v7826, %v549
    %v7845 = vld [vmem:[#allocation4 + $0x8] sm:$0xe]
    %v7846 = vld [vmem:[#allocation4 + $0x4c] sm:$0x3]
    %v7847 = vmul.bf16 %v7845, %v1764
    %v7848 = vmul.bf16 %v7156, %v1767
    %v7849 = vmul.bf16 %v7157, %v1770
    %v7850 = vmul.bf16 %v7158, %v1773
    %v7851 = vmul.bf16 %v7159, %v1776
    %v7852 = vmul.bf16 %v7160, %v1779
    %v7853 = vmul.bf16 %v7161, %v1782
    %v7854 = vmul.bf16 %v7162, %v1785
    %v7855 = vmul.bf16 %v7163, %v1788
    %v7856 = vmul.bf16 %v7164, %v1791
    %v7857 = vmul.bf16 %v7165, %v1794
    %v7858 = vmul.bf16 %v7166, %v1797
    %v7859 = vmul.bf16 %v7167, %v1800
    %v7860 = vmul.bf16 %v7168, %v1803
    %v7861 = vmul.bf16 %v7169, %v1806
    %v7862 = vmul.bf16 %v7513, %v1809
    %v7863 = vmul.bf16 %v7825, %v1812
    %v7864 = vmul.bf16 %v7846, %v1815
    %v7883 = vunpack.c.l.b16 %v7827
    %v7884 = vunpack.c.l.b16 %v7828
    %v7885 = vunpack.c.l.b16 %v7829
    %v7886 = vunpack.c.l.b16 %v7830
    %v7887 = vunpack.c.l.b16 %v7831
    %v7888 = vunpack.c.l.b16 %v7832
    %v7889 = vunpack.c.l.b16 %v7833
    %v7890 = vunpack.c.l.b16 %v7834
    %v7891 = vunpack.c.l.b16 %v7835
    %v7892 = vunpack.c.l.b16 %v7836
    %v7893 = vunpack.c.l.b16 %v7837
    %v7894 = vunpack.c.l.b16 %v7838
    %v7895 = vunpack.c.l.b16 %v7839
    %v7896 = vunpack.c.l.b16 %v7840
    %v7897 = vunpack.c.l.b16 %v7841
    %v7898 = vunpack.c.l.b16 %v7842
    %v7899 = vunpack.c.l.b16 %v7843
    %v7900 = vunpack.c.l.b16 %v7844
    %v7901 = vpack.c.b16 %v7884, %v7883
    %v7902 = vpack.c.b16 %v7886, %v7885
    %v7903 = vpack.c.b16 %v7888, %v7887
    %v7904 = vpack.c.b16 %v7890, %v7889
    %v7905 = vpack.c.b16 %v7892, %v7891
    %v7906 = vpack.c.b16 %v7894, %v7893
    %v7907 = vpack.c.b16 %v7896, %v7895
    %v7908 = vpack.c.b16 %v7898, %v7897
    %v7909 = vpack.c.b16 %v7900, %v7899
    %v7912 = vunpack.c.l.b16 %v7825
    %v7913 = vunpack.c.l.b16 %v7826
    %v7914 = vpack.c.b16 %v7600, %v7288
    %v7915 = vpack.c.b16 %v7913, %v7912
    %v7917 = vshll.u32 %v7914, 16
    %v7919 = vrot.slane %v7917, 1
    %v7920 = vsel %vm658, %v7361, %v7919
    %v7921 = vshrl.u32 %v7914, 16
    %v7923 = vor.u32 %v7921, %v7919
    %v7925 = vshll.u32 %v7915, 16
    %v7927 = vrot.slane %v7925, 1
    %v7928 = vsel %vm658, %v7923, %v7927
    %v7929 = vshrl.u32 %v7915, 16
    %v7931 = vor.u32 %v7929, %v7927
    %7932 = vrot.lane.b32.xlu0 %v7920, 32
    %v7933 = vpop.permute.xlu0 %7932
    %7934 = vrot.lane.b32.xlu0 %v7928, 32
    %v7935 = vpop.permute.xlu0 %7934
    %7936 = vrot.lane.b32.xlu0 %v7931, 32
    %v7937 = vpop.permute.xlu0 %7936
    %v7956 = vunpack.c.l.b16 %v7847
    %v7957 = vunpack.c.l.b16 %v7848
    %v7958 = vunpack.c.l.b16 %v7849
    %v7959 = vunpack.c.l.b16 %v7850
    %v7960 = vunpack.c.l.b16 %v7851
    %v7961 = vunpack.c.l.b16 %v7852
    %v7962 = vunpack.c.l.b16 %v7853
    %v7963 = vunpack.c.l.b16 %v7854
    %v7964 = vunpack.c.l.b16 %v7855
    %v7965 = vunpack.c.l.b16 %v7856
    %v7966 = vunpack.c.l.b16 %v7857
    %v7967 = vunpack.c.l.b16 %v7858
    %v7968 = vunpack.c.l.b16 %v7859
    %v7969 = vunpack.c.l.b16 %v7860
    %v7970 = vunpack.c.l.b16 %v7861
    %v7971 = vunpack.c.l.b16 %v7862
    %v7972 = vunpack.c.l.b16 %v7863
    %v7973 = vunpack.c.l.b16 %v7864
    %v7974 = vpack.c.b16 %v7957, %v7956
    %v7975 = vpack.c.b16 %v7959, %v7958
    %v7976 = vpack.c.b16 %v7961, %v7960
    %v7977 = vpack.c.b16 %v7963, %v7962
    %v7978 = vpack.c.b16 %v7965, %v7964
    %v7979 = vpack.c.b16 %v7967, %v7966
    %v7980 = vpack.c.b16 %v7969, %v7968
    %v7981 = vpack.c.b16 %v7971, %v7970
    %v7982 = vpack.c.b16 %v7973, %v7972
    %v7983 = vrot.slane %v7974, 1
    %v7984 = vrot.slane %v7975, 1
    %v7985 = vsel %vm2076, %v7983, %v7984
    %v7986 = vrot.slane %v7976, 1
    %v7987 = vsel %vm2076, %v7984, %v7986
    %v7988 = vrot.slane %v7977, 1
    %v7989 = vsel %vm2076, %v7986, %v7988
    %v7990 = vrot.slane %v7978, 1
    %v7991 = vsel %vm2076, %v7988, %v7990
    %v7992 = vrot.slane %v7979, 1
    %v7993 = vsel %vm2076, %v7990, %v7992
    %v7994 = vrot.slane %v7980, 1
    %v7995 = vsel %vm2076, %v7992, %v7994
    %v7996 = vrot.slane %v7981, 1
    %v7997 = vsel %vm2076, %v7994, %v7996
    %v7998 = vrot.slane %v7982, 1
    %v7999 = vsel %vm2076, %v7996, %v7998
    %8000 = vrot.lane.b32.xlu0 %v7985, 64
    %v8001 = vpop.permute.xlu0 %8000
    %8002 = vrot.lane.b32.xlu0 %v7987, 64
    %v8003 = vpop.permute.xlu0 %8002
    %8004 = vrot.lane.b32.xlu0 %v7989, 64
    %v8005 = vpop.permute.xlu0 %8004
    %8006 = vrot.lane.b32.xlu0 %v7991, 64
    %v8007 = vpop.permute.xlu0 %8006
    %8008 = vrot.lane.b32.xlu0 %v7993, 64
    %v8009 = vpop.permute.xlu0 %8008
    %8010 = vrot.lane.b32.xlu0 %v7995, 64
    %v8011 = vpop.permute.xlu0 %8010
    %8012 = vrot.lane.b32.xlu0 %v7997, 64
    %v8013 = vpop.permute.xlu0 %8012
    %8014 = vrot.lane.b32.xlu0 %v7999, 64
    %v8015 = vpop.permute.xlu0 %8014
    %8016 = vrot.lane.b32.xlu0 %v7998, 64
    %v8017 = vpop.permute.xlu0 %8016
    %v8019 = vsel %vm1045, %v7901, %v7373
    %v8021 = vsel %vm1045, %v7902, %v7375
    %v8023 = vsel %vm1045, %v7903, %v7377
    %v8025 = vsel %vm1045, %v7904, %v7379
    %v8027 = vsel %vm1045, %v7905, %v7381
    %v8029 = vsel %vm1045, %v7906, %v7383
    %v8032 = vsel %vm1045, %v7907, %v7933
    %v8035 = vsel %vm1045, %v7908, %v7935
    %v8038 = vsel %vm1045, %v7909, %v7937
    %v8040 = vsel %vm1094, %v8019, %v8001
    %v8042 = vsel %vm1094, %v8021, %v8003
    %v8044 = vsel %vm1094, %v8023, %v8005
    %v8046 = vsel %vm1094, %v8025, %v8007
    %v8048 = vsel %vm1094, %v8027, %v8009
    %v8050 = vsel %vm1094, %v8029, %v8011
    %v8052 = vsel %vm1094, %v8032, %v8013
    %v8054 = vsel %vm1094, %v8035, %v8015
    %v8056 = vsel %vm1094, %v8038, %v8017
    %8066 = vrot.lane.b32.xlu0 %v7808, 96
    %v8067 = vpop.permute.xlu0 %8066
    %8068 = vrot.lane.b32.xlu0 %v7810, 96
    %v8069 = vpop.permute.xlu0 %8068
    %8070 = vrot.lane.b32.xlu0 %v7812, 96
    %v8071 = vpop.permute.xlu0 %8070
    %8072 = vrot.lane.b32.xlu0 %v7814, 96
    %v8073 = vpop.permute.xlu0 %8072
    %8074 = vrot.lane.b32.xlu0 %v7816, 96
    %v8075 = vpop.permute.xlu0 %8074
    %8076 = vrot.lane.b32.xlu0 %v7818, 96
    %v8077 = vpop.permute.xlu0 %8076
    %8078 = vrot.lane.b32.xlu0 %v7820, 96
    %v8079 = vpop.permute.xlu0 %8078
    %8080 = vrot.lane.b32.xlu0 %v7822, 96
    %v8081 = vpop.permute.xlu0 %8080
    %8082 = vrot.lane.b32.xlu0 %v7824, 96
    %v8083 = vpop.permute.xlu0 %8082
    %8093 = vrot.lane.b32.xlu0 %v8040, 64
    %v8094 = vpop.permute.xlu0 %8093
    %8095 = vrot.lane.b32.xlu0 %v8042, 64
    %v8096 = vpop.permute.xlu0 %8095
    %8097 = vrot.lane.b32.xlu0 %v8044, 64
    %v8098 = vpop.permute.xlu0 %8097
    %8099 = vrot.lane.b32.xlu0 %v8046, 64
    %v8100 = vpop.permute.xlu0 %8099
    %8101 = vrot.lane.b32.xlu0 %v8048, 64
    %v8102 = vpop.permute.xlu0 %8101
    %8103 = vrot.lane.b32.xlu0 %v8050, 64
    %v8104 = vpop.permute.xlu0 %8103
    %8105 = vrot.lane.b32.xlu0 %v8052, 64
    %v8106 = vpop.permute.xlu0 %8105
    %8107 = vrot.lane.b32.xlu0 %v8054, 64
    %v8108 = vpop.permute.xlu0 %8107
    %8109 = vrot.lane.b32.xlu0 %v8056, 64
    %v8110 = vpop.permute.xlu0 %8109
    %v8112 = vsel %vm2883, %v7496, %v8067
    %v8115 = vsel %vm2883, %v7498, %v8069
    %v8118 = vsel %vm2883, %v7500, %v8071
    %v8121 = vsel %vm2883, %v7502, %v8073
    %v8124 = vsel %vm2883, %v7504, %v8075
    %v8127 = vsel %vm2883, %v7506, %v8077
    %v8130 = vsel %vm2883, %v7508, %v8079
    %v8133 = vsel %vm2883, %v7510, %v8081
    %v8136 = vsel %vm2883, %v7512, %v8083
    %v8139 = vsel %vm1094, %v8067, %v8094
    %v8142 = vsel %vm1094, %v8069, %v8096
    %v8145 = vsel %vm1094, %v8071, %v8098
    %v8148 = vsel %vm1094, %v8073, %v8100
    %v8151 = vsel %vm1094, %v8075, %v8102
    %v8154 = vsel %vm1094, %v8077, %v8104
    %v8157 = vsel %vm1094, %v8079, %v8106
    %v8160 = vsel %vm1094, %v8081, %v8108
    %v8163 = vsel %vm1094, %v8083, %v8110
    %v8166 = vlaneseq
    %v8167 = vshrl.u32 %v8166, 7
    %v8168 = vsub.s32 0, %v8167
    %v8169 = vrot.slane %v7152, %v8168
    %v8207 = vunpack.c.l.b16 %v7115
    %v8208 = vunpack.c.l.b16 %v7116
    %v8209 = vunpack.c.l.b16 %v7117
    %v8210 = vunpack.c.l.b16 %v7118
    %v8211 = vunpack.c.l.b16 %v7119
    %v8212 = vunpack.c.l.b16 %v7120
    %v8213 = vunpack.c.l.b16 %v7121
    %v8214 = vunpack.c.l.b16 %v7122
    %v8215 = vunpack.c.l.b16 %v7123
    %v8216 = vunpack.c.l.b16 %v7124
    %v8217 = vunpack.c.l.b16 %v7125
    %v8218 = vunpack.c.l.b16 %v7126
    %v8219 = vunpack.c.l.b16 %v7127
    %v8220 = vunpack.c.l.b16 %v7128
    %v8221 = vunpack.c.l.b16 %v7129
    %v8222 = vunpack.c.l.b16 %v7130
    %v8223 = vunpack.c.l.b16 %v7131
    %v8224 = vunpack.c.l.b16 %v7132
    %v8225 = vunpack.c.l.b16 %v7133
    %v8226 = vunpack.c.l.b16 %v7134
    %v8227 = vunpack.c.l.b16 %v7135
    %v8228 = vunpack.c.l.b16 %v7136
    %v8229 = vunpack.c.l.b16 %v7137
    %v8230 = vunpack.c.l.b16 %v7138
    %v8231 = vunpack.c.l.b16 %v7139
    %v8232 = vunpack.c.l.b16 %v7140
    %v8233 = vunpack.c.l.b16 %v7141
    %v8234 = vunpack.c.l.b16 %v7142
    %v8235 = vunpack.c.l.b16 %v7143
    %v8236 = vunpack.c.l.b16 %v7144
    %v8237 = vunpack.c.l.b16 %v7145
    %v8238 = vunpack.c.l.b16 %v7146
    %v8239 = vunpack.c.l.b16 %v7147
    %v8240 = vunpack.c.l.b16 %v7148
    %v8241 = vunpack.c.l.b16 %v7149
    %v8242 = vunpack.c.l.b16 %v7150
    %v8243 = vpack.c.b16 %v8208, %v8207
    %v8244 = vpack.c.b16 %v8210, %v8209
    %v8245 = vpack.c.b16 %v8212, %v8211
    %v8246 = vpack.c.b16 %v8214, %v8213
    %v8247 = vpack.c.b16 %v8216, %v8215
    %v8248 = vpack.c.b16 %v8218, %v8217
    %v8249 = vpack.c.b16 %v8220, %v8219
    %v8250 = vpack.c.b16 %v8222, %v8221
    %v8251 = vpack.c.b16 %v8224, %v8223
    %v8252 = vpack.c.b16 %v8226, %v8225
    %v8253 = vpack.c.b16 %v8228, %v8227
    %v8254 = vpack.c.b16 %v8230, %v8229
    %v8255 = vpack.c.b16 %v8232, %v8231
    %v8256 = vpack.c.b16 %v8234, %v8233
    %v8257 = vpack.c.b16 %v8236, %v8235
    %v8258 = vpack.c.b16 %v8238, %v8237
    %v8259 = vpack.c.b16 %v8240, %v8239
    %v8260 = vpack.c.b16 %v8242, %v8241
    %v8279 = vsel %vm1045, %v8094, 0
    %v8281 = vsel %vm1045, %v8096, 0
    %v8283 = vsel %vm1045, %v8098, 0
    %v8285 = vsel %vm1045, %v8100, 0
    %v8287 = vsel %vm1045, %v8102, 0
    %v8289 = vsel %vm1045, %v8104, 0
    %v8291 = vsel %vm1045, %v8106, 0
    %v8293 = vsel %vm1045, %v8108, 0
    %v8295 = vsel %vm1045, %v8110, 0
    %8297 = vmatprep.subr.bf16.mxu0 0
    %8298 = vmatpush1.bf16.msra.mxu0 %v8243
    %8299 = vmatprep.subr.bf16.mxu0 0
    %8300 = vmatpush1.bf16.msra.mxu0 %v8244
    %8301 = vmatprep.subr.bf16.mxu0 0
    %8302 = vmatpush1.bf16.msra.mxu0 %v8245
    %8303 = vmatprep.subr.bf16.mxu0 0
    %8304 = vmatpush1.bf16.msra.mxu0 %v8246
    %8305 = vmatprep.subr.bf16.mxu0 0
    %8306 = vmatpush1.bf16.msra.mxu0 %v8247
    %8307 = vmatprep.subr.bf16.mxu0 0
    %8308 = vmatpush1.bf16.msra.mxu0 %v8248
    %8309 = vmatprep.subr.bf16.mxu0 0
    %8310 = vmatpush1.bf16.msra.mxu0 %v8249
    %8311 = vmatprep.subr.bf16.mxu0 0
    %8312 = vmatpush1.bf16.msra.mxu0 %v8250
    %8313 = vmatprep.subr.bf16.mxu0 0
    %8314 = vmatpush1.bf16.msra.mxu0 %v8251
    %8315 = vmatprep.subr.bf16.mxu0 0
    %8316 = vmatpush1.bf16.msra.mxu0 %v8252
    %8317 = vmatprep.subr.bf16.mxu0 0
    %8318 = vmatpush1.bf16.msra.mxu0 %v8253
    %8319 = vmatprep.subr.bf16.mxu0 0
    %8320 = vmatpush1.bf16.msra.mxu0 %v8254
    %8321 = vmatprep.subr.bf16.mxu0 0
    %8322 = vmatpush1.bf16.msra.mxu0 %v8255
    %8323 = vmatprep.subr.bf16.mxu0 0
    %8324 = vmatpush1.bf16.msra.mxu0 %v8256
    %8325 = vmatprep.subr.bf16.mxu0 0
    %8326 = vmatpush1.bf16.msra.mxu0 %v8257
    %8327 = vmatprep.subr.bf16.mxu0 0
    %8328 = vmatpush1.bf16.msra.mxu0 %v8258
    %8329 = vmatprep.mubr.bf16.mxu0 %v8139
    %8330 = vmatmul.mubr.bf16.gmra.mrb[0].mxu0 %v8112
    %v8331 = vpop.f32.mrb[0].mxu0
    %v8332 = vadd.f32 %v8169, %v8331
    %v8333 = vpop.f32.mrb[0].mxu0
    %v8334 = vpop.f32.mrb[0].mxu0
    %v8335 = vadd.f32 %v8169, %v8334
    %v8336 = vpop.f32.mrb[0].mxu0
    %8337 = vmatprep.mubr.bf16.mxu0 %v8142
    %8338 = vmatmul.mubr.bf16.gmra.mrb[0].mxu0 %v8115
    %v8339 = vpop.f32.mrb[0].mxu0
    %v8340 = vadd.f32 %v8169, %v8339
    %v8341 = vpop.f32.mrb[0].mxu0
    %v8342 = vpop.f32.mrb[0].mxu0
    %v8343 = vadd.f32 %v8169, %v8342
    %v8344 = vpop.f32.mrb[0].mxu0
    %8345 = vmatprep.mubr.bf16.mxu0 %v8145
    %8346 = vmatmul.mubr.bf16.gmra.mrb[0].mxu0 %v8118
    %v8347 = vpop.f32.mrb[0].mxu0
    %v8348 = vadd.f32 %v8169, %v8347
    %v8349 = vpop.f32.mrb[0].mxu0
    %v8350 = vpop.f32.mrb[0].mxu0
    %v8351 = vadd.f32 %v8169, %v8350
    %v8352 = vpop.f32.mrb[0].mxu0
    %8353 = vmatprep.mubr.bf16.mxu0 %v8148
    %8354 = vmatmul.mubr.bf16.gmra.mrb[0].mxu0 %v8121
    %v8355 = vpop.f32.mrb[0].mxu0
    %v8356 = vadd.f32 %v8169, %v8355
    %v8357 = vpop.f32.mrb[0].mxu0
    %v8358 = vpop.f32.mrb[0].mxu0
    %v8359 = vadd.f32 %v8169, %v8358
    %v8360 = vpop.f32.mrb[0].mxu0
    %8361 = vmatprep.mubr.bf16.mxu0 %v8151
    %8362 = vmatmul.mubr.bf16.gmra.mrb[0].mxu0 %v8124
    %v8363 = vpop.f32.mrb[0].mxu0
    %v8364 = vpop.f32.mrb[0].mxu0
    %v8365 = vpop.f32.mrb[0].mxu0
    %v8366 = vadd.f32 %v8169, %v8365
    %v8367 = vpop.f32.mrb[0].mxu0
    %8368 = vmatprep.mubr.bf16.mxu0 %v8154
    %8369 = vmatmul.mubr.bf16.gmra.mrb[0].mxu0 %v8127
    %v8370 = vpop.f32.mrb[0].mxu0
    %v8371 = vadd.f32 %v8169, %v8370
    %v8372 = vpop.f32.mrb[0].mxu0
    %v8373 = vpop.f32.mrb[0].mxu0
    %v8374 = vadd.f32 %v8169, %v8373
    %v8375 = vpop.f32.mrb[0].mxu0
    %8376 = vmatprep.mubr.bf16.mxu0 %v8157
    %8377 = vmatmul.mubr.bf16.gmra.mrb[0].mxu0 %v8130
    %v8378 = vpop.f32.mrb[0].mxu0
    %v8379 = vadd.f32 %v8169, %v8378
    %v8380 = vpop.f32.mrb[0].mxu0
    %v8381 = vpop.f32.mrb[0].mxu0
    %v8382 = vadd.f32 %v8169, %v8381
    %v8383 = vpop.f32.mrb[0].mxu0
    %8384 = vmatprep.mubr.bf16.mxu0 %v8160
    %8385 = vmatmul.mubr.bf16.gmra.mrb[0].mxu0 %v8133
    %v8386 = vpop.f32.mrb[0].mxu0
    %v8387 = vadd.f32 %v8169, %v8386
    %v8388 = vpop.f32.mrb[0].mxu0
    %v8389 = vpop.f32.mrb[0].mxu0
    %v8390 = vadd.f32 %v8169, %v8389
    %v8391 = vpop.f32.mrb[0].mxu0
    %8392 = vmatprep.mubr.bf16.mxu0 %v8163
    %8393 = vmatmul.mubr.bf16.gmra.mrb[0].mxu0 %v8136
    %v8394 = vpop.f32.mrb[0].mxu0
    %v8395 = vadd.f32 %v8169, %v8394
    %v8396 = vpop.f32.mrb[0].mxu0
    %v8397 = vpop.f32.mrb[0].mxu0
    %v8398 = vadd.f32 %v8169, %v8397
    %v8399 = vpop.f32.mrb[0].mxu0
    %8400 = vdwg.mxu0
    %8401 = vmatprep.subr.bf16.mxu0 0
    %8402 = vmatpush1.bf16.msra.mxu0 %v8259
    %8403 = vmatprep.subr.bf16.mxu0 0
    %8404 = vmatpush1.bf16.msra.mxu0 %v8260
    %8405 = vmatprep.subr.bf16.mxu0 0
    %8406 = vmatpush1.bf16.msra.mxu0 0
    %8407 = vmatprep.subr.bf16.mxu0 0
    %8408 = vmatpush1.bf16.msra.mxu0 0
    %8409 = vmatprep.subr.bf16.mxu0 0
    %8410 = vmatpush1.bf16.msra.mxu0 0
    %8411 = vmatprep.subr.bf16.mxu0 0
    %8412 = vmatpush1.bf16.msra.mxu0 0
    %8413 = vmatprep.subr.bf16.mxu0 0
    %8414 = vmatpush1.bf16.msra.mxu0 0
    %8415 = vmatprep.subr.bf16.mxu0 0
    %8416 = vmatpush1.bf16.msra.mxu0 0
    %8417 = vmatprep.subr.bf16.mxu0 0
    %8418 = vmatpush1.bf16.msra.mxu0 0
    %8419 = vmatprep.subr.bf16.mxu0 0
    %8420 = vmatpush1.bf16.msra.mxu0 0
    %8421 = vmatprep.subr.bf16.mxu0 0
    %8422 = vmatpush1.bf16.msra.mxu0 0
    %8423 = vmatprep.subr.bf16.mxu0 0
    %8424 = vmatpush1.bf16.msra.mxu0 0
    %8425 = vmatprep.subr.bf16.mxu0 0
    %8426 = vmatpush1.bf16.msra.mxu0 0
    %8427 = vmatprep.subr.bf16.mxu0 0
    %8428 = vmatpush1.bf16.msra.mxu0 0
    %8429 = vmatprep.subr.bf16.mxu0 0
    %8430 = vmatpush1.bf16.msra.mxu0 0
    %8431 = vmatprep.subr.bf16.mxu0 0
    %8432 = vmatpush1.bf16.msra.mxu0 0
    %8433 = vmatprep.mubr.bf16.mxu0 0
    %8434 = vmatmul.mubr.bf16.gmra.mrb[0].mxu0 %v8279
    %v8435 = vpop.f32.mrb[0].mxu0
    %v8436 = vadd.f32 %v8332, %v8435
    %v8437 = vpop.f32.mrb[0].mxu0
    %v8438 = vpop.f32.mrb[0].mxu0
    %v8439 = vadd.f32 %v8335, %v8438
    %v8440 = vpop.f32.mrb[0].mxu0
    %8441 = vmatprep.mubr.bf16.mxu0 0
    %8442 = vmatmul.mubr.bf16.gmra.mrb[0].mxu0 %v8281
    %v8443 = vpop.f32.mrb[0].mxu0
    %v8444 = vadd.f32 %v8340, %v8443
    %v8445 = vpop.f32.mrb[0].mxu0
    %v8446 = vpop.f32.mrb[0].mxu0
    %v8447 = vadd.f32 %v8343, %v8446
    %v8448 = vpop.f32.mrb[0].mxu0
    %8449 = vmatprep.mubr.bf16.mxu0 0
    %8450 = vmatmul.mubr.bf16.gmra.mrb[0].mxu0 %v8283
    %v8451 = vpop.f32.mrb[0].mxu0
    %v8452 = vadd.f32 %v8348, %v8451
    %v8453 = vpop.f32.mrb[0].mxu0
    %v8454 = vpop.f32.mrb[0].mxu0
    %v8455 = vadd.f32 %v8351, %v8454
    %v8456 = vpop.f32.mrb[0].mxu0
    %8457 = vmatprep.mubr.bf16.mxu0 0
    %8458 = vmatmul.mubr.bf16.gmra.mrb[0].mxu0 %v8285
    %v8459 = vpop.f32.mrb[0].mxu0
    %v8460 = vadd.f32 %v8356, %v8459
    %v8461 = vpop.f32.mrb[0].mxu0
    %v8462 = vpop.f32.mrb[0].mxu0
    %v8463 = vadd.f32 %v8359, %v8462
    %v8464 = vpop.f32.mrb[0].mxu0
    %8465 = vmatprep.mubr.bf16.mxu0 0
    %8466 = vmatmul.mubr.bf16.gmra.mrb[0].mxu0 %v8287
    %v8467 = vpop.f32.mrb[0].mxu0
    %v8468 = vpop.f32.mrb[0].mxu0
    %v8469 = vpop.f32.mrb[0].mxu0
    %v8470 = vadd.f32 %v8366, %v8469
    %v8471 = vpop.f32.mrb[0].mxu0
    %8472 = vmatprep.mubr.bf16.mxu0 0
    %8473 = vmatmul.mubr.bf16.gmra.mrb[0].mxu0 %v8289
    %v8474 = vpop.f32.mrb[0].mxu0
    %v8475 = vadd.f32 %v8371, %v8474
    %v8476 = vpop.f32.mrb[0].mxu0
    %v8477 = vpop.f32.mrb[0].mxu0
    %v8478 = vadd.f32 %v8374, %v8477
    %v8479 = vpop.f32.mrb[0].mxu0
    %8480 = vmatprep.mubr.bf16.mxu0 0
    %8481 = vmatmul.mubr.bf16.gmra.mrb[0].mxu0 %v8291
    %v8482 = vpop.f32.mrb[0].mxu0
    %v8483 = vadd.f32 %v8379, %v8482
    %v8484 = vpop.f32.mrb[0].mxu0
    %v8485 = vpop.f32.mrb[0].mxu0
    %v8486 = vadd.f32 %v8382, %v8485
    %v8487 = vpop.f32.mrb[0].mxu0
    %8488 = vmatprep.mubr.bf16.mxu0 0
    %8489 = vmatmul.mubr.bf16.gmra.mrb[0].mxu0 %v8293
    %v8490 = vpop.f32.mrb[0].mxu0
    %v8491 = vadd.f32 %v8387, %v8490
    %v8492 = vpop.f32.mrb[0].mxu0
    %v8493 = vpop.f32.mrb[0].mxu0
    %v8494 = vadd.f32 %v8390, %v8493
    %v8495 = vpop.f32.mrb[0].mxu0
    %8496 = vmatprep.mubr.bf16.mxu0 0
    %8497 = vmatmul.mubr.bf16.gmra.mrb[0].mxu0 %v8295
    %v8498 = vpop.f32.mrb[0].mxu0
    %v8499 = vadd.f32 %v8395, %v8498
    %v8500 = vpop.f32.mrb[0].mxu0
    %v8501 = vpop.f32.mrb[0].mxu0
    %v8502 = vadd.f32 %v8398, %v8501
    %v8503 = vpop.f32.mrb[0].mxu0
    %8504 = vdwg.mxu0
    %vm8505 = vcmp.gt.f32.partialorder %v8436, 0.0
    %vm8506 = vcmp.gt.f32.partialorder %v8439, 0.0
    %vm8507 = vcmp.gt.f32.partialorder %v8444, 0.0
    %vm8508 = vcmp.gt.f32.partialorder %v8447, 0.0
    %vm8509 = vcmp.gt.f32.partialorder %v8452, 0.0
    %vm8510 = vcmp.gt.f32.partialorder %v8455, 0.0
    %vm8511 = vcmp.gt.f32.partialorder %v8460, 0.0
    %vm8512 = vcmp.gt.f32.partialorder %v8463, 0.0
    %vm8513 = vcmp.gt.f32.partialorder %v8470, 0.0
    %vm8514 = vcmp.gt.f32.partialorder %v8475, 0.0
    %vm8515 = vcmp.gt.f32.partialorder %v8478, 0.0
    %vm8516 = vcmp.gt.f32.partialorder %v8483, 0.0
    %vm8517 = vcmp.gt.f32.partialorder %v8486, 0.0
    %vm8518 = vcmp.gt.f32.partialorder %v8491, 0.0
    %vm8519 = vcmp.gt.f32.partialorder %v8494, 0.0
    %vm8520 = vcmp.gt.f32.partialorder %v8499, 0.0
    %vm8521 = vcmp.gt.f32.partialorder %v8502, 0.0
    %v8522 = vmin.f32 %v8436, 0.0
    %v8523 = vmin.f32 %v8439, 0.0
    %v8524 = vmin.f32 %v8444, 0.0
    %v8525 = vmin.f32 %v8447, 0.0
    %v8526 = vmin.f32 %v8452, 0.0
    %v8527 = vmin.f32 %v8455, 0.0
    %v8528 = vmin.f32 %v8460, 0.0
    %v8529 = vmin.f32 %v8463, 0.0
    %v8530 = vmin.f32 %v8470, 0.0
    %v8531 = vmin.f32 %v8475, 0.0
    %v8532 = vmin.f32 %v8478, 0.0
    %v8533 = vmin.f32 %v8483, 0.0
    %v8534 = vmin.f32 %v8486, 0.0
    %v8535 = vmin.f32 %v8491, 0.0
    %v8536 = vmin.f32 %v8494, 0.0
    %v8537 = vmin.f32 %v8499, 0.0
    %v8538 = vmin.f32 %v8502, 0.0
    %v8539 = vmul.f32 %v8522, 1.442695
    %v8540 = vpow.pop %v8539
    %v8541 = vmul.f32 %v8523, 1.442695
    %v8542 = vpow.pop %v8541
    %v8543 = vmul.f32 %v8524, 1.442695
    %v8544 = vpow.pop %v8543
    %v8545 = vmul.f32 %v8525, 1.442695
    %v8546 = vpow.pop %v8545
    %v8547 = vmul.f32 %v8526, 1.442695
    %v8548 = vpow.pop %v8547
    %v8549 = vmul.f32 %v8527, 1.442695
    %v8550 = vpow.pop %v8549
    %v8551 = vmul.f32 %v8528, 1.442695
    %v8552 = vpow.pop %v8551
    %v8553 = vmul.f32 %v8529, 1.442695
    %v8554 = vpow.pop %v8553
    %v8555 = vmul.f32 %v8530, 1.442695
    %v8556 = vpow.pop %v8555
    %v8557 = vmul.f32 %v8531, 1.442695
    %v8558 = vpow.pop %v8557
    %v8559 = vmul.f32 %v8532, 1.442695
    %v8560 = vpow.pop %v8559
    %v8561 = vmul.f32 %v8533, 1.442695
    %v8562 = vpow.pop %v8561
    %v8563 = vmul.f32 %v8534, 1.442695
    %v8564 = vpow.pop %v8563
    %v8565 = vmul.f32 %v8535, 1.442695
    %v8566 = vpow.pop %v8565
    %v8567 = vmul.f32 %v8536, 1.442695
    %v8568 = vpow.pop %v8567
    %v8569 = vmul.f32 %v8537, 1.442695
    %v8570 = vpow.pop %v8569
    %v8571 = vmul.f32 %v8538, 1.442695
    %v8572 = vpow.pop %v8571
    %v8573 = vsub.f32 %v8540, 1.0
    %v8574 = vsub.f32 %v8542, 1.0
    %v8575 = vsub.f32 %v8544, 1.0
    %v8576 = vsub.f32 %v8546, 1.0
    %v8577 = vsub.f32 %v8548, 1.0
    %v8578 = vsub.f32 %v8550, 1.0
    %v8579 = vsub.f32 %v8552, 1.0
    %v8580 = vsub.f32 %v8554, 1.0
    %v8581 = vsub.f32 %v8556, 1.0
    %v8582 = vsub.f32 %v8558, 1.0
    %v8583 = vsub.f32 %v8560, 1.0
    %v8584 = vsub.f32 %v8562, 1.0
    %v8585 = vsub.f32 %v8564, 1.0
    %v8586 = vsub.f32 %v8566, 1.0
    %v8587 = vsub.f32 %v8568, 1.0
    %v8588 = vsub.f32 %v8570, 1.0
    %v8589 = vsub.f32 %v8572, 1.0
    %v8590 = vsel %vm8505, %v8436, %v8573
    %v8591 = vsel %vm8506, %v8439, %v8574
    %v8592 = vsel %vm8507, %v8444, %v8575
    %v8593 = vsel %vm8508, %v8447, %v8576
    %v8594 = vsel %vm8509, %v8452, %v8577
    %v8595 = vsel %vm8510, %v8455, %v8578
    %v8596 = vsel %vm8511, %v8460, %v8579
    %v8597 = vsel %vm8512, %v8463, %v8580
    %v8598 = vsel %vm8513, %v8470, %v8581
    %v8599 = vsel %vm8514, %v8475, %v8582
    %v8600 = vsel %vm8515, %v8478, %v8583
    %v8601 = vsel %vm8516, %v8483, %v8584
    %v8602 = vsel %vm8517, %v8486, %v8585
    %v8603 = vsel %vm8518, %v8491, %v8586
    %v8604 = vsel %vm8519, %v8494, %v8587
    %v8605 = vsel %vm8520, %v8499, %v8588
    %v8606 = vsel %vm8521, %v8502, %v8589
    %s8607 = sld [smem:[#allocation5 + $0x80]]
    %v8608 = vstv %s8607
    %v8609 = vmul.f32 %v8590, %v8608
    %v8610 = vmul.f32 %v8591, %v8608
    %v8611 = vmul.f32 %v8592, %v8608
    %v8612 = vmul.f32 %v8593, %v8608
    %v8613 = vmul.f32 %v8594, %v8608
    %v8614 = vmul.f32 %v8595, %v8608
    %v8615 = vmul.f32 %v8596, %v8608
    %v8616 = vmul.f32 %v8597, %v8608
    %v8617 = vmul.f32 %v8598, %v8608
    %v8618 = vmul.f32 %v8599, %v8608
    %v8619 = vmul.f32 %v8600, %v8608
    %v8620 = vmul.f32 %v8601, %v8608
    %v8621 = vmul.f32 %v8602, %v8608
    %v8622 = vmul.f32 %v8603, %v8608
    %v8623 = vmul.f32 %v8604, %v8608
    %v8624 = vmul.f32 %v8605, %v8608
    %v8625 = vmul.f32 %v8606, %v8608
    %v8626 = vadd.f32 %v8609, %v5128
    %v8627 = vadd.f32 %v8610, %v5129
    %v8628 = vadd.f32 %v8611, %v5130
    %v8629 = vadd.f32 %v8612, %v5131
    %v8630 = vadd.f32 %v8613, %v5132
    %v8631 = vadd.f32 %v8614, %v5133
    %v8632 = vadd.f32 %v8615, %v5134
    %v8633 = vadd.f32 %v8616, %v5135
    %v8634 = vadd.f32 %v8617, %v5136
    %v8635 = vadd.f32 %v8618, %v5137
    %v8636 = vadd.f32 %v8619, %v5138
    %v8637 = vadd.f32 %v8620, %v5139
    %v8638 = vadd.f32 %v8621, %v5140
    %v8639 = vadd.f32 %v8622, %v5141
    %v8640 = vadd.f32 %v8623, %v5142
    %v8641 = vadd.f32 %v8624, %v5143
    %v8642 = vadd.f32 %v8625, %v5144
    %v8643 = vmax.f32 %v8626, 0.0
    %v8644 = vmax.f32 %v8627, 0.0
    %v8645 = vmax.f32 %v8628, 0.0
    %v8646 = vmax.f32 %v8629, 0.0
    %v8647 = vmax.f32 %v8630, 0.0
    %v8648 = vmax.f32 %v8631, 0.0
    %v8649 = vmax.f32 %v8632, 0.0
    %v8650 = vmax.f32 %v8633, 0.0
    %v8651 = vmax.f32 %v8634, 0.0
    %v8652 = vmax.f32 %v8635, 0.0
    %v8653 = vmax.f32 %v8636, 0.0
    %v8654 = vmax.f32 %v8637, 0.0
    %v8655 = vmax.f32 %v8638, 0.0
    %v8656 = vmax.f32 %v8639, 0.0
    %v8657 = vmax.f32 %v8640, 0.0
    %v8658 = vmax.f32 %v8641, 0.0
    %v8659 = vmax.f32 %v8642, 0.0
    %8660 = vst.msk [vmem:[#allocation8] sm:$0xff] %vm1045, %v8643
    %8661 = vst.msk [vmem:[#allocation8 + $0x8] sm:$0xff] %vm1045, %v8644
    %8662 = vst.msk [vmem:[#allocation8 + $0x10] sm:$0xff] %vm1045, %v8645
    %8663 = vst.msk [vmem:[#allocation8 + $0x18] sm:$0xff] %vm1045, %v8646
    %8664 = vst.msk [vmem:[#allocation8 + $0x20] sm:$0xff] %vm1045, %v8647
    %8665 = vst.msk [vmem:[#allocation8 + $0x28] sm:$0xff] %vm1045, %v8648
    %8666 = vst.msk [vmem:[#allocation8 + $0x30] sm:$0xff] %vm1045, %v8649
    %8667 = vst.msk [vmem:[#allocation8 + $0x38] sm:$0xff] %vm1045, %v8650
    %s8668 = scalar_lea.vmem [#allocation8], 64
    %vm8669 = vcmask 261121
    %8670 = vst.msk [vmem:[%s8668 - $0x1] sm:$0xfe] %vm8669, %v8651
    %8671 = vst.msk [vmem:[%s8668 + $0x7] sm:$0xff] %vm1045, %v8652
    %8672 = vst.msk [vmem:[%s8668 + $0xf] sm:$0xff] %vm1045, %v8653
    %8673 = vst.msk [vmem:[%s8668 + $0x17] sm:$0xff] %vm1045, %v8654
    %8674 = vst.msk [vmem:[%s8668 + $0x1f] sm:$0xff] %vm1045, %v8655
    %8675 = vst.msk [vmem:[%s8668 + $0x27] sm:$0xff] %vm1045, %v8656
    %8676 = vst.msk [vmem:[%s8668 + $0x2f] sm:$0xff] %vm1045, %v8657
    %8677 = vst.msk [vmem:[%s8668 + $0x37] sm:$0xff] %vm1045, %v8658
    %8678 = vst.msk [vmem:[%s8668 + $0x3f] sm:$0x1] %vm82, %v8659
    // Predicated region
    $region46: #{encoder_forward.1} parent=1 // pred_check
      _
    $region47: #{encoder_forward.1} parent=1 // pred_check_branch
      %8680 = sbr.rel (0) target = $region49
    $region48: #{encoder_forward.1} parent=1 // pred_region
      %s8682 = ssub.s32 2048, 2048
      %8683 = vsyncadd [#allocation6], %s8682
      %s8684 = sshll.u32 [#allocation8], 4
      %s8685 = int_to_ptr.vmem [resolvable:$true] %s8684
      %8690 = dma.vmem_to_hbm [thread:$0]  %s8685, 2048, %s10, [#allocation6], 128, 128, 8
    $region49: #{encoder_forward.1} parent=1 // pred_fallthru
      _
    // Predicated region
    $region50: #{encoder_forward.1} parent=1 // pred_check
      _
    $region51: #{encoder_forward.1} parent=1 // pred_check_branch
      %8692 = sbr.rel (0) target = $region53
    $region52: #{encoder_forward.1} parent=1 // pred_region
      %8693 = dma.done [#allocation6], 2048
    $region53: #{encoder_forward.1} parent=1 // pred_fallthru
      _
    %8694 = vsyncpa [#allocation6], 1
    %8695 = vsyncpa [#allocation7], 1

</llo_original>
